<compile_context>
chip_gen: v6e
topology: v6e:2x2x1
jax: 0.10.0
libtpu: 0.0.40
codegen_flags: <defaults>
</compile_context>

<pallas_src>
import functools

import jax
import jax.numpy as jnp
from jax.experimental import pallas as pl
from jax.experimental.pallas import tpu as pltpu


def _round_up(x, m):
    return (x + m - 1) // m * m


def mpn_encoder_kernel(depth, max_nb, num_msgs, wide_gather,
                       fnode_ref, fmess_ref, gs_ref, A_ref, nmask_ref,
                       wz_x_ref, wz_h_ref, bz_ref,
                       wr_ref, ur_ref, bur_ref,
                       wh_x_ref, wh_h_ref, bh_ref,
                       wo_n_ref, wo_h_ref, bo_ref,
                       out_node_ref, out_h_ref,
                       gbuf, gsem):
    f32 = jnp.float32
    bf16 = jnp.bfloat16

    x = fmess_ref[...]                       # (Mp, Fp) bf16, VMEM resident
    Mp = x.shape[0]
    Hp = out_h_ref.shape[1]

    total = depth * max_nb
    # Prime the Gs stream: neighbor slot 0 -> double-buffer slot 0.
    pltpu.make_async_copy(gs_ref.at[0], gbuf.at[0], gsem.at[0]).start()

    # Message mask: row 0 is the padding message; rows >= num_msgs are pad rows.
    row = jax.lax.broadcasted_iota(jnp.int32, (Mp, 1), 0)
    msg_mask = jnp.logical_and(row != 0, row < num_msgs).astype(f32)

    # Loop-invariant input projections (bf16 MXU operands, f32 accumulation).
    # U_r's bias is folded into xr once (hoisted out of the per-slot loop).
    xz = jnp.dot(x, wz_x_ref[...], preferred_element_type=f32) + bz_ref[...]
    xr = jnp.dot(x, wr_ref[...], preferred_element_type=f32) + bur_ref[...]
    xh = jnp.dot(x, wh_x_ref[...], preferred_element_type=f32) + bh_ref[...]

    wz_h = wz_h_ref[...]
    ur = ur_ref[...]
    wh_h = wh_h_ref[...]

    h = jnp.zeros((Mp, Hp), f32)
    t = 0
    for _ in range(depth):
        hb = h.astype(bf16)
        if wide_gather:
            # (G @ h) @ U_r == G @ (h @ U_r): compute h @ U_r once per depth
            # step and gather a 256-wide RHS, fully using the v6e/v7x MXU
            # result width and deleting the per-slot (Mp,Hp)x(Hp,Hp) matmul.
            hur = jnp.dot(hb, ur, preferred_element_type=f32)
            rhs = jnp.concatenate([hb, hur.astype(bf16)], axis=1)   # (Mp, 2*Hp)
        sum_h = jnp.zeros((Mp, Hp), f32)
        sum_gated = jnp.zeros((Mp, Hp), f32)
        # Per-neighbor-slot one-hot gather + GRU reset gate, streaming Gs from
        # HBM with a 2-deep double buffer (DMA for slot t+1 hidden under the
        # MXU gather of slot t).
        # TODO(synk): replace the one-hot gather matmul with a real index gather
        # of the VMEM-resident h (or tile the message dim) to remove the O(M^2)
        # MXU cost once a robust Mosaic gather path is available.
        for n in range(max_nb):
            slot = t & 1
            pltpu.make_async_copy(gs_ref.at[t % max_nb], gbuf.at[slot],
                                  gsem.at[slot]).wait()
            if t + 1 < total:
                nslot = (t + 1) & 1
                pltpu.make_async_copy(gs_ref.at[(t + 1) % max_nb],
                                      gbuf.at[nslot], gsem.at[nslot]).start()
            g = gbuf[slot].astype(bf16)      # int8 one-hot -> bf16 (exact)
            if wide_gather:
                both = jnp.dot(g, rhs, preferred_element_type=f32)   # (Mp, 2Hp)
                h_nei_n = both[:, :Hp]
                hur_nei = both[:, Hp:]
            else:
                h_nei_n = jnp.dot(g, hb, preferred_element_type=f32)
                hur_nei = jnp.dot(h_nei_n.astype(bf16), ur,
                                  preferred_element_type=f32)
            sum_h = sum_h + h_nei_n
            r_n = jax.nn.sigmoid(xr + hur_nei)       # xr already carries bur
            sum_gated = sum_gated + r_n * h_nei_n
            t += 1
        z = jnp.sigmoid = jax.nn.sigmoid(
            xz + jnp.dot(sum_h.astype(bf16), wz_h, preferred_element_type=f32))
        pre_h = jnp.tanh(
            xh + jnp.dot(sum_gated.astype(bf16), wh_h, preferred_element_type=f32))
        # fused (1-z)*sum_h + z*pre_h
        # TODO(synk): nn.Dropout between GRU steps is stochastic in train mode;
        # identity here (eval-mode semantics).
        h = (sum_h + z * (pre_h - sum_h)) * msg_mask

    out_h_ref[...] = h

    # Readout: nei_message = sum over agraph gather, then ReLU(W_o([fnode, nei])).
    # TODO(synk): for very large graphs, stream A from HBM like Gs (it is the
    # remaining O(N*M) resident operand) and split message rows across the two
    # v7x TensorCores.
    nei_msg = jnp.dot(A_ref[...], h.astype(bf16), preferred_element_type=f32)
    node_h = (jnp.dot(fnode_ref[...], wo_n_ref[...], preferred_element_type=f32)
              + jnp.dot(nei_msg.astype(bf16), wo_h_ref[...], preferred_element_type=f32)
              + bo_ref[...])
    node_h = jnp.maximum(node_h, 0.0)                                  # ReLU
    out_node_ref[...] = node_h * nmask_ref[...]


def mpn_encoder_forward(params, fnode, fmess, agraph, bgraph, mask, depth=3):
    N, node_fdim = fnode.shape
    M, in_size = fmess.shape
    max_nb = bgraph.shape[1]
    H = params['bz'].shape[0]

    f32, bf16 = jnp.float32, jnp.bfloat16

    # rows of node arrays -> 16 (bf16 sublane tile); message dim -> 128 (it is
    # the lane / contraction dim of Gs and A); feature dims -> 128 lanes.
    Np = _round_up(N, 16)
    Mp = _round_up(M, 128)
    Fp = _round_up(in_size, 128)
    Dp = _round_up(node_fdim, 128)
    Hp = _round_up(H, 128)

    def pad2(a, r, c, dtype):
        out = jnp.zeros((r, c), dtype)
        return out.at[:a.shape[0], :a.shape[1]].set(a.astype(dtype))

    fnode_p = pad2(fnode, Np, Dp, bf16)
    fmess_p = pad2(fmess, Mp, Fp, bf16)
    mask_p = pad2(mask, Np, 1, f32)

    # padded graph rows point at the padding message (index 0, whose h is masked to 0)
    bgraph_p = jnp.zeros((Mp, max_nb), jnp.int32).at[:M].set(bgraph.astype(jnp.int32))
    agraph_p = jnp.zeros((Np, agraph.shape[1]), jnp.int32).at[:N].set(agraph.astype(jnp.int32))

    # Per-neighbor-slot one-hot gather matrices: int8 (0/1 exact), streamed from
    # HBM inside the kernel.  Readout pool matrix A stays VMEM-resident (bf16).
    Gs = jax.nn.one_hot(bgraph_p.T, Mp, dtype=jnp.int8)                    # (max_nb, Mp, Mp)
    A = jax.nn.one_hot(agraph_p, Mp, dtype=f32).sum(axis=1).astype(bf16)   # (Np, Mp)

    def padw(w, rows, cols):   # torch layout (out, in) -> (in_padded, out_padded), bf16
        return pad2(w.T, rows, cols, bf16)

    def padb(b, cols):
        return jnp.zeros((1, cols), f32).at[0, :b.shape[0]].set(b.astype(f32))

    inputs = (
        fnode_p, fmess_p, Gs, A, mask_p,
        padw(params['wz_x'], Fp, Hp), padw(params['wz_h'], Hp, Hp), padb(params['bz'], Hp),
        padw(params['wr'], Fp, Hp), padw(params['ur'], Hp, Hp), padb(params['bur'], Hp),
        padw(params['wh_x'], Fp, Hp), padw(params['wh_h'], Hp, Hp), padb(params['bh'], Hp),
        padw(params['wo_n'], Dp, Hp), padw(params['wo_h'], Hp, Hp), padb(params['bo'], Hp),
    )

    # --- chip-generation-dependent choices -------------------------------------
    kind = jax.devices()[0].device_kind.lower()
    wide_mxu = not any(t in kind for t in ("v2", "v3", "v4", "v5"))
    wide_gather = bool(wide_mxu and Hp == 128)   # 256-wide gather only pays off there

    try:
        vmem_cap = int(pltpu.get_tpu_info().vmem_capacity_bytes)
    except Exception:
        vmem_cap = 64 * 1024 * 1024
    headroom = 16 * 1024 * 1024

    gs_bytes = int(Gs.size) * Gs.dtype.itemsize
    vmem_in = sum(int(a.size) * a.dtype.itemsize for a in inputs) - gs_bytes
    out_bytes = (Np * Hp + Mp * Hp) * 4
    scratch_bytes = 2 * Mp * Mp                           # int8 Gs double buffer
    temp_bytes = 16 * Mp * Hp * 4 + 2 * Mp * (2 * Hp) * 2  # f32 temporaries + bf16 concat
    needed = vmem_in + out_bytes + scratch_bytes + temp_bytes
    vmem_limit = int(min(vmem_cap - headroom, max(32 * 1024 * 1024, 2 * needed)))

    # --- cost estimate ----------------------------------------------------------
    if wide_gather:
        gather_flops = depth * (max_nb * 2 * Mp * Mp * (2 * Hp) + 2 * Mp * Hp * Hp)
    else:
        gather_flops = depth * max_nb * (2 * Mp * Mp * Hp + 2 * Mp * Hp * Hp)
    flops = int(gather_flops
                + depth * 2 * (2 * Mp * Hp * Hp)
                + 3 * 2 * Mp * Fp * Hp
                + 2 * Np * Mp * Hp + 2 * Np * Dp * Hp + 2 * Np * Hp * Hp)
    transcendentals = int(depth * (max_nb + 2) * Mp * Hp)
    bytes_accessed = int(vmem_in + depth * gs_bytes + out_bytes)
    cost = pl.CostEstimate(flops=flops, transcendentals=transcendentals,
                           bytes_accessed=bytes_accessed)

    vmem = pl.BlockSpec(memory_space=pltpu.MemorySpace.VMEM)
    hbm = pl.BlockSpec(memory_space=pl.ANY)
    in_specs = [vmem, vmem, hbm, vmem, vmem] + [vmem] * 12

    fn = pl.pallas_call(
        functools.partial(mpn_encoder_kernel, depth, max_nb, M, wide_gather),
        out_shape=(jax.ShapeDtypeStruct((Np, Hp), f32),
                   jax.ShapeDtypeStruct((Mp, Hp), f32)),
        in_specs=in_specs,
        out_specs=(vmem, vmem),
        scratch_shapes=[pltpu.VMEM((2, Mp, Mp), jnp.int8),
                        pltpu.SemaphoreType.DMA((2,))],
        compiler_params=pltpu.CompilerParams(vmem_limit_bytes=vmem_limit),
        cost_estimate=cost,
    )
    node_p, h_p = fn(*inputs)
    return node_p[:N, :H], h_p[:M, :H]


def reference_forward(params, fnode, fmess, agraph, bgraph, mask, depth=3):
    """Pure-JAX f32 mirror of the PyTorch forward (gather-based) for verification."""
    M = fmess.shape[0]
    H = params['bz'].shape[0]
    wz = jnp.concatenate([params['wz_x'], params['wz_h']], axis=1)
    wh = jnp.concatenate([params['wh_x'], params['wh_h']], axis=1)
    wo = jnp.concatenate([params['wo_n'], params['wo_h']], axis=1)

    h = jnp.zeros((M, H), jnp.float32)
    msg_mask = jnp.ones((M, 1), jnp.float32).at[0, 0].set(0.0)
    for _ in range(depth):
        h_nei = h[bgraph]                                  # (M, nb, H)
        sum_h = h_nei.sum(1)
        z = jax.nn.sigmoid(jnp.concatenate([fmess, sum_h], 1) @ wz.T + params['bz'])
        r1 = (fmess @ params['wr'].T)[:, None, :]
        r2 = h_nei @ params['ur'].T + params['bur']
        r = jax.nn.sigmoid(r1 + r2)
        sum_gated = (r * h_nei).sum(1)
        pre_h = jnp.tanh(jnp.concatenate([fmess, sum_gated], 1) @ wh.T + params['bh'])
        h = (1.0 - z) * sum_h + z * pre_h
        h = h * msg_mask
    nei_msg = h[agraph].sum(1)
    node_h = jnp.concatenate([fnode, nei_msg], 1) @ wo.T + params['bo']
    node_h = jnp.maximum(node_h, 0.0)
    return node_h * mask, h


def make_params(key, input_size, node_fdim, h_size):
    keys = jax.random.split(key, 12)
    s = 0.1
    return {
        'wz_x': jax.random.normal(keys[0], (h_size, input_size), jnp.float32) * s,
        'wz_h': jax.random.normal(keys[1], (h_size, h_size), jnp.float32) * s,
        'bz':   jax.random.normal(keys[2], (h_size,), jnp.float32) * s,
        'wr':   jax.random.normal(keys[3], (h_size, input_size), jnp.float32) * s,
        'ur':   jax.random.normal(keys[4], (h_size, h_size), jnp.float32) * s,
        'bur':  jax.random.normal(keys[5], (h_size,), jnp.float32) * s,
        'wh_x': jax.random.normal(keys[6], (h_size, input_size), jnp.float32) * s,
        'wh_h': jax.random.normal(keys[7], (h_size, h_size), jnp.float32) * s,
        'bh':   jax.random.normal(keys[8], (h_size,), jnp.float32) * s,
        'wo_n': jax.random.normal(keys[9], (h_size, node_fdim), jnp.float32) * s,
        'wo_h': jax.random.normal(keys[10], (h_size, h_size), jnp.float32) * s,
        'bo':   jax.random.normal(keys[11], (h_size,), jnp.float32) * s,
    }


if __name__ == "__main__":
    key = jax.random.PRNGKey(0)
    k_param, k_node, k_mess, k_ag, k_bg = jax.random.split(key, 5)

    # intentionally non-aligned sizes to exercise the padding path
    n_nodes, n_mess, max_nb = 10, 18, 4
    input_size, node_fdim, h_size, depth = 16, 16, 32, 3

    params = make_params(k_param, input_size, node_fdim, h_size)

    fnode = jax.random.normal(k_node, (n_nodes, node_fdim), jnp.float32)
    fmess = jax.random.normal(k_mess, (n_mess, input_size), jnp.float32)
    # index 0 is the padding message (its hidden state is always masked to 0)
    agraph = jax.random.randint(k_ag, (n_nodes, max_nb), 0, n_mess, dtype=jnp.int32)
    bgraph = jax.random.randint(k_bg, (n_mess, max_nb), 0, n_mess, dtype=jnp.int32)
    mask = jnp.ones((n_nodes, 1), jnp.float32).at[0, 0].set(0.0)

    node_out, h_out = mpn_encoder_forward(params, fnode, fmess, agraph, bgraph, mask, depth)
    jax.block_until_ready((node_out, h_out))

    node_ref, h_ref = reference_forward(params, fnode, fmess, agraph, bgraph, mask, depth)
    assert node_out.shape == node_ref.shape and h_out.shape == h_ref.shape
    # bf16 MXU operands with f32 accumulation -> loose-but-safe tolerance vs f32 ref
    assert jnp.allclose(node_out, node_ref, rtol=3e-2, atol=3e-2), "node_hiddens mismatch"
    assert jnp.allclose(h_out, h_ref, rtol=3e-2, atol=3e-2), "message hidden state mismatch"

    print("KERNEL_OK")
</pallas_src>

<mosaic_0001>
module attributes {stable_mosaic.version = 11 : i64} {
  func.func @mpn_encoder_kernel(%arg0: memref<16x128xbf16, #tpu.memory_space<vmem>>, %arg1: memref<128x128xbf16, #tpu.memory_space<vmem>>, %arg2: memref<4x128x128xi8, #tpu.memory_space<any>>, %arg3: memref<16x128xbf16, #tpu.memory_space<vmem>>, %arg4: memref<16x1xf32, #tpu.memory_space<vmem>>, %arg5: memref<128x128xbf16, #tpu.memory_space<vmem>>, %arg6: memref<128x128xbf16, #tpu.memory_space<vmem>>, %arg7: memref<1x128xf32, #tpu.memory_space<vmem>>, %arg8: memref<128x128xbf16, #tpu.memory_space<vmem>>, %arg9: memref<128x128xbf16, #tpu.memory_space<vmem>>, %arg10: memref<1x128xf32, #tpu.memory_space<vmem>>, %arg11: memref<128x128xbf16, #tpu.memory_space<vmem>>, %arg12: memref<128x128xbf16, #tpu.memory_space<vmem>>, %arg13: memref<1x128xf32, #tpu.memory_space<vmem>>, %arg14: memref<128x128xbf16, #tpu.memory_space<vmem>>, %arg15: memref<128x128xbf16, #tpu.memory_space<vmem>>, %arg16: memref<1x128xf32, #tpu.memory_space<vmem>>, %arg17: memref<16x128xf32, #tpu.memory_space<vmem>>, %arg18: memref<128x128xf32, #tpu.memory_space<vmem>>, %arg19: memref<2x128x128xi8, #tpu.memory_space<vmem>>, %arg20: memref<2x!tpu.dma_semaphore, #tpu.memory_space<semaphore_mem>>) attributes {dimension_semantics = [], scalar_prefetch = 0 : i64, scratch_operands = 2 : i64, tpu.core_type = #tpu.core_type<tc>} {
    %c0 = arith.constant 0 : index
    %c0_0 = arith.constant 0 : index
    %0 = vector.load %arg1[%c0, %c0_0] : memref<128x128xbf16, #tpu.memory_space<vmem>>, vector<128x128xbf16>
    %c0_i32 = arith.constant 0 : i32
    %c0_i32_1 = arith.constant 0 : i32
    %c0_i32_2 = arith.constant 0 : i32
    %c0_i32_3 = arith.constant 0 : i32
    %c0_i32_4 = arith.constant 0 : i32
    %1 = tpu.memref_slice %arg2[%c0_i32, %c0_i32_3, %c0_i32_4] : memref<4x128x128xi8, #tpu.memory_space<any>> -> memref<1x128x128xi8, #tpu.memory_space<any>>
    %2 = tpu.memref_squeeze %1 : memref<1x128x128xi8, #tpu.memory_space<any>> -> memref<128x128xi8, #tpu.memory_space<any>>
    %c0_i32_5 = arith.constant 0 : i32
    %c0_i32_6 = arith.constant 0 : i32
    %3 = tpu.memref_slice %arg19[%c0_i32_1, %c0_i32_5, %c0_i32_6] : memref<2x128x128xi8, #tpu.memory_space<vmem>> -> memref<1x128x128xi8, #tpu.memory_space<vmem>>
    %4 = tpu.memref_squeeze %3 : memref<1x128x128xi8, #tpu.memory_space<vmem>> -> memref<128x128xi8, #tpu.memory_space<vmem>>
    %5 = tpu.memref_slice %arg20[%c0_i32_2] : memref<2x!tpu.dma_semaphore, #tpu.memory_space<semaphore_mem>> -> memref<1x!tpu.dma_semaphore, #tpu.memory_space<semaphore_mem>>
    %6 = tpu.memref_squeeze %5 : memref<1x!tpu.dma_semaphore, #tpu.memory_space<semaphore_mem>> -> memref<!tpu.dma_semaphore, #tpu.memory_space<semaphore_mem>>
    tpu.enqueue_dma source(%2 : memref<128x128xi8, #tpu.memory_space<any>>) target(%4 : memref<128x128xi8, #tpu.memory_space<vmem>>) target_semaphore(%6 : memref<!tpu.dma_semaphore, #tpu.memory_space<semaphore_mem>>)
    %7 = tpu.iota {dimensions = array<i32: 0>} : vector<128x1xi32>
    %c0_i32_7 = arith.constant 0 : i32
    %8 = vector.broadcast %c0_i32_7 : i32 to vector<128x1xi32>
    %9 = arith.cmpi ne, %7, %8 : vector<128x1xi32>
    %c18_i32 = arith.constant 18 : i32
    %10 = vector.broadcast %c18_i32 : i32 to vector<128x1xi32>
    %11 = arith.cmpi slt, %7, %10 : vector<128x1xi32>
    %12 = arith.andi %9, %11 : vector<128x1xi1>
    %13 = arith.extui %12 : vector<128x1xi1> to vector<128x1xi32>
    %14 = arith.sitofp %13 : vector<128x1xi32> to vector<128x1xf32>
    %c0_8 = arith.constant 0 : index
    %c0_9 = arith.constant 0 : index
    %15 = vector.load %arg5[%c0_8, %c0_9] : memref<128x128xbf16, #tpu.memory_space<vmem>>, vector<128x128xbf16>
    %cst = arith.constant dense<0.000000e+00> : vector<128x128xf32>
    %16 = tpu.matmul %0, %15, %cst {dimension_numbers = #tpu.dot_dimension_numbers<[1], [0], [0], [1], [0, 0, 1, 1], [], []>} : vector<128x128xbf16>, vector<128x128xbf16>, vector<128x128xf32> -> vector<128x128xf32>
    %c0_10 = arith.constant 0 : index
    %c0_11 = arith.constant 0 : index
    %17 = vector.load %arg7[%c0_10, %c0_11] : memref<1x128xf32, #tpu.memory_space<vmem>>, vector<1x128xf32>
    %18 = vector.broadcast %17 : vector<1x128xf32> to vector<128x128xf32>
    %19 = arith.addf %16, %18 : vector<128x128xf32>
    %c0_12 = arith.constant 0 : index
    %c0_13 = arith.constant 0 : index
    %20 = vector.load %arg8[%c0_12, %c0_13] : memref<128x128xbf16, #tpu.memory_space<vmem>>, vector<128x128xbf16>
    %cst_14 = arith.constant dense<0.000000e+00> : vector<128x128xf32>
    %21 = tpu.matmul %0, %20, %cst_14 {dimension_numbers = #tpu.dot_dimension_numbers<[1], [0], [0], [1], [0, 0, 1, 1], [], []>} : vector<128x128xbf16>, vector<128x128xbf16>, vector<128x128xf32> -> vector<128x128xf32>
    %c0_15 = arith.constant 0 : index
    %c0_16 = arith.constant 0 : index
    %22 = vector.load %arg10[%c0_15, %c0_16] : memref<1x128xf32, #tpu.memory_space<vmem>>, vector<1x128xf32>
    %23 = vector.broadcast %22 : vector<1x128xf32> to vector<128x128xf32>
    %24 = arith.addf %21, %23 : vector<128x128xf32>
    %c0_17 = arith.constant 0 : index
    %c0_18 = arith.constant 0 : index
    %25 = vector.load %arg11[%c0_17, %c0_18] : memref<128x128xbf16, #tpu.memory_space<vmem>>, vector<128x128xbf16>
    %cst_19 = arith.constant dense<0.000000e+00> : vector<128x128xf32>
    %26 = tpu.matmul %0, %25, %cst_19 {dimension_numbers = #tpu.dot_dimension_numbers<[1], [0], [0], [1], [0, 0, 1, 1], [], []>} : vector<128x128xbf16>, vector<128x128xbf16>, vector<128x128xf32> -> vector<128x128xf32>
    %c0_20 = arith.constant 0 : index
    %c0_21 = arith.constant 0 : index
    %27 = vector.load %arg13[%c0_20, %c0_21] : memref<1x128xf32, #tpu.memory_space<vmem>>, vector<1x128xf32>
    %28 = vector.broadcast %27 : vector<1x128xf32> to vector<128x128xf32>
    %29 = arith.addf %26, %28 : vector<128x128xf32>
    %c0_22 = arith.constant 0 : index
    %c0_23 = arith.constant 0 : index
    %30 = vector.load %arg6[%c0_22, %c0_23] : memref<128x128xbf16, #tpu.memory_space<vmem>>, vector<128x128xbf16>
    %c0_24 = arith.constant 0 : index
    %c0_25 = arith.constant 0 : index
    %31 = vector.load %arg9[%c0_24, %c0_25] : memref<128x128xbf16, #tpu.memory_space<vmem>>, vector<128x128xbf16>
    %c0_26 = arith.constant 0 : index
    %c0_27 = arith.constant 0 : index
    %32 = vector.load %arg12[%c0_26, %c0_27] : memref<128x128xbf16, #tpu.memory_space<vmem>>, vector<128x128xbf16>
    %cst_28 = arith.constant 0.000000e+00 : f32
    %33 = vector.broadcast %cst_28 : f32 to vector<128x128xf32>
    %34 = arith.truncf %33 : vector<128x128xf32> to vector<128x128xbf16>
    %cst_29 = arith.constant dense<0.000000e+00> : vector<128x128xf32>
    %35 = tpu.matmul %34, %31, %cst_29 {dimension_numbers = #tpu.dot_dimension_numbers<[1], [0], [0], [1], [0, 0, 1, 1], [], []>} : vector<128x128xbf16>, vector<128x128xbf16>, vector<128x128xf32> -> vector<128x128xf32>
    %36 = arith.truncf %35 : vector<128x128xf32> to vector<128x128xbf16>
    %37 = tpu.concatenate %34, %36 in 1 : vector<128x128xbf16>, vector<128x128xbf16> -> vector<128x256xbf16>
    %cst_30 = arith.constant 0.000000e+00 : f32
    %38 = vector.broadcast %cst_30 : f32 to vector<128x128xf32>
    %cst_31 = arith.constant 0.000000e+00 : f32
    %39 = vector.broadcast %cst_31 : f32 to vector<128x128xf32>
    %c0_i32_32 = arith.constant 0 : i32
    %c0_i32_33 = arith.constant 0 : i32
    %c0_i32_34 = arith.constant 0 : i32
    %c0_i32_35 = arith.constant 0 : i32
    %c0_i32_36 = arith.constant 0 : i32
    %40 = tpu.memref_slice %arg2[%c0_i32_32, %c0_i32_35, %c0_i32_36] : memref<4x128x128xi8, #tpu.memory_space<any>> -> memref<1x128x128xi8, #tpu.memory_space<any>>
    %41 = tpu.memref_squeeze %40 : memref<1x128x128xi8, #tpu.memory_space<any>> -> memref<128x128xi8, #tpu.memory_space<any>>
    %c0_i32_37 = arith.constant 0 : i32
    %c0_i32_38 = arith.constant 0 : i32
    %42 = tpu.memref_slice %arg19[%c0_i32_33, %c0_i32_37, %c0_i32_38] : memref<2x128x128xi8, #tpu.memory_space<vmem>> -> memref<1x128x128xi8, #tpu.memory_space<vmem>>
    %43 = tpu.memref_squeeze %42 : memref<1x128x128xi8, #tpu.memory_space<vmem>> -> memref<128x128xi8, #tpu.memory_space<vmem>>
    %44 = tpu.memref_slice %arg20[%c0_i32_34] : memref<2x!tpu.dma_semaphore, #tpu.memory_space<semaphore_mem>> -> memref<1x!tpu.dma_semaphore, #tpu.memory_space<semaphore_mem>>
    %45 = tpu.memref_squeeze %44 : memref<1x!tpu.dma_semaphore, #tpu.memory_space<semaphore_mem>> -> memref<!tpu.dma_semaphore, #tpu.memory_space<semaphore_mem>>
    tpu.wait_dma2 semaphore(%45 : memref<!tpu.dma_semaphore, #tpu.memory_space<semaphore_mem>>) src(%41 : memref<128x128xi8, #tpu.memory_space<any>>) dst(%43 : memref<128x128xi8, #tpu.memory_space<vmem>>)
    %c1_i32 = arith.constant 1 : i32
    %c1_i32_39 = arith.constant 1 : i32
    %c1_i32_40 = arith.constant 1 : i32
    %c0_i32_41 = arith.constant 0 : i32
    %c0_i32_42 = arith.constant 0 : i32
    %46 = tpu.memref_slice %arg2[%c1_i32, %c0_i32_41, %c0_i32_42] : memref<4x128x128xi8, #tpu.memory_space<any>> -> memref<1x128x128xi8, #tpu.memory_space<any>>
    %47 = tpu.memref_squeeze %46 : memref<1x128x128xi8, #tpu.memory_space<any>> -> memref<128x128xi8, #tpu.memory_space<any>>
    %c0_i32_43 = arith.constant 0 : i32
    %c0_i32_44 = arith.constant 0 : i32
    %48 = tpu.memref_slice %arg19[%c1_i32_39, %c0_i32_43, %c0_i32_44] : memref<2x128x128xi8, #tpu.memory_space<vmem>> -> memref<1x128x128xi8, #tpu.memory_space<vmem>>
    %49 = tpu.memref_squeeze %48 : memref<1x128x128xi8, #tpu.memory_space<vmem>> -> memref<128x128xi8, #tpu.memory_space<vmem>>
    %50 = tpu.memref_slice %arg20[%c1_i32_40] : memref<2x!tpu.dma_semaphore, #tpu.memory_space<semaphore_mem>> -> memref<1x!tpu.dma_semaphore, #tpu.memory_space<semaphore_mem>>
    %51 = tpu.memref_squeeze %50 : memref<1x!tpu.dma_semaphore, #tpu.memory_space<semaphore_mem>> -> memref<!tpu.dma_semaphore, #tpu.memory_space<semaphore_mem>>
    tpu.enqueue_dma source(%47 : memref<128x128xi8, #tpu.memory_space<any>>) target(%49 : memref<128x128xi8, #tpu.memory_space<vmem>>) target_semaphore(%51 : memref<!tpu.dma_semaphore, #tpu.memory_space<semaphore_mem>>)
    %c0_45 = arith.constant 0 : index
    %c0_46 = arith.constant 0 : index
    %c0_47 = arith.constant 0 : index
    %52 = vector.load %arg19[%c0_45, %c0_46, %c0_47] : memref<2x128x128xi8, #tpu.memory_space<vmem>>, vector<1x128x128xi8>
    %53 = vector.shape_cast %52 : vector<1x128x128xi8> to vector<128x128xi8>
    %54 = arith.sitofp %53 : vector<128x128xi8> to vector<128x128xbf16>
    %cst_48 = arith.constant dense<0.000000e+00> : vector<128x256xf32>
    %55 = tpu.matmul %54, %37, %cst_48 {dimension_numbers = #tpu.dot_dimension_numbers<[1], [0], [0], [1], [0, 0, 1, 1], [], []>} : vector<128x128xbf16>, vector<128x256xbf16>, vector<128x256xf32> -> vector<128x256xf32>
    %56 = vector.extract_strided_slice %55 {offsets = [0, 0], sizes = [128, 128], strides = [1, 1]} : vector<128x256xf32> to vector<128x128xf32>
    %57 = vector.extract_strided_slice %55 {offsets = [0, 128], sizes = [128, 128], strides = [1, 1]} : vector<128x256xf32> to vector<128x128xf32>
    %58 = arith.addf %38, %56 : vector<128x128xf32>
    %59 = arith.addf %24, %57 : vector<128x128xf32>
    %60 = arith.negf %59 : vector<128x128xf32>
    %61 = math.exp %60 : vector<128x128xf32>
    %cst_49 = arith.constant 1.000000e+00 : f32
    %62 = vector.broadcast %cst_49 : f32 to vector<128x128xf32>
    %63 = arith.addf %62, %61 : vector<128x128xf32>
    %64 = arith.divf %62, %63 : vector<128x128xf32>
    %65 = arith.mulf %64, %56 : vector<128x128xf32>
    %66 = arith.addf %39, %65 : vector<128x128xf32>
    %c1_i32_50 = arith.constant 1 : i32
    %c1_i32_51 = arith.constant 1 : i32
    %c1_i32_52 = arith.constant 1 : i32
    %c0_i32_53 = arith.constant 0 : i32
    %c0_i32_54 = arith.constant 0 : i32
    %67 = tpu.memref_slice %arg2[%c1_i32_50, %c0_i32_53, %c0_i32_54] : memref<4x128x128xi8, #tpu.memory_space<any>> -> memref<1x128x128xi8, #tpu.memory_space<any>>
    %68 = tpu.memref_squeeze %67 : memref<1x128x128xi8, #tpu.memory_space<any>> -> memref<128x128xi8, #tpu.memory_space<any>>
    %c0_i32_55 = arith.constant 0 : i32
    %c0_i32_56 = arith.constant 0 : i32
    %69 = tpu.memref_slice %arg19[%c1_i32_51, %c0_i32_55, %c0_i32_56] : memref<2x128x128xi8, #tpu.memory_space<vmem>> -> memref<1x128x128xi8, #tpu.memory_space<vmem>>
    %70 = tpu.memref_squeeze %69 : memref<1x128x128xi8, #tpu.memory_space<vmem>> -> memref<128x128xi8, #tpu.memory_space<vmem>>
    %71 = tpu.memref_slice %arg20[%c1_i32_52] : memref<2x!tpu.dma_semaphore, #tpu.memory_space<semaphore_mem>> -> memref<1x!tpu.dma_semaphore, #tpu.memory_space<semaphore_mem>>
    %72 = tpu.memref_squeeze %71 : memref<1x!tpu.dma_semaphore, #tpu.memory_space<semaphore_mem>> -> memref<!tpu.dma_semaphore, #tpu.memory_space<semaphore_mem>>
    tpu.wait_dma2 semaphore(%72 : memref<!tpu.dma_semaphore, #tpu.memory_space<semaphore_mem>>) src(%68 : memref<128x128xi8, #tpu.memory_space<any>>) dst(%70 : memref<128x128xi8, #tpu.memory_space<vmem>>)
    %c2_i32 = arith.constant 2 : i32
    %c0_i32_57 = arith.constant 0 : i32
    %c0_i32_58 = arith.constant 0 : i32
    %c0_i32_59 = arith.constant 0 : i32
    %c0_i32_60 = arith.constant 0 : i32
    %73 = tpu.memref_slice %arg2[%c2_i32, %c0_i32_59, %c0_i32_60] : memref<4x128x128xi8, #tpu.memory_space<any>> -> memref<1x128x128xi8, #tpu.memory_space<any>>
    %74 = tpu.memref_squeeze %73 : memref<1x128x128xi8, #tpu.memory_space<any>> -> memref<128x128xi8, #tpu.memory_space<any>>
    %c0_i32_61 = arith.constant 0 : i32
    %c0_i32_62 = arith.constant 0 : i32
    %75 = tpu.memref_slice %arg19[%c0_i32_57, %c0_i32_61, %c0_i32_62] : memref<2x128x128xi8, #tpu.memory_space<vmem>> -> memref<1x128x128xi8, #tpu.memory_space<vmem>>
    %76 = tpu.memref_squeeze %75 : memref<1x128x128xi8, #tpu.memory_space<vmem>> -> memref<128x128xi8, #tpu.memory_space<vmem>>
    %77 = tpu.memref_slice %arg20[%c0_i32_58] : memref<2x!tpu.dma_semaphore, #tpu.memory_space<semaphore_mem>> -> memref<1x!tpu.dma_semaphore, #tpu.memory_space<semaphore_mem>>
    %78 = tpu.memref_squeeze %77 : memref<1x!tpu.dma_semaphore, #tpu.memory_space<semaphore_mem>> -> memref<!tpu.dma_semaphore, #tpu.memory_space<semaphore_mem>>
    tpu.enqueue_dma source(%74 : memref<128x128xi8, #tpu.memory_space<any>>) target(%76 : memref<128x128xi8, #tpu.memory_space<vmem>>) target_semaphore(%78 : memref<!tpu.dma_semaphore, #tpu.memory_space<semaphore_mem>>)
    %c1 = arith.constant 1 : index
    %c0_63 = arith.constant 0 : index
    %c0_64 = arith.constant 0 : index
    %79 = vector.load %arg19[%c1, %c0_63, %c0_64] : memref<2x128x128xi8, #tpu.memory_space<vmem>>, vector<1x128x128xi8>
    %80 = vector.shape_cast %79 : vector<1x128x128xi8> to vector<128x128xi8>
    %81 = arith.sitofp %80 : vector<128x128xi8> to vector<128x128xbf16>
    %cst_65 = arith.constant dense<0.000000e+00> : vector<128x256xf32>
    %82 = tpu.matmul %81, %37, %cst_65 {dimension_numbers = #tpu.dot_dimension_numbers<[1], [0], [0], [1], [0, 0, 1, 1], [], []>} : vector<128x128xbf16>, vector<128x256xbf16>, vector<128x256xf32> -> vector<128x256xf32>
    %83 = vector.extract_strided_slice %82 {offsets = [0, 0], sizes = [128, 128], strides = [1, 1]} : vector<128x256xf32> to vector<128x128xf32>
    %84 = vector.extract_strided_slice %82 {offsets = [0, 128], sizes = [128, 128], strides = [1, 1]} : vector<128x256xf32> to vector<128x128xf32>
    %85 = arith.addf %58, %83 : vector<128x128xf32>
    %86 = arith.addf %24, %84 : vector<128x128xf32>
    %87 = arith.negf %86 : vector<128x128xf32>
    %88 = math.exp %87 : vector<128x128xf32>
    %cst_66 = arith.constant 1.000000e+00 : f32
    %89 = vector.broadcast %cst_66 : f32 to vector<128x128xf32>
    %90 = arith.addf %89, %88 : vector<128x128xf32>
    %91 = arith.divf %89, %90 : vector<128x128xf32>
    %92 = arith.mulf %91, %83 : vector<128x128xf32>
    %93 = arith.addf %66, %92 : vector<128x128xf32>
    %c2_i32_67 = arith.constant 2 : i32
    %c0_i32_68 = arith.constant 0 : i32
    %c0_i32_69 = arith.constant 0 : i32
    %c0_i32_70 = arith.constant 0 : i32
    %c0_i32_71 = arith.constant 0 : i32
    %94 = tpu.memref_slice %arg2[%c2_i32_67, %c0_i32_70, %c0_i32_71] : memref<4x128x128xi8, #tpu.memory_space<any>> -> memref<1x128x128xi8, #tpu.memory_space<any>>
    %95 = tpu.memref_squeeze %94 : memref<1x128x128xi8, #tpu.memory_space<any>> -> memref<128x128xi8, #tpu.memory_space<any>>
    %c0_i32_72 = arith.constant 0 : i32
    %c0_i32_73 = arith.constant 0 : i32
    %96 = tpu.memref_slice %arg19[%c0_i32_68, %c0_i32_72, %c0_i32_73] : memref<2x128x128xi8, #tpu.memory_space<vmem>> -> memref<1x128x128xi8, #tpu.memory_space<vmem>>
    %97 = tpu.memref_squeeze %96 : memref<1x128x128xi8, #tpu.memory_space<vmem>> -> memref<128x128xi8, #tpu.memory_space<vmem>>
    %98 = tpu.memref_slice %arg20[%c0_i32_69] : memref<2x!tpu.dma_semaphore, #tpu.memory_space<semaphore_mem>> -> memref<1x!tpu.dma_semaphore, #tpu.memory_space<semaphore_mem>>
    %99 = tpu.memref_squeeze %98 : memref<1x!tpu.dma_semaphore, #tpu.memory_space<semaphore_mem>> -> memref<!tpu.dma_semaphore, #tpu.memory_space<semaphore_mem>>
    tpu.wait_dma2 semaphore(%99 : memref<!tpu.dma_semaphore, #tpu.memory_space<semaphore_mem>>) src(%95 : memref<128x128xi8, #tpu.memory_space<any>>) dst(%97 : memref<128x128xi8, #tpu.memory_space<vmem>>)
    %c3_i32 = arith.constant 3 : i32
    %c1_i32_74 = arith.constant 1 : i32
    %c1_i32_75 = arith.constant 1 : i32
    %c0_i32_76 = arith.constant 0 : i32
    %c0_i32_77 = arith.constant 0 : i32
    %100 = tpu.memref_slice %arg2[%c3_i32, %c0_i32_76, %c0_i32_77] : memref<4x128x128xi8, #tpu.memory_space<any>> -> memref<1x128x128xi8, #tpu.memory_space<any>>
    %101 = tpu.memref_squeeze %100 : memref<1x128x128xi8, #tpu.memory_space<any>> -> memref<128x128xi8, #tpu.memory_space<any>>
    %c0_i32_78 = arith.constant 0 : i32
    %c0_i32_79 = arith.constant 0 : i32
    %102 = tpu.memref_slice %arg19[%c1_i32_74, %c0_i32_78, %c0_i32_79] : memref<2x128x128xi8, #tpu.memory_space<vmem>> -> memref<1x128x128xi8, #tpu.memory_space<vmem>>
    %103 = tpu.memref_squeeze %102 : memref<1x128x128xi8, #tpu.memory_space<vmem>> -> memref<128x128xi8, #tpu.memory_space<vmem>>
    %104 = tpu.memref_slice %arg20[%c1_i32_75] : memref<2x!tpu.dma_semaphore, #tpu.memory_space<semaphore_mem>> -> memref<1x!tpu.dma_semaphore, #tpu.memory_space<semaphore_mem>>
    %105 = tpu.memref_squeeze %104 : memref<1x!tpu.dma_semaphore, #tpu.memory_space<semaphore_mem>> -> memref<!tpu.dma_semaphore, #tpu.memory_space<semaphore_mem>>
    tpu.enqueue_dma source(%101 : memref<128x128xi8, #tpu.memory_space<any>>) target(%103 : memref<128x128xi8, #tpu.memory_space<vmem>>) target_semaphore(%105 : memref<!tpu.dma_semaphore, #tpu.memory_space<semaphore_mem>>)
    %c0_80 = arith.constant 0 : index
    %c0_81 = arith.constant 0 : index
    %c0_82 = arith.constant 0 : index
    %106 = vector.load %arg19[%c0_80, %c0_81, %c0_82] : memref<2x128x128xi8, #tpu.memory_space<vmem>>, vector<1x128x128xi8>
    %107 = vector.shape_cast %106 : vector<1x128x128xi8> to vector<128x128xi8>
    %108 = arith.sitofp %107 : vector<128x128xi8> to vector<128x128xbf16>
    %cst_83 = arith.constant dense<0.000000e+00> : vector<128x256xf32>
    %109 = tpu.matmul %108, %37, %cst_83 {dimension_numbers = #tpu.dot_dimension_numbers<[1], [0], [0], [1], [0, 0, 1, 1], [], []>} : vector<128x128xbf16>, vector<128x256xbf16>, vector<128x256xf32> -> vector<128x256xf32>
    %110 = vector.extract_strided_slice %109 {offsets = [0, 0], sizes = [128, 128], strides = [1, 1]} : vector<128x256xf32> to vector<128x128xf32>
    %111 = vector.extract_strided_slice %109 {offsets = [0, 128], sizes = [128, 128], strides = [1, 1]} : vector<128x256xf32> to vector<128x128xf32>
    %112 = arith.addf %85, %110 : vector<128x128xf32>
    %113 = arith.addf %24, %111 : vector<128x128xf32>
    %114 = arith.negf %113 : vector<128x128xf32>
    %115 = math.exp %114 : vector<128x128xf32>
    %cst_84 = arith.constant 1.000000e+00 : f32
    %116 = vector.broadcast %cst_84 : f32 to vector<128x128xf32>
    %117 = arith.addf %116, %115 : vector<128x128xf32>
    %118 = arith.divf %116, %117 : vector<128x128xf32>
    %119 = arith.mulf %118, %110 : vector<128x128xf32>
    %120 = arith.addf %93, %119 : vector<128x128xf32>
    %c3_i32_85 = arith.constant 3 : i32
    %c1_i32_86 = arith.constant 1 : i32
    %c1_i32_87 = arith.constant 1 : i32
    %c0_i32_88 = arith.constant 0 : i32
    %c0_i32_89 = arith.constant 0 : i32
    %121 = tpu.memref_slice %arg2[%c3_i32_85, %c0_i32_88, %c0_i32_89] : memref<4x128x128xi8, #tpu.memory_space<any>> -> memref<1x128x128xi8, #tpu.memory_space<any>>
    %122 = tpu.memref_squeeze %121 : memref<1x128x128xi8, #tpu.memory_space<any>> -> memref<128x128xi8, #tpu.memory_space<any>>
    %c0_i32_90 = arith.constant 0 : i32
    %c0_i32_91 = arith.constant 0 : i32
    %123 = tpu.memref_slice %arg19[%c1_i32_86, %c0_i32_90, %c0_i32_91] : memref<2x128x128xi8, #tpu.memory_space<vmem>> -> memref<1x128x128xi8, #tpu.memory_space<vmem>>
    %124 = tpu.memref_squeeze %123 : memref<1x128x128xi8, #tpu.memory_space<vmem>> -> memref<128x128xi8, #tpu.memory_space<vmem>>
    %125 = tpu.memref_slice %arg20[%c1_i32_87] : memref<2x!tpu.dma_semaphore, #tpu.memory_space<semaphore_mem>> -> memref<1x!tpu.dma_semaphore, #tpu.memory_space<semaphore_mem>>
    %126 = tpu.memref_squeeze %125 : memref<1x!tpu.dma_semaphore, #tpu.memory_space<semaphore_mem>> -> memref<!tpu.dma_semaphore, #tpu.memory_space<semaphore_mem>>
    tpu.wait_dma2 semaphore(%126 : memref<!tpu.dma_semaphore, #tpu.memory_space<semaphore_mem>>) src(%122 : memref<128x128xi8, #tpu.memory_space<any>>) dst(%124 : memref<128x128xi8, #tpu.memory_space<vmem>>)
    %c0_i32_92 = arith.constant 0 : i32
    %c0_i32_93 = arith.constant 0 : i32
    %c0_i32_94 = arith.constant 0 : i32
    %c0_i32_95 = arith.constant 0 : i32
    %c0_i32_96 = arith.constant 0 : i32
    %127 = tpu.memref_slice %arg2[%c0_i32_92, %c0_i32_95, %c0_i32_96] : memref<4x128x128xi8, #tpu.memory_space<any>> -> memref<1x128x128xi8, #tpu.memory_space<any>>
    %128 = tpu.memref_squeeze %127 : memref<1x128x128xi8, #tpu.memory_space<any>> -> memref<128x128xi8, #tpu.memory_space<any>>
    %c0_i32_97 = arith.constant 0 : i32
    %c0_i32_98 = arith.constant 0 : i32
    %129 = tpu.memref_slice %arg19[%c0_i32_93, %c0_i32_97, %c0_i32_98] : memref<2x128x128xi8, #tpu.memory_space<vmem>> -> memref<1x128x128xi8, #tpu.memory_space<vmem>>
    %130 = tpu.memref_squeeze %129 : memref<1x128x128xi8, #tpu.memory_space<vmem>> -> memref<128x128xi8, #tpu.memory_space<vmem>>
    %131 = tpu.memref_slice %arg20[%c0_i32_94] : memref<2x!tpu.dma_semaphore, #tpu.memory_space<semaphore_mem>> -> memref<1x!tpu.dma_semaphore, #tpu.memory_space<semaphore_mem>>
    %132 = tpu.memref_squeeze %131 : memref<1x!tpu.dma_semaphore, #tpu.memory_space<semaphore_mem>> -> memref<!tpu.dma_semaphore, #tpu.memory_space<semaphore_mem>>
    tpu.enqueue_dma source(%128 : memref<128x128xi8, #tpu.memory_space<any>>) target(%130 : memref<128x128xi8, #tpu.memory_space<vmem>>) target_semaphore(%132 : memref<!tpu.dma_semaphore, #tpu.memory_space<semaphore_mem>>)
    %c1_99 = arith.constant 1 : index
    %c0_100 = arith.constant 0 : index
    %c0_101 = arith.constant 0 : index
    %133 = vector.load %arg19[%c1_99, %c0_100, %c0_101] : memref<2x128x128xi8, #tpu.memory_space<vmem>>, vector<1x128x128xi8>
    %134 = vector.shape_cast %133 : vector<1x128x128xi8> to vector<128x128xi8>
    %135 = arith.sitofp %134 : vector<128x128xi8> to vector<128x128xbf16>
    %cst_102 = arith.constant dense<0.000000e+00> : vector<128x256xf32>
    %136 = tpu.matmul %135, %37, %cst_102 {dimension_numbers = #tpu.dot_dimension_numbers<[1], [0], [0], [1], [0, 0, 1, 1], [], []>} : vector<128x128xbf16>, vector<128x256xbf16>, vector<128x256xf32> -> vector<128x256xf32>
    %137 = vector.extract_strided_slice %136 {offsets = [0, 0], sizes = [128, 128], strides = [1, 1]} : vector<128x256xf32> to vector<128x128xf32>
    %138 = vector.extract_strided_slice %136 {offsets = [0, 128], sizes = [128, 128], strides = [1, 1]} : vector<128x256xf32> to vector<128x128xf32>
    %139 = arith.addf %112, %137 : vector<128x128xf32>
    %140 = arith.addf %24, %138 : vector<128x128xf32>
    %141 = arith.negf %140 : vector<128x128xf32>
    %142 = math.exp %141 : vector<128x128xf32>
    %cst_103 = arith.constant 1.000000e+00 : f32
    %143 = vector.broadcast %cst_103 : f32 to vector<128x128xf32>
    %144 = arith.addf %143, %142 : vector<128x128xf32>
    %145 = arith.divf %143, %144 : vector<128x128xf32>
    %146 = arith.mulf %145, %137 : vector<128x128xf32>
    %147 = arith.addf %120, %146 : vector<128x128xf32>
    %148 = arith.truncf %139 : vector<128x128xf32> to vector<128x128xbf16>
    %cst_104 = arith.constant dense<0.000000e+00> : vector<128x128xf32>
    %149 = tpu.matmul %148, %30, %cst_104 {dimension_numbers = #tpu.dot_dimension_numbers<[1], [0], [0], [1], [0, 0, 1, 1], [], []>} : vector<128x128xbf16>, vector<128x128xbf16>, vector<128x128xf32> -> vector<128x128xf32>
    %150 = arith.addf %19, %149 : vector<128x128xf32>
    %151 = arith.negf %150 : vector<128x128xf32>
    %152 = math.exp %151 : vector<128x128xf32>
    %cst_105 = arith.constant 1.000000e+00 : f32
    %153 = vector.broadcast %cst_105 : f32 to vector<128x128xf32>
    %154 = arith.addf %153, %152 : vector<128x128xf32>
    %155 = arith.divf %153, %154 : vector<128x128xf32>
    %156 = arith.truncf %147 : vector<128x128xf32> to vector<128x128xbf16>
    %cst_106 = arith.constant dense<0.000000e+00> : vector<128x128xf32>
    %157 = tpu.matmul %156, %32, %cst_106 {dimension_numbers = #tpu.dot_dimension_numbers<[1], [0], [0], [1], [0, 0, 1, 1], [], []>} : vector<128x128xbf16>, vector<128x128xbf16>, vector<128x128xf32> -> vector<128x128xf32>
    %158 = arith.addf %29, %157 : vector<128x128xf32>
    %159 = math.tanh %158 : vector<128x128xf32>
    %160 = arith.subf %159, %139 : vector<128x128xf32>
    %161 = arith.mulf %155, %160 : vector<128x128xf32>
    %162 = arith.addf %139, %161 : vector<128x128xf32>
    %163 = vector.broadcast %14 : vector<128x1xf32> to vector<128x128xf32>
    %164 = arith.mulf %162, %163 : vector<128x128xf32>
    %165 = arith.truncf %164 : vector<128x128xf32> to vector<128x128xbf16>
    %cst_107 = arith.constant dense<0.000000e+00> : vector<128x128xf32>
    %166 = tpu.matmul %165, %31, %cst_107 {dimension_numbers = #tpu.dot_dimension_numbers<[1], [0], [0], [1], [0, 0, 1, 1], [], []>} : vector<128x128xbf16>, vector<128x128xbf16>, vector<128x128xf32> -> vector<128x128xf32>
    %167 = arith.truncf %166 : vector<128x128xf32> to vector<128x128xbf16>
    %168 = tpu.concatenate %165, %167 in 1 : vector<128x128xbf16>, vector<128x128xbf16> -> vector<128x256xbf16>
    %cst_108 = arith.constant 0.000000e+00 : f32
    %169 = vector.broadcast %cst_108 : f32 to vector<128x128xf32>
    %cst_109 = arith.constant 0.000000e+00 : f32
    %170 = vector.broadcast %cst_109 : f32 to vector<128x128xf32>
    %c0_i32_110 = arith.constant 0 : i32
    %c0_i32_111 = arith.constant 0 : i32
    %c0_i32_112 = arith.constant 0 : i32
    %c0_i32_113 = arith.constant 0 : i32
    %c0_i32_114 = arith.constant 0 : i32
    %171 = tpu.memref_slice %arg2[%c0_i32_110, %c0_i32_113, %c0_i32_114] : memref<4x128x128xi8, #tpu.memory_space<any>> -> memref<1x128x128xi8, #tpu.memory_space<any>>
    %172 = tpu.memref_squeeze %171 : memref<1x128x128xi8, #tpu.memory_space<any>> -> memref<128x128xi8, #tpu.memory_space<any>>
    %c0_i32_115 = arith.constant 0 : i32
    %c0_i32_116 = arith.constant 0 : i32
    %173 = tpu.memref_slice %arg19[%c0_i32_111, %c0_i32_115, %c0_i32_116] : memref<2x128x128xi8, #tpu.memory_space<vmem>> -> memref<1x128x128xi8, #tpu.memory_space<vmem>>
    %174 = tpu.memref_squeeze %173 : memref<1x128x128xi8, #tpu.memory_space<vmem>> -> memref<128x128xi8, #tpu.memory_space<vmem>>
    %175 = tpu.memref_slice %arg20[%c0_i32_112] : memref<2x!tpu.dma_semaphore, #tpu.memory_space<semaphore_mem>> -> memref<1x!tpu.dma_semaphore, #tpu.memory_space<semaphore_mem>>
    %176 = tpu.memref_squeeze %175 : memref<1x!tpu.dma_semaphore, #tpu.memory_space<semaphore_mem>> -> memref<!tpu.dma_semaphore, #tpu.memory_space<semaphore_mem>>
    tpu.wait_dma2 semaphore(%176 : memref<!tpu.dma_semaphore, #tpu.memory_space<semaphore_mem>>) src(%172 : memref<128x128xi8, #tpu.memory_space<any>>) dst(%174 : memref<128x128xi8, #tpu.memory_space<vmem>>)
    %c1_i32_117 = arith.constant 1 : i32
    %c1_i32_118 = arith.constant 1 : i32
    %c1_i32_119 = arith.constant 1 : i32
    %c0_i32_120 = arith.constant 0 : i32
    %c0_i32_121 = arith.constant 0 : i32
    %177 = tpu.memref_slice %arg2[%c1_i32_117, %c0_i32_120, %c0_i32_121] : memref<4x128x128xi8, #tpu.memory_space<any>> -> memref<1x128x128xi8, #tpu.memory_space<any>>
    %178 = tpu.memref_squeeze %177 : memref<1x128x128xi8, #tpu.memory_space<any>> -> memref<128x128xi8, #tpu.memory_space<any>>
    %c0_i32_122 = arith.constant 0 : i32
    %c0_i32_123 = arith.constant 0 : i32
    %179 = tpu.memref_slice %arg19[%c1_i32_118, %c0_i32_122, %c0_i32_123] : memref<2x128x128xi8, #tpu.memory_space<vmem>> -> memref<1x128x128xi8, #tpu.memory_space<vmem>>
    %180 = tpu.memref_squeeze %179 : memref<1x128x128xi8, #tpu.memory_space<vmem>> -> memref<128x128xi8, #tpu.memory_space<vmem>>
    %181 = tpu.memref_slice %arg20[%c1_i32_119] : memref<2x!tpu.dma_semaphore, #tpu.memory_space<semaphore_mem>> -> memref<1x!tpu.dma_semaphore, #tpu.memory_space<semaphore_mem>>
    %182 = tpu.memref_squeeze %181 : memref<1x!tpu.dma_semaphore, #tpu.memory_space<semaphore_mem>> -> memref<!tpu.dma_semaphore, #tpu.memory_space<semaphore_mem>>
    tpu.enqueue_dma source(%178 : memref<128x128xi8, #tpu.memory_space<any>>) target(%180 : memref<128x128xi8, #tpu.memory_space<vmem>>) target_semaphore(%182 : memref<!tpu.dma_semaphore, #tpu.memory_space<semaphore_mem>>)
    %c0_124 = arith.constant 0 : index
    %c0_125 = arith.constant 0 : index
    %c0_126 = arith.constant 0 : index
    %183 = vector.load %arg19[%c0_124, %c0_125, %c0_126] : memref<2x128x128xi8, #tpu.memory_space<vmem>>, vector<1x128x128xi8>
    %184 = vector.shape_cast %183 : vector<1x128x128xi8> to vector<128x128xi8>
    %185 = arith.sitofp %184 : vector<128x128xi8> to vector<128x128xbf16>
    %cst_127 = arith.constant dense<0.000000e+00> : vector<128x256xf32>
    %186 = tpu.matmul %185, %168, %cst_127 {dimension_numbers = #tpu.dot_dimension_numbers<[1], [0], [0], [1], [0, 0, 1, 1], [], []>} : vector<128x128xbf16>, vector<128x256xbf16>, vector<128x256xf32> -> vector<128x256xf32>
    %187 = vector.extract_strided_slice %186 {offsets = [0, 0], sizes = [128, 128], strides = [1, 1]} : vector<128x256xf32> to vector<128x128xf32>
    %188 = vector.extract_strided_slice %186 {offsets = [0, 128], sizes = [128, 128], strides = [1, 1]} : vector<128x256xf32> to vector<128x128xf32>
    %189 = arith.addf %169, %187 : vector<128x128xf32>
    %190 = arith.addf %24, %188 : vector<128x128xf32>
    %191 = arith.negf %190 : vector<128x128xf32>
    %192 = math.exp %191 : vector<128x128xf32>
    %cst_128 = arith.constant 1.000000e+00 : f32
    %193 = vector.broadcast %cst_128 : f32 to vector<128x128xf32>
    %194 = arith.addf %193, %192 : vector<128x128xf32>
    %195 = arith.divf %193, %194 : vector<128x128xf32>
    %196 = arith.mulf %195, %187 : vector<128x128xf32>
    %197 = arith.addf %170, %196 : vector<128x128xf32>
    %c1_i32_129 = arith.constant 1 : i32
    %c1_i32_130 = arith.constant 1 : i32
    %c1_i32_131 = arith.constant 1 : i32
    %c0_i32_132 = arith.constant 0 : i32
    %c0_i32_133 = arith.constant 0 : i32
    %198 = tpu.memref_slice %arg2[%c1_i32_129, %c0_i32_132, %c0_i32_133] : memref<4x128x128xi8, #tpu.memory_space<any>> -> memref<1x128x128xi8, #tpu.memory_space<any>>
    %199 = tpu.memref_squeeze %198 : memref<1x128x128xi8, #tpu.memory_space<any>> -> memref<128x128xi8, #tpu.memory_space<any>>
    %c0_i32_134 = arith.constant 0 : i32
    %c0_i32_135 = arith.constant 0 : i32
    %200 = tpu.memref_slice %arg19[%c1_i32_130, %c0_i32_134, %c0_i32_135] : memref<2x128x128xi8, #tpu.memory_space<vmem>> -> memref<1x128x128xi8, #tpu.memory_space<vmem>>
    %201 = tpu.memref_squeeze %200 : memref<1x128x128xi8, #tpu.memory_space<vmem>> -> memref<128x128xi8, #tpu.memory_space<vmem>>
    %202 = tpu.memref_slice %arg20[%c1_i32_131] : memref<2x!tpu.dma_semaphore, #tpu.memory_space<semaphore_mem>> -> memref<1x!tpu.dma_semaphore, #tpu.memory_space<semaphore_mem>>
    %203 = tpu.memref_squeeze %202 : memref<1x!tpu.dma_semaphore, #tpu.memory_space<semaphore_mem>> -> memref<!tpu.dma_semaphore, #tpu.memory_space<semaphore_mem>>
    tpu.wait_dma2 semaphore(%203 : memref<!tpu.dma_semaphore, #tpu.memory_space<semaphore_mem>>) src(%199 : memref<128x128xi8, #tpu.memory_space<any>>) dst(%201 : memref<128x128xi8, #tpu.memory_space<vmem>>)
    %c2_i32_136 = arith.constant 2 : i32
    %c0_i32_137 = arith.constant 0 : i32
    %c0_i32_138 = arith.constant 0 : i32
    %c0_i32_139 = arith.constant 0 : i32
    %c0_i32_140 = arith.constant 0 : i32
    %204 = tpu.memref_slice %arg2[%c2_i32_136, %c0_i32_139, %c0_i32_140] : memref<4x128x128xi8, #tpu.memory_space<any>> -> memref<1x128x128xi8, #tpu.memory_space<any>>
    %205 = tpu.memref_squeeze %204 : memref<1x128x128xi8, #tpu.memory_space<any>> -> memref<128x128xi8, #tpu.memory_space<any>>
    %c0_i32_141 = arith.constant 0 : i32
    %c0_i32_142 = arith.constant 0 : i32
    %206 = tpu.memref_slice %arg19[%c0_i32_137, %c0_i32_141, %c0_i32_142] : memref<2x128x128xi8, #tpu.memory_space<vmem>> -> memref<1x128x128xi8, #tpu.memory_space<vmem>>
    %207 = tpu.memref_squeeze %206 : memref<1x128x128xi8, #tpu.memory_space<vmem>> -> memref<128x128xi8, #tpu.memory_space<vmem>>
    %208 = tpu.memref_slice %arg20[%c0_i32_138] : memref<2x!tpu.dma_semaphore, #tpu.memory_space<semaphore_mem>> -> memref<1x!tpu.dma_semaphore, #tpu.memory_space<semaphore_mem>>
    %209 = tpu.memref_squeeze %208 : memref<1x!tpu.dma_semaphore, #tpu.memory_space<semaphore_mem>> -> memref<!tpu.dma_semaphore, #tpu.memory_space<semaphore_mem>>
    tpu.enqueue_dma source(%205 : memref<128x128xi8, #tpu.memory_space<any>>) target(%207 : memref<128x128xi8, #tpu.memory_space<vmem>>) target_semaphore(%209 : memref<!tpu.dma_semaphore, #tpu.memory_space<semaphore_mem>>)
    %c1_143 = arith.constant 1 : index
    %c0_144 = arith.constant 0 : index
    %c0_145 = arith.constant 0 : index
    %210 = vector.load %arg19[%c1_143, %c0_144, %c0_145] : memref<2x128x128xi8, #tpu.memory_space<vmem>>, vector<1x128x128xi8>
    %211 = vector.shape_cast %210 : vector<1x128x128xi8> to vector<128x128xi8>
    %212 = arith.sitofp %211 : vector<128x128xi8> to vector<128x128xbf16>
    %cst_146 = arith.constant dense<0.000000e+00> : vector<128x256xf32>
    %213 = tpu.matmul %212, %168, %cst_146 {dimension_numbers = #tpu.dot_dimension_numbers<[1], [0], [0], [1], [0, 0, 1, 1], [], []>} : vector<128x128xbf16>, vector<128x256xbf16>, vector<128x256xf32> -> vector<128x256xf32>
    %214 = vector.extract_strided_slice %213 {offsets = [0, 0], sizes = [128, 128], strides = [1, 1]} : vector<128x256xf32> to vector<128x128xf32>
    %215 = vector.extract_strided_slice %213 {offsets = [0, 128], sizes = [128, 128], strides = [1, 1]} : vector<128x256xf32> to vector<128x128xf32>
    %216 = arith.addf %189, %214 : vector<128x128xf32>
    %217 = arith.addf %24, %215 : vector<128x128xf32>
    %218 = arith.negf %217 : vector<128x128xf32>
    %219 = math.exp %218 : vector<128x128xf32>
    %cst_147 = arith.constant 1.000000e+00 : f32
    %220 = vector.broadcast %cst_147 : f32 to vector<128x128xf32>
    %221 = arith.addf %220, %219 : vector<128x128xf32>
    %222 = arith.divf %220, %221 : vector<128x128xf32>
    %223 = arith.mulf %222, %214 : vector<128x128xf32>
    %224 = arith.addf %197, %223 : vector<128x128xf32>
    %c2_i32_148 = arith.constant 2 : i32
    %c0_i32_149 = arith.constant 0 : i32
    %c0_i32_150 = arith.constant 0 : i32
    %c0_i32_151 = arith.constant 0 : i32
    %c0_i32_152 = arith.constant 0 : i32
    %225 = tpu.memref_slice %arg2[%c2_i32_148, %c0_i32_151, %c0_i32_152] : memref<4x128x128xi8, #tpu.memory_space<any>> -> memref<1x128x128xi8, #tpu.memory_space<any>>
    %226 = tpu.memref_squeeze %225 : memref<1x128x128xi8, #tpu.memory_space<any>> -> memref<128x128xi8, #tpu.memory_space<any>>
    %c0_i32_153 = arith.constant 0 : i32
    %c0_i32_154 = arith.constant 0 : i32
    %227 = tpu.memref_slice %arg19[%c0_i32_149, %c0_i32_153, %c0_i32_154] : memref<2x128x128xi8, #tpu.memory_space<vmem>> -> memref<1x128x128xi8, #tpu.memory_space<vmem>>
    %228 = tpu.memref_squeeze %227 : memref<1x128x128xi8, #tpu.memory_space<vmem>> -> memref<128x128xi8, #tpu.memory_space<vmem>>
    %229 = tpu.memref_slice %arg20[%c0_i32_150] : memref<2x!tpu.dma_semaphore, #tpu.memory_space<semaphore_mem>> -> memref<1x!tpu.dma_semaphore, #tpu.memory_space<semaphore_mem>>
    %230 = tpu.memref_squeeze %229 : memref<1x!tpu.dma_semaphore, #tpu.memory_space<semaphore_mem>> -> memref<!tpu.dma_semaphore, #tpu.memory_space<semaphore_mem>>
    tpu.wait_dma2 semaphore(%230 : memref<!tpu.dma_semaphore, #tpu.memory_space<semaphore_mem>>) src(%226 : memref<128x128xi8, #tpu.memory_space<any>>) dst(%228 : memref<128x128xi8, #tpu.memory_space<vmem>>)
    %c3_i32_155 = arith.constant 3 : i32
    %c1_i32_156 = arith.constant 1 : i32
    %c1_i32_157 = arith.constant 1 : i32
    %c0_i32_158 = arith.constant 0 : i32
    %c0_i32_159 = arith.constant 0 : i32
    %231 = tpu.memref_slice %arg2[%c3_i32_155, %c0_i32_158, %c0_i32_159] : memref<4x128x128xi8, #tpu.memory_space<any>> -> memref<1x128x128xi8, #tpu.memory_space<any>>
    %232 = tpu.memref_squeeze %231 : memref<1x128x128xi8, #tpu.memory_space<any>> -> memref<128x128xi8, #tpu.memory_space<any>>
    %c0_i32_160 = arith.constant 0 : i32
    %c0_i32_161 = arith.constant 0 : i32
    %233 = tpu.memref_slice %arg19[%c1_i32_156, %c0_i32_160, %c0_i32_161] : memref<2x128x128xi8, #tpu.memory_space<vmem>> -> memref<1x128x128xi8, #tpu.memory_space<vmem>>
    %234 = tpu.memref_squeeze %233 : memref<1x128x128xi8, #tpu.memory_space<vmem>> -> memref<128x128xi8, #tpu.memory_space<vmem>>
    %235 = tpu.memref_slice %arg20[%c1_i32_157] : memref<2x!tpu.dma_semaphore, #tpu.memory_space<semaphore_mem>> -> memref<1x!tpu.dma_semaphore, #tpu.memory_space<semaphore_mem>>
    %236 = tpu.memref_squeeze %235 : memref<1x!tpu.dma_semaphore, #tpu.memory_space<semaphore_mem>> -> memref<!tpu.dma_semaphore, #tpu.memory_space<semaphore_mem>>
    tpu.enqueue_dma source(%232 : memref<128x128xi8, #tpu.memory_space<any>>) target(%234 : memref<128x128xi8, #tpu.memory_space<vmem>>) target_semaphore(%236 : memref<!tpu.dma_semaphore, #tpu.memory_space<semaphore_mem>>)
    %c0_162 = arith.constant 0 : index
    %c0_163 = arith.constant 0 : index
    %c0_164 = arith.constant 0 : index
    %237 = vector.load %arg19[%c0_162, %c0_163, %c0_164] : memref<2x128x128xi8, #tpu.memory_space<vmem>>, vector<1x128x128xi8>
    %238 = vector.shape_cast %237 : vector<1x128x128xi8> to vector<128x128xi8>
    %239 = arith.sitofp %238 : vector<128x128xi8> to vector<128x128xbf16>
    %cst_165 = arith.constant dense<0.000000e+00> : vector<128x256xf32>
    %240 = tpu.matmul %239, %168, %cst_165 {dimension_numbers = #tpu.dot_dimension_numbers<[1], [0], [0], [1], [0, 0, 1, 1], [], []>} : vector<128x128xbf16>, vector<128x256xbf16>, vector<128x256xf32> -> vector<128x256xf32>
    %241 = vector.extract_strided_slice %240 {offsets = [0, 0], sizes = [128, 128], strides = [1, 1]} : vector<128x256xf32> to vector<128x128xf32>
    %242 = vector.extract_strided_slice %240 {offsets = [0, 128], sizes = [128, 128], strides = [1, 1]} : vector<128x256xf32> to vector<128x128xf32>
    %243 = arith.addf %216, %241 : vector<128x128xf32>
    %244 = arith.addf %24, %242 : vector<128x128xf32>
    %245 = arith.negf %244 : vector<128x128xf32>
    %246 = math.exp %245 : vector<128x128xf32>
    %cst_166 = arith.constant 1.000000e+00 : f32
    %247 = vector.broadcast %cst_166 : f32 to vector<128x128xf32>
    %248 = arith.addf %247, %246 : vector<128x128xf32>
    %249 = arith.divf %247, %248 : vector<128x128xf32>
    %250 = arith.mulf %249, %241 : vector<128x128xf32>
    %251 = arith.addf %224, %250 : vector<128x128xf32>
    %c3_i32_167 = arith.constant 3 : i32
    %c1_i32_168 = arith.constant 1 : i32
    %c1_i32_169 = arith.constant 1 : i32
    %c0_i32_170 = arith.constant 0 : i32
    %c0_i32_171 = arith.constant 0 : i32
    %252 = tpu.memref_slice %arg2[%c3_i32_167, %c0_i32_170, %c0_i32_171] : memref<4x128x128xi8, #tpu.memory_space<any>> -> memref<1x128x128xi8, #tpu.memory_space<any>>
    %253 = tpu.memref_squeeze %252 : memref<1x128x128xi8, #tpu.memory_space<any>> -> memref<128x128xi8, #tpu.memory_space<any>>
    %c0_i32_172 = arith.constant 0 : i32
    %c0_i32_173 = arith.constant 0 : i32
    %254 = tpu.memref_slice %arg19[%c1_i32_168, %c0_i32_172, %c0_i32_173] : memref<2x128x128xi8, #tpu.memory_space<vmem>> -> memref<1x128x128xi8, #tpu.memory_space<vmem>>
    %255 = tpu.memref_squeeze %254 : memref<1x128x128xi8, #tpu.memory_space<vmem>> -> memref<128x128xi8, #tpu.memory_space<vmem>>
    %256 = tpu.memref_slice %arg20[%c1_i32_169] : memref<2x!tpu.dma_semaphore, #tpu.memory_space<semaphore_mem>> -> memref<1x!tpu.dma_semaphore, #tpu.memory_space<semaphore_mem>>
    %257 = tpu.memref_squeeze %256 : memref<1x!tpu.dma_semaphore, #tpu.memory_space<semaphore_mem>> -> memref<!tpu.dma_semaphore, #tpu.memory_space<semaphore_mem>>
    tpu.wait_dma2 semaphore(%257 : memref<!tpu.dma_semaphore, #tpu.memory_space<semaphore_mem>>) src(%253 : memref<128x128xi8, #tpu.memory_space<any>>) dst(%255 : memref<128x128xi8, #tpu.memory_space<vmem>>)
    %c0_i32_174 = arith.constant 0 : i32
    %c0_i32_175 = arith.constant 0 : i32
    %c0_i32_176 = arith.constant 0 : i32
    %c0_i32_177 = arith.constant 0 : i32
    %c0_i32_178 = arith.constant 0 : i32
    %258 = tpu.memref_slice %arg2[%c0_i32_174, %c0_i32_177, %c0_i32_178] : memref<4x128x128xi8, #tpu.memory_space<any>> -> memref<1x128x128xi8, #tpu.memory_space<any>>
    %259 = tpu.memref_squeeze %258 : memref<1x128x128xi8, #tpu.memory_space<any>> -> memref<128x128xi8, #tpu.memory_space<any>>
    %c0_i32_179 = arith.constant 0 : i32
    %c0_i32_180 = arith.constant 0 : i32
    %260 = tpu.memref_slice %arg19[%c0_i32_175, %c0_i32_179, %c0_i32_180] : memref<2x128x128xi8, #tpu.memory_space<vmem>> -> memref<1x128x128xi8, #tpu.memory_space<vmem>>
    %261 = tpu.memref_squeeze %260 : memref<1x128x128xi8, #tpu.memory_space<vmem>> -> memref<128x128xi8, #tpu.memory_space<vmem>>
    %262 = tpu.memref_slice %arg20[%c0_i32_176] : memref<2x!tpu.dma_semaphore, #tpu.memory_space<semaphore_mem>> -> memref<1x!tpu.dma_semaphore, #tpu.memory_space<semaphore_mem>>
    %263 = tpu.memref_squeeze %262 : memref<1x!tpu.dma_semaphore, #tpu.memory_space<semaphore_mem>> -> memref<!tpu.dma_semaphore, #tpu.memory_space<semaphore_mem>>
    tpu.enqueue_dma source(%259 : memref<128x128xi8, #tpu.memory_space<any>>) target(%261 : memref<128x128xi8, #tpu.memory_space<vmem>>) target_semaphore(%263 : memref<!tpu.dma_semaphore, #tpu.memory_space<semaphore_mem>>)
    %c1_181 = arith.constant 1 : index
    %c0_182 = arith.constant 0 : index
    %c0_183 = arith.constant 0 : index
    %264 = vector.load %arg19[%c1_181, %c0_182, %c0_183] : memref<2x128x128xi8, #tpu.memory_space<vmem>>, vector<1x128x128xi8>
    %265 = vector.shape_cast %264 : vector<1x128x128xi8> to vector<128x128xi8>
    %266 = arith.sitofp %265 : vector<128x128xi8> to vector<128x128xbf16>
    %cst_184 = arith.constant dense<0.000000e+00> : vector<128x256xf32>
    %267 = tpu.matmul %266, %168, %cst_184 {dimension_numbers = #tpu.dot_dimension_numbers<[1], [0], [0], [1], [0, 0, 1, 1], [], []>} : vector<128x128xbf16>, vector<128x256xbf16>, vector<128x256xf32> -> vector<128x256xf32>
    %268 = vector.extract_strided_slice %267 {offsets = [0, 0], sizes = [128, 128], strides = [1, 1]} : vector<128x256xf32> to vector<128x128xf32>
    %269 = vector.extract_strided_slice %267 {offsets = [0, 128], sizes = [128, 128], strides = [1, 1]} : vector<128x256xf32> to vector<128x128xf32>
    %270 = arith.addf %243, %268 : vector<128x128xf32>
    %271 = arith.addf %24, %269 : vector<128x128xf32>
    %272 = arith.negf %271 : vector<128x128xf32>
    %273 = math.exp %272 : vector<128x128xf32>
    %cst_185 = arith.constant 1.000000e+00 : f32
    %274 = vector.broadcast %cst_185 : f32 to vector<128x128xf32>
    %275 = arith.addf %274, %273 : vector<128x128xf32>
    %276 = arith.divf %274, %275 : vector<128x128xf32>
    %277 = arith.mulf %276, %268 : vector<128x128xf32>
    %278 = arith.addf %251, %277 : vector<128x128xf32>
    %279 = arith.truncf %270 : vector<128x128xf32> to vector<128x128xbf16>
    %cst_186 = arith.constant dense<0.000000e+00> : vector<128x128xf32>
    %280 = tpu.matmul %279, %30, %cst_186 {dimension_numbers = #tpu.dot_dimension_numbers<[1], [0], [0], [1], [0, 0, 1, 1], [], []>} : vector<128x128xbf16>, vector<128x128xbf16>, vector<128x128xf32> -> vector<128x128xf32>
    %281 = arith.addf %19, %280 : vector<128x128xf32>
    %282 = arith.negf %281 : vector<128x128xf32>
    %283 = math.exp %282 : vector<128x128xf32>
    %cst_187 = arith.constant 1.000000e+00 : f32
    %284 = vector.broadcast %cst_187 : f32 to vector<128x128xf32>
    %285 = arith.addf %284, %283 : vector<128x128xf32>
    %286 = arith.divf %284, %285 : vector<128x128xf32>
    %287 = arith.truncf %278 : vector<128x128xf32> to vector<128x128xbf16>
    %cst_188 = arith.constant dense<0.000000e+00> : vector<128x128xf32>
    %288 = tpu.matmul %287, %32, %cst_188 {dimension_numbers = #tpu.dot_dimension_numbers<[1], [0], [0], [1], [0, 0, 1, 1], [], []>} : vector<128x128xbf16>, vector<128x128xbf16>, vector<128x128xf32> -> vector<128x128xf32>
    %289 = arith.addf %29, %288 : vector<128x128xf32>
    %290 = math.tanh %289 : vector<128x128xf32>
    %291 = arith.subf %290, %270 : vector<128x128xf32>
    %292 = arith.mulf %286, %291 : vector<128x128xf32>
    %293 = arith.addf %270, %292 : vector<128x128xf32>
    %294 = vector.broadcast %14 : vector<128x1xf32> to vector<128x128xf32>
    %295 = arith.mulf %293, %294 : vector<128x128xf32>
    %296 = arith.truncf %295 : vector<128x128xf32> to vector<128x128xbf16>
    %cst_189 = arith.constant dense<0.000000e+00> : vector<128x128xf32>
    %297 = tpu.matmul %296, %31, %cst_189 {dimension_numbers = #tpu.dot_dimension_numbers<[1], [0], [0], [1], [0, 0, 1, 1], [], []>} : vector<128x128xbf16>, vector<128x128xbf16>, vector<128x128xf32> -> vector<128x128xf32>
    %298 = arith.truncf %297 : vector<128x128xf32> to vector<128x128xbf16>
    %299 = tpu.concatenate %296, %298 in 1 : vector<128x128xbf16>, vector<128x128xbf16> -> vector<128x256xbf16>
    %cst_190 = arith.constant 0.000000e+00 : f32
    %300 = vector.broadcast %cst_190 : f32 to vector<128x128xf32>
    %cst_191 = arith.constant 0.000000e+00 : f32
    %301 = vector.broadcast %cst_191 : f32 to vector<128x128xf32>
    %c0_i32_192 = arith.constant 0 : i32
    %c0_i32_193 = arith.constant 0 : i32
    %c0_i32_194 = arith.constant 0 : i32
    %c0_i32_195 = arith.constant 0 : i32
    %c0_i32_196 = arith.constant 0 : i32
    %302 = tpu.memref_slice %arg2[%c0_i32_192, %c0_i32_195, %c0_i32_196] : memref<4x128x128xi8, #tpu.memory_space<any>> -> memref<1x128x128xi8, #tpu.memory_space<any>>
    %303 = tpu.memref_squeeze %302 : memref<1x128x128xi8, #tpu.memory_space<any>> -> memref<128x128xi8, #tpu.memory_space<any>>
    %c0_i32_197 = arith.constant 0 : i32
    %c0_i32_198 = arith.constant 0 : i32
    %304 = tpu.memref_slice %arg19[%c0_i32_193, %c0_i32_197, %c0_i32_198] : memref<2x128x128xi8, #tpu.memory_space<vmem>> -> memref<1x128x128xi8, #tpu.memory_space<vmem>>
    %305 = tpu.memref_squeeze %304 : memref<1x128x128xi8, #tpu.memory_space<vmem>> -> memref<128x128xi8, #tpu.memory_space<vmem>>
    %306 = tpu.memref_slice %arg20[%c0_i32_194] : memref<2x!tpu.dma_semaphore, #tpu.memory_space<semaphore_mem>> -> memref<1x!tpu.dma_semaphore, #tpu.memory_space<semaphore_mem>>
    %307 = tpu.memref_squeeze %306 : memref<1x!tpu.dma_semaphore, #tpu.memory_space<semaphore_mem>> -> memref<!tpu.dma_semaphore, #tpu.memory_space<semaphore_mem>>
    tpu.wait_dma2 semaphore(%307 : memref<!tpu.dma_semaphore, #tpu.memory_space<semaphore_mem>>) src(%303 : memref<128x128xi8, #tpu.memory_space<any>>) dst(%305 : memref<128x128xi8, #tpu.memory_space<vmem>>)
    %c1_i32_199 = arith.constant 1 : i32
    %c1_i32_200 = arith.constant 1 : i32
    %c1_i32_201 = arith.constant 1 : i32
    %c0_i32_202 = arith.constant 0 : i32
    %c0_i32_203 = arith.constant 0 : i32
    %308 = tpu.memref_slice %arg2[%c1_i32_199, %c0_i32_202, %c0_i32_203] : memref<4x128x128xi8, #tpu.memory_space<any>> -> memref<1x128x128xi8, #tpu.memory_space<any>>
    %309 = tpu.memref_squeeze %308 : memref<1x128x128xi8, #tpu.memory_space<any>> -> memref<128x128xi8, #tpu.memory_space<any>>
    %c0_i32_204 = arith.constant 0 : i32
    %c0_i32_205 = arith.constant 0 : i32
    %310 = tpu.memref_slice %arg19[%c1_i32_200, %c0_i32_204, %c0_i32_205] : memref<2x128x128xi8, #tpu.memory_space<vmem>> -> memref<1x128x128xi8, #tpu.memory_space<vmem>>
    %311 = tpu.memref_squeeze %310 : memref<1x128x128xi8, #tpu.memory_space<vmem>> -> memref<128x128xi8, #tpu.memory_space<vmem>>
    %312 = tpu.memref_slice %arg20[%c1_i32_201] : memref<2x!tpu.dma_semaphore, #tpu.memory_space<semaphore_mem>> -> memref<1x!tpu.dma_semaphore, #tpu.memory_space<semaphore_mem>>
    %313 = tpu.memref_squeeze %312 : memref<1x!tpu.dma_semaphore, #tpu.memory_space<semaphore_mem>> -> memref<!tpu.dma_semaphore, #tpu.memory_space<semaphore_mem>>
    tpu.enqueue_dma source(%309 : memref<128x128xi8, #tpu.memory_space<any>>) target(%311 : memref<128x128xi8, #tpu.memory_space<vmem>>) target_semaphore(%313 : memref<!tpu.dma_semaphore, #tpu.memory_space<semaphore_mem>>)
    %c0_206 = arith.constant 0 : index
    %c0_207 = arith.constant 0 : index
    %c0_208 = arith.constant 0 : index
    %314 = vector.load %arg19[%c0_206, %c0_207, %c0_208] : memref<2x128x128xi8, #tpu.memory_space<vmem>>, vector<1x128x128xi8>
    %315 = vector.shape_cast %314 : vector<1x128x128xi8> to vector<128x128xi8>
    %316 = arith.sitofp %315 : vector<128x128xi8> to vector<128x128xbf16>
    %cst_209 = arith.constant dense<0.000000e+00> : vector<128x256xf32>
    %317 = tpu.matmul %316, %299, %cst_209 {dimension_numbers = #tpu.dot_dimension_numbers<[1], [0], [0], [1], [0, 0, 1, 1], [], []>} : vector<128x128xbf16>, vector<128x256xbf16>, vector<128x256xf32> -> vector<128x256xf32>
    %318 = vector.extract_strided_slice %317 {offsets = [0, 0], sizes = [128, 128], strides = [1, 1]} : vector<128x256xf32> to vector<128x128xf32>
    %319 = vector.extract_strided_slice %317 {offsets = [0, 128], sizes = [128, 128], strides = [1, 1]} : vector<128x256xf32> to vector<128x128xf32>
    %320 = arith.addf %300, %318 : vector<128x128xf32>
    %321 = arith.addf %24, %319 : vector<128x128xf32>
    %322 = arith.negf %321 : vector<128x128xf32>
    %323 = math.exp %322 : vector<128x128xf32>
    %cst_210 = arith.constant 1.000000e+00 : f32
    %324 = vector.broadcast %cst_210 : f32 to vector<128x128xf32>
    %325 = arith.addf %324, %323 : vector<128x128xf32>
    %326 = arith.divf %324, %325 : vector<128x128xf32>
    %327 = arith.mulf %326, %318 : vector<128x128xf32>
    %328 = arith.addf %301, %327 : vector<128x128xf32>
    %c1_i32_211 = arith.constant 1 : i32
    %c1_i32_212 = arith.constant 1 : i32
    %c1_i32_213 = arith.constant 1 : i32
    %c0_i32_214 = arith.constant 0 : i32
    %c0_i32_215 = arith.constant 0 : i32
    %329 = tpu.memref_slice %arg2[%c1_i32_211, %c0_i32_214, %c0_i32_215] : memref<4x128x128xi8, #tpu.memory_space<any>> -> memref<1x128x128xi8, #tpu.memory_space<any>>
    %330 = tpu.memref_squeeze %329 : memref<1x128x128xi8, #tpu.memory_space<any>> -> memref<128x128xi8, #tpu.memory_space<any>>
    %c0_i32_216 = arith.constant 0 : i32
    %c0_i32_217 = arith.constant 0 : i32
    %331 = tpu.memref_slice %arg19[%c1_i32_212, %c0_i32_216, %c0_i32_217] : memref<2x128x128xi8, #tpu.memory_space<vmem>> -> memref<1x128x128xi8, #tpu.memory_space<vmem>>
    %332 = tpu.memref_squeeze %331 : memref<1x128x128xi8, #tpu.memory_space<vmem>> -> memref<128x128xi8, #tpu.memory_space<vmem>>
    %333 = tpu.memref_slice %arg20[%c1_i32_213] : memref<2x!tpu.dma_semaphore, #tpu.memory_space<semaphore_mem>> -> memref<1x!tpu.dma_semaphore, #tpu.memory_space<semaphore_mem>>
    %334 = tpu.memref_squeeze %333 : memref<1x!tpu.dma_semaphore, #tpu.memory_space<semaphore_mem>> -> memref<!tpu.dma_semaphore, #tpu.memory_space<semaphore_mem>>
    tpu.wait_dma2 semaphore(%334 : memref<!tpu.dma_semaphore, #tpu.memory_space<semaphore_mem>>) src(%330 : memref<128x128xi8, #tpu.memory_space<any>>) dst(%332 : memref<128x128xi8, #tpu.memory_space<vmem>>)
    %c2_i32_218 = arith.constant 2 : i32
    %c0_i32_219 = arith.constant 0 : i32
    %c0_i32_220 = arith.constant 0 : i32
    %c0_i32_221 = arith.constant 0 : i32
    %c0_i32_222 = arith.constant 0 : i32
    %335 = tpu.memref_slice %arg2[%c2_i32_218, %c0_i32_221, %c0_i32_222] : memref<4x128x128xi8, #tpu.memory_space<any>> -> memref<1x128x128xi8, #tpu.memory_space<any>>
    %336 = tpu.memref_squeeze %335 : memref<1x128x128xi8, #tpu.memory_space<any>> -> memref<128x128xi8, #tpu.memory_space<any>>
    %c0_i32_223 = arith.constant 0 : i32
    %c0_i32_224 = arith.constant 0 : i32
    %337 = tpu.memref_slice %arg19[%c0_i32_219, %c0_i32_223, %c0_i32_224] : memref<2x128x128xi8, #tpu.memory_space<vmem>> -> memref<1x128x128xi8, #tpu.memory_space<vmem>>
    %338 = tpu.memref_squeeze %337 : memref<1x128x128xi8, #tpu.memory_space<vmem>> -> memref<128x128xi8, #tpu.memory_space<vmem>>
    %339 = tpu.memref_slice %arg20[%c0_i32_220] : memref<2x!tpu.dma_semaphore, #tpu.memory_space<semaphore_mem>> -> memref<1x!tpu.dma_semaphore, #tpu.memory_space<semaphore_mem>>
    %340 = tpu.memref_squeeze %339 : memref<1x!tpu.dma_semaphore, #tpu.memory_space<semaphore_mem>> -> memref<!tpu.dma_semaphore, #tpu.memory_space<semaphore_mem>>
    tpu.enqueue_dma source(%336 : memref<128x128xi8, #tpu.memory_space<any>>) target(%338 : memref<128x128xi8, #tpu.memory_space<vmem>>) target_semaphore(%340 : memref<!tpu.dma_semaphore, #tpu.memory_space<semaphore_mem>>)
    %c1_225 = arith.constant 1 : index
    %c0_226 = arith.constant 0 : index
    %c0_227 = arith.constant 0 : index
    %341 = vector.load %arg19[%c1_225, %c0_226, %c0_227] : memref<2x128x128xi8, #tpu.memory_space<vmem>>, vector<1x128x128xi8>
    %342 = vector.shape_cast %341 : vector<1x128x128xi8> to vector<128x128xi8>
    %343 = arith.sitofp %342 : vector<128x128xi8> to vector<128x128xbf16>
    %cst_228 = arith.constant dense<0.000000e+00> : vector<128x256xf32>
    %344 = tpu.matmul %343, %299, %cst_228 {dimension_numbers = #tpu.dot_dimension_numbers<[1], [0], [0], [1], [0, 0, 1, 1], [], []>} : vector<128x128xbf16>, vector<128x256xbf16>, vector<128x256xf32> -> vector<128x256xf32>
    %345 = vector.extract_strided_slice %344 {offsets = [0, 0], sizes = [128, 128], strides = [1, 1]} : vector<128x256xf32> to vector<128x128xf32>
    %346 = vector.extract_strided_slice %344 {offsets = [0, 128], sizes = [128, 128], strides = [1, 1]} : vector<128x256xf32> to vector<128x128xf32>
    %347 = arith.addf %320, %345 : vector<128x128xf32>
    %348 = arith.addf %24, %346 : vector<128x128xf32>
    %349 = arith.negf %348 : vector<128x128xf32>
    %350 = math.exp %349 : vector<128x128xf32>
    %cst_229 = arith.constant 1.000000e+00 : f32
    %351 = vector.broadcast %cst_229 : f32 to vector<128x128xf32>
    %352 = arith.addf %351, %350 : vector<128x128xf32>
    %353 = arith.divf %351, %352 : vector<128x128xf32>
    %354 = arith.mulf %353, %345 : vector<128x128xf32>
    %355 = arith.addf %328, %354 : vector<128x128xf32>
    %c2_i32_230 = arith.constant 2 : i32
    %c0_i32_231 = arith.constant 0 : i32
    %c0_i32_232 = arith.constant 0 : i32
    %c0_i32_233 = arith.constant 0 : i32
    %c0_i32_234 = arith.constant 0 : i32
    %356 = tpu.memref_slice %arg2[%c2_i32_230, %c0_i32_233, %c0_i32_234] : memref<4x128x128xi8, #tpu.memory_space<any>> -> memref<1x128x128xi8, #tpu.memory_space<any>>
    %357 = tpu.memref_squeeze %356 : memref<1x128x128xi8, #tpu.memory_space<any>> -> memref<128x128xi8, #tpu.memory_space<any>>
    %c0_i32_235 = arith.constant 0 : i32
    %c0_i32_236 = arith.constant 0 : i32
    %358 = tpu.memref_slice %arg19[%c0_i32_231, %c0_i32_235, %c0_i32_236] : memref<2x128x128xi8, #tpu.memory_space<vmem>> -> memref<1x128x128xi8, #tpu.memory_space<vmem>>
    %359 = tpu.memref_squeeze %358 : memref<1x128x128xi8, #tpu.memory_space<vmem>> -> memref<128x128xi8, #tpu.memory_space<vmem>>
    %360 = tpu.memref_slice %arg20[%c0_i32_232] : memref<2x!tpu.dma_semaphore, #tpu.memory_space<semaphore_mem>> -> memref<1x!tpu.dma_semaphore, #tpu.memory_space<semaphore_mem>>
    %361 = tpu.memref_squeeze %360 : memref<1x!tpu.dma_semaphore, #tpu.memory_space<semaphore_mem>> -> memref<!tpu.dma_semaphore, #tpu.memory_space<semaphore_mem>>
    tpu.wait_dma2 semaphore(%361 : memref<!tpu.dma_semaphore, #tpu.memory_space<semaphore_mem>>) src(%357 : memref<128x128xi8, #tpu.memory_space<any>>) dst(%359 : memref<128x128xi8, #tpu.memory_space<vmem>>)
    %c3_i32_237 = arith.constant 3 : i32
    %c1_i32_238 = arith.constant 1 : i32
    %c1_i32_239 = arith.constant 1 : i32
    %c0_i32_240 = arith.constant 0 : i32
    %c0_i32_241 = arith.constant 0 : i32
    %362 = tpu.memref_slice %arg2[%c3_i32_237, %c0_i32_240, %c0_i32_241] : memref<4x128x128xi8, #tpu.memory_space<any>> -> memref<1x128x128xi8, #tpu.memory_space<any>>
    %363 = tpu.memref_squeeze %362 : memref<1x128x128xi8, #tpu.memory_space<any>> -> memref<128x128xi8, #tpu.memory_space<any>>
    %c0_i32_242 = arith.constant 0 : i32
    %c0_i32_243 = arith.constant 0 : i32
    %364 = tpu.memref_slice %arg19[%c1_i32_238, %c0_i32_242, %c0_i32_243] : memref<2x128x128xi8, #tpu.memory_space<vmem>> -> memref<1x128x128xi8, #tpu.memory_space<vmem>>
    %365 = tpu.memref_squeeze %364 : memref<1x128x128xi8, #tpu.memory_space<vmem>> -> memref<128x128xi8, #tpu.memory_space<vmem>>
    %366 = tpu.memref_slice %arg20[%c1_i32_239] : memref<2x!tpu.dma_semaphore, #tpu.memory_space<semaphore_mem>> -> memref<1x!tpu.dma_semaphore, #tpu.memory_space<semaphore_mem>>
    %367 = tpu.memref_squeeze %366 : memref<1x!tpu.dma_semaphore, #tpu.memory_space<semaphore_mem>> -> memref<!tpu.dma_semaphore, #tpu.memory_space<semaphore_mem>>
    tpu.enqueue_dma source(%363 : memref<128x128xi8, #tpu.memory_space<any>>) target(%365 : memref<128x128xi8, #tpu.memory_space<vmem>>) target_semaphore(%367 : memref<!tpu.dma_semaphore, #tpu.memory_space<semaphore_mem>>)
    %c0_244 = arith.constant 0 : index
    %c0_245 = arith.constant 0 : index
    %c0_246 = arith.constant 0 : index
    %368 = vector.load %arg19[%c0_244, %c0_245, %c0_246] : memref<2x128x128xi8, #tpu.memory_space<vmem>>, vector<1x128x128xi8>
    %369 = vector.shape_cast %368 : vector<1x128x128xi8> to vector<128x128xi8>
    %370 = arith.sitofp %369 : vector<128x128xi8> to vector<128x128xbf16>
    %cst_247 = arith.constant dense<0.000000e+00> : vector<128x256xf32>
    %371 = tpu.matmul %370, %299, %cst_247 {dimension_numbers = #tpu.dot_dimension_numbers<[1], [0], [0], [1], [0, 0, 1, 1], [], []>} : vector<128x128xbf16>, vector<128x256xbf16>, vector<128x256xf32> -> vector<128x256xf32>
    %372 = vector.extract_strided_slice %371 {offsets = [0, 0], sizes = [128, 128], strides = [1, 1]} : vector<128x256xf32> to vector<128x128xf32>
    %373 = vector.extract_strided_slice %371 {offsets = [0, 128], sizes = [128, 128], strides = [1, 1]} : vector<128x256xf32> to vector<128x128xf32>
    %374 = arith.addf %347, %372 : vector<128x128xf32>
    %375 = arith.addf %24, %373 : vector<128x128xf32>
    %376 = arith.negf %375 : vector<128x128xf32>
    %377 = math.exp %376 : vector<128x128xf32>
    %cst_248 = arith.constant 1.000000e+00 : f32
    %378 = vector.broadcast %cst_248 : f32 to vector<128x128xf32>
    %379 = arith.addf %378, %377 : vector<128x128xf32>
    %380 = arith.divf %378, %379 : vector<128x128xf32>
    %381 = arith.mulf %380, %372 : vector<128x128xf32>
    %382 = arith.addf %355, %381 : vector<128x128xf32>
    %c3_i32_249 = arith.constant 3 : i32
    %c1_i32_250 = arith.constant 1 : i32
    %c1_i32_251 = arith.constant 1 : i32
    %c0_i32_252 = arith.constant 0 : i32
    %c0_i32_253 = arith.constant 0 : i32
    %383 = tpu.memref_slice %arg2[%c3_i32_249, %c0_i32_252, %c0_i32_253] : memref<4x128x128xi8, #tpu.memory_space<any>> -> memref<1x128x128xi8, #tpu.memory_space<any>>
    %384 = tpu.memref_squeeze %383 : memref<1x128x128xi8, #tpu.memory_space<any>> -> memref<128x128xi8, #tpu.memory_space<any>>
    %c0_i32_254 = arith.constant 0 : i32
    %c0_i32_255 = arith.constant 0 : i32
    %385 = tpu.memref_slice %arg19[%c1_i32_250, %c0_i32_254, %c0_i32_255] : memref<2x128x128xi8, #tpu.memory_space<vmem>> -> memref<1x128x128xi8, #tpu.memory_space<vmem>>
    %386 = tpu.memref_squeeze %385 : memref<1x128x128xi8, #tpu.memory_space<vmem>> -> memref<128x128xi8, #tpu.memory_space<vmem>>
    %387 = tpu.memref_slice %arg20[%c1_i32_251] : memref<2x!tpu.dma_semaphore, #tpu.memory_space<semaphore_mem>> -> memref<1x!tpu.dma_semaphore, #tpu.memory_space<semaphore_mem>>
    %388 = tpu.memref_squeeze %387 : memref<1x!tpu.dma_semaphore, #tpu.memory_space<semaphore_mem>> -> memref<!tpu.dma_semaphore, #tpu.memory_space<semaphore_mem>>
    tpu.wait_dma2 semaphore(%388 : memref<!tpu.dma_semaphore, #tpu.memory_space<semaphore_mem>>) src(%384 : memref<128x128xi8, #tpu.memory_space<any>>) dst(%386 : memref<128x128xi8, #tpu.memory_space<vmem>>)
    %c1_256 = arith.constant 1 : index
    %c0_257 = arith.constant 0 : index
    %c0_258 = arith.constant 0 : index
    %389 = vector.load %arg19[%c1_256, %c0_257, %c0_258] : memref<2x128x128xi8, #tpu.memory_space<vmem>>, vector<1x128x128xi8>
    %390 = vector.shape_cast %389 : vector<1x128x128xi8> to vector<128x128xi8>
    %391 = arith.sitofp %390 : vector<128x128xi8> to vector<128x128xbf16>
    %cst_259 = arith.constant dense<0.000000e+00> : vector<128x256xf32>
    %392 = tpu.matmul %391, %299, %cst_259 {dimension_numbers = #tpu.dot_dimension_numbers<[1], [0], [0], [1], [0, 0, 1, 1], [], []>} : vector<128x128xbf16>, vector<128x256xbf16>, vector<128x256xf32> -> vector<128x256xf32>
    %393 = vector.extract_strided_slice %392 {offsets = [0, 0], sizes = [128, 128], strides = [1, 1]} : vector<128x256xf32> to vector<128x128xf32>
    %394 = vector.extract_strided_slice %392 {offsets = [0, 128], sizes = [128, 128], strides = [1, 1]} : vector<128x256xf32> to vector<128x128xf32>
    %395 = arith.addf %374, %393 : vector<128x128xf32>
    %396 = arith.addf %24, %394 : vector<128x128xf32>
    %397 = arith.negf %396 : vector<128x128xf32>
    %398 = math.exp %397 : vector<128x128xf32>
    %cst_260 = arith.constant 1.000000e+00 : f32
    %399 = vector.broadcast %cst_260 : f32 to vector<128x128xf32>
    %400 = arith.addf %399, %398 : vector<128x128xf32>
    %401 = arith.divf %399, %400 : vector<128x128xf32>
    %402 = arith.mulf %401, %393 : vector<128x128xf32>
    %403 = arith.addf %382, %402 : vector<128x128xf32>
    %404 = arith.truncf %395 : vector<128x128xf32> to vector<128x128xbf16>
    %cst_261 = arith.constant dense<0.000000e+00> : vector<128x128xf32>
    %405 = tpu.matmul %404, %30, %cst_261 {dimension_numbers = #tpu.dot_dimension_numbers<[1], [0], [0], [1], [0, 0, 1, 1], [], []>} : vector<128x128xbf16>, vector<128x128xbf16>, vector<128x128xf32> -> vector<128x128xf32>
    %406 = arith.addf %19, %405 : vector<128x128xf32>
    %407 = arith.negf %406 : vector<128x128xf32>
    %408 = math.exp %407 : vector<128x128xf32>
    %cst_262 = arith.constant 1.000000e+00 : f32
    %409 = vector.broadcast %cst_262 : f32 to vector<128x128xf32>
    %410 = arith.addf %409, %408 : vector<128x128xf32>
    %411 = arith.divf %409, %410 : vector<128x128xf32>
    %412 = arith.truncf %403 : vector<128x128xf32> to vector<128x128xbf16>
    %cst_263 = arith.constant dense<0.000000e+00> : vector<128x128xf32>
    %413 = tpu.matmul %412, %32, %cst_263 {dimension_numbers = #tpu.dot_dimension_numbers<[1], [0], [0], [1], [0, 0, 1, 1], [], []>} : vector<128x128xbf16>, vector<128x128xbf16>, vector<128x128xf32> -> vector<128x128xf32>
    %414 = arith.addf %29, %413 : vector<128x128xf32>
    %415 = math.tanh %414 : vector<128x128xf32>
    %416 = arith.subf %415, %395 : vector<128x128xf32>
    %417 = arith.mulf %411, %416 : vector<128x128xf32>
    %418 = arith.addf %395, %417 : vector<128x128xf32>
    %419 = vector.broadcast %14 : vector<128x1xf32> to vector<128x128xf32>
    %420 = arith.mulf %418, %419 : vector<128x128xf32>
    %c0_264 = arith.constant 0 : index
    %c0_265 = arith.constant 0 : index
    %421 = vector.load %arg18[%c0_264, %c0_265] : memref<128x128xf32, #tpu.memory_space<vmem>>, vector<128x128xf32>
    tpu.vector_store %arg18[%c0_264, %c0_265], %420 {strides = array<i32>} : memref<128x128xf32, #tpu.memory_space<vmem>>, vector<128x128xf32>,
    %c0_266 = arith.constant 0 : index
    %c0_267 = arith.constant 0 : index
    %422 = vector.load %arg3[%c0_266, %c0_267] : memref<16x128xbf16, #tpu.memory_space<vmem>>, vector<16x128xbf16>
    %423 = arith.truncf %420 : vector<128x128xf32> to vector<128x128xbf16>
    %cst_268 = arith.constant dense<0.000000e+00> : vector<16x128xf32>
    %424 = tpu.matmul %422, %423, %cst_268 {dimension_numbers = #tpu.dot_dimension_numbers<[1], [0], [0], [1], [0, 0, 1, 1], [], []>} : vector<16x128xbf16>, vector<128x128xbf16>, vector<16x128xf32> -> vector<16x128xf32>
    %c0_269 = arith.constant 0 : index
    %c0_270 = arith.constant 0 : index
    %425 = vector.load %arg0[%c0_269, %c0_270] : memref<16x128xbf16, #tpu.memory_space<vmem>>, vector<16x128xbf16>
    %c0_271 = arith.constant 0 : index
    %c0_272 = arith.constant 0 : index
    %426 = vector.load %arg14[%c0_271, %c0_272] : memref<128x128xbf16, #tpu.memory_space<vmem>>, vector<128x128xbf16>
    %cst_273 = arith.constant dense<0.000000e+00> : vector<16x128xf32>
    %427 = tpu.matmul %425, %426, %cst_273 {dimension_numbers = #tpu.dot_dimension_numbers<[1], [0], [0], [1], [0, 0, 1, 1], [], []>} : vector<16x128xbf16>, vector<128x128xbf16>, vector<16x128xf32> -> vector<16x128xf32>
    %428 = arith.truncf %424 : vector<16x128xf32> to vector<16x128xbf16>
    %c0_274 = arith.constant 0 : index
    %c0_275 = arith.constant 0 : index
    %429 = vector.load %arg15[%c0_274, %c0_275] : memref<128x128xbf16, #tpu.memory_space<vmem>>, vector<128x128xbf16>
    %cst_276 = arith.constant dense<0.000000e+00> : vector<16x128xf32>
    %430 = tpu.matmul %428, %429, %cst_276 {dimension_numbers = #tpu.dot_dimension_numbers<[1], [0], [0], [1], [0, 0, 1, 1], [], []>} : vector<16x128xbf16>, vector<128x128xbf16>, vector<16x128xf32> -> vector<16x128xf32>
    %431 = arith.addf %427, %430 : vector<16x128xf32>
    %c0_277 = arith.constant 0 : index
    %c0_278 = arith.constant 0 : index
    %432 = vector.load %arg16[%c0_277, %c0_278] : memref<1x128xf32, #tpu.memory_space<vmem>>, vector<1x128xf32>
    %433 = vector.broadcast %432 : vector<1x128xf32> to vector<16x128xf32>
    %434 = arith.addf %431, %433 : vector<16x128xf32>
    %cst_279 = arith.constant 0.000000e+00 : f32
    %435 = vector.broadcast %cst_279 : f32 to vector<16x128xf32>
    %436 = arith.maximumf %434, %435 : vector<16x128xf32>
    %c0_280 = arith.constant 0 : index
    %c0_281 = arith.constant 0 : index
    %437 = vector.load %arg4[%c0_280, %c0_281] : memref<16x1xf32, #tpu.memory_space<vmem>>, vector<16x1xf32>
    %438 = vector.broadcast %437 : vector<16x1xf32> to vector<16x128xf32>
    %439 = arith.mulf %436, %438 : vector<16x128xf32>
    %c0_282 = arith.constant 0 : index
    %c0_283 = arith.constant 0 : index
    %440 = vector.load %arg17[%c0_282, %c0_283] : memref<16x128xf32, #tpu.memory_space<vmem>>, vector<16x128xf32>
    tpu.vector_store %arg17[%c0_282, %c0_283], %439 {strides = array<i32>} : memref<16x128xf32, #tpu.memory_space<vmem>>, vector<16x128xf32>,
    return
  }
}

</mosaic_0001>

<llo_original>
// kernel: tpu_custom_call.1
$region0: #{tpu_custom_call.1}
  #allocation0 [shape = 'u32[]', space=smem, size = 0x4, offset = 0x4, fixed_abs, tag = 'smem constant byte address 0x4 - core index']
  #allocation1 [shape = 'u32[144,128]{1,0:T(1,128)}', space=vmem, size = 0x12000, scoped, tag = 'internal scratch']
  #allocation2 [shape = 's8[2,128,128]{2,1,0:T(32,128)(4,1)}', space=vmem, size = 0x8000, scoped, tag = 'scratch operand']
  #allocation3 [shape = 's32[2]{0}', space=sflag, size = 0x8, scoped, tag = 'scratch operand']
  #allocation22 [shape = 's32[]', space=sflag, size = 0x4, offset = 0, fixed_abs, tag = 'sflag constant byte address 0x0 - dummy sync flag']
  #allocation23 [shape = 's32[]', space=sflag, size = 0x4, offset = 0, fixed_abs, tag = 'sflag constant byte address 0x0 - dummy sync flag']
  #allocation24 [shape = 'u32[]', space=smem, size = 0x4, offset = 0x44, fixed_abs, tag = 'smem constant byte address 0x44 - assertion arg 0']
  #allocation25 [shape = 'u32[]', space=smem, size = 0x4, offset = 0x48, fixed_abs, tag = 'smem constant byte address 0x48 - assertion arg 1']
  #allocation26 [shape = 's32[]', space=sflag, size = 0x4, offset = 0, fixed_abs, tag = 'sflag constant byte address 0x0 - dummy sync flag']
  #allocation27 [shape = 's32[]', space=sflag, size = 0x4, offset = 0, fixed_abs, tag = 'sflag constant byte address 0x0 - dummy sync flag']
  #allocation28 [shape = 's32[]', space=sflag, size = 0x4, offset = 0, fixed_abs, tag = 'sflag constant byte address 0x0 - dummy sync flag']
  #allocation29 [shape = 's32[]', space=sflag, size = 0x4, offset = 0, fixed_abs, tag = 'sflag constant byte address 0x0 - dummy sync flag']
  #allocation30 [shape = 's32[]', space=sflag, size = 0x4, offset = 0, fixed_abs, tag = 'sflag constant byte address 0x0 - dummy sync flag']
  #allocation31 [shape = 's32[]', space=sflag, size = 0x4, offset = 0, fixed_abs, tag = 'sflag constant byte address 0x0 - dummy sync flag']
  #allocation32 [shape = 's32[]', space=sflag, size = 0x4, offset = 0, fixed_abs, tag = 'sflag constant byte address 0x0 - dummy sync flag']
  #allocation33 [shape = 's32[]', space=sflag, size = 0x4, offset = 0, fixed_abs, tag = 'sflag constant byte address 0x0 - dummy sync flag']
  #allocation34 [shape = 's32[]', space=sflag, size = 0x4, offset = 0, fixed_abs, tag = 'sflag constant byte address 0x0 - dummy sync flag']
  #allocation35 [shape = 's32[]', space=sflag, size = 0x4, offset = 0, fixed_abs, tag = 'sflag constant byte address 0x0 - dummy sync flag']
  #allocation36 [shape = 's32[]', space=sflag, size = 0x4, offset = 0, fixed_abs, tag = 'sflag constant byte address 0x0 - dummy sync flag']
  #allocation37 [shape = 's32[]', space=sflag, size = 0x4, offset = 0, fixed_abs, tag = 'sflag constant byte address 0x0 - dummy sync flag']
  #allocation38 [shape = 's32[]', space=sflag, size = 0x4, offset = 0, fixed_abs, tag = 'sflag constant byte address 0x0 - dummy sync flag']
  #allocation39 [shape = 's32[]', space=sflag, size = 0x4, offset = 0, fixed_abs, tag = 'sflag constant byte address 0x0 - dummy sync flag']
  #allocation40 [shape = 's32[]', space=sflag, size = 0x4, offset = 0, fixed_abs, tag = 'sflag constant byte address 0x0 - dummy sync flag']
  #allocation41 [shape = 's32[]', space=sflag, size = 0x4, offset = 0, fixed_abs, tag = 'sflag constant byte address 0x0 - dummy sync flag']
  #allocation42 [shape = 's32[]', space=sflag, size = 0x4, offset = 0, fixed_abs, tag = 'sflag constant byte address 0x0 - dummy sync flag']
  #allocation43 [shape = 's32[]', space=sflag, size = 0x4, offset = 0, fixed_abs, tag = 'sflag constant byte address 0x0 - dummy sync flag']
  #allocation44 [shape = 's32[]', space=sflag, size = 0x4, offset = 0, fixed_abs, tag = 'sflag constant byte address 0x0 - dummy sync flag']
  #allocation45 [shape = 's32[]', space=sflag, size = 0x4, offset = 0, fixed_abs, tag = 'sflag constant byte address 0x0 - dummy sync flag']
  #allocation46 [shape = 's32[]', space=sflag, size = 0x4, offset = 0, fixed_abs, tag = 'sflag constant byte address 0x0 - dummy sync flag']
  #allocation47 [shape = 's32[]', space=sflag, size = 0x4, offset = 0, fixed_abs, tag = 'sflag constant byte address 0x0 - dummy sync flag']
  %s0 = inlined_call_operand.vmem [shape: bf16[16,128], index: 0, kind: input, shape index: {}]
  %s1 = inlined_call_operand.hbm [shape: bf16[128,128], index: 1, kind: input, shape index: {}]
  %s2 = inlined_call_operand.hbm [shape: s8[4,128,128], index: 2, kind: input, shape index: {}]
  %s3 = inlined_call_operand.vmem [shape: bf16[16,128], index: 3, kind: input, shape index: {}]
  %s4 = inlined_call_operand.vmem [shape: f32[16,1], index: 4, kind: input, shape index: {}]
  %s5 = inlined_call_operand.hbm [shape: bf16[128,128], index: 5, kind: input, shape index: {}]
  %s6 = inlined_call_operand.hbm [shape: bf16[128,128], index: 6, kind: input, shape index: {}]
  %s7 = inlined_call_operand.vmem [shape: f32[1,128], index: 7, kind: input, shape index: {}]
  %s8 = inlined_call_operand.hbm [shape: bf16[128,128], index: 8, kind: input, shape index: {}]
  %s9 = inlined_call_operand.hbm [shape: bf16[128,128], index: 9, kind: input, shape index: {}]
  %s10 = inlined_call_operand.vmem [shape: f32[1,128], index: 10, kind: input, shape index: {}]
  %s11 = inlined_call_operand.hbm [shape: bf16[128,128], index: 11, kind: input, shape index: {}]
  %s12 = inlined_call_operand.hbm [shape: bf16[128,128], index: 12, kind: input, shape index: {}]
  %s13 = inlined_call_operand.vmem [shape: f32[1,128], index: 13, kind: input, shape index: {}]
  %s14 = inlined_call_operand.hbm [shape: bf16[128,128], index: 14, kind: input, shape index: {}]
  %s15 = inlined_call_operand.hbm [shape: bf16[128,128], index: 15, kind: input, shape index: {}]
  %s16 = inlined_call_operand.vmem [shape: f32[1,128], index: 16, kind: input, shape index: {}]
  %s17 = inlined_call_operand.hbm [shape: f32[16,128], index: 17, kind: output, shape index: {0}]
  %s18 = inlined_call_operand.hbm [shape: f32[128,128], index: 18, kind: output, shape index: {1}]
  %19 = xla_tuple %s17, %s18
  %s20 = sld [smem:[#allocation0]]
  $region166: #{tpu_custom_call.1} parent=0
    _
  %s22 = ssub.s32 1, %s20
  %s23 = scalar_select 0, %s22, %s20
  $region1: #{tpu_custom_call.1} parent=0
    #allocation4 [shape = 'u8[32768]{0}', space=vmem, size = 0x8000, scoped, tag = 'input window, operand 1, single buffered']
    #allocation5 [shape = 's32[1]{0}', space=sflag, size = 0x4, scoped, tag = 'scoped memory for tpu_custom_call.1']
    #allocation6 [shape = 's32[1]{0}', space=sflag, size = 0x4, scoped, tag = 'scoped memory for tpu_custom_call.1']
    #allocation7 [shape = 'u8[32768]{0}', space=vmem, size = 0x8000, scoped, tag = 'input window, operand 5, single buffered']
    #allocation8 [shape = 's32[1]{0}', space=sflag, size = 0x4, scoped, tag = 'scoped memory for tpu_custom_call.1']
    #allocation9 [shape = 'u8[32768]{0}', space=vmem, size = 0x8000, scoped, tag = 'input window, operand 6, single buffered']
    #allocation10 [shape = 'u8[32768]{0}', space=vmem, size = 0x8000, scoped, tag = 'input window, operand 8, single buffered']
    #allocation11 [shape = 's32[1]{0}', space=sflag, size = 0x4, scoped, tag = 'scoped memory for tpu_custom_call.1']
    #allocation12 [shape = 'u8[32768]{0}', space=vmem, size = 0x8000, scoped, tag = 'input window, operand 9, single buffered']
    #allocation13 [shape = 'u8[32768]{0}', space=vmem, size = 0x8000, scoped, tag = 'input window, operand 11, single buffered']
    #allocation14 [shape = 's32[1]{0}', space=sflag, size = 0x4, scoped, tag = 'scoped memory for tpu_custom_call.1']
    #allocation15 [shape = 'u8[32768]{0}', space=vmem, size = 0x8000, scoped, tag = 'input window, operand 12, single buffered']
    #allocation16 [shape = 'u8[32768]{0}', space=vmem, size = 0x8000, scoped, tag = 'input window, operand 14, single buffered']
    #allocation17 [shape = 's32[1]{0}', space=sflag, size = 0x4, scoped, tag = 'scoped memory for tpu_custom_call.1']
    #allocation18 [shape = 'u8[32768]{0}', space=vmem, size = 0x8000, scoped, tag = 'input window, operand 15, single buffered']
    #allocation19 [shape = 'u8[8192]{0}', space=vmem, size = 0x2000, scoped, tag = 'output window, operand 0, single buffered']
    #allocation20 [shape = 'u8[65536]{0}', space=vmem, size = 0x10000, scoped, tag = 'output window, operand 1, single buffered']
    #allocation21 [shape = 's32[1]{0}', space=sflag, size = 0x4, scoped, tag = 'scoped memory for tpu_custom_call.1']
    %24 = vsyncpa [#allocation5], 0
    %25 = vsyncpa [#allocation8], 0
    %26 = vsyncpa [#allocation11], 0
    %27 = vsyncpa [#allocation14], 0
    %28 = vsyncpa [#allocation17], 0
    %29 = vsyncpa [#allocation6], 0
    %30 = vsyncpa [#allocation21], 0
    // Predicated region
    $region2: #{tpu_custom_call.1} parent=1 // pred_check
      _
    $region3: #{tpu_custom_call.1} parent=1 // pred_check_branch
      %32 = sbr.rel (0) target = $region5
    $region4: #{tpu_custom_call.1} parent=1 // pred_region
      _
    $region5: #{tpu_custom_call.1} parent=1 // pred_fallthru
      _
    // Predicated region
    $region6: #{tpu_custom_call.1} parent=1 // pred_check
      _
    $region7: #{tpu_custom_call.1} parent=1 // pred_check_branch
      %34 = sbr.rel (0) target = $region9
    $region8: #{tpu_custom_call.1} parent=1 // pred_region
      %s36 = ssub.s32 1024, 1024
      %37 = vsyncadd [#allocation5], %s36
      %s38 = sshll.u32 [#allocation4], 4
      %s39 = int_to_ptr.vmem [resolvable:$true] %s38
      %44 = dma.hbm_to_vmem [thread:$0]  %s1, 1024, %s39, [#allocation5], 64, 64, 4
    $region9: #{tpu_custom_call.1} parent=1 // pred_fallthru
      _
    // Predicated region
    $region10: #{tpu_custom_call.1} parent=1 // pred_check
      _
    $region11: #{tpu_custom_call.1} parent=1 // pred_check_branch
      %46 = sbr.rel (0) target = $region13
    $region12: #{tpu_custom_call.1} parent=1 // pred_region
      _
    $region13: #{tpu_custom_call.1} parent=1 // pred_fallthru
      _
    // Predicated region
    $region14: #{tpu_custom_call.1} parent=1 // pred_check
      _
    $region15: #{tpu_custom_call.1} parent=1 // pred_check_branch
      %48 = sbr.rel (0) target = $region17
    $region16: #{tpu_custom_call.1} parent=1 // pred_region
      _
    $region17: #{tpu_custom_call.1} parent=1 // pred_fallthru
      _
    // Predicated region
    $region18: #{tpu_custom_call.1} parent=1 // pred_check
      _
    $region19: #{tpu_custom_call.1} parent=1 // pred_check_branch
      %50 = sbr.rel (0) target = $region21
    $region20: #{tpu_custom_call.1} parent=1 // pred_region
      %s52 = ssub.s32 1024, 1024
      %53 = vsyncadd [#allocation8], %s52
      %s54 = sshll.u32 [#allocation7], 4
      %s55 = int_to_ptr.vmem [resolvable:$true] %s54
      %60 = dma.hbm_to_vmem [thread:$0]  %s5, 1024, %s55, [#allocation8], 64, 64, 4
    $region21: #{tpu_custom_call.1} parent=1 // pred_fallthru
      _
    // Predicated region
    $region22: #{tpu_custom_call.1} parent=1 // pred_check
      _
    $region23: #{tpu_custom_call.1} parent=1 // pred_check_branch
      %62 = sbr.rel (0) target = $region25
    $region24: #{tpu_custom_call.1} parent=1 // pred_region
      %s64 = ssub.s32 1024, 1024
      %65 = vsyncadd [#allocation8], %s64
      %s66 = sshll.u32 [#allocation9], 4
      %s67 = int_to_ptr.vmem [resolvable:$true] %s66
      %72 = dma.hbm_to_vmem [thread:$0]  %s6, 1024, %s67, [#allocation8], 64, 64, 4
    $region25: #{tpu_custom_call.1} parent=1 // pred_fallthru
      _
    // Predicated region
    $region26: #{tpu_custom_call.1} parent=1 // pred_check
      _
    $region27: #{tpu_custom_call.1} parent=1 // pred_check_branch
      %74 = sbr.rel (0) target = $region29
    $region28: #{tpu_custom_call.1} parent=1 // pred_region
      _
    $region29: #{tpu_custom_call.1} parent=1 // pred_fallthru
      _
    // Predicated region
    $region30: #{tpu_custom_call.1} parent=1 // pred_check
      _
    $region31: #{tpu_custom_call.1} parent=1 // pred_check_branch
      %76 = sbr.rel (0) target = $region33
    $region32: #{tpu_custom_call.1} parent=1 // pred_region
      %s78 = ssub.s32 1024, 1024
      %79 = vsyncadd [#allocation11], %s78
      %s80 = sshll.u32 [#allocation10], 4
      %s81 = int_to_ptr.vmem [resolvable:$true] %s80
      %86 = dma.hbm_to_vmem [thread:$0]  %s8, 1024, %s81, [#allocation11], 64, 64, 4
    $region33: #{tpu_custom_call.1} parent=1 // pred_fallthru
      _
    // Predicated region
    $region34: #{tpu_custom_call.1} parent=1 // pred_check
      _
    $region35: #{tpu_custom_call.1} parent=1 // pred_check_branch
      %88 = sbr.rel (0) target = $region37
    $region36: #{tpu_custom_call.1} parent=1 // pred_region
      %s90 = ssub.s32 1024, 1024
      %91 = vsyncadd [#allocation11], %s90
      %s92 = sshll.u32 [#allocation12], 4
      %s93 = int_to_ptr.vmem [resolvable:$true] %s92
      %98 = dma.hbm_to_vmem [thread:$0]  %s9, 1024, %s93, [#allocation11], 64, 64, 4
    $region37: #{tpu_custom_call.1} parent=1 // pred_fallthru
      _
    // Predicated region
    $region38: #{tpu_custom_call.1} parent=1 // pred_check
      _
    $region39: #{tpu_custom_call.1} parent=1 // pred_check_branch
      %100 = sbr.rel (0) target = $region41
    $region40: #{tpu_custom_call.1} parent=1 // pred_region
      _
    $region41: #{tpu_custom_call.1} parent=1 // pred_fallthru
      _
    // Predicated region
    $region42: #{tpu_custom_call.1} parent=1 // pred_check
      _
    $region43: #{tpu_custom_call.1} parent=1 // pred_check_branch
      %102 = sbr.rel (0) target = $region45
    $region44: #{tpu_custom_call.1} parent=1 // pred_region
      %s104 = ssub.s32 1024, 1024
      %105 = vsyncadd [#allocation14], %s104
      %s106 = sshll.u32 [#allocation13], 4
      %s107 = int_to_ptr.vmem [resolvable:$true] %s106
      %112 = dma.hbm_to_vmem [thread:$0]  %s11, 1024, %s107, [#allocation14], 64, 64, 4
    $region45: #{tpu_custom_call.1} parent=1 // pred_fallthru
      _
    // Predicated region
    $region46: #{tpu_custom_call.1} parent=1 // pred_check
      _
    $region47: #{tpu_custom_call.1} parent=1 // pred_check_branch
      %114 = sbr.rel (0) target = $region49
    $region48: #{tpu_custom_call.1} parent=1 // pred_region
      %s116 = ssub.s32 1024, 1024
      %117 = vsyncadd [#allocation14], %s116
      %s118 = sshll.u32 [#allocation15], 4
      %s119 = int_to_ptr.vmem [resolvable:$true] %s118
      %124 = dma.hbm_to_vmem [thread:$0]  %s12, 1024, %s119, [#allocation14], 64, 64, 4
    $region49: #{tpu_custom_call.1} parent=1 // pred_fallthru
      _
    // Predicated region
    $region50: #{tpu_custom_call.1} parent=1 // pred_check
      _
    $region51: #{tpu_custom_call.1} parent=1 // pred_check_branch
      %126 = sbr.rel (0) target = $region53
    $region52: #{tpu_custom_call.1} parent=1 // pred_region
      _
    $region53: #{tpu_custom_call.1} parent=1 // pred_fallthru
      _
    // Predicated region
    $region54: #{tpu_custom_call.1} parent=1 // pred_check
      _
    $region55: #{tpu_custom_call.1} parent=1 // pred_check_branch
      %128 = sbr.rel (0) target = $region57
    $region56: #{tpu_custom_call.1} parent=1 // pred_region
      %s130 = ssub.s32 1024, 1024
      %131 = vsyncadd [#allocation17], %s130
      %s132 = sshll.u32 [#allocation16], 4
      %s133 = int_to_ptr.vmem [resolvable:$true] %s132
      %138 = dma.hbm_to_vmem [thread:$0]  %s14, 1024, %s133, [#allocation17], 64, 64, 4
    $region57: #{tpu_custom_call.1} parent=1 // pred_fallthru
      _
    // Predicated region
    $region58: #{tpu_custom_call.1} parent=1 // pred_check
      _
    $region59: #{tpu_custom_call.1} parent=1 // pred_check_branch
      %140 = sbr.rel (0) target = $region61
    $region60: #{tpu_custom_call.1} parent=1 // pred_region
      %s142 = ssub.s32 1024, 1024
      %143 = vsyncadd [#allocation17], %s142
      %s144 = sshll.u32 [#allocation18], 4
      %s145 = int_to_ptr.vmem [resolvable:$true] %s144
      %150 = dma.hbm_to_vmem [thread:$0]  %s15, 1024, %s145, [#allocation17], 64, 64, 4
    $region61: #{tpu_custom_call.1} parent=1 // pred_fallthru
      _
    // Predicated region
    $region62: #{tpu_custom_call.1} parent=1 // pred_check
      _
    $region63: #{tpu_custom_call.1} parent=1 // pred_check_branch
      %152 = sbr.rel (0) target = $region65
    $region64: #{tpu_custom_call.1} parent=1 // pred_region
      _
    $region65: #{tpu_custom_call.1} parent=1 // pred_fallthru
      _
    // Predicated region
    $region66: #{tpu_custom_call.1} parent=1 // pred_check
      _
    $region67: #{tpu_custom_call.1} parent=1 // pred_check_branch
      %154 = sbr.rel (0) target = $region69
    $region68: #{tpu_custom_call.1} parent=1 // pred_region
      %155 = dma.done [#allocation5], 1024
    $region69: #{tpu_custom_call.1} parent=1 // pred_fallthru
      _
    // Predicated region
    $region70: #{tpu_custom_call.1} parent=1 // pred_check
      _
    $region71: #{tpu_custom_call.1} parent=1 // pred_check_branch
      %157 = sbr.rel (0) target = $region73
    $region72: #{tpu_custom_call.1} parent=1 // pred_region
      %158 = dma.done [#allocation8], 1024
    $region73: #{tpu_custom_call.1} parent=1 // pred_fallthru
      _
    // Predicated region
    $region74: #{tpu_custom_call.1} parent=1 // pred_check
      _
    $region75: #{tpu_custom_call.1} parent=1 // pred_check_branch
      %160 = sbr.rel (0) target = $region77
    $region76: #{tpu_custom_call.1} parent=1 // pred_region
      %161 = dma.done [#allocation8], 1024
    $region77: #{tpu_custom_call.1} parent=1 // pred_fallthru
      _
    // Predicated region
    $region78: #{tpu_custom_call.1} parent=1 // pred_check
      _
    $region79: #{tpu_custom_call.1} parent=1 // pred_check_branch
      %163 = sbr.rel (0) target = $region81
    $region80: #{tpu_custom_call.1} parent=1 // pred_region
      %164 = dma.done [#allocation11], 1024
    $region81: #{tpu_custom_call.1} parent=1 // pred_fallthru
      _
    // Predicated region
    $region82: #{tpu_custom_call.1} parent=1 // pred_check
      _
    $region83: #{tpu_custom_call.1} parent=1 // pred_check_branch
      %166 = sbr.rel (0) target = $region85
    $region84: #{tpu_custom_call.1} parent=1 // pred_region
      %167 = dma.done [#allocation11], 1024
    $region85: #{tpu_custom_call.1} parent=1 // pred_fallthru
      _
    // Predicated region
    $region86: #{tpu_custom_call.1} parent=1 // pred_check
      _
    $region87: #{tpu_custom_call.1} parent=1 // pred_check_branch
      %169 = sbr.rel (0) target = $region89
    $region88: #{tpu_custom_call.1} parent=1 // pred_region
      %170 = dma.done [#allocation14], 1024
    $region89: #{tpu_custom_call.1} parent=1 // pred_fallthru
      _
    // Predicated region
    $region90: #{tpu_custom_call.1} parent=1 // pred_check
      _
    $region91: #{tpu_custom_call.1} parent=1 // pred_check_branch
      %172 = sbr.rel (0) target = $region93
    $region92: #{tpu_custom_call.1} parent=1 // pred_region
      %173 = dma.done [#allocation14], 1024
    $region93: #{tpu_custom_call.1} parent=1 // pred_fallthru
      _
    // Predicated region
    $region94: #{tpu_custom_call.1} parent=1 // pred_check
      _
    $region95: #{tpu_custom_call.1} parent=1 // pred_check_branch
      %175 = sbr.rel (0) target = $region97
    $region96: #{tpu_custom_call.1} parent=1 // pred_region
      %176 = dma.done [#allocation17], 1024
    $region97: #{tpu_custom_call.1} parent=1 // pred_fallthru
      _
    // Predicated region
    $region98: #{tpu_custom_call.1} parent=1 // pred_check
      _
    $region99: #{tpu_custom_call.1} parent=1 // pred_check_branch
      %178 = sbr.rel (0) target = $region101
    $region100: #{tpu_custom_call.1} parent=1 // pred_region
      %179 = dma.done [#allocation17], 1024
    $region101: #{tpu_custom_call.1} parent=1 // pred_fallthru
      _
    %v181 = vld [vmem:[#allocation4] sm:$0xf]
    %v182 = vld [vmem:[#allocation4 + $0x4] sm:$0xf]
    %v183 = vld [vmem:[#allocation4 + $0x8] sm:$0xf]
    %v184 = vld [vmem:[#allocation4 + $0xc] sm:$0xf]
    %v185 = vld [vmem:[#allocation4 + $0x10] sm:$0xf]
    %v186 = vld [vmem:[#allocation4 + $0x14] sm:$0xf]
    %v187 = vld [vmem:[#allocation4 + $0x18] sm:$0xf]
    %v188 = vld [vmem:[#allocation4 + $0x1c] sm:$0xf]
    %v189 = vld [vmem:[#allocation4 + $0x20] sm:$0xf]
    %v190 = vld [vmem:[#allocation4 + $0x24] sm:$0xf]
    %v191 = vld [vmem:[#allocation4 + $0x28] sm:$0xf]
    %v192 = vld [vmem:[#allocation4 + $0x2c] sm:$0xf]
    %v193 = vld [vmem:[#allocation4 + $0x30] sm:$0xf]
    %v194 = vld [vmem:[#allocation4 + $0x34] sm:$0xf]
    %v195 = vld [vmem:[#allocation4 + $0x38] sm:$0xf]
    %v196 = vld [vmem:[#allocation4 + $0x3c] sm:$0xf]
    // Predicated region
    $region102: #{tpu_custom_call.1} parent=1 // pred_check
      _
    $region103: #{tpu_custom_call.1} parent=1 // pred_check_branch
      %198 = sbr.rel target = $region105
    $region104: #{tpu_custom_call.1} parent=1 // pred_region
      %199 = sst [smem:[#allocation24]] [#allocation23]
      %200 = sst [smem:[#allocation25]] [#allocation22]
    $region105: #{tpu_custom_call.1} parent=1 // pred_fallthru
      _
    %202 = shalt.err (0)
    %s204 = sshll.u32 [#allocation2], 4
    %s205 = int_to_ptr.vmem [resolvable:$true] %s204
    %207 = dma.hbm_to_vmem [thread:$0]  %s2, 512, %s205, [#allocation3]
    %v208 = vlaneseq
    %v209 = vshrl.u32 %v208, 7
    %v210 = vadd.s32 %v209, 8
    %v211 = vadd.s32 %v209, 16
    %v212 = vadd.s32 %v209, 24
    %v213 = vadd.s32 %v209, 32
    %v214 = vadd.s32 %v209, 40
    %v215 = vadd.s32 %v209, 48
    %v216 = vadd.s32 %v209, 56
    %v217 = vadd.s32 %v209, 64
    %v218 = vadd.s32 %v209, 72
    %v219 = vadd.s32 %v209, 80
    %v220 = vadd.s32 %v209, 88
    %v221 = vadd.s32 %v209, 96
    %v222 = vadd.s32 %v209, 104
    %v223 = vadd.s32 %v209, 112
    %v224 = vadd.s32 %v209, 120
    %vm225 = vcmp.ne.s32.totalorder %v209, 0
    %vm226 = vcmp.ne.s32.totalorder %v210, 0
    %vm227 = vcmp.ne.s32.totalorder %v211, 0
    %vm228 = vcmp.ne.s32.totalorder %v212, 0
    %vm229 = vcmp.ne.s32.totalorder %v213, 0
    %vm230 = vcmp.ne.s32.totalorder %v214, 0
    %vm231 = vcmp.ne.s32.totalorder %v215, 0
    %vm232 = vcmp.ne.s32.totalorder %v216, 0
    %vm233 = vcmp.ne.s32.totalorder %v217, 0
    %vm234 = vcmp.ne.s32.totalorder %v218, 0
    %vm235 = vcmp.ne.s32.totalorder %v219, 0
    %vm236 = vcmp.ne.s32.totalorder %v220, 0
    %vm237 = vcmp.ne.s32.totalorder %v221, 0
    %vm238 = vcmp.ne.s32.totalorder %v222, 0
    %vm239 = vcmp.ne.s32.totalorder %v223, 0
    %vm240 = vcmp.ne.s32.totalorder %v224, 0
    %vm241 = vcmp.lt.s32.totalorder %v209, 18
    %vm242 = vcmp.lt.s32.totalorder %v210, 18
    %vm243 = vcmp.lt.s32.totalorder %v211, 18
    %vm244 = vcmp.lt.s32.totalorder %v212, 18
    %vm245 = vcmp.lt.s32.totalorder %v213, 18
    %vm246 = vcmp.lt.s32.totalorder %v214, 18
    %vm247 = vcmp.lt.s32.totalorder %v215, 18
    %vm248 = vcmp.lt.s32.totalorder %v216, 18
    %vm249 = vcmp.lt.s32.totalorder %v217, 18
    %vm250 = vcmp.lt.s32.totalorder %v218, 18
    %vm251 = vcmp.lt.s32.totalorder %v219, 18
    %vm252 = vcmp.lt.s32.totalorder %v220, 18
    %vm253 = vcmp.lt.s32.totalorder %v221, 18
    %vm254 = vcmp.lt.s32.totalorder %v222, 18
    %vm255 = vcmp.lt.s32.totalorder %v223, 18
    %vm256 = vcmp.lt.s32.totalorder %v224, 18
    %vm257 = vmand %vm225, %vm241
    %vm258 = vmand %vm226, %vm242
    %vm259 = vmand %vm227, %vm243
    %vm260 = vmand %vm228, %vm244
    %vm261 = vmand %vm229, %vm245
    %vm262 = vmand %vm230, %vm246
    %vm263 = vmand %vm231, %vm247
    %vm264 = vmand %vm232, %vm248
    %vm265 = vmand %vm233, %vm249
    %vm266 = vmand %vm234, %vm250
    %vm267 = vmand %vm235, %vm251
    %vm268 = vmand %vm236, %vm252
    %vm269 = vmand %vm237, %vm253
    %vm270 = vmand %vm238, %vm254
    %vm271 = vmand %vm239, %vm255
    %vm272 = vmand %vm240, %vm256
    %v273 = vsel %vm257, 1, 0
    %v274 = vsel %vm258, 1, 0
    %v275 = vsel %vm259, 1, 0
    %v276 = vsel %vm260, 1, 0
    %v277 = vsel %vm261, 1, 0
    %v278 = vsel %vm262, 1, 0
    %v279 = vsel %vm263, 1, 0
    %v280 = vsel %vm264, 1, 0
    %v281 = vsel %vm265, 1, 0
    %v282 = vsel %vm266, 1, 0
    %v283 = vsel %vm267, 1, 0
    %v284 = vsel %vm268, 1, 0
    %v285 = vsel %vm269, 1, 0
    %v286 = vsel %vm270, 1, 0
    %v287 = vsel %vm271, 1, 0
    %v288 = vsel %vm272, 1, 0
    %v289 = vcvt.s32.f32 %v273
    %v290 = vcvt.s32.f32 %v274
    %v291 = vcvt.s32.f32 %v275
    %v292 = vcvt.s32.f32 %v276
    %v293 = vcvt.s32.f32 %v277
    %v294 = vcvt.s32.f32 %v278
    %v295 = vcvt.s32.f32 %v279
    %v296 = vcvt.s32.f32 %v280
    %v297 = vcvt.s32.f32 %v281
    %v298 = vcvt.s32.f32 %v282
    %v299 = vcvt.s32.f32 %v283
    %v300 = vcvt.s32.f32 %v284
    %v301 = vcvt.s32.f32 %v285
    %v302 = vcvt.s32.f32 %v286
    %v303 = vcvt.s32.f32 %v287
    %v304 = vcvt.s32.f32 %v288
    %v305 = vld [vmem:[#allocation7] sm:$0xf]
    %v306 = vld [vmem:[#allocation7 + $0x4] sm:$0xf]
    %v307 = vld [vmem:[#allocation7 + $0x8] sm:$0xf]
    %v308 = vld [vmem:[#allocation7 + $0xc] sm:$0xf]
    %v309 = vld [vmem:[#allocation7 + $0x10] sm:$0xf]
    %v310 = vld [vmem:[#allocation7 + $0x14] sm:$0xf]
    %v311 = vld [vmem:[#allocation7 + $0x18] sm:$0xf]
    %v312 = vld [vmem:[#allocation7 + $0x1c] sm:$0xf]
    %v313 = vld [vmem:[#allocation7 + $0x20] sm:$0xf]
    %v314 = vld [vmem:[#allocation7 + $0x24] sm:$0xf]
    %v315 = vld [vmem:[#allocation7 + $0x28] sm:$0xf]
    %v316 = vld [vmem:[#allocation7 + $0x2c] sm:$0xf]
    %v317 = vld [vmem:[#allocation7 + $0x30] sm:$0xf]
    %v318 = vld [vmem:[#allocation7 + $0x34] sm:$0xf]
    %v319 = vld [vmem:[#allocation7 + $0x38] sm:$0xf]
    %v320 = vld [vmem:[#allocation7 + $0x3c] sm:$0xf]
    %v321 = vld [vmem:[%s7] sm:$0x1]
    %v323 = vlaneseq
    %v324 = vshrl.u32 %v323, 7
    %v325 = vsub.s32 0, %v324
    %v326 = vrot.slane %v321, %v325
    %v344 = vunpack.c.l.b16 %v181
    %v345 = vunpack.c.l.b16 %v182
    %v346 = vunpack.c.l.b16 %v183
    %v347 = vunpack.c.l.b16 %v184
    %v348 = vunpack.c.l.b16 %v185
    %v349 = vunpack.c.l.b16 %v186
    %v350 = vunpack.c.l.b16 %v187
    %v351 = vunpack.c.l.b16 %v188
    %v352 = vunpack.c.l.b16 %v189
    %v353 = vunpack.c.l.b16 %v190
    %v354 = vunpack.c.l.b16 %v191
    %v355 = vunpack.c.l.b16 %v192
    %v356 = vunpack.c.l.b16 %v193
    %v357 = vunpack.c.l.b16 %v194
    %v358 = vunpack.c.l.b16 %v195
    %v359 = vunpack.c.l.b16 %v196
    %v360 = vpack.c.b16 %v345, %v344
    %v361 = vpack.c.b16 %v347, %v346
    %v362 = vpack.c.b16 %v349, %v348
    %v363 = vpack.c.b16 %v351, %v350
    %v364 = vpack.c.b16 %v353, %v352
    %v365 = vpack.c.b16 %v355, %v354
    %v366 = vpack.c.b16 %v357, %v356
    %v367 = vpack.c.b16 %v359, %v358
    %v392 = vunpack.c.l.b16 %v305
    %v393 = vunpack.c.l.b16 %v306
    %v394 = vunpack.c.l.b16 %v307
    %v395 = vunpack.c.l.b16 %v308
    %v396 = vunpack.c.l.b16 %v309
    %v397 = vunpack.c.l.b16 %v310
    %v398 = vunpack.c.l.b16 %v311
    %v399 = vunpack.c.l.b16 %v312
    %v400 = vunpack.c.l.b16 %v313
    %v401 = vunpack.c.l.b16 %v314
    %v402 = vunpack.c.l.b16 %v315
    %v403 = vunpack.c.l.b16 %v316
    %v404 = vunpack.c.l.b16 %v317
    %v405 = vunpack.c.l.b16 %v318
    %v406 = vunpack.c.l.b16 %v319
    %v407 = vunpack.c.l.b16 %v320
    %v408 = vpack.c.b16 %v393, %v392
    %v409 = vpack.c.b16 %v395, %v394
    %v410 = vpack.c.b16 %v397, %v396
    %v411 = vpack.c.b16 %v399, %v398
    %v412 = vpack.c.b16 %v401, %v400
    %v413 = vpack.c.b16 %v403, %v402
    %v414 = vpack.c.b16 %v405, %v404
    %v415 = vpack.c.b16 %v407, %v406
    %424 = vmatprep.subr.bf16.mxu0 0
    %425 = vmatpush1.bf16.msra.mxu0 %v415
    %426 = vmatprep.subr.bf16.mxu0 0
    %427 = vmatpush1.bf16.msra.mxu0 %v414
    %428 = vmatprep.subr.bf16.mxu0 0
    %429 = vmatpush1.bf16.msra.mxu0 %v413
    %430 = vmatprep.subr.bf16.mxu0 0
    %431 = vmatpush1.bf16.msra.mxu0 %v412
    %432 = vmatprep.subr.bf16.mxu0 0
    %433 = vmatpush1.bf16.msra.mxu0 %v411
    %434 = vmatprep.subr.bf16.mxu0 0
    %435 = vmatpush1.bf16.msra.mxu0 %v410
    %436 = vmatprep.subr.bf16.mxu0 0
    %437 = vmatpush1.bf16.msra.mxu0 %v409
    %438 = vmatprep.subr.bf16.mxu0 0
    %439 = vmatpush1.bf16.msra.mxu0 %v408
    %440 = vmatprep.subr.bf16.mxu0 0
    %441 = vmatpush2.bf16.msra.mxu0 0
    %442 = vmatprep.subr.bf16.mxu0 0
    %443 = vmatpush2.bf16.msra.mxu0 0
    %444 = vmatprep.subr.bf16.mxu0 0
    %445 = vmatpush2.bf16.msra.mxu0 0
    %446 = vmatprep.subr.bf16.mxu0 0
    %447 = vmatpush2.bf16.msra.mxu0 0
    %448 = vmatprep.subr.bf16.mxu0 0
    %449 = vmatpush2.bf16.msra.mxu0 0
    %450 = vmatprep.subr.bf16.mxu0 0
    %451 = vmatpush2.bf16.msra.mxu0 0
    %452 = vmatprep.subr.bf16.mxu0 0
    %453 = vmatpush2.bf16.msra.mxu0 0
    %454 = vmatprep.subr.bf16.mxu0 0
    %455 = vmatpush2.bf16.msra.mxu0 0
    %456 = vmatprep.mubr.bf16.mxu0 0
    %457 = vmatmul.mubr.bf16.gmra.mxu0 %v360
    %v458 = vpop.f32.mrf.mxu0
    %v459 = vadd.f32 %v326, %v458
    %v460 = vpop.f32.mrf.mxu0
    %v461 = vpop.f32.mrf.mxu0
    %v462 = vadd.f32 %v326, %v461
    %v463 = vpop.f32.mrf.mxu0
    %464 = vmatprep.mubr.bf16.mxu0 0
    %465 = vmatmul.mubr.bf16.gmra.mxu0 %v361
    %v466 = vpop.f32.mrf.mxu0
    %v467 = vadd.f32 %v326, %v466
    %v468 = vpop.f32.mrf.mxu0
    %v469 = vpop.f32.mrf.mxu0
    %v470 = vadd.f32 %v326, %v469
    %v471 = vpop.f32.mrf.mxu0
    %472 = vmatprep.mubr.bf16.mxu0 0
    %473 = vmatmul.mubr.bf16.gmra.mxu0 %v362
    %v474 = vpop.f32.mrf.mxu0
    %v475 = vadd.f32 %v326, %v474
    %v476 = vpop.f32.mrf.mxu0
    %v477 = vpop.f32.mrf.mxu0
    %v478 = vadd.f32 %v326, %v477
    %v479 = vpop.f32.mrf.mxu0
    %480 = vmatprep.mubr.bf16.mxu0 0
    %481 = vmatmul.mubr.bf16.gmra.mxu0 %v363
    %v482 = vpop.f32.mrf.mxu0
    %v483 = vadd.f32 %v326, %v482
    %v484 = vpop.f32.mrf.mxu0
    %v485 = vpop.f32.mrf.mxu0
    %v486 = vadd.f32 %v326, %v485
    %v487 = vpop.f32.mrf.mxu0
    %488 = vmatprep.mubr.bf16.mxu0 0
    %489 = vmatmul.mubr.bf16.gmra.mxu0 %v364
    %v490 = vpop.f32.mrf.mxu0
    %v491 = vadd.f32 %v326, %v490
    %v492 = vpop.f32.mrf.mxu0
    %v493 = vpop.f32.mrf.mxu0
    %v494 = vadd.f32 %v326, %v493
    %v495 = vpop.f32.mrf.mxu0
    %496 = vmatprep.mubr.bf16.mxu0 0
    %497 = vmatmul.mubr.bf16.gmra.mxu0 %v365
    %v498 = vpop.f32.mrf.mxu0
    %v499 = vadd.f32 %v326, %v498
    %v500 = vpop.f32.mrf.mxu0
    %v501 = vpop.f32.mrf.mxu0
    %v502 = vadd.f32 %v326, %v501
    %v503 = vpop.f32.mrf.mxu0
    %504 = vmatprep.mubr.bf16.mxu0 0
    %505 = vmatmul.mubr.bf16.gmra.mxu0 %v366
    %v506 = vpop.f32.mrf.mxu0
    %v507 = vadd.f32 %v326, %v506
    %v508 = vpop.f32.mrf.mxu0
    %v509 = vpop.f32.mrf.mxu0
    %v510 = vadd.f32 %v326, %v509
    %v511 = vpop.f32.mrf.mxu0
    %512 = vmatprep.mubr.bf16.mxu0 0
    %513 = vmatmul.mubr.bf16.gmra.mxu0 %v367
    %v514 = vpop.f32.mrf.mxu0
    %v515 = vadd.f32 %v326, %v514
    %v516 = vpop.f32.mrf.mxu0
    %v517 = vpop.f32.mrf.mxu0
    %v518 = vadd.f32 %v326, %v517
    %v519 = vpop.f32.mrf.mxu0
    %520 = vdwg.mxu0
    %v521 = vld [vmem:[#allocation10] sm:$0xf]
    %v522 = vld [vmem:[#allocation10 + $0x4] sm:$0xf]
    %v523 = vld [vmem:[#allocation10 + $0x8] sm:$0xf]
    %v524 = vld [vmem:[#allocation10 + $0xc] sm:$0xf]
    %v525 = vld [vmem:[#allocation10 + $0x10] sm:$0xf]
    %v526 = vld [vmem:[#allocation10 + $0x14] sm:$0xf]
    %v527 = vld [vmem:[#allocation10 + $0x18] sm:$0xf]
    %v528 = vld [vmem:[#allocation10 + $0x1c] sm:$0xf]
    %v529 = vld [vmem:[#allocation10 + $0x20] sm:$0xf]
    %v530 = vld [vmem:[#allocation10 + $0x24] sm:$0xf]
    %v531 = vld [vmem:[#allocation10 + $0x28] sm:$0xf]
    %v532 = vld [vmem:[#allocation10 + $0x2c] sm:$0xf]
    %v533 = vld [vmem:[#allocation10 + $0x30] sm:$0xf]
    %v534 = vld [vmem:[#allocation10 + $0x34] sm:$0xf]
    %v535 = vld [vmem:[#allocation10 + $0x38] sm:$0xf]
    %v536 = vld [vmem:[#allocation10 + $0x3c] sm:$0xf]
    %v537 = vld [vmem:[%s10] sm:$0x1]
    %v539 = vlaneseq
    %v540 = vshrl.u32 %v539, 7
    %v541 = vsub.s32 0, %v540
    %v542 = vrot.slane %v537, %v541
    %v560 = vunpack.c.l.b16 %v521
    %v561 = vunpack.c.l.b16 %v522
    %v562 = vunpack.c.l.b16 %v523
    %v563 = vunpack.c.l.b16 %v524
    %v564 = vunpack.c.l.b16 %v525
    %v565 = vunpack.c.l.b16 %v526
    %v566 = vunpack.c.l.b16 %v527
    %v567 = vunpack.c.l.b16 %v528
    %v568 = vunpack.c.l.b16 %v529
    %v569 = vunpack.c.l.b16 %v530
    %v570 = vunpack.c.l.b16 %v531
    %v571 = vunpack.c.l.b16 %v532
    %v572 = vunpack.c.l.b16 %v533
    %v573 = vunpack.c.l.b16 %v534
    %v574 = vunpack.c.l.b16 %v535
    %v575 = vunpack.c.l.b16 %v536
    %v576 = vpack.c.b16 %v561, %v560
    %v577 = vpack.c.b16 %v563, %v562
    %v578 = vpack.c.b16 %v565, %v564
    %v579 = vpack.c.b16 %v567, %v566
    %v580 = vpack.c.b16 %v569, %v568
    %v581 = vpack.c.b16 %v571, %v570
    %v582 = vpack.c.b16 %v573, %v572
    %v583 = vpack.c.b16 %v575, %v574
    %592 = vmatprep.subr.bf16.mxu0 0
    %593 = vmatpush1.bf16.msra.mxu0 %v583
    %594 = vmatprep.subr.bf16.mxu0 0
    %595 = vmatpush1.bf16.msra.mxu0 %v582
    %596 = vmatprep.subr.bf16.mxu0 0
    %597 = vmatpush1.bf16.msra.mxu0 %v581
    %598 = vmatprep.subr.bf16.mxu0 0
    %599 = vmatpush1.bf16.msra.mxu0 %v580
    %600 = vmatprep.subr.bf16.mxu0 0
    %601 = vmatpush1.bf16.msra.mxu0 %v579
    %602 = vmatprep.subr.bf16.mxu0 0
    %603 = vmatpush1.bf16.msra.mxu0 %v578
    %604 = vmatprep.subr.bf16.mxu0 0
    %605 = vmatpush1.bf16.msra.mxu0 %v577
    %606 = vmatprep.subr.bf16.mxu0 0
    %607 = vmatpush1.bf16.msra.mxu0 %v576
    %608 = vmatprep.subr.bf16.mxu0 0
    %609 = vmatpush2.bf16.msra.mxu0 0
    %610 = vmatprep.subr.bf16.mxu0 0
    %611 = vmatpush2.bf16.msra.mxu0 0
    %612 = vmatprep.subr.bf16.mxu0 0
    %613 = vmatpush2.bf16.msra.mxu0 0
    %614 = vmatprep.subr.bf16.mxu0 0
    %615 = vmatpush2.bf16.msra.mxu0 0
    %616 = vmatprep.subr.bf16.mxu0 0
    %617 = vmatpush2.bf16.msra.mxu0 0
    %618 = vmatprep.subr.bf16.mxu0 0
    %619 = vmatpush2.bf16.msra.mxu0 0
    %620 = vmatprep.subr.bf16.mxu0 0
    %621 = vmatpush2.bf16.msra.mxu0 0
    %622 = vmatprep.subr.bf16.mxu0 0
    %623 = vmatpush2.bf16.msra.mxu0 0
    %624 = vmatprep.mubr.bf16.mxu0 0
    %625 = vmatmul.mubr.bf16.gmra.mxu0 %v360
    %v626 = vpop.f32.mrf.mxu0
    %v627 = vadd.f32 %v542, %v626
    %v628 = vpop.f32.mrf.mxu0
    %v629 = vpop.f32.mrf.mxu0
    %v630 = vadd.f32 %v542, %v629
    %v631 = vpop.f32.mrf.mxu0
    %632 = vmatprep.mubr.bf16.mxu0 0
    %633 = vmatmul.mubr.bf16.gmra.mxu0 %v361
    %v634 = vpop.f32.mrf.mxu0
    %v635 = vadd.f32 %v542, %v634
    %v636 = vpop.f32.mrf.mxu0
    %v637 = vpop.f32.mrf.mxu0
    %v638 = vadd.f32 %v542, %v637
    %v639 = vpop.f32.mrf.mxu0
    %640 = vmatprep.mubr.bf16.mxu0 0
    %641 = vmatmul.mubr.bf16.gmra.mxu0 %v362
    %v642 = vpop.f32.mrf.mxu0
    %v643 = vadd.f32 %v542, %v642
    %v644 = vpop.f32.mrf.mxu0
    %v645 = vpop.f32.mrf.mxu0
    %v646 = vadd.f32 %v542, %v645
    %v647 = vpop.f32.mrf.mxu0
    %648 = vmatprep.mubr.bf16.mxu0 0
    %649 = vmatmul.mubr.bf16.gmra.mxu0 %v363
    %v650 = vpop.f32.mrf.mxu0
    %v651 = vadd.f32 %v542, %v650
    %v652 = vpop.f32.mrf.mxu0
    %v653 = vpop.f32.mrf.mxu0
    %v654 = vadd.f32 %v542, %v653
    %v655 = vpop.f32.mrf.mxu0
    %656 = vmatprep.mubr.bf16.mxu0 0
    %657 = vmatmul.mubr.bf16.gmra.mxu0 %v364
    %v658 = vpop.f32.mrf.mxu0
    %v659 = vadd.f32 %v542, %v658
    %v660 = vpop.f32.mrf.mxu0
    %v661 = vpop.f32.mrf.mxu0
    %v662 = vadd.f32 %v542, %v661
    %v663 = vpop.f32.mrf.mxu0
    %664 = vmatprep.mubr.bf16.mxu0 0
    %665 = vmatmul.mubr.bf16.gmra.mxu0 %v365
    %v666 = vpop.f32.mrf.mxu0
    %v667 = vadd.f32 %v542, %v666
    %v668 = vpop.f32.mrf.mxu0
    %v669 = vpop.f32.mrf.mxu0
    %v670 = vadd.f32 %v542, %v669
    %v671 = vpop.f32.mrf.mxu0
    %672 = vmatprep.mubr.bf16.mxu0 0
    %673 = vmatmul.mubr.bf16.gmra.mxu0 %v366
    %v674 = vpop.f32.mrf.mxu0
    %v675 = vadd.f32 %v542, %v674
    %v676 = vpop.f32.mrf.mxu0
    %v677 = vpop.f32.mrf.mxu0
    %v678 = vadd.f32 %v542, %v677
    %v679 = vpop.f32.mrf.mxu0
    %680 = vmatprep.mubr.bf16.mxu0 0
    %681 = vmatmul.mubr.bf16.gmra.mxu0 %v367
    %v682 = vpop.f32.mrf.mxu0
    %v683 = vadd.f32 %v542, %v682
    %v684 = vpop.f32.mrf.mxu0
    %v685 = vpop.f32.mrf.mxu0
    %v686 = vadd.f32 %v542, %v685
    %v687 = vpop.f32.mrf.mxu0
    %688 = vdwg.mxu0
    %v689 = vld [vmem:[#allocation13] sm:$0xf]
    %v690 = vld [vmem:[#allocation13 + $0x4] sm:$0xf]
    %v691 = vld [vmem:[#allocation13 + $0x8] sm:$0xf]
    %v692 = vld [vmem:[#allocation13 + $0xc] sm:$0xf]
    %v693 = vld [vmem:[#allocation13 + $0x10] sm:$0xf]
    %v694 = vld [vmem:[#allocation13 + $0x14] sm:$0xf]
    %v695 = vld [vmem:[#allocation13 + $0x18] sm:$0xf]
    %v696 = vld [vmem:[#allocation13 + $0x1c] sm:$0xf]
    %v697 = vld [vmem:[#allocation13 + $0x20] sm:$0xf]
    %v698 = vld [vmem:[#allocation13 + $0x24] sm:$0xf]
    %v699 = vld [vmem:[#allocation13 + $0x28] sm:$0xf]
    %v700 = vld [vmem:[#allocation13 + $0x2c] sm:$0xf]
    %v701 = vld [vmem:[#allocation13 + $0x30] sm:$0xf]
    %v702 = vld [vmem:[#allocation13 + $0x34] sm:$0xf]
    %v703 = vld [vmem:[#allocation13 + $0x38] sm:$0xf]
    %v704 = vld [vmem:[#allocation13 + $0x3c] sm:$0xf]
    %v705 = vld [vmem:[%s13] sm:$0x1]
    %v707 = vlaneseq
    %v708 = vshrl.u32 %v707, 7
    %v709 = vsub.s32 0, %v708
    %v710 = vrot.slane %v705, %v709
    %v728 = vunpack.c.l.b16 %v689
    %v729 = vunpack.c.l.b16 %v690
    %v730 = vunpack.c.l.b16 %v691
    %v731 = vunpack.c.l.b16 %v692
    %v732 = vunpack.c.l.b16 %v693
    %v733 = vunpack.c.l.b16 %v694
    %v734 = vunpack.c.l.b16 %v695
    %v735 = vunpack.c.l.b16 %v696
    %v736 = vunpack.c.l.b16 %v697
    %v737 = vunpack.c.l.b16 %v698
    %v738 = vunpack.c.l.b16 %v699
    %v739 = vunpack.c.l.b16 %v700
    %v740 = vunpack.c.l.b16 %v701
    %v741 = vunpack.c.l.b16 %v702
    %v742 = vunpack.c.l.b16 %v703
    %v743 = vunpack.c.l.b16 %v704
    %v744 = vpack.c.b16 %v729, %v728
    %v745 = vpack.c.b16 %v731, %v730
    %v746 = vpack.c.b16 %v733, %v732
    %v747 = vpack.c.b16 %v735, %v734
    %v748 = vpack.c.b16 %v737, %v736
    %v749 = vpack.c.b16 %v739, %v738
    %v750 = vpack.c.b16 %v741, %v740
    %v751 = vpack.c.b16 %v743, %v742
    %760 = vmatprep.subr.bf16.mxu0 0
    %761 = vmatpush1.bf16.msra.mxu0 %v751
    %762 = vmatprep.subr.bf16.mxu0 0
    %763 = vmatpush1.bf16.msra.mxu0 %v750
    %764 = vmatprep.subr.bf16.mxu0 0
    %765 = vmatpush1.bf16.msra.mxu0 %v749
    %766 = vmatprep.subr.bf16.mxu0 0
    %767 = vmatpush1.bf16.msra.mxu0 %v748
    %768 = vmatprep.subr.bf16.mxu0 0
    %769 = vmatpush1.bf16.msra.mxu0 %v747
    %770 = vmatprep.subr.bf16.mxu0 0
    %771 = vmatpush1.bf16.msra.mxu0 %v746
    %772 = vmatprep.subr.bf16.mxu0 0
    %773 = vmatpush1.bf16.msra.mxu0 %v745
    %774 = vmatprep.subr.bf16.mxu0 0
    %775 = vmatpush1.bf16.msra.mxu0 %v744
    %776 = vmatprep.subr.bf16.mxu0 0
    %777 = vmatpush2.bf16.msra.mxu0 0
    %778 = vmatprep.subr.bf16.mxu0 0
    %779 = vmatpush2.bf16.msra.mxu0 0
    %780 = vmatprep.subr.bf16.mxu0 0
    %781 = vmatpush2.bf16.msra.mxu0 0
    %782 = vmatprep.subr.bf16.mxu0 0
    %783 = vmatpush2.bf16.msra.mxu0 0
    %784 = vmatprep.subr.bf16.mxu0 0
    %785 = vmatpush2.bf16.msra.mxu0 0
    %786 = vmatprep.subr.bf16.mxu0 0
    %787 = vmatpush2.bf16.msra.mxu0 0
    %788 = vmatprep.subr.bf16.mxu0 0
    %789 = vmatpush2.bf16.msra.mxu0 0
    %790 = vmatprep.subr.bf16.mxu0 0
    %791 = vmatpush2.bf16.msra.mxu0 0
    %792 = vmatprep.mubr.bf16.mxu0 0
    %793 = vmatmul.mubr.bf16.gmra.mxu0 %v360
    %v794 = vpop.f32.mrf.mxu0
    %v795 = vadd.f32 %v710, %v794
    %v796 = vpop.f32.mrf.mxu0
    %v797 = vpop.f32.mrf.mxu0
    %v798 = vadd.f32 %v710, %v797
    %v799 = vpop.f32.mrf.mxu0
    %800 = vmatprep.mubr.bf16.mxu0 0
    %801 = vmatmul.mubr.bf16.gmra.mxu0 %v361
    %v802 = vpop.f32.mrf.mxu0
    %v803 = vadd.f32 %v710, %v802
    %v804 = vpop.f32.mrf.mxu0
    %v805 = vpop.f32.mrf.mxu0
    %v806 = vadd.f32 %v710, %v805
    %v807 = vpop.f32.mrf.mxu0
    %808 = vmatprep.mubr.bf16.mxu0 0
    %809 = vmatmul.mubr.bf16.gmra.mxu0 %v362
    %v810 = vpop.f32.mrf.mxu0
    %v811 = vadd.f32 %v710, %v810
    %v812 = vpop.f32.mrf.mxu0
    %v813 = vpop.f32.mrf.mxu0
    %v814 = vadd.f32 %v710, %v813
    %v815 = vpop.f32.mrf.mxu0
    %816 = vmatprep.mubr.bf16.mxu0 0
    %817 = vmatmul.mubr.bf16.gmra.mxu0 %v363
    %v818 = vpop.f32.mrf.mxu0
    %v819 = vadd.f32 %v710, %v818
    %v820 = vpop.f32.mrf.mxu0
    %v821 = vpop.f32.mrf.mxu0
    %v822 = vadd.f32 %v710, %v821
    %v823 = vpop.f32.mrf.mxu0
    %824 = vmatprep.mubr.bf16.mxu0 0
    %825 = vmatmul.mubr.bf16.gmra.mxu0 %v364
    %v826 = vpop.f32.mrf.mxu0
    %v827 = vadd.f32 %v710, %v826
    %v828 = vpop.f32.mrf.mxu0
    %v829 = vpop.f32.mrf.mxu0
    %v830 = vadd.f32 %v710, %v829
    %v831 = vpop.f32.mrf.mxu0
    %832 = vmatprep.mubr.bf16.mxu0 0
    %833 = vmatmul.mubr.bf16.gmra.mxu0 %v365
    %v834 = vpop.f32.mrf.mxu0
    %v835 = vadd.f32 %v710, %v834
    %v836 = vpop.f32.mrf.mxu0
    %v837 = vpop.f32.mrf.mxu0
    %v838 = vadd.f32 %v710, %v837
    %v839 = vpop.f32.mrf.mxu0
    %840 = vmatprep.mubr.bf16.mxu0 0
    %841 = vmatmul.mubr.bf16.gmra.mxu0 %v366
    %v842 = vpop.f32.mrf.mxu0
    %v843 = vadd.f32 %v710, %v842
    %v844 = vpop.f32.mrf.mxu0
    %v845 = vpop.f32.mrf.mxu0
    %v846 = vadd.f32 %v710, %v845
    %v847 = vpop.f32.mrf.mxu0
    %848 = vmatprep.mubr.bf16.mxu0 0
    %849 = vmatmul.mubr.bf16.gmra.mxu0 %v367
    %v850 = vpop.f32.mrf.mxu0
    %v851 = vadd.f32 %v710, %v850
    %v852 = vpop.f32.mrf.mxu0
    %v853 = vpop.f32.mrf.mxu0
    %v854 = vadd.f32 %v710, %v853
    %v855 = vpop.f32.mrf.mxu0
    %856 = vdwg.mxu0
    %v857 = vld [vmem:[#allocation9] sm:$0xf]
    %v858 = vld [vmem:[#allocation9 + $0x4] sm:$0xf]
    %v859 = vld [vmem:[#allocation9 + $0x8] sm:$0xf]
    %v860 = vld [vmem:[#allocation9 + $0xc] sm:$0xf]
    %v861 = vld [vmem:[#allocation9 + $0x10] sm:$0xf]
    %v862 = vld [vmem:[#allocation9 + $0x14] sm:$0xf]
    %v863 = vld [vmem:[#allocation9 + $0x18] sm:$0xf]
    %v864 = vld [vmem:[#allocation9 + $0x1c] sm:$0xf]
    %v865 = vld [vmem:[#allocation9 + $0x20] sm:$0xf]
    %v866 = vld [vmem:[#allocation9 + $0x24] sm:$0xf]
    %v867 = vld [vmem:[#allocation9 + $0x28] sm:$0xf]
    %v868 = vld [vmem:[#allocation9 + $0x2c] sm:$0xf]
    %v869 = vld [vmem:[#allocation9 + $0x30] sm:$0xf]
    %v870 = vld [vmem:[#allocation9 + $0x34] sm:$0xf]
    %v871 = vld [vmem:[#allocation9 + $0x38] sm:$0xf]
    %v872 = vld [vmem:[#allocation9 + $0x3c] sm:$0xf]
    %v873 = vld [vmem:[#allocation12] sm:$0xf]
    %v874 = vld [vmem:[#allocation12 + $0x4] sm:$0xf]
    %v875 = vld [vmem:[#allocation12 + $0x8] sm:$0xf]
    %v876 = vld [vmem:[#allocation12 + $0xc] sm:$0xf]
    %v877 = vld [vmem:[#allocation12 + $0x10] sm:$0xf]
    %v878 = vld [vmem:[#allocation12 + $0x14] sm:$0xf]
    %v879 = vld [vmem:[#allocation12 + $0x18] sm:$0xf]
    %v880 = vld [vmem:[#allocation12 + $0x1c] sm:$0xf]
    %v881 = vld [vmem:[#allocation12 + $0x20] sm:$0xf]
    %v882 = vld [vmem:[#allocation12 + $0x24] sm:$0xf]
    %v883 = vld [vmem:[#allocation12 + $0x28] sm:$0xf]
    %v884 = vld [vmem:[#allocation12 + $0x2c] sm:$0xf]
    %v885 = vld [vmem:[#allocation12 + $0x30] sm:$0xf]
    %v886 = vld [vmem:[#allocation12 + $0x34] sm:$0xf]
    %v887 = vld [vmem:[#allocation12 + $0x38] sm:$0xf]
    %v888 = vld [vmem:[#allocation12 + $0x3c] sm:$0xf]
    %v889 = vld [vmem:[#allocation15] sm:$0xf]
    %v890 = vld [vmem:[#allocation15 + $0x4] sm:$0xf]
    %v891 = vld [vmem:[#allocation15 + $0x8] sm:$0xf]
    %v892 = vld [vmem:[#allocation15 + $0xc] sm:$0xf]
    %v893 = vld [vmem:[#allocation15 + $0x10] sm:$0xf]
    %v894 = vld [vmem:[#allocation15 + $0x14] sm:$0xf]
    %v895 = vld [vmem:[#allocation15 + $0x18] sm:$0xf]
    %v896 = vld [vmem:[#allocation15 + $0x1c] sm:$0xf]
    %v897 = vld [vmem:[#allocation15 + $0x20] sm:$0xf]
    %v898 = vld [vmem:[#allocation15 + $0x24] sm:$0xf]
    %v899 = vld [vmem:[#allocation15 + $0x28] sm:$0xf]
    %v900 = vld [vmem:[#allocation15 + $0x2c] sm:$0xf]
    %v901 = vld [vmem:[#allocation15 + $0x30] sm:$0xf]
    %v902 = vld [vmem:[#allocation15 + $0x34] sm:$0xf]
    %v903 = vld [vmem:[#allocation15 + $0x38] sm:$0xf]
    %v904 = vld [vmem:[#allocation15 + $0x3c] sm:$0xf]
    %v921 = vunpack.c.l.b16 %v873
    %v922 = vunpack.c.l.b16 %v874
    %v923 = vunpack.c.l.b16 %v875
    %v924 = vunpack.c.l.b16 %v876
    %v925 = vunpack.c.l.b16 %v877
    %v926 = vunpack.c.l.b16 %v878
    %v927 = vunpack.c.l.b16 %v879
    %v928 = vunpack.c.l.b16 %v880
    %v929 = vunpack.c.l.b16 %v881
    %v930 = vunpack.c.l.b16 %v882
    %v931 = vunpack.c.l.b16 %v883
    %v932 = vunpack.c.l.b16 %v884
    %v933 = vunpack.c.l.b16 %v885
    %v934 = vunpack.c.l.b16 %v886
    %v935 = vunpack.c.l.b16 %v887
    %v936 = vunpack.c.l.b16 %v888
    %v937 = vpack.c.b16 %v922, %v921
    %v938 = vpack.c.b16 %v924, %v923
    %v939 = vpack.c.b16 %v926, %v925
    %v940 = vpack.c.b16 %v928, %v927
    %v941 = vpack.c.b16 %v930, %v929
    %v942 = vpack.c.b16 %v932, %v931
    %v943 = vpack.c.b16 %v934, %v933
    %v944 = vpack.c.b16 %v936, %v935
    %953 = vmatprep.subr.bf16.mxu0 0
    %954 = vmatpush1.bf16.msra.mxu0 %v944
    %955 = vmatprep.subr.bf16.mxu0 0
    %956 = vmatpush1.bf16.msra.mxu0 %v943
    %957 = vmatprep.subr.bf16.mxu0 0
    %958 = vmatpush1.bf16.msra.mxu0 %v942
    %959 = vmatprep.subr.bf16.mxu0 0
    %960 = vmatpush1.bf16.msra.mxu0 %v941
    %961 = vmatprep.subr.bf16.mxu0 0
    %962 = vmatpush1.bf16.msra.mxu0 %v940
    %963 = vmatprep.subr.bf16.mxu0 0
    %964 = vmatpush1.bf16.msra.mxu0 %v939
    %965 = vmatprep.subr.bf16.mxu0 0
    %966 = vmatpush1.bf16.msra.mxu0 %v938
    %967 = vmatprep.subr.bf16.mxu0 0
    %968 = vmatpush1.bf16.msra.mxu0 %v937
    %969 = vmatprep.subr.bf16.mxu0 0
    %970 = vmatpush2.bf16.msra.mxu0 0
    %971 = vmatprep.subr.bf16.mxu0 0
    %972 = vmatpush2.bf16.msra.mxu0 0
    %973 = vmatprep.subr.bf16.mxu0 0
    %974 = vmatpush2.bf16.msra.mxu0 0
    %975 = vmatprep.subr.bf16.mxu0 0
    %976 = vmatpush2.bf16.msra.mxu0 0
    %977 = vmatprep.subr.bf16.mxu0 0
    %978 = vmatpush2.bf16.msra.mxu0 0
    %979 = vmatprep.subr.bf16.mxu0 0
    %980 = vmatpush2.bf16.msra.mxu0 0
    %981 = vmatprep.subr.bf16.mxu0 0
    %982 = vmatpush2.bf16.msra.mxu0 0
    %983 = vmatprep.subr.bf16.mxu0 0
    %984 = vmatpush2.bf16.msra.mxu0 0
    %985 = vmatprep.mubr.bf16.mxu0 0
    %986 = vmatmul.mubr.bf16.gmra.mxu0 0
    %v987 = vpop.f32.mrf.mxu0
    %v988 = vadd.f32 0.0, %v987
    %v989 = vpop.f32.mrf.mxu0
    %v990 = vpop.f32.mrf.mxu0
    %v991 = vadd.f32 0.0, %v990
    %v992 = vpop.f32.mrf.mxu0
    %993 = vmatprep.mubr.bf16.mxu0 0
    %994 = vmatmul.mubr.bf16.gmra.mxu0 0
    %v995 = vpop.f32.mrf.mxu0
    %v996 = vadd.f32 0.0, %v995
    %v997 = vpop.f32.mrf.mxu0
    %v998 = vpop.f32.mrf.mxu0
    %v999 = vadd.f32 0.0, %v998
    %v1000 = vpop.f32.mrf.mxu0
    %1001 = vmatprep.mubr.bf16.mxu0 0
    %1002 = vmatmul.mubr.bf16.gmra.mxu0 0
    %v1003 = vpop.f32.mrf.mxu0
    %v1004 = vadd.f32 0.0, %v1003
    %v1005 = vpop.f32.mrf.mxu0
    %v1006 = vpop.f32.mrf.mxu0
    %v1007 = vadd.f32 0.0, %v1006
    %v1008 = vpop.f32.mrf.mxu0
    %1009 = vmatprep.mubr.bf16.mxu0 0
    %1010 = vmatmul.mubr.bf16.gmra.mxu0 0
    %v1011 = vpop.f32.mrf.mxu0
    %v1012 = vadd.f32 0.0, %v1011
    %v1013 = vpop.f32.mrf.mxu0
    %v1014 = vpop.f32.mrf.mxu0
    %v1015 = vadd.f32 0.0, %v1014
    %v1016 = vpop.f32.mrf.mxu0
    %1017 = vmatprep.mubr.bf16.mxu0 0
    %1018 = vmatmul.mubr.bf16.gmra.mxu0 0
    %v1019 = vpop.f32.mrf.mxu0
    %v1020 = vadd.f32 0.0, %v1019
    %v1021 = vpop.f32.mrf.mxu0
    %v1022 = vpop.f32.mrf.mxu0
    %v1023 = vadd.f32 0.0, %v1022
    %v1024 = vpop.f32.mrf.mxu0
    %1025 = vmatprep.mubr.bf16.mxu0 0
    %1026 = vmatmul.mubr.bf16.gmra.mxu0 0
    %v1027 = vpop.f32.mrf.mxu0
    %v1028 = vadd.f32 0.0, %v1027
    %v1029 = vpop.f32.mrf.mxu0
    %v1030 = vpop.f32.mrf.mxu0
    %v1031 = vadd.f32 0.0, %v1030
    %v1032 = vpop.f32.mrf.mxu0
    %1033 = vmatprep.mubr.bf16.mxu0 0
    %1034 = vmatmul.mubr.bf16.gmra.mxu0 0
    %v1035 = vpop.f32.mrf.mxu0
    %v1036 = vadd.f32 0.0, %v1035
    %v1037 = vpop.f32.mrf.mxu0
    %v1038 = vpop.f32.mrf.mxu0
    %v1039 = vadd.f32 0.0, %v1038
    %v1040 = vpop.f32.mrf.mxu0
    %1041 = vmatprep.mubr.bf16.mxu0 0
    %1042 = vmatmul.mubr.bf16.gmra.mxu0 0
    %v1043 = vpop.f32.mrf.mxu0
    %v1044 = vadd.f32 0.0, %v1043
    %v1045 = vpop.f32.mrf.mxu0
    %v1046 = vpop.f32.mrf.mxu0
    %v1047 = vadd.f32 0.0, %v1046
    %v1048 = vpop.f32.mrf.mxu0
    %1049 = vdwg.mxu0
    %v1050 = vpack.c.bf16 %v991, %v988
    %v1051 = vpack.c.bf16 %v999, %v996
    %v1052 = vpack.c.bf16 %v1007, %v1004
    %v1053 = vpack.c.bf16 %v1015, %v1012
    %v1054 = vpack.c.bf16 %v1023, %v1020
    %v1055 = vpack.c.bf16 %v1031, %v1028
    %v1056 = vpack.c.bf16 %v1039, %v1036
    %v1057 = vpack.c.bf16 %v1047, %v1044
    %s1058 = smul.u32 2, 16
    %s1059 = smul.u32 %s1058, 1
    %s1060 = sshll.u32 %s1059, 4
    %1061 = dma.done [#allocation3], %s1060
    %s1062 = scalar_lea.hbm %s2, 512
    %s1063 = scalar_lea.vmem [#allocation2], 32
    %s1064 = scalar_lea.sflag [#allocation3], 1
    // Predicated region
    $region106: #{tpu_custom_call.1} parent=1 // pred_check
      _
    $region107: #{tpu_custom_call.1} parent=1 // pred_check_branch
      %1066 = sbr.rel target = $region109
    $region108: #{tpu_custom_call.1} parent=1 // pred_region
      %1067 = sst [smem:[#allocation24]] [#allocation27]
      %1068 = sst [smem:[#allocation25]] [#allocation26]
    $region109: #{tpu_custom_call.1} parent=1 // pred_fallthru
      _
    %1070 = shalt.err (0)
    %s1072 = sshll.u32 %s1063, 4
    %s1073 = int_to_ptr.vmem [resolvable:$true] %s1072
    %1075 = dma.hbm_to_vmem [thread:$0]  %s1062, 512, %s1073, %s1064
    %v1076 = vld [vmem:[#allocation2] sm:$0xff]
    %v1077 = vld [vmem:[#allocation2 + $0x8] sm:$0xff]
    %v1078 = vld [vmem:[#allocation2 + $0x10] sm:$0xff]
    %v1079 = vld [vmem:[#allocation2 + $0x18] sm:$0xff]
    %v1080 = vunpack.c.l.s8.bf16 %v1076
    %v1081 = vunpack.c.h.s8.bf16 %v1076
    %v1082 = vunpack.c.l.s8.bf16 %v1077
    %v1083 = vunpack.c.h.s8.bf16 %v1077
    %v1084 = vunpack.c.l.s8.bf16 %v1078
    %v1085 = vunpack.c.h.s8.bf16 %v1078
    %v1086 = vunpack.c.l.s8.bf16 %v1079
    %v1087 = vunpack.c.h.s8.bf16 %v1079
    %1088 = vmatprep.subr.bf16.mxu0 %v1057
    %1089 = vmatpush1.bf16.msra.mxu0 0
    %1090 = vmatprep.subr.bf16.mxu0 %v1056
    %1091 = vmatpush1.bf16.msra.mxu0 0
    %1092 = vmatprep.subr.bf16.mxu0 %v1055
    %1093 = vmatpush1.bf16.msra.mxu0 0
    %1094 = vmatprep.subr.bf16.mxu0 %v1054
    %1095 = vmatpush1.bf16.msra.mxu0 0
    %1096 = vmatprep.subr.bf16.mxu0 %v1053
    %1097 = vmatpush1.bf16.msra.mxu0 0
    %1098 = vmatprep.subr.bf16.mxu0 %v1052
    %1099 = vmatpush1.bf16.msra.mxu0 0
    %1100 = vmatprep.subr.bf16.mxu0 %v1051
    %1101 = vmatpush1.bf16.msra.mxu0 0
    %1102 = vmatprep.subr.bf16.mxu0 %v1050
    %1103 = vmatpush1.bf16.msra.mxu0 0
    %1104 = vmatprep.subr.bf16.mxu0 0
    %1105 = vmatpush2.bf16.msra.mxu0 0
    %1106 = vmatprep.subr.bf16.mxu0 0
    %1107 = vmatpush2.bf16.msra.mxu0 0
    %1108 = vmatprep.subr.bf16.mxu0 0
    %1109 = vmatpush2.bf16.msra.mxu0 0
    %1110 = vmatprep.subr.bf16.mxu0 0
    %1111 = vmatpush2.bf16.msra.mxu0 0
    %1112 = vmatprep.subr.bf16.mxu0 0
    %1113 = vmatpush2.bf16.msra.mxu0 0
    %1114 = vmatprep.subr.bf16.mxu0 0
    %1115 = vmatpush2.bf16.msra.mxu0 0
    %1116 = vmatprep.subr.bf16.mxu0 0
    %1117 = vmatpush2.bf16.msra.mxu0 0
    %1118 = vmatprep.subr.bf16.mxu0 0
    %1119 = vmatpush2.bf16.msra.mxu0 0
    %1120 = vmatprep.mubr.bf16.mxu0 0
    %1121 = vmatmul.mubr.bf16.gmra.mxu0 %v1080
    %v1122 = vpop.f32.mrf.mxu0
    %v1123 = vadd.f32 0.0, %v1122
    %v1124 = vpop.f32.mrf.mxu0
    %v1125 = vadd.f32 0.0, %v1124
    %v1126 = vpop.f32.mrf.mxu0
    %v1127 = vadd.f32 0.0, %v1126
    %v1128 = vpop.f32.mrf.mxu0
    %v1129 = vadd.f32 0.0, %v1128
    %1130 = vmatprep.mubr.bf16.mxu0 0
    %1131 = vmatmul.mubr.bf16.gmra.mxu0 %v1081
    %v1132 = vpop.f32.mrf.mxu0
    %v1133 = vadd.f32 0.0, %v1132
    %v1134 = vpop.f32.mrf.mxu0
    %v1135 = vadd.f32 0.0, %v1134
    %v1136 = vpop.f32.mrf.mxu0
    %v1137 = vadd.f32 0.0, %v1136
    %v1138 = vpop.f32.mrf.mxu0
    %v1139 = vadd.f32 0.0, %v1138
    %1140 = vmatprep.mubr.bf16.mxu0 0
    %1141 = vmatmul.mubr.bf16.gmra.mxu0 %v1082
    %v1142 = vpop.f32.mrf.mxu0
    %v1143 = vadd.f32 0.0, %v1142
    %v1144 = vpop.f32.mrf.mxu0
    %v1145 = vadd.f32 0.0, %v1144
    %v1146 = vpop.f32.mrf.mxu0
    %v1147 = vadd.f32 0.0, %v1146
    %v1148 = vpop.f32.mrf.mxu0
    %v1149 = vadd.f32 0.0, %v1148
    %1150 = vmatprep.mubr.bf16.mxu0 0
    %1151 = vmatmul.mubr.bf16.gmra.mxu0 %v1083
    %v1152 = vpop.f32.mrf.mxu0
    %v1153 = vadd.f32 0.0, %v1152
    %v1154 = vpop.f32.mrf.mxu0
    %v1155 = vadd.f32 0.0, %v1154
    %v1156 = vpop.f32.mrf.mxu0
    %v1157 = vadd.f32 0.0, %v1156
    %v1158 = vpop.f32.mrf.mxu0
    %v1159 = vadd.f32 0.0, %v1158
    %1160 = vmatprep.mubr.bf16.mxu0 0
    %1161 = vmatmul.mubr.bf16.gmra.mxu0 %v1084
    %v1162 = vpop.f32.mrf.mxu0
    %v1163 = vadd.f32 0.0, %v1162
    %v1164 = vpop.f32.mrf.mxu0
    %v1165 = vadd.f32 0.0, %v1164
    %v1166 = vpop.f32.mrf.mxu0
    %v1167 = vadd.f32 0.0, %v1166
    %v1168 = vpop.f32.mrf.mxu0
    %v1169 = vadd.f32 0.0, %v1168
    %1170 = vmatprep.mubr.bf16.mxu0 0
    %1171 = vmatmul.mubr.bf16.gmra.mxu0 %v1085
    %v1172 = vpop.f32.mrf.mxu0
    %v1173 = vadd.f32 0.0, %v1172
    %v1174 = vpop.f32.mrf.mxu0
    %v1175 = vadd.f32 0.0, %v1174
    %v1176 = vpop.f32.mrf.mxu0
    %v1177 = vadd.f32 0.0, %v1176
    %v1178 = vpop.f32.mrf.mxu0
    %v1179 = vadd.f32 0.0, %v1178
    %1180 = vmatprep.mubr.bf16.mxu0 0
    %1181 = vmatmul.mubr.bf16.gmra.mxu0 %v1086
    %v1182 = vpop.f32.mrf.mxu0
    %v1183 = vadd.f32 0.0, %v1182
    %v1184 = vpop.f32.mrf.mxu0
    %v1185 = vadd.f32 0.0, %v1184
    %v1186 = vpop.f32.mrf.mxu0
    %v1187 = vadd.f32 0.0, %v1186
    %v1188 = vpop.f32.mrf.mxu0
    %v1189 = vadd.f32 0.0, %v1188
    %1190 = vmatprep.mubr.bf16.mxu0 0
    %1191 = vmatmul.mubr.bf16.gmra.mxu0 %v1087
    %v1192 = vpop.f32.mrf.mxu0
    %v1193 = vadd.f32 0.0, %v1192
    %v1194 = vpop.f32.mrf.mxu0
    %v1195 = vadd.f32 0.0, %v1194
    %v1196 = vpop.f32.mrf.mxu0
    %v1197 = vadd.f32 0.0, %v1196
    %v1198 = vpop.f32.mrf.mxu0
    %v1199 = vadd.f32 0.0, %v1198
    %1200 = vdwg.mxu0
    %v1201 = vadd.f32 %v1123, 0.0
    %v1202 = vadd.f32 %v1127, 0.0
    %v1203 = vadd.f32 %v1133, 0.0
    %v1204 = vadd.f32 %v1137, 0.0
    %v1205 = vadd.f32 %v1143, 0.0
    %v1206 = vadd.f32 %v1147, 0.0
    %v1207 = vadd.f32 %v1153, 0.0
    %v1208 = vadd.f32 %v1157, 0.0
    %v1209 = vadd.f32 %v1163, 0.0
    %v1210 = vadd.f32 %v1167, 0.0
    %v1211 = vadd.f32 %v1173, 0.0
    %v1212 = vadd.f32 %v1177, 0.0
    %v1213 = vadd.f32 %v1183, 0.0
    %v1214 = vadd.f32 %v1187, 0.0
    %v1215 = vadd.f32 %v1193, 0.0
    %v1216 = vadd.f32 %v1197, 0.0
    %v1217 = vadd.f32 %v627, %v1125
    %v1218 = vadd.f32 %v630, %v1129
    %v1219 = vadd.f32 %v635, %v1135
    %v1220 = vadd.f32 %v638, %v1139
    %v1221 = vadd.f32 %v643, %v1145
    %v1222 = vadd.f32 %v646, %v1149
    %v1223 = vadd.f32 %v651, %v1155
    %v1224 = vadd.f32 %v654, %v1159
    %v1225 = vadd.f32 %v659, %v1165
    %v1226 = vadd.f32 %v662, %v1169
    %v1227 = vadd.f32 %v667, %v1175
    %v1228 = vadd.f32 %v670, %v1179
    %v1229 = vadd.f32 %v675, %v1185
    %v1230 = vadd.f32 %v678, %v1189
    %v1231 = vadd.f32 %v683, %v1195
    %v1232 = vadd.f32 %v686, %v1199
    %v1233 = vxor.u32 %v1217, 2147483648
    %v1234 = vxor.u32 %v1218, 2147483648
    %v1235 = vxor.u32 %v1219, 2147483648
    %v1236 = vxor.u32 %v1220, 2147483648
    %v1237 = vxor.u32 %v1221, 2147483648
    %v1238 = vxor.u32 %v1222, 2147483648
    %v1239 = vxor.u32 %v1223, 2147483648
    %v1240 = vxor.u32 %v1224, 2147483648
    %v1241 = vxor.u32 %v1225, 2147483648
    %v1242 = vxor.u32 %v1226, 2147483648
    %v1243 = vxor.u32 %v1227, 2147483648
    %v1244 = vxor.u32 %v1228, 2147483648
    %v1245 = vxor.u32 %v1229, 2147483648
    %v1246 = vxor.u32 %v1230, 2147483648
    %v1247 = vxor.u32 %v1231, 2147483648
    %v1248 = vxor.u32 %v1232, 2147483648
    %v1249 = vmul.f32 %v1233, 1.442695
    %v1250 = vpow.pop %v1249
    %v1251 = vmul.f32 %v1234, 1.442695
    %v1252 = vpow.pop %v1251
    %v1253 = vmul.f32 %v1235, 1.442695
    %v1254 = vpow.pop %v1253
    %v1255 = vmul.f32 %v1236, 1.442695
    %v1256 = vpow.pop %v1255
    %v1257 = vmul.f32 %v1237, 1.442695
    %v1258 = vpow.pop %v1257
    %v1259 = vmul.f32 %v1238, 1.442695
    %v1260 = vpow.pop %v1259
    %v1261 = vmul.f32 %v1239, 1.442695
    %v1262 = vpow.pop %v1261
    %v1263 = vmul.f32 %v1240, 1.442695
    %v1264 = vpow.pop %v1263
    %v1265 = vmul.f32 %v1241, 1.442695
    %v1266 = vpow.pop %v1265
    %v1267 = vmul.f32 %v1242, 1.442695
    %v1268 = vpow.pop %v1267
    %v1269 = vmul.f32 %v1243, 1.442695
    %v1270 = vpow.pop %v1269
    %v1271 = vmul.f32 %v1244, 1.442695
    %v1272 = vpow.pop %v1271
    %v1273 = vmul.f32 %v1245, 1.442695
    %v1274 = vpow.pop %v1273
    %v1275 = vmul.f32 %v1246, 1.442695
    %v1276 = vpow.pop %v1275
    %v1277 = vmul.f32 %v1247, 1.442695
    %v1278 = vpow.pop %v1277
    %v1279 = vmul.f32 %v1248, 1.442695
    %v1280 = vpow.pop %v1279
    %v1281 = vadd.f32 %v1250, 1.0
    %v1282 = vadd.f32 %v1252, 1.0
    %v1283 = vadd.f32 %v1254, 1.0
    %v1284 = vadd.f32 %v1256, 1.0
    %v1285 = vadd.f32 %v1258, 1.0
    %v1286 = vadd.f32 %v1260, 1.0
    %v1287 = vadd.f32 %v1262, 1.0
    %v1288 = vadd.f32 %v1264, 1.0
    %v1289 = vadd.f32 %v1266, 1.0
    %v1290 = vadd.f32 %v1268, 1.0
    %v1291 = vadd.f32 %v1270, 1.0
    %v1292 = vadd.f32 %v1272, 1.0
    %v1293 = vadd.f32 %v1274, 1.0
    %v1294 = vadd.f32 %v1276, 1.0
    %v1295 = vadd.f32 %v1278, 1.0
    %v1296 = vadd.f32 %v1280, 1.0
    %v1297 = vrcp.pop %v1281
    %v1298 = vmul.f32 1.0, %v1297
    %v1299 = vrcp.pop %v1282
    %v1300 = vmul.f32 1.0, %v1299
    %v1301 = vrcp.pop %v1283
    %v1302 = vmul.f32 1.0, %v1301
    %v1303 = vrcp.pop %v1284
    %v1304 = vmul.f32 1.0, %v1303
    %v1305 = vrcp.pop %v1285
    %v1306 = vmul.f32 1.0, %v1305
    %v1307 = vrcp.pop %v1286
    %v1308 = vmul.f32 1.0, %v1307
    %v1309 = vrcp.pop %v1287
    %v1310 = vmul.f32 1.0, %v1309
    %v1311 = vrcp.pop %v1288
    %v1312 = vmul.f32 1.0, %v1311
    %v1313 = vrcp.pop %v1289
    %v1314 = vmul.f32 1.0, %v1313
    %v1315 = vrcp.pop %v1290
    %v1316 = vmul.f32 1.0, %v1315
    %v1317 = vrcp.pop %v1291
    %v1318 = vmul.f32 1.0, %v1317
    %v1319 = vrcp.pop %v1292
    %v1320 = vmul.f32 1.0, %v1319
    %v1321 = vrcp.pop %v1293
    %v1322 = vmul.f32 1.0, %v1321
    %v1323 = vrcp.pop %v1294
    %v1324 = vmul.f32 1.0, %v1323
    %v1325 = vrcp.pop %v1295
    %v1326 = vmul.f32 1.0, %v1325
    %v1327 = vrcp.pop %v1296
    %v1328 = vmul.f32 1.0, %v1327
    %v1329 = vmul.f32 %v1298, %v1123
    %v1330 = vmul.f32 %v1300, %v1127
    %v1331 = vmul.f32 %v1302, %v1133
    %v1332 = vmul.f32 %v1304, %v1137
    %v1333 = vmul.f32 %v1306, %v1143
    %v1334 = vmul.f32 %v1308, %v1147
    %v1335 = vmul.f32 %v1310, %v1153
    %v1336 = vmul.f32 %v1312, %v1157
    %v1337 = vmul.f32 %v1314, %v1163
    %v1338 = vmul.f32 %v1316, %v1167
    %v1339 = vmul.f32 %v1318, %v1173
    %v1340 = vmul.f32 %v1320, %v1177
    %v1341 = vmul.f32 %v1322, %v1183
    %v1342 = vmul.f32 %v1324, %v1187
    %v1343 = vmul.f32 %v1326, %v1193
    %v1344 = vmul.f32 %v1328, %v1197
    %v1345 = vadd.f32 %v1329, 0.0
    %v1346 = vadd.f32 %v1330, 0.0
    %v1347 = vadd.f32 %v1331, 0.0
    %v1348 = vadd.f32 %v1332, 0.0
    %v1349 = vadd.f32 %v1333, 0.0
    %v1350 = vadd.f32 %v1334, 0.0
    %v1351 = vadd.f32 %v1335, 0.0
    %v1352 = vadd.f32 %v1336, 0.0
    %v1353 = vadd.f32 %v1337, 0.0
    %v1354 = vadd.f32 %v1338, 0.0
    %v1355 = vadd.f32 %v1339, 0.0
    %v1356 = vadd.f32 %v1340, 0.0
    %v1357 = vadd.f32 %v1341, 0.0
    %v1358 = vadd.f32 %v1342, 0.0
    %v1359 = vadd.f32 %v1343, 0.0
    %v1360 = vadd.f32 %v1344, 0.0
    %s1361 = sshll.u32 %s1059, 4
    %1362 = dma.done %s1064, %s1361
    %s1363 = scalar_lea.hbm %s2, 1024
    // Predicated region
    $region110: #{tpu_custom_call.1} parent=1 // pred_check
      _
    $region111: #{tpu_custom_call.1} parent=1 // pred_check_branch
      %1365 = sbr.rel target = $region113
    $region112: #{tpu_custom_call.1} parent=1 // pred_region
      %1366 = sst [smem:[#allocation24]] [#allocation29]
      %1367 = sst [smem:[#allocation25]] [#allocation28]
    $region113: #{tpu_custom_call.1} parent=1 // pred_fallthru
      _
    %1369 = shalt.err (0)
    %s1371 = sshll.u32 [#allocation2], 4
    %s1372 = int_to_ptr.vmem [resolvable:$true] %s1371
    %1374 = dma.hbm_to_vmem [thread:$0]  %s1363, 512, %s1372, [#allocation3]
    %v1375 = vld [vmem:[%s1063] sm:$0xff]
    %v1376 = vld [vmem:[%s1063 + $0x8] sm:$0xff]
    %v1377 = vld [vmem:[%s1063 + $0x10] sm:$0xff]
    %v1378 = vld [vmem:[%s1063 + $0x18] sm:$0xff]
    %v1379 = vunpack.c.l.s8.bf16 %v1375
    %v1380 = vunpack.c.h.s8.bf16 %v1375
    %v1381 = vunpack.c.l.s8.bf16 %v1376
    %v1382 = vunpack.c.h.s8.bf16 %v1376
    %v1383 = vunpack.c.l.s8.bf16 %v1377
    %v1384 = vunpack.c.h.s8.bf16 %v1377
    %v1385 = vunpack.c.l.s8.bf16 %v1378
    %v1386 = vunpack.c.h.s8.bf16 %v1378
    %1387 = vmatprep.subr.bf16.mxu0 %v1057
    %1388 = vmatpush1.bf16.msra.mxu0 0
    %1389 = vmatprep.subr.bf16.mxu0 %v1056
    %1390 = vmatpush1.bf16.msra.mxu0 0
    %1391 = vmatprep.subr.bf16.mxu0 %v1055
    %1392 = vmatpush1.bf16.msra.mxu0 0
    %1393 = vmatprep.subr.bf16.mxu0 %v1054
    %1394 = vmatpush1.bf16.msra.mxu0 0
    %1395 = vmatprep.subr.bf16.mxu0 %v1053
    %1396 = vmatpush1.bf16.msra.mxu0 0
    %1397 = vmatprep.subr.bf16.mxu0 %v1052
    %1398 = vmatpush1.bf16.msra.mxu0 0
    %1399 = vmatprep.subr.bf16.mxu0 %v1051
    %1400 = vmatpush1.bf16.msra.mxu0 0
    %1401 = vmatprep.subr.bf16.mxu0 %v1050
    %1402 = vmatpush1.bf16.msra.mxu0 0
    %1403 = vmatprep.subr.bf16.mxu0 0
    %1404 = vmatpush2.bf16.msra.mxu0 0
    %1405 = vmatprep.subr.bf16.mxu0 0
    %1406 = vmatpush2.bf16.msra.mxu0 0
    %1407 = vmatprep.subr.bf16.mxu0 0
    %1408 = vmatpush2.bf16.msra.mxu0 0
    %1409 = vmatprep.subr.bf16.mxu0 0
    %1410 = vmatpush2.bf16.msra.mxu0 0
    %1411 = vmatprep.subr.bf16.mxu0 0
    %1412 = vmatpush2.bf16.msra.mxu0 0
    %1413 = vmatprep.subr.bf16.mxu0 0
    %1414 = vmatpush2.bf16.msra.mxu0 0
    %1415 = vmatprep.subr.bf16.mxu0 0
    %1416 = vmatpush2.bf16.msra.mxu0 0
    %1417 = vmatprep.subr.bf16.mxu0 0
    %1418 = vmatpush2.bf16.msra.mxu0 0
    %1419 = vmatprep.mubr.bf16.mxu0 0
    %1420 = vmatmul.mubr.bf16.gmra.mxu0 %v1379
    %v1421 = vpop.f32.mrf.mxu0
    %v1422 = vadd.f32 0.0, %v1421
    %v1423 = vpop.f32.mrf.mxu0
    %v1424 = vadd.f32 0.0, %v1423
    %v1425 = vpop.f32.mrf.mxu0
    %v1426 = vadd.f32 0.0, %v1425
    %v1427 = vpop.f32.mrf.mxu0
    %v1428 = vadd.f32 0.0, %v1427
    %1429 = vmatprep.mubr.bf16.mxu0 0
    %1430 = vmatmul.mubr.bf16.gmra.mxu0 %v1380
    %v1431 = vpop.f32.mrf.mxu0
    %v1432 = vadd.f32 0.0, %v1431
    %v1433 = vpop.f32.mrf.mxu0
    %v1434 = vadd.f32 0.0, %v1433
    %v1435 = vpop.f32.mrf.mxu0
    %v1436 = vadd.f32 0.0, %v1435
    %v1437 = vpop.f32.mrf.mxu0
    %v1438 = vadd.f32 0.0, %v1437
    %1439 = vmatprep.mubr.bf16.mxu0 0
    %1440 = vmatmul.mubr.bf16.gmra.mxu0 %v1381
    %v1441 = vpop.f32.mrf.mxu0
    %v1442 = vadd.f32 0.0, %v1441
    %v1443 = vpop.f32.mrf.mxu0
    %v1444 = vadd.f32 0.0, %v1443
    %v1445 = vpop.f32.mrf.mxu0
    %v1446 = vadd.f32 0.0, %v1445
    %v1447 = vpop.f32.mrf.mxu0
    %v1448 = vadd.f32 0.0, %v1447
    %1449 = vmatprep.mubr.bf16.mxu0 0
    %1450 = vmatmul.mubr.bf16.gmra.mxu0 %v1382
    %v1451 = vpop.f32.mrf.mxu0
    %v1452 = vadd.f32 0.0, %v1451
    %v1453 = vpop.f32.mrf.mxu0
    %v1454 = vadd.f32 0.0, %v1453
    %v1455 = vpop.f32.mrf.mxu0
    %v1456 = vadd.f32 0.0, %v1455
    %v1457 = vpop.f32.mrf.mxu0
    %v1458 = vadd.f32 0.0, %v1457
    %1459 = vmatprep.mubr.bf16.mxu0 0
    %1460 = vmatmul.mubr.bf16.gmra.mxu0 %v1383
    %v1461 = vpop.f32.mrf.mxu0
    %v1462 = vadd.f32 0.0, %v1461
    %v1463 = vpop.f32.mrf.mxu0
    %v1464 = vadd.f32 0.0, %v1463
    %v1465 = vpop.f32.mrf.mxu0
    %v1466 = vadd.f32 0.0, %v1465
    %v1467 = vpop.f32.mrf.mxu0
    %v1468 = vadd.f32 0.0, %v1467
    %1469 = vmatprep.mubr.bf16.mxu0 0
    %1470 = vmatmul.mubr.bf16.gmra.mxu0 %v1384
    %v1471 = vpop.f32.mrf.mxu0
    %v1472 = vadd.f32 0.0, %v1471
    %v1473 = vpop.f32.mrf.mxu0
    %v1474 = vadd.f32 0.0, %v1473
    %v1475 = vpop.f32.mrf.mxu0
    %v1476 = vadd.f32 0.0, %v1475
    %v1477 = vpop.f32.mrf.mxu0
    %v1478 = vadd.f32 0.0, %v1477
    %1479 = vmatprep.mubr.bf16.mxu0 0
    %1480 = vmatmul.mubr.bf16.gmra.mxu0 %v1385
    %v1481 = vpop.f32.mrf.mxu0
    %v1482 = vadd.f32 0.0, %v1481
    %v1483 = vpop.f32.mrf.mxu0
    %v1484 = vadd.f32 0.0, %v1483
    %v1485 = vpop.f32.mrf.mxu0
    %v1486 = vadd.f32 0.0, %v1485
    %v1487 = vpop.f32.mrf.mxu0
    %v1488 = vadd.f32 0.0, %v1487
    %1489 = vmatprep.mubr.bf16.mxu0 0
    %1490 = vmatmul.mubr.bf16.gmra.mxu0 %v1386
    %v1491 = vpop.f32.mrf.mxu0
    %v1492 = vadd.f32 0.0, %v1491
    %v1493 = vpop.f32.mrf.mxu0
    %v1494 = vadd.f32 0.0, %v1493
    %v1495 = vpop.f32.mrf.mxu0
    %v1496 = vadd.f32 0.0, %v1495
    %v1497 = vpop.f32.mrf.mxu0
    %v1498 = vadd.f32 0.0, %v1497
    %1499 = vdwg.mxu0
    %v1500 = vadd.f32 %v1201, %v1422
    %v1501 = vadd.f32 %v1202, %v1426
    %v1502 = vadd.f32 %v1203, %v1432
    %v1503 = vadd.f32 %v1204, %v1436
    %v1504 = vadd.f32 %v1205, %v1442
    %v1505 = vadd.f32 %v1206, %v1446
    %v1506 = vadd.f32 %v1207, %v1452
    %v1507 = vadd.f32 %v1208, %v1456
    %v1508 = vadd.f32 %v1209, %v1462
    %v1509 = vadd.f32 %v1210, %v1466
    %v1510 = vadd.f32 %v1211, %v1472
    %v1511 = vadd.f32 %v1212, %v1476
    %v1512 = vadd.f32 %v1213, %v1482
    %v1513 = vadd.f32 %v1214, %v1486
    %v1514 = vadd.f32 %v1215, %v1492
    %v1515 = vadd.f32 %v1216, %v1496
    %v1516 = vadd.f32 %v627, %v1424
    %v1517 = vadd.f32 %v630, %v1428
    %v1518 = vadd.f32 %v635, %v1434
    %v1519 = vadd.f32 %v638, %v1438
    %v1520 = vadd.f32 %v643, %v1444
    %v1521 = vadd.f32 %v646, %v1448
    %v1522 = vadd.f32 %v651, %v1454
    %v1523 = vadd.f32 %v654, %v1458
    %v1524 = vadd.f32 %v659, %v1464
    %v1525 = vadd.f32 %v662, %v1468
    %v1526 = vadd.f32 %v667, %v1474
    %v1527 = vadd.f32 %v670, %v1478
    %v1528 = vadd.f32 %v675, %v1484
    %v1529 = vadd.f32 %v678, %v1488
    %v1530 = vadd.f32 %v683, %v1494
    %v1531 = vadd.f32 %v686, %v1498
    %v1532 = vxor.u32 %v1516, 2147483648
    %v1533 = vxor.u32 %v1517, 2147483648
    %v1534 = vxor.u32 %v1518, 2147483648
    %v1535 = vxor.u32 %v1519, 2147483648
    %v1536 = vxor.u32 %v1520, 2147483648
    %v1537 = vxor.u32 %v1521, 2147483648
    %v1538 = vxor.u32 %v1522, 2147483648
    %v1539 = vxor.u32 %v1523, 2147483648
    %v1540 = vxor.u32 %v1524, 2147483648
    %v1541 = vxor.u32 %v1525, 2147483648
    %v1542 = vxor.u32 %v1526, 2147483648
    %v1543 = vxor.u32 %v1527, 2147483648
    %v1544 = vxor.u32 %v1528, 2147483648
    %v1545 = vxor.u32 %v1529, 2147483648
    %v1546 = vxor.u32 %v1530, 2147483648
    %v1547 = vxor.u32 %v1531, 2147483648
    %v1548 = vmul.f32 %v1532, 1.442695
    %v1549 = vpow.pop %v1548
    %v1550 = vmul.f32 %v1533, 1.442695
    %v1551 = vpow.pop %v1550
    %v1552 = vmul.f32 %v1534, 1.442695
    %v1553 = vpow.pop %v1552
    %v1554 = vmul.f32 %v1535, 1.442695
    %v1555 = vpow.pop %v1554
    %v1556 = vmul.f32 %v1536, 1.442695
    %v1557 = vpow.pop %v1556
    %v1558 = vmul.f32 %v1537, 1.442695
    %v1559 = vpow.pop %v1558
    %v1560 = vmul.f32 %v1538, 1.442695
    %v1561 = vpow.pop %v1560
    %v1562 = vmul.f32 %v1539, 1.442695
    %v1563 = vpow.pop %v1562
    %v1564 = vmul.f32 %v1540, 1.442695
    %v1565 = vpow.pop %v1564
    %v1566 = vmul.f32 %v1541, 1.442695
    %v1567 = vpow.pop %v1566
    %v1568 = vmul.f32 %v1542, 1.442695
    %v1569 = vpow.pop %v1568
    %v1570 = vmul.f32 %v1543, 1.442695
    %v1571 = vpow.pop %v1570
    %v1572 = vmul.f32 %v1544, 1.442695
    %v1573 = vpow.pop %v1572
    %v1574 = vmul.f32 %v1545, 1.442695
    %v1575 = vpow.pop %v1574
    %v1576 = vmul.f32 %v1546, 1.442695
    %v1577 = vpow.pop %v1576
    %v1578 = vmul.f32 %v1547, 1.442695
    %v1579 = vpow.pop %v1578
    %v1580 = vadd.f32 %v1549, 1.0
    %v1581 = vadd.f32 %v1551, 1.0
    %v1582 = vadd.f32 %v1553, 1.0
    %v1583 = vadd.f32 %v1555, 1.0
    %v1584 = vadd.f32 %v1557, 1.0
    %v1585 = vadd.f32 %v1559, 1.0
    %v1586 = vadd.f32 %v1561, 1.0
    %v1587 = vadd.f32 %v1563, 1.0
    %v1588 = vadd.f32 %v1565, 1.0
    %v1589 = vadd.f32 %v1567, 1.0
    %v1590 = vadd.f32 %v1569, 1.0
    %v1591 = vadd.f32 %v1571, 1.0
    %v1592 = vadd.f32 %v1573, 1.0
    %v1593 = vadd.f32 %v1575, 1.0
    %v1594 = vadd.f32 %v1577, 1.0
    %v1595 = vadd.f32 %v1579, 1.0
    %v1596 = vrcp.pop %v1580
    %v1597 = vmul.f32 1.0, %v1596
    %v1598 = vrcp.pop %v1581
    %v1599 = vmul.f32 1.0, %v1598
    %v1600 = vrcp.pop %v1582
    %v1601 = vmul.f32 1.0, %v1600
    %v1602 = vrcp.pop %v1583
    %v1603 = vmul.f32 1.0, %v1602
    %v1604 = vrcp.pop %v1584
    %v1605 = vmul.f32 1.0, %v1604
    %v1606 = vrcp.pop %v1585
    %v1607 = vmul.f32 1.0, %v1606
    %v1608 = vrcp.pop %v1586
    %v1609 = vmul.f32 1.0, %v1608
    %v1610 = vrcp.pop %v1587
    %v1611 = vmul.f32 1.0, %v1610
    %v1612 = vrcp.pop %v1588
    %v1613 = vmul.f32 1.0, %v1612
    %v1614 = vrcp.pop %v1589
    %v1615 = vmul.f32 1.0, %v1614
    %v1616 = vrcp.pop %v1590
    %v1617 = vmul.f32 1.0, %v1616
    %v1618 = vrcp.pop %v1591
    %v1619 = vmul.f32 1.0, %v1618
    %v1620 = vrcp.pop %v1592
    %v1621 = vmul.f32 1.0, %v1620
    %v1622 = vrcp.pop %v1593
    %v1623 = vmul.f32 1.0, %v1622
    %v1624 = vrcp.pop %v1594
    %v1625 = vmul.f32 1.0, %v1624
    %v1626 = vrcp.pop %v1595
    %v1627 = vmul.f32 1.0, %v1626
    %v1628 = vmul.f32 %v1597, %v1422
    %v1629 = vmul.f32 %v1599, %v1426
    %v1630 = vmul.f32 %v1601, %v1432
    %v1631 = vmul.f32 %v1603, %v1436
    %v1632 = vmul.f32 %v1605, %v1442
    %v1633 = vmul.f32 %v1607, %v1446
    %v1634 = vmul.f32 %v1609, %v1452
    %v1635 = vmul.f32 %v1611, %v1456
    %v1636 = vmul.f32 %v1613, %v1462
    %v1637 = vmul.f32 %v1615, %v1466
    %v1638 = vmul.f32 %v1617, %v1472
    %v1639 = vmul.f32 %v1619, %v1476
    %v1640 = vmul.f32 %v1621, %v1482
    %v1641 = vmul.f32 %v1623, %v1486
    %v1642 = vmul.f32 %v1625, %v1492
    %v1643 = vmul.f32 %v1627, %v1496
    %v1644 = vadd.f32 %v1345, %v1628
    %v1645 = vadd.f32 %v1346, %v1629
    %v1646 = vadd.f32 %v1347, %v1630
    %v1647 = vadd.f32 %v1348, %v1631
    %v1648 = vadd.f32 %v1349, %v1632
    %v1649 = vadd.f32 %v1350, %v1633
    %v1650 = vadd.f32 %v1351, %v1634
    %v1651 = vadd.f32 %v1352, %v1635
    %v1652 = vadd.f32 %v1353, %v1636
    %v1653 = vadd.f32 %v1354, %v1637
    %v1654 = vadd.f32 %v1355, %v1638
    %v1655 = vadd.f32 %v1356, %v1639
    %v1656 = vadd.f32 %v1357, %v1640
    %v1657 = vadd.f32 %v1358, %v1641
    %v1658 = vadd.f32 %v1359, %v1642
    %v1659 = vadd.f32 %v1360, %v1643
    %s1660 = sshll.u32 %s1059, 4
    %1661 = dma.done [#allocation3], %s1660
    %s1662 = scalar_lea.hbm %s2, 1536
    // Predicated region
    $region114: #{tpu_custom_call.1} parent=1 // pred_check
      _
    $region115: #{tpu_custom_call.1} parent=1 // pred_check_branch
      %1664 = sbr.rel target = $region117
    $region116: #{tpu_custom_call.1} parent=1 // pred_region
      %1665 = sst [smem:[#allocation24]] [#allocation31]
      %1666 = sst [smem:[#allocation25]] [#allocation30]
    $region117: #{tpu_custom_call.1} parent=1 // pred_fallthru
      _
    %1668 = shalt.err (0)
    %s1670 = sshll.u32 %s1063, 4
    %s1671 = int_to_ptr.vmem [resolvable:$true] %s1670
    %1673 = dma.hbm_to_vmem [thread:$0]  %s1662, 512, %s1671, %s1064
    %v1674 = vld [vmem:[#allocation2] sm:$0xff]
    %v1675 = vld [vmem:[#allocation2 + $0x8] sm:$0xff]
    %v1676 = vld [vmem:[#allocation2 + $0x10] sm:$0xff]
    %v1677 = vld [vmem:[#allocation2 + $0x18] sm:$0xff]
    %v1678 = vunpack.c.l.s8.bf16 %v1674
    %v1679 = vunpack.c.h.s8.bf16 %v1674
    %v1680 = vunpack.c.l.s8.bf16 %v1675
    %v1681 = vunpack.c.h.s8.bf16 %v1675
    %v1682 = vunpack.c.l.s8.bf16 %v1676
    %v1683 = vunpack.c.h.s8.bf16 %v1676
    %v1684 = vunpack.c.l.s8.bf16 %v1677
    %v1685 = vunpack.c.h.s8.bf16 %v1677
    %1686 = vmatprep.subr.bf16.mxu0 %v1057
    %1687 = vmatpush1.bf16.msra.mxu0 0
    %1688 = vmatprep.subr.bf16.mxu0 %v1056
    %1689 = vmatpush1.bf16.msra.mxu0 0
    %1690 = vmatprep.subr.bf16.mxu0 %v1055
    %1691 = vmatpush1.bf16.msra.mxu0 0
    %1692 = vmatprep.subr.bf16.mxu0 %v1054
    %1693 = vmatpush1.bf16.msra.mxu0 0
    %1694 = vmatprep.subr.bf16.mxu0 %v1053
    %1695 = vmatpush1.bf16.msra.mxu0 0
    %1696 = vmatprep.subr.bf16.mxu0 %v1052
    %1697 = vmatpush1.bf16.msra.mxu0 0
    %1698 = vmatprep.subr.bf16.mxu0 %v1051
    %1699 = vmatpush1.bf16.msra.mxu0 0
    %1700 = vmatprep.subr.bf16.mxu0 %v1050
    %1701 = vmatpush1.bf16.msra.mxu0 0
    %1702 = vmatprep.subr.bf16.mxu0 0
    %1703 = vmatpush2.bf16.msra.mxu0 0
    %1704 = vmatprep.subr.bf16.mxu0 0
    %1705 = vmatpush2.bf16.msra.mxu0 0
    %1706 = vmatprep.subr.bf16.mxu0 0
    %1707 = vmatpush2.bf16.msra.mxu0 0
    %1708 = vmatprep.subr.bf16.mxu0 0
    %1709 = vmatpush2.bf16.msra.mxu0 0
    %1710 = vmatprep.subr.bf16.mxu0 0
    %1711 = vmatpush2.bf16.msra.mxu0 0
    %1712 = vmatprep.subr.bf16.mxu0 0
    %1713 = vmatpush2.bf16.msra.mxu0 0
    %1714 = vmatprep.subr.bf16.mxu0 0
    %1715 = vmatpush2.bf16.msra.mxu0 0
    %1716 = vmatprep.subr.bf16.mxu0 0
    %1717 = vmatpush2.bf16.msra.mxu0 0
    %1718 = vmatprep.mubr.bf16.mxu0 0
    %1719 = vmatmul.mubr.bf16.gmra.mxu0 %v1678
    %v1720 = vpop.f32.mrf.mxu0
    %v1721 = vadd.f32 0.0, %v1720
    %v1722 = vpop.f32.mrf.mxu0
    %v1723 = vadd.f32 0.0, %v1722
    %v1724 = vpop.f32.mrf.mxu0
    %v1725 = vadd.f32 0.0, %v1724
    %v1726 = vpop.f32.mrf.mxu0
    %v1727 = vadd.f32 0.0, %v1726
    %1728 = vmatprep.mubr.bf16.mxu0 0
    %1729 = vmatmul.mubr.bf16.gmra.mxu0 %v1679
    %v1730 = vpop.f32.mrf.mxu0
    %v1731 = vadd.f32 0.0, %v1730
    %v1732 = vpop.f32.mrf.mxu0
    %v1733 = vadd.f32 0.0, %v1732
    %v1734 = vpop.f32.mrf.mxu0
    %v1735 = vadd.f32 0.0, %v1734
    %v1736 = vpop.f32.mrf.mxu0
    %v1737 = vadd.f32 0.0, %v1736
    %1738 = vmatprep.mubr.bf16.mxu0 0
    %1739 = vmatmul.mubr.bf16.gmra.mxu0 %v1680
    %v1740 = vpop.f32.mrf.mxu0
    %v1741 = vadd.f32 0.0, %v1740
    %v1742 = vpop.f32.mrf.mxu0
    %v1743 = vadd.f32 0.0, %v1742
    %v1744 = vpop.f32.mrf.mxu0
    %v1745 = vadd.f32 0.0, %v1744
    %v1746 = vpop.f32.mrf.mxu0
    %v1747 = vadd.f32 0.0, %v1746
    %1748 = vmatprep.mubr.bf16.mxu0 0
    %1749 = vmatmul.mubr.bf16.gmra.mxu0 %v1681
    %v1750 = vpop.f32.mrf.mxu0
    %v1751 = vadd.f32 0.0, %v1750
    %v1752 = vpop.f32.mrf.mxu0
    %v1753 = vadd.f32 0.0, %v1752
    %v1754 = vpop.f32.mrf.mxu0
    %v1755 = vadd.f32 0.0, %v1754
    %v1756 = vpop.f32.mrf.mxu0
    %v1757 = vadd.f32 0.0, %v1756
    %1758 = vmatprep.mubr.bf16.mxu0 0
    %1759 = vmatmul.mubr.bf16.gmra.mxu0 %v1682
    %v1760 = vpop.f32.mrf.mxu0
    %v1761 = vadd.f32 0.0, %v1760
    %v1762 = vpop.f32.mrf.mxu0
    %v1763 = vadd.f32 0.0, %v1762
    %v1764 = vpop.f32.mrf.mxu0
    %v1765 = vadd.f32 0.0, %v1764
    %v1766 = vpop.f32.mrf.mxu0
    %v1767 = vadd.f32 0.0, %v1766
    %1768 = vmatprep.mubr.bf16.mxu0 0
    %1769 = vmatmul.mubr.bf16.gmra.mxu0 %v1683
    %v1770 = vpop.f32.mrf.mxu0
    %v1771 = vadd.f32 0.0, %v1770
    %v1772 = vpop.f32.mrf.mxu0
    %v1773 = vadd.f32 0.0, %v1772
    %v1774 = vpop.f32.mrf.mxu0
    %v1775 = vadd.f32 0.0, %v1774
    %v1776 = vpop.f32.mrf.mxu0
    %v1777 = vadd.f32 0.0, %v1776
    %1778 = vmatprep.mubr.bf16.mxu0 0
    %1779 = vmatmul.mubr.bf16.gmra.mxu0 %v1684
    %v1780 = vpop.f32.mrf.mxu0
    %v1781 = vadd.f32 0.0, %v1780
    %v1782 = vpop.f32.mrf.mxu0
    %v1783 = vadd.f32 0.0, %v1782
    %v1784 = vpop.f32.mrf.mxu0
    %v1785 = vadd.f32 0.0, %v1784
    %v1786 = vpop.f32.mrf.mxu0
    %v1787 = vadd.f32 0.0, %v1786
    %1788 = vmatprep.mubr.bf16.mxu0 0
    %1789 = vmatmul.mubr.bf16.gmra.mxu0 %v1685
    %v1790 = vpop.f32.mrf.mxu0
    %v1791 = vadd.f32 0.0, %v1790
    %v1792 = vpop.f32.mrf.mxu0
    %v1793 = vadd.f32 0.0, %v1792
    %v1794 = vpop.f32.mrf.mxu0
    %v1795 = vadd.f32 0.0, %v1794
    %v1796 = vpop.f32.mrf.mxu0
    %v1797 = vadd.f32 0.0, %v1796
    %1798 = vdwg.mxu0
    %v1799 = vadd.f32 %v1500, %v1721
    %v1800 = vadd.f32 %v1501, %v1725
    %v1801 = vadd.f32 %v1502, %v1731
    %v1802 = vadd.f32 %v1503, %v1735
    %v1803 = vadd.f32 %v1504, %v1741
    %v1804 = vadd.f32 %v1505, %v1745
    %v1805 = vadd.f32 %v1506, %v1751
    %v1806 = vadd.f32 %v1507, %v1755
    %v1807 = vadd.f32 %v1508, %v1761
    %v1808 = vadd.f32 %v1509, %v1765
    %v1809 = vadd.f32 %v1510, %v1771
    %v1810 = vadd.f32 %v1511, %v1775
    %v1811 = vadd.f32 %v1512, %v1781
    %v1812 = vadd.f32 %v1513, %v1785
    %v1813 = vadd.f32 %v1514, %v1791
    %v1814 = vadd.f32 %v1515, %v1795
    %v1815 = vadd.f32 %v627, %v1723
    %v1816 = vadd.f32 %v630, %v1727
    %v1817 = vadd.f32 %v635, %v1733
    %v1818 = vadd.f32 %v638, %v1737
    %v1819 = vadd.f32 %v643, %v1743
    %v1820 = vadd.f32 %v646, %v1747
    %v1821 = vadd.f32 %v651, %v1753
    %v1822 = vadd.f32 %v654, %v1757
    %v1823 = vadd.f32 %v659, %v1763
    %v1824 = vadd.f32 %v662, %v1767
    %v1825 = vadd.f32 %v667, %v1773
    %v1826 = vadd.f32 %v670, %v1777
    %v1827 = vadd.f32 %v675, %v1783
    %v1828 = vadd.f32 %v678, %v1787
    %v1829 = vadd.f32 %v683, %v1793
    %v1830 = vadd.f32 %v686, %v1797
    %v1831 = vxor.u32 %v1815, 2147483648
    %v1832 = vxor.u32 %v1816, 2147483648
    %v1833 = vxor.u32 %v1817, 2147483648
    %v1834 = vxor.u32 %v1818, 2147483648
    %v1835 = vxor.u32 %v1819, 2147483648
    %v1836 = vxor.u32 %v1820, 2147483648
    %v1837 = vxor.u32 %v1821, 2147483648
    %v1838 = vxor.u32 %v1822, 2147483648
    %v1839 = vxor.u32 %v1823, 2147483648
    %v1840 = vxor.u32 %v1824, 2147483648
    %v1841 = vxor.u32 %v1825, 2147483648
    %v1842 = vxor.u32 %v1826, 2147483648
    %v1843 = vxor.u32 %v1827, 2147483648
    %v1844 = vxor.u32 %v1828, 2147483648
    %v1845 = vxor.u32 %v1829, 2147483648
    %v1846 = vxor.u32 %v1830, 2147483648
    %v1847 = vmul.f32 %v1831, 1.442695
    %v1848 = vpow.pop %v1847
    %v1849 = vmul.f32 %v1832, 1.442695
    %v1850 = vpow.pop %v1849
    %v1851 = vmul.f32 %v1833, 1.442695
    %v1852 = vpow.pop %v1851
    %v1853 = vmul.f32 %v1834, 1.442695
    %v1854 = vpow.pop %v1853
    %v1855 = vmul.f32 %v1835, 1.442695
    %v1856 = vpow.pop %v1855
    %v1857 = vmul.f32 %v1836, 1.442695
    %v1858 = vpow.pop %v1857
    %v1859 = vmul.f32 %v1837, 1.442695
    %v1860 = vpow.pop %v1859
    %v1861 = vmul.f32 %v1838, 1.442695
    %v1862 = vpow.pop %v1861
    %v1863 = vmul.f32 %v1839, 1.442695
    %v1864 = vpow.pop %v1863
    %v1865 = vmul.f32 %v1840, 1.442695
    %v1866 = vpow.pop %v1865
    %v1867 = vmul.f32 %v1841, 1.442695
    %v1868 = vpow.pop %v1867
    %v1869 = vmul.f32 %v1842, 1.442695
    %v1870 = vpow.pop %v1869
    %v1871 = vmul.f32 %v1843, 1.442695
    %v1872 = vpow.pop %v1871
    %v1873 = vmul.f32 %v1844, 1.442695
    %v1874 = vpow.pop %v1873
    %v1875 = vmul.f32 %v1845, 1.442695
    %v1876 = vpow.pop %v1875
    %v1877 = vmul.f32 %v1846, 1.442695
    %v1878 = vpow.pop %v1877
    %v1879 = vadd.f32 %v1848, 1.0
    %v1880 = vadd.f32 %v1850, 1.0
    %v1881 = vadd.f32 %v1852, 1.0
    %v1882 = vadd.f32 %v1854, 1.0
    %v1883 = vadd.f32 %v1856, 1.0
    %v1884 = vadd.f32 %v1858, 1.0
    %v1885 = vadd.f32 %v1860, 1.0
    %v1886 = vadd.f32 %v1862, 1.0
    %v1887 = vadd.f32 %v1864, 1.0
    %v1888 = vadd.f32 %v1866, 1.0
    %v1889 = vadd.f32 %v1868, 1.0
    %v1890 = vadd.f32 %v1870, 1.0
    %v1891 = vadd.f32 %v1872, 1.0
    %v1892 = vadd.f32 %v1874, 1.0
    %v1893 = vadd.f32 %v1876, 1.0
    %v1894 = vadd.f32 %v1878, 1.0
    %v1895 = vrcp.pop %v1879
    %v1896 = vmul.f32 1.0, %v1895
    %v1897 = vrcp.pop %v1880
    %v1898 = vmul.f32 1.0, %v1897
    %v1899 = vrcp.pop %v1881
    %v1900 = vmul.f32 1.0, %v1899
    %v1901 = vrcp.pop %v1882
    %v1902 = vmul.f32 1.0, %v1901
    %v1903 = vrcp.pop %v1883
    %v1904 = vmul.f32 1.0, %v1903
    %v1905 = vrcp.pop %v1884
    %v1906 = vmul.f32 1.0, %v1905
    %v1907 = vrcp.pop %v1885
    %v1908 = vmul.f32 1.0, %v1907
    %v1909 = vrcp.pop %v1886
    %v1910 = vmul.f32 1.0, %v1909
    %v1911 = vrcp.pop %v1887
    %v1912 = vmul.f32 1.0, %v1911
    %v1913 = vrcp.pop %v1888
    %v1914 = vmul.f32 1.0, %v1913
    %v1915 = vrcp.pop %v1889
    %v1916 = vmul.f32 1.0, %v1915
    %v1917 = vrcp.pop %v1890
    %v1918 = vmul.f32 1.0, %v1917
    %v1919 = vrcp.pop %v1891
    %v1920 = vmul.f32 1.0, %v1919
    %v1921 = vrcp.pop %v1892
    %v1922 = vmul.f32 1.0, %v1921
    %v1923 = vrcp.pop %v1893
    %v1924 = vmul.f32 1.0, %v1923
    %v1925 = vrcp.pop %v1894
    %v1926 = vmul.f32 1.0, %v1925
    %v1927 = vmul.f32 %v1896, %v1721
    %v1928 = vmul.f32 %v1898, %v1725
    %v1929 = vmul.f32 %v1900, %v1731
    %v1930 = vmul.f32 %v1902, %v1735
    %v1931 = vmul.f32 %v1904, %v1741
    %v1932 = vmul.f32 %v1906, %v1745
    %v1933 = vmul.f32 %v1908, %v1751
    %v1934 = vmul.f32 %v1910, %v1755
    %v1935 = vmul.f32 %v1912, %v1761
    %v1936 = vmul.f32 %v1914, %v1765
    %v1937 = vmul.f32 %v1916, %v1771
    %v1938 = vmul.f32 %v1918, %v1775
    %v1939 = vmul.f32 %v1920, %v1781
    %v1940 = vmul.f32 %v1922, %v1785
    %v1941 = vmul.f32 %v1924, %v1791
    %v1942 = vmul.f32 %v1926, %v1795
    %v1943 = vadd.f32 %v1644, %v1927
    %v1944 = vadd.f32 %v1645, %v1928
    %v1945 = vadd.f32 %v1646, %v1929
    %v1946 = vadd.f32 %v1647, %v1930
    %v1947 = vadd.f32 %v1648, %v1931
    %v1948 = vadd.f32 %v1649, %v1932
    %v1949 = vadd.f32 %v1650, %v1933
    %v1950 = vadd.f32 %v1651, %v1934
    %v1951 = vadd.f32 %v1652, %v1935
    %v1952 = vadd.f32 %v1653, %v1936
    %v1953 = vadd.f32 %v1654, %v1937
    %v1954 = vadd.f32 %v1655, %v1938
    %v1955 = vadd.f32 %v1656, %v1939
    %v1956 = vadd.f32 %v1657, %v1940
    %v1957 = vadd.f32 %v1658, %v1941
    %v1958 = vadd.f32 %v1659, %v1942
    %s1959 = sshll.u32 %s1059, 4
    %1960 = dma.done %s1064, %s1959
    // Predicated region
    $region118: #{tpu_custom_call.1} parent=1 // pred_check
      _
    $region119: #{tpu_custom_call.1} parent=1 // pred_check_branch
      %1962 = sbr.rel target = $region121
    $region120: #{tpu_custom_call.1} parent=1 // pred_region
      %1963 = sst [smem:[#allocation24]] [#allocation33]
      %1964 = sst [smem:[#allocation25]] [#allocation32]
    $region121: #{tpu_custom_call.1} parent=1 // pred_fallthru
      _
    %1966 = shalt.err (0)
    %s1968 = sshll.u32 [#allocation2], 4
    %s1969 = int_to_ptr.vmem [resolvable:$true] %s1968
    %1971 = dma.hbm_to_vmem [thread:$0]  %s2, 512, %s1969, [#allocation3]
    %v1972 = vld [vmem:[%s1063] sm:$0xff]
    %v1973 = vld [vmem:[%s1063 + $0x8] sm:$0xff]
    %v1974 = vld [vmem:[%s1063 + $0x10] sm:$0xff]
    %v1975 = vld [vmem:[%s1063 + $0x18] sm:$0xff]
    %v1976 = vunpack.c.l.s8.bf16 %v1972
    %v1977 = vunpack.c.h.s8.bf16 %v1972
    %v1978 = vunpack.c.l.s8.bf16 %v1973
    %v1979 = vunpack.c.h.s8.bf16 %v1973
    %v1980 = vunpack.c.l.s8.bf16 %v1974
    %v1981 = vunpack.c.h.s8.bf16 %v1974
    %v1982 = vunpack.c.l.s8.bf16 %v1975
    %v1983 = vunpack.c.h.s8.bf16 %v1975
    %1984 = vmatprep.subr.bf16.mxu0 %v1057
    %1985 = vmatpush1.bf16.msra.mxu0 0
    %1986 = vmatprep.subr.bf16.mxu0 %v1056
    %1987 = vmatpush1.bf16.msra.mxu0 0
    %1988 = vmatprep.subr.bf16.mxu0 %v1055
    %1989 = vmatpush1.bf16.msra.mxu0 0
    %1990 = vmatprep.subr.bf16.mxu0 %v1054
    %1991 = vmatpush1.bf16.msra.mxu0 0
    %1992 = vmatprep.subr.bf16.mxu0 %v1053
    %1993 = vmatpush1.bf16.msra.mxu0 0
    %1994 = vmatprep.subr.bf16.mxu0 %v1052
    %1995 = vmatpush1.bf16.msra.mxu0 0
    %1996 = vmatprep.subr.bf16.mxu0 %v1051
    %1997 = vmatpush1.bf16.msra.mxu0 0
    %1998 = vmatprep.subr.bf16.mxu0 %v1050
    %1999 = vmatpush1.bf16.msra.mxu0 0
    %2000 = vmatprep.subr.bf16.mxu0 0
    %2001 = vmatpush2.bf16.msra.mxu0 0
    %2002 = vmatprep.subr.bf16.mxu0 0
    %2003 = vmatpush2.bf16.msra.mxu0 0
    %2004 = vmatprep.subr.bf16.mxu0 0
    %2005 = vmatpush2.bf16.msra.mxu0 0
    %2006 = vmatprep.subr.bf16.mxu0 0
    %2007 = vmatpush2.bf16.msra.mxu0 0
    %2008 = vmatprep.subr.bf16.mxu0 0
    %2009 = vmatpush2.bf16.msra.mxu0 0
    %2010 = vmatprep.subr.bf16.mxu0 0
    %2011 = vmatpush2.bf16.msra.mxu0 0
    %2012 = vmatprep.subr.bf16.mxu0 0
    %2013 = vmatpush2.bf16.msra.mxu0 0
    %2014 = vmatprep.subr.bf16.mxu0 0
    %2015 = vmatpush2.bf16.msra.mxu0 0
    %2016 = vmatprep.mubr.bf16.mxu0 0
    %2017 = vmatmul.mubr.bf16.gmra.mxu0 %v1976
    %v2018 = vpop.f32.mrf.mxu0
    %v2019 = vadd.f32 0.0, %v2018
    %v2020 = vpop.f32.mrf.mxu0
    %v2021 = vadd.f32 0.0, %v2020
    %v2022 = vpop.f32.mrf.mxu0
    %v2023 = vadd.f32 0.0, %v2022
    %v2024 = vpop.f32.mrf.mxu0
    %v2025 = vadd.f32 0.0, %v2024
    %2026 = vmatprep.mubr.bf16.mxu0 0
    %2027 = vmatmul.mubr.bf16.gmra.mxu0 %v1977
    %v2028 = vpop.f32.mrf.mxu0
    %v2029 = vadd.f32 0.0, %v2028
    %v2030 = vpop.f32.mrf.mxu0
    %v2031 = vadd.f32 0.0, %v2030
    %v2032 = vpop.f32.mrf.mxu0
    %v2033 = vadd.f32 0.0, %v2032
    %v2034 = vpop.f32.mrf.mxu0
    %v2035 = vadd.f32 0.0, %v2034
    %2036 = vmatprep.mubr.bf16.mxu0 0
    %2037 = vmatmul.mubr.bf16.gmra.mxu0 %v1978
    %v2038 = vpop.f32.mrf.mxu0
    %v2039 = vadd.f32 0.0, %v2038
    %v2040 = vpop.f32.mrf.mxu0
    %v2041 = vadd.f32 0.0, %v2040
    %v2042 = vpop.f32.mrf.mxu0
    %v2043 = vadd.f32 0.0, %v2042
    %v2044 = vpop.f32.mrf.mxu0
    %v2045 = vadd.f32 0.0, %v2044
    %2046 = vmatprep.mubr.bf16.mxu0 0
    %2047 = vmatmul.mubr.bf16.gmra.mxu0 %v1979
    %v2048 = vpop.f32.mrf.mxu0
    %v2049 = vadd.f32 0.0, %v2048
    %v2050 = vpop.f32.mrf.mxu0
    %v2051 = vadd.f32 0.0, %v2050
    %v2052 = vpop.f32.mrf.mxu0
    %v2053 = vadd.f32 0.0, %v2052
    %v2054 = vpop.f32.mrf.mxu0
    %v2055 = vadd.f32 0.0, %v2054
    %2056 = vmatprep.mubr.bf16.mxu0 0
    %2057 = vmatmul.mubr.bf16.gmra.mxu0 %v1980
    %v2058 = vpop.f32.mrf.mxu0
    %v2059 = vadd.f32 0.0, %v2058
    %v2060 = vpop.f32.mrf.mxu0
    %v2061 = vadd.f32 0.0, %v2060
    %v2062 = vpop.f32.mrf.mxu0
    %v2063 = vadd.f32 0.0, %v2062
    %v2064 = vpop.f32.mrf.mxu0
    %v2065 = vadd.f32 0.0, %v2064
    %2066 = vmatprep.mubr.bf16.mxu0 0
    %2067 = vmatmul.mubr.bf16.gmra.mxu0 %v1981
    %v2068 = vpop.f32.mrf.mxu0
    %v2069 = vadd.f32 0.0, %v2068
    %v2070 = vpop.f32.mrf.mxu0
    %v2071 = vadd.f32 0.0, %v2070
    %v2072 = vpop.f32.mrf.mxu0
    %v2073 = vadd.f32 0.0, %v2072
    %v2074 = vpop.f32.mrf.mxu0
    %v2075 = vadd.f32 0.0, %v2074
    %2076 = vmatprep.mubr.bf16.mxu0 0
    %2077 = vmatmul.mubr.bf16.gmra.mxu0 %v1982
    %v2078 = vpop.f32.mrf.mxu0
    %v2079 = vadd.f32 0.0, %v2078
    %v2080 = vpop.f32.mrf.mxu0
    %v2081 = vadd.f32 0.0, %v2080
    %v2082 = vpop.f32.mrf.mxu0
    %v2083 = vadd.f32 0.0, %v2082
    %v2084 = vpop.f32.mrf.mxu0
    %v2085 = vadd.f32 0.0, %v2084
    %2086 = vmatprep.mubr.bf16.mxu0 0
    %2087 = vmatmul.mubr.bf16.gmra.mxu0 %v1983
    %v2088 = vpop.f32.mrf.mxu0
    %v2089 = vadd.f32 0.0, %v2088
    %v2090 = vpop.f32.mrf.mxu0
    %v2091 = vadd.f32 0.0, %v2090
    %v2092 = vpop.f32.mrf.mxu0
    %v2093 = vadd.f32 0.0, %v2092
    %v2094 = vpop.f32.mrf.mxu0
    %v2095 = vadd.f32 0.0, %v2094
    %2096 = vdwg.mxu0
    %v2097 = vadd.f32 %v1799, %v2019
    %v2098 = vadd.f32 %v1800, %v2023
    %v2099 = vadd.f32 %v1801, %v2029
    %v2100 = vadd.f32 %v1802, %v2033
    %v2101 = vadd.f32 %v1803, %v2039
    %v2102 = vadd.f32 %v1804, %v2043
    %v2103 = vadd.f32 %v1805, %v2049
    %v2104 = vadd.f32 %v1806, %v2053
    %v2105 = vadd.f32 %v1807, %v2059
    %v2106 = vadd.f32 %v1808, %v2063
    %v2107 = vadd.f32 %v1809, %v2069
    %v2108 = vadd.f32 %v1810, %v2073
    %v2109 = vadd.f32 %v1811, %v2079
    %v2110 = vadd.f32 %v1812, %v2083
    %v2111 = vadd.f32 %v1813, %v2089
    %v2112 = vadd.f32 %v1814, %v2093
    %v2113 = vadd.f32 %v627, %v2021
    %v2114 = vadd.f32 %v630, %v2025
    %v2115 = vadd.f32 %v635, %v2031
    %v2116 = vadd.f32 %v638, %v2035
    %v2117 = vadd.f32 %v643, %v2041
    %v2118 = vadd.f32 %v646, %v2045
    %v2119 = vadd.f32 %v651, %v2051
    %v2120 = vadd.f32 %v654, %v2055
    %v2121 = vadd.f32 %v659, %v2061
    %v2122 = vadd.f32 %v662, %v2065
    %v2123 = vadd.f32 %v667, %v2071
    %v2124 = vadd.f32 %v670, %v2075
    %v2125 = vadd.f32 %v675, %v2081
    %v2126 = vadd.f32 %v678, %v2085
    %v2127 = vadd.f32 %v683, %v2091
    %v2128 = vadd.f32 %v686, %v2095
    %v2129 = vxor.u32 %v2113, 2147483648
    %v2130 = vxor.u32 %v2114, 2147483648
    %v2131 = vxor.u32 %v2115, 2147483648
    %v2132 = vxor.u32 %v2116, 2147483648
    %v2133 = vxor.u32 %v2117, 2147483648
    %v2134 = vxor.u32 %v2118, 2147483648
    %v2135 = vxor.u32 %v2119, 2147483648
    %v2136 = vxor.u32 %v2120, 2147483648
    %v2137 = vxor.u32 %v2121, 2147483648
    %v2138 = vxor.u32 %v2122, 2147483648
    %v2139 = vxor.u32 %v2123, 2147483648
    %v2140 = vxor.u32 %v2124, 2147483648
    %v2141 = vxor.u32 %v2125, 2147483648
    %v2142 = vxor.u32 %v2126, 2147483648
    %v2143 = vxor.u32 %v2127, 2147483648
    %v2144 = vxor.u32 %v2128, 2147483648
    %v2145 = vmul.f32 %v2129, 1.442695
    %v2146 = vpow.pop %v2145
    %v2147 = vmul.f32 %v2130, 1.442695
    %v2148 = vpow.pop %v2147
    %v2149 = vmul.f32 %v2131, 1.442695
    %v2150 = vpow.pop %v2149
    %v2151 = vmul.f32 %v2132, 1.442695
    %v2152 = vpow.pop %v2151
    %v2153 = vmul.f32 %v2133, 1.442695
    %v2154 = vpow.pop %v2153
    %v2155 = vmul.f32 %v2134, 1.442695
    %v2156 = vpow.pop %v2155
    %v2157 = vmul.f32 %v2135, 1.442695
    %v2158 = vpow.pop %v2157
    %v2159 = vmul.f32 %v2136, 1.442695
    %v2160 = vpow.pop %v2159
    %v2161 = vmul.f32 %v2137, 1.442695
    %v2162 = vpow.pop %v2161
    %v2163 = vmul.f32 %v2138, 1.442695
    %v2164 = vpow.pop %v2163
    %v2165 = vmul.f32 %v2139, 1.442695
    %v2166 = vpow.pop %v2165
    %v2167 = vmul.f32 %v2140, 1.442695
    %v2168 = vpow.pop %v2167
    %v2169 = vmul.f32 %v2141, 1.442695
    %v2170 = vpow.pop %v2169
    %v2171 = vmul.f32 %v2142, 1.442695
    %v2172 = vpow.pop %v2171
    %v2173 = vmul.f32 %v2143, 1.442695
    %v2174 = vpow.pop %v2173
    %v2175 = vmul.f32 %v2144, 1.442695
    %v2176 = vpow.pop %v2175
    %v2177 = vadd.f32 %v2146, 1.0
    %v2178 = vadd.f32 %v2148, 1.0
    %v2179 = vadd.f32 %v2150, 1.0
    %v2180 = vadd.f32 %v2152, 1.0
    %v2181 = vadd.f32 %v2154, 1.0
    %v2182 = vadd.f32 %v2156, 1.0
    %v2183 = vadd.f32 %v2158, 1.0
    %v2184 = vadd.f32 %v2160, 1.0
    %v2185 = vadd.f32 %v2162, 1.0
    %v2186 = vadd.f32 %v2164, 1.0
    %v2187 = vadd.f32 %v2166, 1.0
    %v2188 = vadd.f32 %v2168, 1.0
    %v2189 = vadd.f32 %v2170, 1.0
    %v2190 = vadd.f32 %v2172, 1.0
    %v2191 = vadd.f32 %v2174, 1.0
    %v2192 = vadd.f32 %v2176, 1.0
    %v2193 = vrcp.pop %v2177
    %v2194 = vmul.f32 1.0, %v2193
    %v2195 = vrcp.pop %v2178
    %v2196 = vmul.f32 1.0, %v2195
    %v2197 = vrcp.pop %v2179
    %v2198 = vmul.f32 1.0, %v2197
    %v2199 = vrcp.pop %v2180
    %v2200 = vmul.f32 1.0, %v2199
    %v2201 = vrcp.pop %v2181
    %v2202 = vmul.f32 1.0, %v2201
    %v2203 = vrcp.pop %v2182
    %v2204 = vmul.f32 1.0, %v2203
    %v2205 = vrcp.pop %v2183
    %v2206 = vmul.f32 1.0, %v2205
    %v2207 = vrcp.pop %v2184
    %v2208 = vmul.f32 1.0, %v2207
    %v2209 = vrcp.pop %v2185
    %v2210 = vmul.f32 1.0, %v2209
    %v2211 = vrcp.pop %v2186
    %v2212 = vmul.f32 1.0, %v2211
    %v2213 = vrcp.pop %v2187
    %v2214 = vmul.f32 1.0, %v2213
    %v2215 = vrcp.pop %v2188
    %v2216 = vmul.f32 1.0, %v2215
    %v2217 = vrcp.pop %v2189
    %v2218 = vmul.f32 1.0, %v2217
    %v2219 = vrcp.pop %v2190
    %v2220 = vmul.f32 1.0, %v2219
    %v2221 = vrcp.pop %v2191
    %v2222 = vmul.f32 1.0, %v2221
    %v2223 = vrcp.pop %v2192
    %v2224 = vmul.f32 1.0, %v2223
    %v2225 = vmul.f32 %v2194, %v2019
    %v2226 = vmul.f32 %v2196, %v2023
    %v2227 = vmul.f32 %v2198, %v2029
    %v2228 = vmul.f32 %v2200, %v2033
    %v2229 = vmul.f32 %v2202, %v2039
    %v2230 = vmul.f32 %v2204, %v2043
    %v2231 = vmul.f32 %v2206, %v2049
    %v2232 = vmul.f32 %v2208, %v2053
    %v2233 = vmul.f32 %v2210, %v2059
    %v2234 = vmul.f32 %v2212, %v2063
    %v2235 = vmul.f32 %v2214, %v2069
    %v2236 = vmul.f32 %v2216, %v2073
    %v2237 = vmul.f32 %v2218, %v2079
    %v2238 = vmul.f32 %v2220, %v2083
    %v2239 = vmul.f32 %v2222, %v2089
    %v2240 = vmul.f32 %v2224, %v2093
    %v2241 = vadd.f32 %v1943, %v2225
    %v2242 = vadd.f32 %v1944, %v2226
    %v2243 = vadd.f32 %v1945, %v2227
    %v2244 = vadd.f32 %v1946, %v2228
    %v2245 = vadd.f32 %v1947, %v2229
    %v2246 = vadd.f32 %v1948, %v2230
    %v2247 = vadd.f32 %v1949, %v2231
    %v2248 = vadd.f32 %v1950, %v2232
    %v2249 = vadd.f32 %v1951, %v2233
    %v2250 = vadd.f32 %v1952, %v2234
    %v2251 = vadd.f32 %v1953, %v2235
    %v2252 = vadd.f32 %v1954, %v2236
    %v2253 = vadd.f32 %v1955, %v2237
    %v2254 = vadd.f32 %v1956, %v2238
    %v2255 = vadd.f32 %v1957, %v2239
    %v2256 = vadd.f32 %v1958, %v2240
    %v2257 = vpack.c.bf16 %v2098, %v2097
    %v2258 = vpack.c.bf16 %v2100, %v2099
    %v2259 = vpack.c.bf16 %v2102, %v2101
    %v2260 = vpack.c.bf16 %v2104, %v2103
    %v2261 = vpack.c.bf16 %v2106, %v2105
    %v2262 = vpack.c.bf16 %v2108, %v2107
    %v2263 = vpack.c.bf16 %v2110, %v2109
    %v2264 = vpack.c.bf16 %v2112, %v2111
    %v2281 = vunpack.c.l.b16 %v857
    %v2282 = vunpack.c.l.b16 %v858
    %v2283 = vunpack.c.l.b16 %v859
    %v2284 = vunpack.c.l.b16 %v860
    %v2285 = vunpack.c.l.b16 %v861
    %v2286 = vunpack.c.l.b16 %v862
    %v2287 = vunpack.c.l.b16 %v863
    %v2288 = vunpack.c.l.b16 %v864
    %v2289 = vunpack.c.l.b16 %v865
    %v2290 = vunpack.c.l.b16 %v866
    %v2291 = vunpack.c.l.b16 %v867
    %v2292 = vunpack.c.l.b16 %v868
    %v2293 = vunpack.c.l.b16 %v869
    %v2294 = vunpack.c.l.b16 %v870
    %v2295 = vunpack.c.l.b16 %v871
    %v2296 = vunpack.c.l.b16 %v872
    %v2297 = vpack.c.b16 %v2282, %v2281
    %v2298 = vpack.c.b16 %v2284, %v2283
    %v2299 = vpack.c.b16 %v2286, %v2285
    %v2300 = vpack.c.b16 %v2288, %v2287
    %v2301 = vpack.c.b16 %v2290, %v2289
    %v2302 = vpack.c.b16 %v2292, %v2291
    %v2303 = vpack.c.b16 %v2294, %v2293
    %v2304 = vpack.c.b16 %v2296, %v2295
    %2313 = vmatprep.subr.bf16.mxu0 0
    %2314 = vmatpush1.bf16.msra.mxu0 %v2304
    %2315 = vmatprep.subr.bf16.mxu0 0
    %2316 = vmatpush1.bf16.msra.mxu0 %v2303
    %2317 = vmatprep.subr.bf16.mxu0 0
    %2318 = vmatpush1.bf16.msra.mxu0 %v2302
    %2319 = vmatprep.subr.bf16.mxu0 0
    %2320 = vmatpush1.bf16.msra.mxu0 %v2301
    %2321 = vmatprep.subr.bf16.mxu0 0
    %2322 = vmatpush1.bf16.msra.mxu0 %v2300
    %2323 = vmatprep.subr.bf16.mxu0 0
    %2324 = vmatpush1.bf16.msra.mxu0 %v2299
    %2325 = vmatprep.subr.bf16.mxu0 0
    %2326 = vmatpush1.bf16.msra.mxu0 %v2298
    %2327 = vmatprep.subr.bf16.mxu0 0
    %2328 = vmatpush1.bf16.msra.mxu0 %v2297
    %2329 = vmatprep.subr.bf16.mxu0 0
    %2330 = vmatpush2.bf16.msra.mxu0 0
    %2331 = vmatprep.subr.bf16.mxu0 0
    %2332 = vmatpush2.bf16.msra.mxu0 0
    %2333 = vmatprep.subr.bf16.mxu0 0
    %2334 = vmatpush2.bf16.msra.mxu0 0
    %2335 = vmatprep.subr.bf16.mxu0 0
    %2336 = vmatpush2.bf16.msra.mxu0 0
    %2337 = vmatprep.subr.bf16.mxu0 0
    %2338 = vmatpush2.bf16.msra.mxu0 0
    %2339 = vmatprep.subr.bf16.mxu0 0
    %2340 = vmatpush2.bf16.msra.mxu0 0
    %2341 = vmatprep.subr.bf16.mxu0 0
    %2342 = vmatpush2.bf16.msra.mxu0 0
    %2343 = vmatprep.subr.bf16.mxu0 0
    %2344 = vmatpush2.bf16.msra.mxu0 0
    %2345 = vmatprep.mubr.bf16.mxu0 0
    %2346 = vmatmul.mubr.bf16.gmra.mxu0 %v2257
    %v2347 = vpop.f32.mrf.mxu0
    %v2348 = vadd.f32 0.0, %v2347
    %v2349 = vpop.f32.mrf.mxu0
    %v2350 = vpop.f32.mrf.mxu0
    %v2351 = vadd.f32 0.0, %v2350
    %v2352 = vpop.f32.mrf.mxu0
    %2353 = vmatprep.mubr.bf16.mxu0 0
    %2354 = vmatmul.mubr.bf16.gmra.mxu0 %v2258
    %v2355 = vpop.f32.mrf.mxu0
    %v2356 = vadd.f32 0.0, %v2355
    %v2357 = vpop.f32.mrf.mxu0
    %v2358 = vpop.f32.mrf.mxu0
    %v2359 = vadd.f32 0.0, %v2358
    %v2360 = vpop.f32.mrf.mxu0
    %2361 = vmatprep.mubr.bf16.mxu0 0
    %2362 = vmatmul.mubr.bf16.gmra.mxu0 %v2259
    %v2363 = vpop.f32.mrf.mxu0
    %v2364 = vadd.f32 0.0, %v2363
    %v2365 = vpop.f32.mrf.mxu0
    %v2366 = vpop.f32.mrf.mxu0
    %v2367 = vadd.f32 0.0, %v2366
    %v2368 = vpop.f32.mrf.mxu0
    %2369 = vmatprep.mubr.bf16.mxu0 0
    %2370 = vmatmul.mubr.bf16.gmra.mxu0 %v2260
    %v2371 = vpop.f32.mrf.mxu0
    %v2372 = vadd.f32 0.0, %v2371
    %v2373 = vpop.f32.mrf.mxu0
    %v2374 = vpop.f32.mrf.mxu0
    %v2375 = vadd.f32 0.0, %v2374
    %v2376 = vpop.f32.mrf.mxu0
    %2377 = vmatprep.mubr.bf16.mxu0 0
    %2378 = vmatmul.mubr.bf16.gmra.mxu0 %v2261
    %v2379 = vpop.f32.mrf.mxu0
    %v2380 = vadd.f32 0.0, %v2379
    %v2381 = vpop.f32.mrf.mxu0
    %v2382 = vpop.f32.mrf.mxu0
    %v2383 = vadd.f32 0.0, %v2382
    %v2384 = vpop.f32.mrf.mxu0
    %2385 = vmatprep.mubr.bf16.mxu0 0
    %2386 = vmatmul.mubr.bf16.gmra.mxu0 %v2262
    %v2387 = vpop.f32.mrf.mxu0
    %v2388 = vadd.f32 0.0, %v2387
    %v2389 = vpop.f32.mrf.mxu0
    %v2390 = vpop.f32.mrf.mxu0
    %v2391 = vadd.f32 0.0, %v2390
    %v2392 = vpop.f32.mrf.mxu0
    %2393 = vmatprep.mubr.bf16.mxu0 0
    %2394 = vmatmul.mubr.bf16.gmra.mxu0 %v2263
    %v2395 = vpop.f32.mrf.mxu0
    %v2396 = vadd.f32 0.0, %v2395
    %v2397 = vpop.f32.mrf.mxu0
    %v2398 = vpop.f32.mrf.mxu0
    %v2399 = vadd.f32 0.0, %v2398
    %v2400 = vpop.f32.mrf.mxu0
    %2401 = vmatprep.mubr.bf16.mxu0 0
    %2402 = vmatmul.mubr.bf16.gmra.mxu0 %v2264
    %v2403 = vpop.f32.mrf.mxu0
    %v2404 = vadd.f32 0.0, %v2403
    %v2405 = vpop.f32.mrf.mxu0
    %v2406 = vpop.f32.mrf.mxu0
    %v2407 = vadd.f32 0.0, %v2406
    %v2408 = vpop.f32.mrf.mxu0
    %2409 = vdwg.mxu0
    %v2410 = vadd.f32 %v459, %v2348
    %v2411 = vadd.f32 %v462, %v2351
    %v2412 = vadd.f32 %v467, %v2356
    %v2413 = vadd.f32 %v470, %v2359
    %v2414 = vadd.f32 %v475, %v2364
    %v2415 = vadd.f32 %v478, %v2367
    %v2416 = vadd.f32 %v483, %v2372
    %v2417 = vadd.f32 %v486, %v2375
    %v2418 = vadd.f32 %v491, %v2380
    %v2419 = vadd.f32 %v494, %v2383
    %v2420 = vadd.f32 %v499, %v2388
    %v2421 = vadd.f32 %v502, %v2391
    %v2422 = vadd.f32 %v507, %v2396
    %v2423 = vadd.f32 %v510, %v2399
    %v2424 = vadd.f32 %v515, %v2404
    %v2425 = vadd.f32 %v518, %v2407
    %v2426 = vxor.u32 %v2410, 2147483648
    %v2427 = vxor.u32 %v2411, 2147483648
    %v2428 = vxor.u32 %v2412, 2147483648
    %v2429 = vxor.u32 %v2413, 2147483648
    %v2430 = vxor.u32 %v2414, 2147483648
    %v2431 = vxor.u32 %v2415, 2147483648
    %v2432 = vxor.u32 %v2416, 2147483648
    %v2433 = vxor.u32 %v2417, 2147483648
    %v2434 = vxor.u32 %v2418, 2147483648
    %v2435 = vxor.u32 %v2419, 2147483648
    %v2436 = vxor.u32 %v2420, 2147483648
    %v2437 = vxor.u32 %v2421, 2147483648
    %v2438 = vxor.u32 %v2422, 2147483648
    %v2439 = vxor.u32 %v2423, 2147483648
    %v2440 = vxor.u32 %v2424, 2147483648
    %v2441 = vxor.u32 %v2425, 2147483648
    %v2442 = vmul.f32 %v2426, 1.442695
    %v2443 = vpow.pop %v2442
    %v2444 = vmul.f32 %v2427, 1.442695
    %v2445 = vpow.pop %v2444
    %v2446 = vmul.f32 %v2428, 1.442695
    %v2447 = vpow.pop %v2446
    %v2448 = vmul.f32 %v2429, 1.442695
    %v2449 = vpow.pop %v2448
    %v2450 = vmul.f32 %v2430, 1.442695
    %v2451 = vpow.pop %v2450
    %v2452 = vmul.f32 %v2431, 1.442695
    %v2453 = vpow.pop %v2452
    %v2454 = vmul.f32 %v2432, 1.442695
    %v2455 = vpow.pop %v2454
    %v2456 = vmul.f32 %v2433, 1.442695
    %v2457 = vpow.pop %v2456
    %v2458 = vmul.f32 %v2434, 1.442695
    %v2459 = vpow.pop %v2458
    %v2460 = vmul.f32 %v2435, 1.442695
    %v2461 = vpow.pop %v2460
    %v2462 = vmul.f32 %v2436, 1.442695
    %v2463 = vpow.pop %v2462
    %v2464 = vmul.f32 %v2437, 1.442695
    %v2465 = vpow.pop %v2464
    %v2466 = vmul.f32 %v2438, 1.442695
    %v2467 = vpow.pop %v2466
    %v2468 = vmul.f32 %v2439, 1.442695
    %v2469 = vpow.pop %v2468
    %v2470 = vmul.f32 %v2440, 1.442695
    %v2471 = vpow.pop %v2470
    %v2472 = vmul.f32 %v2441, 1.442695
    %v2473 = vpow.pop %v2472
    %v2474 = vadd.f32 %v2443, 1.0
    %v2475 = vadd.f32 %v2445, 1.0
    %v2476 = vadd.f32 %v2447, 1.0
    %v2477 = vadd.f32 %v2449, 1.0
    %v2478 = vadd.f32 %v2451, 1.0
    %v2479 = vadd.f32 %v2453, 1.0
    %v2480 = vadd.f32 %v2455, 1.0
    %v2481 = vadd.f32 %v2457, 1.0
    %v2482 = vadd.f32 %v2459, 1.0
    %v2483 = vadd.f32 %v2461, 1.0
    %v2484 = vadd.f32 %v2463, 1.0
    %v2485 = vadd.f32 %v2465, 1.0
    %v2486 = vadd.f32 %v2467, 1.0
    %v2487 = vadd.f32 %v2469, 1.0
    %v2488 = vadd.f32 %v2471, 1.0
    %v2489 = vadd.f32 %v2473, 1.0
    %v2490 = vrcp.pop %v2474
    %v2491 = vmul.f32 1.0, %v2490
    %v2492 = vrcp.pop %v2475
    %v2493 = vmul.f32 1.0, %v2492
    %v2494 = vrcp.pop %v2476
    %v2495 = vmul.f32 1.0, %v2494
    %v2496 = vrcp.pop %v2477
    %v2497 = vmul.f32 1.0, %v2496
    %v2498 = vrcp.pop %v2478
    %v2499 = vmul.f32 1.0, %v2498
    %v2500 = vrcp.pop %v2479
    %v2501 = vmul.f32 1.0, %v2500
    %v2502 = vrcp.pop %v2480
    %v2503 = vmul.f32 1.0, %v2502
    %v2504 = vrcp.pop %v2481
    %v2505 = vmul.f32 1.0, %v2504
    %v2506 = vrcp.pop %v2482
    %v2507 = vmul.f32 1.0, %v2506
    %v2508 = vrcp.pop %v2483
    %v2509 = vmul.f32 1.0, %v2508
    %v2510 = vrcp.pop %v2484
    %v2511 = vmul.f32 1.0, %v2510
    %v2512 = vrcp.pop %v2485
    %v2513 = vmul.f32 1.0, %v2512
    %v2514 = vrcp.pop %v2486
    %v2515 = vmul.f32 1.0, %v2514
    %v2516 = vrcp.pop %v2487
    %v2517 = vmul.f32 1.0, %v2516
    %v2518 = vrcp.pop %v2488
    %v2519 = vmul.f32 1.0, %v2518
    %v2520 = vrcp.pop %v2489
    %v2521 = vmul.f32 1.0, %v2520
    %v2522 = vpack.c.bf16 %v2242, %v2241
    %v2523 = vpack.c.bf16 %v2244, %v2243
    %v2524 = vpack.c.bf16 %v2246, %v2245
    %v2525 = vpack.c.bf16 %v2248, %v2247
    %v2526 = vpack.c.bf16 %v2250, %v2249
    %v2527 = vpack.c.bf16 %v2252, %v2251
    %v2528 = vpack.c.bf16 %v2254, %v2253
    %v2529 = vpack.c.bf16 %v2256, %v2255
    %v2546 = vunpack.c.l.b16 %v889
    %v2547 = vunpack.c.l.b16 %v890
    %v2548 = vunpack.c.l.b16 %v891
    %v2549 = vunpack.c.l.b16 %v892
    %v2550 = vunpack.c.l.b16 %v893
    %v2551 = vunpack.c.l.b16 %v894
    %v2552 = vunpack.c.l.b16 %v895
    %v2553 = vunpack.c.l.b16 %v896
    %v2554 = vunpack.c.l.b16 %v897
    %v2555 = vunpack.c.l.b16 %v898
    %v2556 = vunpack.c.l.b16 %v899
    %v2557 = vunpack.c.l.b16 %v900
    %v2558 = vunpack.c.l.b16 %v901
    %v2559 = vunpack.c.l.b16 %v902
    %v2560 = vunpack.c.l.b16 %v903
    %v2561 = vunpack.c.l.b16 %v904
    %v2562 = vpack.c.b16 %v2547, %v2546
    %v2563 = vpack.c.b16 %v2549, %v2548
    %v2564 = vpack.c.b16 %v2551, %v2550
    %v2565 = vpack.c.b16 %v2553, %v2552
    %v2566 = vpack.c.b16 %v2555, %v2554
    %v2567 = vpack.c.b16 %v2557, %v2556
    %v2568 = vpack.c.b16 %v2559, %v2558
    %v2569 = vpack.c.b16 %v2561, %v2560
    %2578 = vmatprep.subr.bf16.mxu0 0
    %2579 = vmatpush1.bf16.msra.mxu0 %v2569
    %2580 = vmatprep.subr.bf16.mxu0 0
    %2581 = vmatpush1.bf16.msra.mxu0 %v2568
    %2582 = vmatprep.subr.bf16.mxu0 0
    %2583 = vmatpush1.bf16.msra.mxu0 %v2567
    %2584 = vmatprep.subr.bf16.mxu0 0
    %2585 = vmatpush1.bf16.msra.mxu0 %v2566
    %2586 = vmatprep.subr.bf16.mxu0 0
    %2587 = vmatpush1.bf16.msra.mxu0 %v2565
    %2588 = vmatprep.subr.bf16.mxu0 0
    %2589 = vmatpush1.bf16.msra.mxu0 %v2564
    %2590 = vmatprep.subr.bf16.mxu0 0
    %2591 = vmatpush1.bf16.msra.mxu0 %v2563
    %2592 = vmatprep.subr.bf16.mxu0 0
    %2593 = vmatpush1.bf16.msra.mxu0 %v2562
    %2594 = vmatprep.subr.bf16.mxu0 0
    %2595 = vmatpush2.bf16.msra.mxu0 0
    %2596 = vmatprep.subr.bf16.mxu0 0
    %2597 = vmatpush2.bf16.msra.mxu0 0
    %2598 = vmatprep.subr.bf16.mxu0 0
    %2599 = vmatpush2.bf16.msra.mxu0 0
    %2600 = vmatprep.subr.bf16.mxu0 0
    %2601 = vmatpush2.bf16.msra.mxu0 0
    %2602 = vmatprep.subr.bf16.mxu0 0
    %2603 = vmatpush2.bf16.msra.mxu0 0
    %2604 = vmatprep.subr.bf16.mxu0 0
    %2605 = vmatpush2.bf16.msra.mxu0 0
    %2606 = vmatprep.subr.bf16.mxu0 0
    %2607 = vmatpush2.bf16.msra.mxu0 0
    %2608 = vmatprep.subr.bf16.mxu0 0
    %2609 = vmatpush2.bf16.msra.mxu0 0
    %2610 = vmatprep.mubr.bf16.mxu0 0
    %2611 = vmatmul.mubr.bf16.gmra.mxu0 %v2522
    %v2612 = vpop.f32.mrf.mxu0
    %v2613 = vadd.f32 0.0, %v2612
    %v2614 = vpop.f32.mrf.mxu0
    %v2615 = vpop.f32.mrf.mxu0
    %v2616 = vadd.f32 0.0, %v2615
    %v2617 = vpop.f32.mrf.mxu0
    %2618 = vmatprep.mubr.bf16.mxu0 0
    %2619 = vmatmul.mubr.bf16.gmra.mxu0 %v2523
    %v2620 = vpop.f32.mrf.mxu0
    %v2621 = vadd.f32 0.0, %v2620
    %v2622 = vpop.f32.mrf.mxu0
    %v2623 = vpop.f32.mrf.mxu0
    %v2624 = vadd.f32 0.0, %v2623
    %v2625 = vpop.f32.mrf.mxu0
    %2626 = vmatprep.mubr.bf16.mxu0 0
    %2627 = vmatmul.mubr.bf16.gmra.mxu0 %v2524
    %v2628 = vpop.f32.mrf.mxu0
    %v2629 = vadd.f32 0.0, %v2628
    %v2630 = vpop.f32.mrf.mxu0
    %v2631 = vpop.f32.mrf.mxu0
    %v2632 = vadd.f32 0.0, %v2631
    %v2633 = vpop.f32.mrf.mxu0
    %2634 = vmatprep.mubr.bf16.mxu0 0
    %2635 = vmatmul.mubr.bf16.gmra.mxu0 %v2525
    %v2636 = vpop.f32.mrf.mxu0
    %v2637 = vadd.f32 0.0, %v2636
    %v2638 = vpop.f32.mrf.mxu0
    %v2639 = vpop.f32.mrf.mxu0
    %v2640 = vadd.f32 0.0, %v2639
    %v2641 = vpop.f32.mrf.mxu0
    %2642 = vmatprep.mubr.bf16.mxu0 0
    %2643 = vmatmul.mubr.bf16.gmra.mxu0 %v2526
    %v2644 = vpop.f32.mrf.mxu0
    %v2645 = vadd.f32 0.0, %v2644
    %v2646 = vpop.f32.mrf.mxu0
    %v2647 = vpop.f32.mrf.mxu0
    %v2648 = vadd.f32 0.0, %v2647
    %v2649 = vpop.f32.mrf.mxu0
    %2650 = vmatprep.mubr.bf16.mxu0 0
    %2651 = vmatmul.mubr.bf16.gmra.mxu0 %v2527
    %v2652 = vpop.f32.mrf.mxu0
    %v2653 = vadd.f32 0.0, %v2652
    %v2654 = vpop.f32.mrf.mxu0
    %v2655 = vpop.f32.mrf.mxu0
    %v2656 = vadd.f32 0.0, %v2655
    %v2657 = vpop.f32.mrf.mxu0
    %2658 = vmatprep.mubr.bf16.mxu0 0
    %2659 = vmatmul.mubr.bf16.gmra.mxu0 %v2528
    %v2660 = vpop.f32.mrf.mxu0
    %v2661 = vadd.f32 0.0, %v2660
    %v2662 = vpop.f32.mrf.mxu0
    %v2663 = vpop.f32.mrf.mxu0
    %v2664 = vadd.f32 0.0, %v2663
    %v2665 = vpop.f32.mrf.mxu0
    %2666 = vmatprep.mubr.bf16.mxu0 0
    %2667 = vmatmul.mubr.bf16.gmra.mxu0 %v2529
    %v2668 = vpop.f32.mrf.mxu0
    %v2669 = vadd.f32 0.0, %v2668
    %v2670 = vpop.f32.mrf.mxu0
    %v2671 = vpop.f32.mrf.mxu0
    %v2672 = vadd.f32 0.0, %v2671
    %v2673 = vpop.f32.mrf.mxu0
    %2674 = vdwg.mxu0
    %v2675 = vadd.f32 %v795, %v2613
    %v2676 = vadd.f32 %v798, %v2616
    %v2677 = vadd.f32 %v803, %v2621
    %v2678 = vadd.f32 %v806, %v2624
    %v2679 = vadd.f32 %v811, %v2629
    %v2680 = vadd.f32 %v814, %v2632
    %v2681 = vadd.f32 %v819, %v2637
    %v2682 = vadd.f32 %v822, %v2640
    %v2683 = vadd.f32 %v827, %v2645
    %v2684 = vadd.f32 %v830, %v2648
    %v2685 = vadd.f32 %v835, %v2653
    %v2686 = vadd.f32 %v838, %v2656
    %v2687 = vadd.f32 %v843, %v2661
    %v2688 = vadd.f32 %v846, %v2664
    %v2689 = vadd.f32 %v851, %v2669
    %v2690 = vadd.f32 %v854, %v2672
    %v2691 = vtanh.pop %v2675
    %v2692 = vtanh.pop %v2676
    %v2693 = vtanh.pop %v2677
    %v2694 = vtanh.pop %v2678
    %v2695 = vtanh.pop %v2679
    %v2696 = vtanh.pop %v2680
    %v2697 = vtanh.pop %v2681
    %v2698 = vtanh.pop %v2682
    %v2699 = vtanh.pop %v2683
    %v2700 = vtanh.pop %v2684
    %v2701 = vtanh.pop %v2685
    %v2702 = vtanh.pop %v2686
    %v2703 = vtanh.pop %v2687
    %v2704 = vtanh.pop %v2688
    %v2705 = vtanh.pop %v2689
    %v2706 = vtanh.pop %v2690
    %v2707 = vsub.f32 %v2691, %v2097
    %v2708 = vsub.f32 %v2692, %v2098
    %v2709 = vsub.f32 %v2693, %v2099
    %v2710 = vsub.f32 %v2694, %v2100
    %v2711 = vsub.f32 %v2695, %v2101
    %v2712 = vsub.f32 %v2696, %v2102
    %v2713 = vsub.f32 %v2697, %v2103
    %v2714 = vsub.f32 %v2698, %v2104
    %v2715 = vsub.f32 %v2699, %v2105
    %v2716 = vsub.f32 %v2700, %v2106
    %v2717 = vsub.f32 %v2701, %v2107
    %v2718 = vsub.f32 %v2702, %v2108
    %v2719 = vsub.f32 %v2703, %v2109
    %v2720 = vsub.f32 %v2704, %v2110
    %v2721 = vsub.f32 %v2705, %v2111
    %v2722 = vsub.f32 %v2706, %v2112
    %v2723 = vmul.f32 %v2491, %v2707
    %v2724 = vmul.f32 %v2493, %v2708
    %v2725 = vmul.f32 %v2495, %v2709
    %v2726 = vmul.f32 %v2497, %v2710
    %v2727 = vmul.f32 %v2499, %v2711
    %v2728 = vmul.f32 %v2501, %v2712
    %v2729 = vmul.f32 %v2503, %v2713
    %v2730 = vmul.f32 %v2505, %v2714
    %v2731 = vmul.f32 %v2507, %v2715
    %v2732 = vmul.f32 %v2509, %v2716
    %v2733 = vmul.f32 %v2511, %v2717
    %v2734 = vmul.f32 %v2513, %v2718
    %v2735 = vmul.f32 %v2515, %v2719
    %v2736 = vmul.f32 %v2517, %v2720
    %v2737 = vmul.f32 %v2519, %v2721
    %v2738 = vmul.f32 %v2521, %v2722
    %v2739 = vadd.f32 %v2097, %v2723
    %v2740 = vadd.f32 %v2098, %v2724
    %v2741 = vadd.f32 %v2099, %v2725
    %v2742 = vadd.f32 %v2100, %v2726
    %v2743 = vadd.f32 %v2101, %v2727
    %v2744 = vadd.f32 %v2102, %v2728
    %v2745 = vadd.f32 %v2103, %v2729
    %v2746 = vadd.f32 %v2104, %v2730
    %v2747 = vadd.f32 %v2105, %v2731
    %v2748 = vadd.f32 %v2106, %v2732
    %v2749 = vadd.f32 %v2107, %v2733
    %v2750 = vadd.f32 %v2108, %v2734
    %v2751 = vadd.f32 %v2109, %v2735
    %v2752 = vadd.f32 %v2110, %v2736
    %v2753 = vadd.f32 %v2111, %v2737
    %v2754 = vadd.f32 %v2112, %v2738
    %v2755 = vmul.f32 %v2739, %v289
    %v2756 = vmul.f32 %v2740, %v290
    %v2757 = vmul.f32 %v2741, %v291
    %v2758 = vmul.f32 %v2742, %v292
    %v2759 = vmul.f32 %v2743, %v293
    %v2760 = vmul.f32 %v2744, %v294
    %v2761 = vmul.f32 %v2745, %v295
    %v2762 = vmul.f32 %v2746, %v296
    %v2763 = vmul.f32 %v2747, %v297
    %v2764 = vmul.f32 %v2748, %v298
    %v2765 = vmul.f32 %v2749, %v299
    %v2766 = vmul.f32 %v2750, %v300
    %v2767 = vmul.f32 %v2751, %v301
    %v2768 = vmul.f32 %v2752, %v302
    %v2769 = vmul.f32 %v2753, %v303
    %v2770 = vmul.f32 %v2754, %v304
    %v2771 = vpack.c.bf16 %v2756, %v2755
    %v2772 = vpack.c.bf16 %v2758, %v2757
    %v2773 = vpack.c.bf16 %v2760, %v2759
    %v2774 = vpack.c.bf16 %v2762, %v2761
    %v2775 = vpack.c.bf16 %v2764, %v2763
    %v2776 = vpack.c.bf16 %v2766, %v2765
    %v2777 = vpack.c.bf16 %v2768, %v2767
    %v2778 = vpack.c.bf16 %v2770, %v2769
    %2779 = vmatprep.subr.bf16.mxu0 0
    %2780 = vmatpush1.bf16.msra.mxu0 %v944
    %2781 = vmatprep.subr.bf16.mxu0 0
    %2782 = vmatpush1.bf16.msra.mxu0 %v943
    %2783 = vmatprep.subr.bf16.mxu0 0
    %2784 = vmatpush1.bf16.msra.mxu0 %v942
    %2785 = vmatprep.subr.bf16.mxu0 0
    %2786 = vmatpush1.bf16.msra.mxu0 %v941
    %2787 = vmatprep.subr.bf16.mxu0 0
    %2788 = vmatpush1.bf16.msra.mxu0 %v940
    %2789 = vmatprep.subr.bf16.mxu0 0
    %2790 = vmatpush1.bf16.msra.mxu0 %v939
    %2791 = vmatprep.subr.bf16.mxu0 0
    %2792 = vmatpush1.bf16.msra.mxu0 %v938
    %2793 = vmatprep.subr.bf16.mxu0 0
    %2794 = vmatpush1.bf16.msra.mxu0 %v937
    %2795 = vmatprep.subr.bf16.mxu0 0
    %2796 = vmatpush2.bf16.msra.mxu0 0
    %2797 = vmatprep.subr.bf16.mxu0 0
    %2798 = vmatpush2.bf16.msra.mxu0 0
    %2799 = vmatprep.subr.bf16.mxu0 0
    %2800 = vmatpush2.bf16.msra.mxu0 0
    %2801 = vmatprep.subr.bf16.mxu0 0
    %2802 = vmatpush2.bf16.msra.mxu0 0
    %2803 = vmatprep.subr.bf16.mxu0 0
    %2804 = vmatpush2.bf16.msra.mxu0 0
    %2805 = vmatprep.subr.bf16.mxu0 0
    %2806 = vmatpush2.bf16.msra.mxu0 0
    %2807 = vmatprep.subr.bf16.mxu0 0
    %2808 = vmatpush2.bf16.msra.mxu0 0
    %2809 = vmatprep.subr.bf16.mxu0 0
    %2810 = vmatpush2.bf16.msra.mxu0 0
    %2811 = vmatprep.mubr.bf16.mxu0 0
    %2812 = vmatmul.mubr.bf16.gmra.mxu0 %v2771
    %v2813 = vpop.f32.mrf.mxu0
    %v2814 = vadd.f32 0.0, %v2813
    %v2815 = vpop.f32.mrf.mxu0
    %v2816 = vpop.f32.mrf.mxu0
    %v2817 = vadd.f32 0.0, %v2816
    %v2818 = vpop.f32.mrf.mxu0
    %2819 = vmatprep.mubr.bf16.mxu0 0
    %2820 = vmatmul.mubr.bf16.gmra.mxu0 %v2772
    %v2821 = vpop.f32.mrf.mxu0
    %v2822 = vadd.f32 0.0, %v2821
    %v2823 = vpop.f32.mrf.mxu0
    %v2824 = vpop.f32.mrf.mxu0
    %v2825 = vadd.f32 0.0, %v2824
    %v2826 = vpop.f32.mrf.mxu0
    %2827 = vmatprep.mubr.bf16.mxu0 0
    %2828 = vmatmul.mubr.bf16.gmra.mxu0 %v2773
    %v2829 = vpop.f32.mrf.mxu0
    %v2830 = vadd.f32 0.0, %v2829
    %v2831 = vpop.f32.mrf.mxu0
    %v2832 = vpop.f32.mrf.mxu0
    %v2833 = vadd.f32 0.0, %v2832
    %v2834 = vpop.f32.mrf.mxu0
    %2835 = vmatprep.mubr.bf16.mxu0 0
    %2836 = vmatmul.mubr.bf16.gmra.mxu0 %v2774
    %v2837 = vpop.f32.mrf.mxu0
    %v2838 = vadd.f32 0.0, %v2837
    %v2839 = vpop.f32.mrf.mxu0
    %v2840 = vpop.f32.mrf.mxu0
    %v2841 = vadd.f32 0.0, %v2840
    %v2842 = vpop.f32.mrf.mxu0
    %2843 = vmatprep.mubr.bf16.mxu0 0
    %2844 = vmatmul.mubr.bf16.gmra.mxu0 %v2775
    %v2845 = vpop.f32.mrf.mxu0
    %v2846 = vadd.f32 0.0, %v2845
    %v2847 = vpop.f32.mrf.mxu0
    %v2848 = vpop.f32.mrf.mxu0
    %v2849 = vadd.f32 0.0, %v2848
    %v2850 = vpop.f32.mrf.mxu0
    %2851 = vmatprep.mubr.bf16.mxu0 0
    %2852 = vmatmul.mubr.bf16.gmra.mxu0 %v2776
    %v2853 = vpop.f32.mrf.mxu0
    %v2854 = vadd.f32 0.0, %v2853
    %v2855 = vpop.f32.mrf.mxu0
    %v2856 = vpop.f32.mrf.mxu0
    %v2857 = vadd.f32 0.0, %v2856
    %v2858 = vpop.f32.mrf.mxu0
    %2859 = vmatprep.mubr.bf16.mxu0 0
    %2860 = vmatmul.mubr.bf16.gmra.mxu0 %v2777
    %v2861 = vpop.f32.mrf.mxu0
    %v2862 = vadd.f32 0.0, %v2861
    %v2863 = vpop.f32.mrf.mxu0
    %v2864 = vpop.f32.mrf.mxu0
    %v2865 = vadd.f32 0.0, %v2864
    %v2866 = vpop.f32.mrf.mxu0
    %2867 = vmatprep.mubr.bf16.mxu0 0
    %2868 = vmatmul.mubr.bf16.gmra.mxu0 %v2778
    %v2869 = vpop.f32.mrf.mxu0
    %v2870 = vadd.f32 0.0, %v2869
    %v2871 = vpop.f32.mrf.mxu0
    %v2872 = vpop.f32.mrf.mxu0
    %v2873 = vadd.f32 0.0, %v2872
    %v2874 = vpop.f32.mrf.mxu0
    %2875 = vdwg.mxu0
    %v2876 = vpack.c.bf16 %v2817, %v2814
    %v2877 = vpack.c.bf16 %v2825, %v2822
    %v2878 = vpack.c.bf16 %v2833, %v2830
    %v2879 = vpack.c.bf16 %v2841, %v2838
    %v2880 = vpack.c.bf16 %v2849, %v2846
    %v2881 = vpack.c.bf16 %v2857, %v2854
    %v2882 = vpack.c.bf16 %v2865, %v2862
    %v2883 = vpack.c.bf16 %v2873, %v2870
    %s2884 = sshll.u32 %s1059, 4
    %2885 = dma.done [#allocation3], %s2884
    // Predicated region
    $region122: #{tpu_custom_call.1} parent=1 // pred_check
      _
    $region123: #{tpu_custom_call.1} parent=1 // pred_check_branch
      %2887 = sbr.rel target = $region125
    $region124: #{tpu_custom_call.1} parent=1 // pred_region
      %2888 = sst [smem:[#allocation24]] [#allocation35]
      %2889 = sst [smem:[#allocation25]] [#allocation34]
    $region125: #{tpu_custom_call.1} parent=1 // pred_fallthru
      _
    %2891 = shalt.err (0)
    %s2893 = sshll.u32 %s1063, 4
    %s2894 = int_to_ptr.vmem [resolvable:$true] %s2893
    %2896 = dma.hbm_to_vmem [thread:$0]  %s1062, 512, %s2894, %s1064
    %v2897 = vld [vmem:[#allocation2] sm:$0xff]
    %v2898 = vld [vmem:[#allocation2 + $0x8] sm:$0xff]
    %v2899 = vld [vmem:[#allocation2 + $0x10] sm:$0xff]
    %v2900 = vld [vmem:[#allocation2 + $0x18] sm:$0xff]
    %v2901 = vunpack.c.l.s8.bf16 %v2897
    %v2902 = vunpack.c.h.s8.bf16 %v2897
    %v2903 = vunpack.c.l.s8.bf16 %v2898
    %v2904 = vunpack.c.h.s8.bf16 %v2898
    %v2905 = vunpack.c.l.s8.bf16 %v2899
    %v2906 = vunpack.c.h.s8.bf16 %v2899
    %v2907 = vunpack.c.l.s8.bf16 %v2900
    %v2908 = vunpack.c.h.s8.bf16 %v2900
    %2909 = vmatprep.subr.bf16.mxu0 %v2883
    %2910 = vmatpush1.bf16.msra.mxu0 %v2778
    %2911 = vmatprep.subr.bf16.mxu0 %v2882
    %2912 = vmatpush1.bf16.msra.mxu0 %v2777
    %2913 = vmatprep.subr.bf16.mxu0 %v2881
    %2914 = vmatpush1.bf16.msra.mxu0 %v2776
    %2915 = vmatprep.subr.bf16.mxu0 %v2880
    %2916 = vmatpush1.bf16.msra.mxu0 %v2775
    %2917 = vmatprep.subr.bf16.mxu0 %v2879
    %2918 = vmatpush1.bf16.msra.mxu0 %v2774
    %2919 = vmatprep.subr.bf16.mxu0 %v2878
    %2920 = vmatpush1.bf16.msra.mxu0 %v2773
    %2921 = vmatprep.subr.bf16.mxu0 %v2877
    %2922 = vmatpush1.bf16.msra.mxu0 %v2772
    %2923 = vmatprep.subr.bf16.mxu0 %v2876
    %2924 = vmatpush1.bf16.msra.mxu0 %v2771
    %2925 = vmatprep.subr.bf16.mxu0 0
    %2926 = vmatpush2.bf16.msra.mxu0 0
    %2927 = vmatprep.subr.bf16.mxu0 0
    %2928 = vmatpush2.bf16.msra.mxu0 0
    %2929 = vmatprep.subr.bf16.mxu0 0
    %2930 = vmatpush2.bf16.msra.mxu0 0
    %2931 = vmatprep.subr.bf16.mxu0 0
    %2932 = vmatpush2.bf16.msra.mxu0 0
    %2933 = vmatprep.subr.bf16.mxu0 0
    %2934 = vmatpush2.bf16.msra.mxu0 0
    %2935 = vmatprep.subr.bf16.mxu0 0
    %2936 = vmatpush2.bf16.msra.mxu0 0
    %2937 = vmatprep.subr.bf16.mxu0 0
    %2938 = vmatpush2.bf16.msra.mxu0 0
    %2939 = vmatprep.subr.bf16.mxu0 0
    %2940 = vmatpush2.bf16.msra.mxu0 0
    %2941 = vmatprep.mubr.bf16.mxu0 0
    %2942 = vmatmul.mubr.bf16.gmra.mxu0 %v2901
    %v2943 = vpop.f32.mrf.mxu0
    %v2944 = vadd.f32 0.0, %v2943
    %v2945 = vpop.f32.mrf.mxu0
    %v2946 = vadd.f32 0.0, %v2945
    %v2947 = vpop.f32.mrf.mxu0
    %v2948 = vadd.f32 0.0, %v2947
    %v2949 = vpop.f32.mrf.mxu0
    %v2950 = vadd.f32 0.0, %v2949
    %2951 = vmatprep.mubr.bf16.mxu0 0
    %2952 = vmatmul.mubr.bf16.gmra.mxu0 %v2902
    %v2953 = vpop.f32.mrf.mxu0
    %v2954 = vadd.f32 0.0, %v2953
    %v2955 = vpop.f32.mrf.mxu0
    %v2956 = vadd.f32 0.0, %v2955
    %v2957 = vpop.f32.mrf.mxu0
    %v2958 = vadd.f32 0.0, %v2957
    %v2959 = vpop.f32.mrf.mxu0
    %v2960 = vadd.f32 0.0, %v2959
    %2961 = vmatprep.mubr.bf16.mxu0 0
    %2962 = vmatmul.mubr.bf16.gmra.mxu0 %v2903
    %v2963 = vpop.f32.mrf.mxu0
    %v2964 = vadd.f32 0.0, %v2963
    %v2965 = vpop.f32.mrf.mxu0
    %v2966 = vadd.f32 0.0, %v2965
    %v2967 = vpop.f32.mrf.mxu0
    %v2968 = vadd.f32 0.0, %v2967
    %v2969 = vpop.f32.mrf.mxu0
    %v2970 = vadd.f32 0.0, %v2969
    %2971 = vmatprep.mubr.bf16.mxu0 0
    %2972 = vmatmul.mubr.bf16.gmra.mxu0 %v2904
    %v2973 = vpop.f32.mrf.mxu0
    %v2974 = vadd.f32 0.0, %v2973
    %v2975 = vpop.f32.mrf.mxu0
    %v2976 = vadd.f32 0.0, %v2975
    %v2977 = vpop.f32.mrf.mxu0
    %v2978 = vadd.f32 0.0, %v2977
    %v2979 = vpop.f32.mrf.mxu0
    %v2980 = vadd.f32 0.0, %v2979
    %2981 = vmatprep.mubr.bf16.mxu0 0
    %2982 = vmatmul.mubr.bf16.gmra.mxu0 %v2905
    %v2983 = vpop.f32.mrf.mxu0
    %v2984 = vadd.f32 0.0, %v2983
    %v2985 = vpop.f32.mrf.mxu0
    %v2986 = vadd.f32 0.0, %v2985
    %v2987 = vpop.f32.mrf.mxu0
    %v2988 = vadd.f32 0.0, %v2987
    %v2989 = vpop.f32.mrf.mxu0
    %v2990 = vadd.f32 0.0, %v2989
    %2991 = vmatprep.mubr.bf16.mxu0 0
    %2992 = vmatmul.mubr.bf16.gmra.mxu0 %v2906
    %v2993 = vpop.f32.mrf.mxu0
    %v2994 = vadd.f32 0.0, %v2993
    %v2995 = vpop.f32.mrf.mxu0
    %v2996 = vadd.f32 0.0, %v2995
    %v2997 = vpop.f32.mrf.mxu0
    %v2998 = vadd.f32 0.0, %v2997
    %v2999 = vpop.f32.mrf.mxu0
    %v3000 = vadd.f32 0.0, %v2999
    %3001 = vmatprep.mubr.bf16.mxu0 0
    %3002 = vmatmul.mubr.bf16.gmra.mxu0 %v2907
    %v3003 = vpop.f32.mrf.mxu0
    %v3004 = vadd.f32 0.0, %v3003
    %v3005 = vpop.f32.mrf.mxu0
    %v3006 = vadd.f32 0.0, %v3005
    %v3007 = vpop.f32.mrf.mxu0
    %v3008 = vadd.f32 0.0, %v3007
    %v3009 = vpop.f32.mrf.mxu0
    %v3010 = vadd.f32 0.0, %v3009
    %3011 = vmatprep.mubr.bf16.mxu0 0
    %3012 = vmatmul.mubr.bf16.gmra.mxu0 %v2908
    %v3013 = vpop.f32.mrf.mxu0
    %v3014 = vadd.f32 0.0, %v3013
    %v3015 = vpop.f32.mrf.mxu0
    %v3016 = vadd.f32 0.0, %v3015
    %v3017 = vpop.f32.mrf.mxu0
    %v3018 = vadd.f32 0.0, %v3017
    %v3019 = vpop.f32.mrf.mxu0
    %v3020 = vadd.f32 0.0, %v3019
    %3021 = vdwg.mxu0
    %v3022 = vadd.f32 %v2944, 0.0
    %v3023 = vadd.f32 %v2948, 0.0
    %v3024 = vadd.f32 %v2954, 0.0
    %v3025 = vadd.f32 %v2958, 0.0
    %v3026 = vadd.f32 %v2964, 0.0
    %v3027 = vadd.f32 %v2968, 0.0
    %v3028 = vadd.f32 %v2974, 0.0
    %v3029 = vadd.f32 %v2978, 0.0
    %v3030 = vadd.f32 %v2984, 0.0
    %v3031 = vadd.f32 %v2988, 0.0
    %v3032 = vadd.f32 %v2994, 0.0
    %v3033 = vadd.f32 %v2998, 0.0
    %v3034 = vadd.f32 %v3004, 0.0
    %v3035 = vadd.f32 %v3008, 0.0
    %v3036 = vadd.f32 %v3014, 0.0
    %v3037 = vadd.f32 %v3018, 0.0
    %v3038 = vadd.f32 %v627, %v2946
    %v3039 = vadd.f32 %v630, %v2950
    %v3040 = vadd.f32 %v635, %v2956
    %v3041 = vadd.f32 %v638, %v2960
    %v3042 = vadd.f32 %v643, %v2966
    %v3043 = vadd.f32 %v646, %v2970
    %v3044 = vadd.f32 %v651, %v2976
    %v3045 = vadd.f32 %v654, %v2980
    %v3046 = vadd.f32 %v659, %v2986
    %v3047 = vadd.f32 %v662, %v2990
    %v3048 = vadd.f32 %v667, %v2996
    %v3049 = vadd.f32 %v670, %v3000
    %v3050 = vadd.f32 %v675, %v3006
    %v3051 = vadd.f32 %v678, %v3010
    %v3052 = vadd.f32 %v683, %v3016
    %v3053 = vadd.f32 %v686, %v3020
    %v3054 = vxor.u32 %v3038, 2147483648
    %v3055 = vxor.u32 %v3039, 2147483648
    %v3056 = vxor.u32 %v3040, 2147483648
    %v3057 = vxor.u32 %v3041, 2147483648
    %v3058 = vxor.u32 %v3042, 2147483648
    %v3059 = vxor.u32 %v3043, 2147483648
    %v3060 = vxor.u32 %v3044, 2147483648
    %v3061 = vxor.u32 %v3045, 2147483648
    %v3062 = vxor.u32 %v3046, 2147483648
    %v3063 = vxor.u32 %v3047, 2147483648
    %v3064 = vxor.u32 %v3048, 2147483648
    %v3065 = vxor.u32 %v3049, 2147483648
    %v3066 = vxor.u32 %v3050, 2147483648
    %v3067 = vxor.u32 %v3051, 2147483648
    %v3068 = vxor.u32 %v3052, 2147483648
    %v3069 = vxor.u32 %v3053, 2147483648
    %v3070 = vmul.f32 %v3054, 1.442695
    %v3071 = vpow.pop %v3070
    %v3072 = vmul.f32 %v3055, 1.442695
    %v3073 = vpow.pop %v3072
    %v3074 = vmul.f32 %v3056, 1.442695
    %v3075 = vpow.pop %v3074
    %v3076 = vmul.f32 %v3057, 1.442695
    %v3077 = vpow.pop %v3076
    %v3078 = vmul.f32 %v3058, 1.442695
    %v3079 = vpow.pop %v3078
    %v3080 = vmul.f32 %v3059, 1.442695
    %v3081 = vpow.pop %v3080
    %v3082 = vmul.f32 %v3060, 1.442695
    %v3083 = vpow.pop %v3082
    %v3084 = vmul.f32 %v3061, 1.442695
    %v3085 = vpow.pop %v3084
    %v3086 = vmul.f32 %v3062, 1.442695
    %v3087 = vpow.pop %v3086
    %v3088 = vmul.f32 %v3063, 1.442695
    %v3089 = vpow.pop %v3088
    %v3090 = vmul.f32 %v3064, 1.442695
    %v3091 = vpow.pop %v3090
    %v3092 = vmul.f32 %v3065, 1.442695
    %v3093 = vpow.pop %v3092
    %v3094 = vmul.f32 %v3066, 1.442695
    %v3095 = vpow.pop %v3094
    %v3096 = vmul.f32 %v3067, 1.442695
    %v3097 = vpow.pop %v3096
    %v3098 = vmul.f32 %v3068, 1.442695
    %v3099 = vpow.pop %v3098
    %v3100 = vmul.f32 %v3069, 1.442695
    %v3101 = vpow.pop %v3100
    %v3102 = vadd.f32 %v3071, 1.0
    %v3103 = vadd.f32 %v3073, 1.0
    %v3104 = vadd.f32 %v3075, 1.0
    %v3105 = vadd.f32 %v3077, 1.0
    %v3106 = vadd.f32 %v3079, 1.0
    %v3107 = vadd.f32 %v3081, 1.0
    %v3108 = vadd.f32 %v3083, 1.0
    %v3109 = vadd.f32 %v3085, 1.0
    %v3110 = vadd.f32 %v3087, 1.0
    %v3111 = vadd.f32 %v3089, 1.0
    %v3112 = vadd.f32 %v3091, 1.0
    %v3113 = vadd.f32 %v3093, 1.0
    %v3114 = vadd.f32 %v3095, 1.0
    %v3115 = vadd.f32 %v3097, 1.0
    %v3116 = vadd.f32 %v3099, 1.0
    %v3117 = vadd.f32 %v3101, 1.0
    %v3118 = vrcp.pop %v3102
    %v3119 = vmul.f32 1.0, %v3118
    %v3120 = vrcp.pop %v3103
    %v3121 = vmul.f32 1.0, %v3120
    %v3122 = vrcp.pop %v3104
    %v3123 = vmul.f32 1.0, %v3122
    %v3124 = vrcp.pop %v3105
    %v3125 = vmul.f32 1.0, %v3124
    %v3126 = vrcp.pop %v3106
    %v3127 = vmul.f32 1.0, %v3126
    %v3128 = vrcp.pop %v3107
    %v3129 = vmul.f32 1.0, %v3128
    %v3130 = vrcp.pop %v3108
    %v3131 = vmul.f32 1.0, %v3130
    %v3132 = vrcp.pop %v3109
    %v3133 = vmul.f32 1.0, %v3132
    %v3134 = vrcp.pop %v3110
    %v3135 = vmul.f32 1.0, %v3134
    %v3136 = vrcp.pop %v3111
    %v3137 = vmul.f32 1.0, %v3136
    %v3138 = vrcp.pop %v3112
    %v3139 = vmul.f32 1.0, %v3138
    %v3140 = vrcp.pop %v3113
    %v3141 = vmul.f32 1.0, %v3140
    %v3142 = vrcp.pop %v3114
    %v3143 = vmul.f32 1.0, %v3142
    %v3144 = vrcp.pop %v3115
    %v3145 = vmul.f32 1.0, %v3144
    %v3146 = vrcp.pop %v3116
    %v3147 = vmul.f32 1.0, %v3146
    %v3148 = vrcp.pop %v3117
    %v3149 = vmul.f32 1.0, %v3148
    %v3150 = vmul.f32 %v3119, %v2944
    %v3151 = vmul.f32 %v3121, %v2948
    %v3152 = vmul.f32 %v3123, %v2954
    %v3153 = vmul.f32 %v3125, %v2958
    %v3154 = vmul.f32 %v3127, %v2964
    %v3155 = vmul.f32 %v3129, %v2968
    %v3156 = vmul.f32 %v3131, %v2974
    %v3157 = vmul.f32 %v3133, %v2978
    %v3158 = vmul.f32 %v3135, %v2984
    %v3159 = vmul.f32 %v3137, %v2988
    %v3160 = vmul.f32 %v3139, %v2994
    %v3161 = vmul.f32 %v3141, %v2998
    %v3162 = vmul.f32 %v3143, %v3004
    %v3163 = vmul.f32 %v3145, %v3008
    %v3164 = vmul.f32 %v3147, %v3014
    %v3165 = vmul.f32 %v3149, %v3018
    %v3166 = vadd.f32 %v3150, 0.0
    %v3167 = vadd.f32 %v3151, 0.0
    %v3168 = vadd.f32 %v3152, 0.0
    %v3169 = vadd.f32 %v3153, 0.0
    %v3170 = vadd.f32 %v3154, 0.0
    %v3171 = vadd.f32 %v3155, 0.0
    %v3172 = vadd.f32 %v3156, 0.0
    %v3173 = vadd.f32 %v3157, 0.0
    %v3174 = vadd.f32 %v3158, 0.0
    %v3175 = vadd.f32 %v3159, 0.0
    %v3176 = vadd.f32 %v3160, 0.0
    %v3177 = vadd.f32 %v3161, 0.0
    %v3178 = vadd.f32 %v3162, 0.0
    %v3179 = vadd.f32 %v3163, 0.0
    %v3180 = vadd.f32 %v3164, 0.0
    %v3181 = vadd.f32 %v3165, 0.0
    %s3182 = sshll.u32 %s1059, 4
    %3183 = dma.done %s1064, %s3182
    // Predicated region
    $region126: #{tpu_custom_call.1} parent=1 // pred_check
      _
    $region127: #{tpu_custom_call.1} parent=1 // pred_check_branch
      %3185 = sbr.rel target = $region129
    $region128: #{tpu_custom_call.1} parent=1 // pred_region
      %3186 = sst [smem:[#allocation24]] [#allocation37]
      %3187 = sst [smem:[#allocation25]] [#allocation36]
    $region129: #{tpu_custom_call.1} parent=1 // pred_fallthru
      _
    %3189 = shalt.err (0)
    %s3191 = sshll.u32 [#allocation2], 4
    %s3192 = int_to_ptr.vmem [resolvable:$true] %s3191
    %3194 = dma.hbm_to_vmem [thread:$0]  %s1363, 512, %s3192, [#allocation3]
    %v3195 = vld [vmem:[%s1063] sm:$0xff]
    %v3196 = vld [vmem:[%s1063 + $0x8] sm:$0xff]
    %v3197 = vld [vmem:[%s1063 + $0x10] sm:$0xff]
    %v3198 = vld [vmem:[%s1063 + $0x18] sm:$0xff]
    %v3199 = vunpack.c.l.s8.bf16 %v3195
    %v3200 = vunpack.c.h.s8.bf16 %v3195
    %v3201 = vunpack.c.l.s8.bf16 %v3196
    %v3202 = vunpack.c.h.s8.bf16 %v3196
    %v3203 = vunpack.c.l.s8.bf16 %v3197
    %v3204 = vunpack.c.h.s8.bf16 %v3197
    %v3205 = vunpack.c.l.s8.bf16 %v3198
    %v3206 = vunpack.c.h.s8.bf16 %v3198
    %3207 = vmatprep.subr.bf16.mxu0 %v2883
    %3208 = vmatpush1.bf16.msra.mxu0 %v2778
    %3209 = vmatprep.subr.bf16.mxu0 %v2882
    %3210 = vmatpush1.bf16.msra.mxu0 %v2777
    %3211 = vmatprep.subr.bf16.mxu0 %v2881
    %3212 = vmatpush1.bf16.msra.mxu0 %v2776
    %3213 = vmatprep.subr.bf16.mxu0 %v2880
    %3214 = vmatpush1.bf16.msra.mxu0 %v2775
    %3215 = vmatprep.subr.bf16.mxu0 %v2879
    %3216 = vmatpush1.bf16.msra.mxu0 %v2774
    %3217 = vmatprep.subr.bf16.mxu0 %v2878
    %3218 = vmatpush1.bf16.msra.mxu0 %v2773
    %3219 = vmatprep.subr.bf16.mxu0 %v2877
    %3220 = vmatpush1.bf16.msra.mxu0 %v2772
    %3221 = vmatprep.subr.bf16.mxu0 %v2876
    %3222 = vmatpush1.bf16.msra.mxu0 %v2771
    %3223 = vmatprep.subr.bf16.mxu0 0
    %3224 = vmatpush2.bf16.msra.mxu0 0
    %3225 = vmatprep.subr.bf16.mxu0 0
    %3226 = vmatpush2.bf16.msra.mxu0 0
    %3227 = vmatprep.subr.bf16.mxu0 0
    %3228 = vmatpush2.bf16.msra.mxu0 0
    %3229 = vmatprep.subr.bf16.mxu0 0
    %3230 = vmatpush2.bf16.msra.mxu0 0
    %3231 = vmatprep.subr.bf16.mxu0 0
    %3232 = vmatpush2.bf16.msra.mxu0 0
    %3233 = vmatprep.subr.bf16.mxu0 0
    %3234 = vmatpush2.bf16.msra.mxu0 0
    %3235 = vmatprep.subr.bf16.mxu0 0
    %3236 = vmatpush2.bf16.msra.mxu0 0
    %3237 = vmatprep.subr.bf16.mxu0 0
    %3238 = vmatpush2.bf16.msra.mxu0 0
    %3239 = vmatprep.mubr.bf16.mxu0 0
    %3240 = vmatmul.mubr.bf16.gmra.mxu0 %v3199
    %v3241 = vpop.f32.mrf.mxu0
    %v3242 = vadd.f32 0.0, %v3241
    %v3243 = vpop.f32.mrf.mxu0
    %v3244 = vadd.f32 0.0, %v3243
    %v3245 = vpop.f32.mrf.mxu0
    %v3246 = vadd.f32 0.0, %v3245
    %v3247 = vpop.f32.mrf.mxu0
    %v3248 = vadd.f32 0.0, %v3247
    %3249 = vmatprep.mubr.bf16.mxu0 0
    %3250 = vmatmul.mubr.bf16.gmra.mxu0 %v3200
    %v3251 = vpop.f32.mrf.mxu0
    %v3252 = vadd.f32 0.0, %v3251
    %v3253 = vpop.f32.mrf.mxu0
    %v3254 = vadd.f32 0.0, %v3253
    %v3255 = vpop.f32.mrf.mxu0
    %v3256 = vadd.f32 0.0, %v3255
    %v3257 = vpop.f32.mrf.mxu0
    %v3258 = vadd.f32 0.0, %v3257
    %3259 = vmatprep.mubr.bf16.mxu0 0
    %3260 = vmatmul.mubr.bf16.gmra.mxu0 %v3201
    %v3261 = vpop.f32.mrf.mxu0
    %v3262 = vadd.f32 0.0, %v3261
    %v3263 = vpop.f32.mrf.mxu0
    %v3264 = vadd.f32 0.0, %v3263
    %v3265 = vpop.f32.mrf.mxu0
    %v3266 = vadd.f32 0.0, %v3265
    %v3267 = vpop.f32.mrf.mxu0
    %v3268 = vadd.f32 0.0, %v3267
    %3269 = vmatprep.mubr.bf16.mxu0 0
    %3270 = vmatmul.mubr.bf16.gmra.mxu0 %v3202
    %v3271 = vpop.f32.mrf.mxu0
    %v3272 = vadd.f32 0.0, %v3271
    %v3273 = vpop.f32.mrf.mxu0
    %v3274 = vadd.f32 0.0, %v3273
    %v3275 = vpop.f32.mrf.mxu0
    %v3276 = vadd.f32 0.0, %v3275
    %v3277 = vpop.f32.mrf.mxu0
    %v3278 = vadd.f32 0.0, %v3277
    %3279 = vmatprep.mubr.bf16.mxu0 0
    %3280 = vmatmul.mubr.bf16.gmra.mxu0 %v3203
    %v3281 = vpop.f32.mrf.mxu0
    %v3282 = vadd.f32 0.0, %v3281
    %v3283 = vpop.f32.mrf.mxu0
    %v3284 = vadd.f32 0.0, %v3283
    %v3285 = vpop.f32.mrf.mxu0
    %v3286 = vadd.f32 0.0, %v3285
    %v3287 = vpop.f32.mrf.mxu0
    %v3288 = vadd.f32 0.0, %v3287
    %3289 = vmatprep.mubr.bf16.mxu0 0
    %3290 = vmatmul.mubr.bf16.gmra.mxu0 %v3204
    %v3291 = vpop.f32.mrf.mxu0
    %v3292 = vadd.f32 0.0, %v3291
    %v3293 = vpop.f32.mrf.mxu0
    %v3294 = vadd.f32 0.0, %v3293
    %v3295 = vpop.f32.mrf.mxu0
    %v3296 = vadd.f32 0.0, %v3295
    %v3297 = vpop.f32.mrf.mxu0
    %v3298 = vadd.f32 0.0, %v3297
    %3299 = vmatprep.mubr.bf16.mxu0 0
    %3300 = vmatmul.mubr.bf16.gmra.mxu0 %v3205
    %v3301 = vpop.f32.mrf.mxu0
    %v3302 = vadd.f32 0.0, %v3301
    %v3303 = vpop.f32.mrf.mxu0
    %v3304 = vadd.f32 0.0, %v3303
    %v3305 = vpop.f32.mrf.mxu0
    %v3306 = vadd.f32 0.0, %v3305
    %v3307 = vpop.f32.mrf.mxu0
    %v3308 = vadd.f32 0.0, %v3307
    %3309 = vmatprep.mubr.bf16.mxu0 0
    %3310 = vmatmul.mubr.bf16.gmra.mxu0 %v3206
    %v3311 = vpop.f32.mrf.mxu0
    %v3312 = vadd.f32 0.0, %v3311
    %v3313 = vpop.f32.mrf.mxu0
    %v3314 = vadd.f32 0.0, %v3313
    %v3315 = vpop.f32.mrf.mxu0
    %v3316 = vadd.f32 0.0, %v3315
    %v3317 = vpop.f32.mrf.mxu0
    %v3318 = vadd.f32 0.0, %v3317
    %3319 = vdwg.mxu0
    %v3320 = vadd.f32 %v3022, %v3242
    %v3321 = vadd.f32 %v3023, %v3246
    %v3322 = vadd.f32 %v3024, %v3252
    %v3323 = vadd.f32 %v3025, %v3256
    %v3324 = vadd.f32 %v3026, %v3262
    %v3325 = vadd.f32 %v3027, %v3266
    %v3326 = vadd.f32 %v3028, %v3272
    %v3327 = vadd.f32 %v3029, %v3276
    %v3328 = vadd.f32 %v3030, %v3282
    %v3329 = vadd.f32 %v3031, %v3286
    %v3330 = vadd.f32 %v3032, %v3292
    %v3331 = vadd.f32 %v3033, %v3296
    %v3332 = vadd.f32 %v3034, %v3302
    %v3333 = vadd.f32 %v3035, %v3306
    %v3334 = vadd.f32 %v3036, %v3312
    %v3335 = vadd.f32 %v3037, %v3316
    %v3336 = vadd.f32 %v627, %v3244
    %v3337 = vadd.f32 %v630, %v3248
    %v3338 = vadd.f32 %v635, %v3254
    %v3339 = vadd.f32 %v638, %v3258
    %v3340 = vadd.f32 %v643, %v3264
    %v3341 = vadd.f32 %v646, %v3268
    %v3342 = vadd.f32 %v651, %v3274
    %v3343 = vadd.f32 %v654, %v3278
    %v3344 = vadd.f32 %v659, %v3284
    %v3345 = vadd.f32 %v662, %v3288
    %v3346 = vadd.f32 %v667, %v3294
    %v3347 = vadd.f32 %v670, %v3298
    %v3348 = vadd.f32 %v675, %v3304
    %v3349 = vadd.f32 %v678, %v3308
    %v3350 = vadd.f32 %v683, %v3314
    %v3351 = vadd.f32 %v686, %v3318
    %v3352 = vxor.u32 %v3336, 2147483648
    %v3353 = vxor.u32 %v3337, 2147483648
    %v3354 = vxor.u32 %v3338, 2147483648
    %v3355 = vxor.u32 %v3339, 2147483648
    %v3356 = vxor.u32 %v3340, 2147483648
    %v3357 = vxor.u32 %v3341, 2147483648
    %v3358 = vxor.u32 %v3342, 2147483648
    %v3359 = vxor.u32 %v3343, 2147483648
    %v3360 = vxor.u32 %v3344, 2147483648
    %v3361 = vxor.u32 %v3345, 2147483648
    %v3362 = vxor.u32 %v3346, 2147483648
    %v3363 = vxor.u32 %v3347, 2147483648
    %v3364 = vxor.u32 %v3348, 2147483648
    %v3365 = vxor.u32 %v3349, 2147483648
    %v3366 = vxor.u32 %v3350, 2147483648
    %v3367 = vxor.u32 %v3351, 2147483648
    %v3368 = vmul.f32 %v3352, 1.442695
    %v3369 = vpow.pop %v3368
    %v3370 = vmul.f32 %v3353, 1.442695
    %v3371 = vpow.pop %v3370
    %v3372 = vmul.f32 %v3354, 1.442695
    %v3373 = vpow.pop %v3372
    %v3374 = vmul.f32 %v3355, 1.442695
    %v3375 = vpow.pop %v3374
    %v3376 = vmul.f32 %v3356, 1.442695
    %v3377 = vpow.pop %v3376
    %v3378 = vmul.f32 %v3357, 1.442695
    %v3379 = vpow.pop %v3378
    %v3380 = vmul.f32 %v3358, 1.442695
    %v3381 = vpow.pop %v3380
    %v3382 = vmul.f32 %v3359, 1.442695
    %v3383 = vpow.pop %v3382
    %v3384 = vmul.f32 %v3360, 1.442695
    %v3385 = vpow.pop %v3384
    %v3386 = vmul.f32 %v3361, 1.442695
    %v3387 = vpow.pop %v3386
    %v3388 = vmul.f32 %v3362, 1.442695
    %v3389 = vpow.pop %v3388
    %v3390 = vmul.f32 %v3363, 1.442695
    %v3391 = vpow.pop %v3390
    %v3392 = vmul.f32 %v3364, 1.442695
    %v3393 = vpow.pop %v3392
    %v3394 = vmul.f32 %v3365, 1.442695
    %v3395 = vpow.pop %v3394
    %v3396 = vmul.f32 %v3366, 1.442695
    %v3397 = vpow.pop %v3396
    %v3398 = vmul.f32 %v3367, 1.442695
    %v3399 = vpow.pop %v3398
    %v3400 = vadd.f32 %v3369, 1.0
    %v3401 = vadd.f32 %v3371, 1.0
    %v3402 = vadd.f32 %v3373, 1.0
    %v3403 = vadd.f32 %v3375, 1.0
    %v3404 = vadd.f32 %v3377, 1.0
    %v3405 = vadd.f32 %v3379, 1.0
    %v3406 = vadd.f32 %v3381, 1.0
    %v3407 = vadd.f32 %v3383, 1.0
    %v3408 = vadd.f32 %v3385, 1.0
    %v3409 = vadd.f32 %v3387, 1.0
    %v3410 = vadd.f32 %v3389, 1.0
    %v3411 = vadd.f32 %v3391, 1.0
    %v3412 = vadd.f32 %v3393, 1.0
    %v3413 = vadd.f32 %v3395, 1.0
    %v3414 = vadd.f32 %v3397, 1.0
    %v3415 = vadd.f32 %v3399, 1.0
    %v3416 = vrcp.pop %v3400
    %v3417 = vmul.f32 1.0, %v3416
    %v3418 = vrcp.pop %v3401
    %v3419 = vmul.f32 1.0, %v3418
    %v3420 = vrcp.pop %v3402
    %v3421 = vmul.f32 1.0, %v3420
    %v3422 = vrcp.pop %v3403
    %v3423 = vmul.f32 1.0, %v3422
    %v3424 = vrcp.pop %v3404
    %v3425 = vmul.f32 1.0, %v3424
    %v3426 = vrcp.pop %v3405
    %v3427 = vmul.f32 1.0, %v3426
    %v3428 = vrcp.pop %v3406
    %v3429 = vmul.f32 1.0, %v3428
    %v3430 = vrcp.pop %v3407
    %v3431 = vmul.f32 1.0, %v3430
    %v3432 = vrcp.pop %v3408
    %v3433 = vmul.f32 1.0, %v3432
    %v3434 = vrcp.pop %v3409
    %v3435 = vmul.f32 1.0, %v3434
    %v3436 = vrcp.pop %v3410
    %v3437 = vmul.f32 1.0, %v3436
    %v3438 = vrcp.pop %v3411
    %v3439 = vmul.f32 1.0, %v3438
    %v3440 = vrcp.pop %v3412
    %v3441 = vmul.f32 1.0, %v3440
    %v3442 = vrcp.pop %v3413
    %v3443 = vmul.f32 1.0, %v3442
    %v3444 = vrcp.pop %v3414
    %v3445 = vmul.f32 1.0, %v3444
    %v3446 = vrcp.pop %v3415
    %v3447 = vmul.f32 1.0, %v3446
    %v3448 = vmul.f32 %v3417, %v3242
    %v3449 = vmul.f32 %v3419, %v3246
    %v3450 = vmul.f32 %v3421, %v3252
    %v3451 = vmul.f32 %v3423, %v3256
    %v3452 = vmul.f32 %v3425, %v3262
    %v3453 = vmul.f32 %v3427, %v3266
    %v3454 = vmul.f32 %v3429, %v3272
    %v3455 = vmul.f32 %v3431, %v3276
    %v3456 = vmul.f32 %v3433, %v3282
    %v3457 = vmul.f32 %v3435, %v3286
    %v3458 = vmul.f32 %v3437, %v3292
    %v3459 = vmul.f32 %v3439, %v3296
    %v3460 = vmul.f32 %v3441, %v3302
    %v3461 = vmul.f32 %v3443, %v3306
    %v3462 = vmul.f32 %v3445, %v3312
    %v3463 = vmul.f32 %v3447, %v3316
    %v3464 = vadd.f32 %v3166, %v3448
    %v3465 = vadd.f32 %v3167, %v3449
    %v3466 = vadd.f32 %v3168, %v3450
    %v3467 = vadd.f32 %v3169, %v3451
    %v3468 = vadd.f32 %v3170, %v3452
    %v3469 = vadd.f32 %v3171, %v3453
    %v3470 = vadd.f32 %v3172, %v3454
    %v3471 = vadd.f32 %v3173, %v3455
    %v3472 = vadd.f32 %v3174, %v3456
    %v3473 = vadd.f32 %v3175, %v3457
    %v3474 = vadd.f32 %v3176, %v3458
    %v3475 = vadd.f32 %v3177, %v3459
    %v3476 = vadd.f32 %v3178, %v3460
    %v3477 = vadd.f32 %v3179, %v3461
    %v3478 = vadd.f32 %v3180, %v3462
    %v3479 = vadd.f32 %v3181, %v3463
    %s3480 = sshll.u32 %s1059, 4
    %3481 = dma.done [#allocation3], %s3480
    // Predicated region
    $region130: #{tpu_custom_call.1} parent=1 // pred_check
      _
    $region131: #{tpu_custom_call.1} parent=1 // pred_check_branch
      %3483 = sbr.rel target = $region133
    $region132: #{tpu_custom_call.1} parent=1 // pred_region
      %3484 = sst [smem:[#allocation24]] [#allocation39]
      %3485 = sst [smem:[#allocation25]] [#allocation38]
    $region133: #{tpu_custom_call.1} parent=1 // pred_fallthru
      _
    %3487 = shalt.err (0)
    %s3489 = sshll.u32 %s1063, 4
    %s3490 = int_to_ptr.vmem [resolvable:$true] %s3489
    %3492 = dma.hbm_to_vmem [thread:$0]  %s1662, 512, %s3490, %s1064
    %v3493 = vld [vmem:[#allocation2] sm:$0xff]
    %v3494 = vld [vmem:[#allocation2 + $0x8] sm:$0xff]
    %v3495 = vld [vmem:[#allocation2 + $0x10] sm:$0xff]
    %v3496 = vld [vmem:[#allocation2 + $0x18] sm:$0xff]
    %v3497 = vunpack.c.l.s8.bf16 %v3493
    %v3498 = vunpack.c.h.s8.bf16 %v3493
    %v3499 = vunpack.c.l.s8.bf16 %v3494
    %v3500 = vunpack.c.h.s8.bf16 %v3494
    %v3501 = vunpack.c.l.s8.bf16 %v3495
    %v3502 = vunpack.c.h.s8.bf16 %v3495
    %v3503 = vunpack.c.l.s8.bf16 %v3496
    %v3504 = vunpack.c.h.s8.bf16 %v3496
    %3505 = vmatprep.subr.bf16.mxu0 %v2883
    %3506 = vmatpush1.bf16.msra.mxu0 %v2778
    %3507 = vmatprep.subr.bf16.mxu0 %v2882
    %3508 = vmatpush1.bf16.msra.mxu0 %v2777
    %3509 = vmatprep.subr.bf16.mxu0 %v2881
    %3510 = vmatpush1.bf16.msra.mxu0 %v2776
    %3511 = vmatprep.subr.bf16.mxu0 %v2880
    %3512 = vmatpush1.bf16.msra.mxu0 %v2775
    %3513 = vmatprep.subr.bf16.mxu0 %v2879
    %3514 = vmatpush1.bf16.msra.mxu0 %v2774
    %3515 = vmatprep.subr.bf16.mxu0 %v2878
    %3516 = vmatpush1.bf16.msra.mxu0 %v2773
    %3517 = vmatprep.subr.bf16.mxu0 %v2877
    %3518 = vmatpush1.bf16.msra.mxu0 %v2772
    %3519 = vmatprep.subr.bf16.mxu0 %v2876
    %3520 = vmatpush1.bf16.msra.mxu0 %v2771
    %3521 = vmatprep.subr.bf16.mxu0 0
    %3522 = vmatpush2.bf16.msra.mxu0 0
    %3523 = vmatprep.subr.bf16.mxu0 0
    %3524 = vmatpush2.bf16.msra.mxu0 0
    %3525 = vmatprep.subr.bf16.mxu0 0
    %3526 = vmatpush2.bf16.msra.mxu0 0
    %3527 = vmatprep.subr.bf16.mxu0 0
    %3528 = vmatpush2.bf16.msra.mxu0 0
    %3529 = vmatprep.subr.bf16.mxu0 0
    %3530 = vmatpush2.bf16.msra.mxu0 0
    %3531 = vmatprep.subr.bf16.mxu0 0
    %3532 = vmatpush2.bf16.msra.mxu0 0
    %3533 = vmatprep.subr.bf16.mxu0 0
    %3534 = vmatpush2.bf16.msra.mxu0 0
    %3535 = vmatprep.subr.bf16.mxu0 0
    %3536 = vmatpush2.bf16.msra.mxu0 0
    %3537 = vmatprep.mubr.bf16.mxu0 0
    %3538 = vmatmul.mubr.bf16.gmra.mxu0 %v3497
    %v3539 = vpop.f32.mrf.mxu0
    %v3540 = vadd.f32 0.0, %v3539
    %v3541 = vpop.f32.mrf.mxu0
    %v3542 = vadd.f32 0.0, %v3541
    %v3543 = vpop.f32.mrf.mxu0
    %v3544 = vadd.f32 0.0, %v3543
    %v3545 = vpop.f32.mrf.mxu0
    %v3546 = vadd.f32 0.0, %v3545
    %3547 = vmatprep.mubr.bf16.mxu0 0
    %3548 = vmatmul.mubr.bf16.gmra.mxu0 %v3498
    %v3549 = vpop.f32.mrf.mxu0
    %v3550 = vadd.f32 0.0, %v3549
    %v3551 = vpop.f32.mrf.mxu0
    %v3552 = vadd.f32 0.0, %v3551
    %v3553 = vpop.f32.mrf.mxu0
    %v3554 = vadd.f32 0.0, %v3553
    %v3555 = vpop.f32.mrf.mxu0
    %v3556 = vadd.f32 0.0, %v3555
    %3557 = vmatprep.mubr.bf16.mxu0 0
    %3558 = vmatmul.mubr.bf16.gmra.mxu0 %v3499
    %v3559 = vpop.f32.mrf.mxu0
    %v3560 = vadd.f32 0.0, %v3559
    %v3561 = vpop.f32.mrf.mxu0
    %v3562 = vadd.f32 0.0, %v3561
    %v3563 = vpop.f32.mrf.mxu0
    %v3564 = vadd.f32 0.0, %v3563
    %v3565 = vpop.f32.mrf.mxu0
    %v3566 = vadd.f32 0.0, %v3565
    %3567 = vmatprep.mubr.bf16.mxu0 0
    %3568 = vmatmul.mubr.bf16.gmra.mxu0 %v3500
    %v3569 = vpop.f32.mrf.mxu0
    %v3570 = vadd.f32 0.0, %v3569
    %v3571 = vpop.f32.mrf.mxu0
    %v3572 = vadd.f32 0.0, %v3571
    %v3573 = vpop.f32.mrf.mxu0
    %v3574 = vadd.f32 0.0, %v3573
    %v3575 = vpop.f32.mrf.mxu0
    %v3576 = vadd.f32 0.0, %v3575
    %3577 = vmatprep.mubr.bf16.mxu0 0
    %3578 = vmatmul.mubr.bf16.gmra.mxu0 %v3501
    %v3579 = vpop.f32.mrf.mxu0
    %v3580 = vadd.f32 0.0, %v3579
    %v3581 = vpop.f32.mrf.mxu0
    %v3582 = vadd.f32 0.0, %v3581
    %v3583 = vpop.f32.mrf.mxu0
    %v3584 = vadd.f32 0.0, %v3583
    %v3585 = vpop.f32.mrf.mxu0
    %v3586 = vadd.f32 0.0, %v3585
    %3587 = vmatprep.mubr.bf16.mxu0 0
    %3588 = vmatmul.mubr.bf16.gmra.mxu0 %v3502
    %v3589 = vpop.f32.mrf.mxu0
    %v3590 = vadd.f32 0.0, %v3589
    %v3591 = vpop.f32.mrf.mxu0
    %v3592 = vadd.f32 0.0, %v3591
    %v3593 = vpop.f32.mrf.mxu0
    %v3594 = vadd.f32 0.0, %v3593
    %v3595 = vpop.f32.mrf.mxu0
    %v3596 = vadd.f32 0.0, %v3595
    %3597 = vmatprep.mubr.bf16.mxu0 0
    %3598 = vmatmul.mubr.bf16.gmra.mxu0 %v3503
    %v3599 = vpop.f32.mrf.mxu0
    %v3600 = vadd.f32 0.0, %v3599
    %v3601 = vpop.f32.mrf.mxu0
    %v3602 = vadd.f32 0.0, %v3601
    %v3603 = vpop.f32.mrf.mxu0
    %v3604 = vadd.f32 0.0, %v3603
    %v3605 = vpop.f32.mrf.mxu0
    %v3606 = vadd.f32 0.0, %v3605
    %3607 = vmatprep.mubr.bf16.mxu0 0
    %3608 = vmatmul.mubr.bf16.gmra.mxu0 %v3504
    %v3609 = vpop.f32.mrf.mxu0
    %v3610 = vadd.f32 0.0, %v3609
    %v3611 = vpop.f32.mrf.mxu0
    %v3612 = vadd.f32 0.0, %v3611
    %v3613 = vpop.f32.mrf.mxu0
    %v3614 = vadd.f32 0.0, %v3613
    %v3615 = vpop.f32.mrf.mxu0
    %v3616 = vadd.f32 0.0, %v3615
    %3617 = vdwg.mxu0
    %v3618 = vadd.f32 %v3320, %v3540
    %v3619 = vadd.f32 %v3321, %v3544
    %v3620 = vadd.f32 %v3322, %v3550
    %v3621 = vadd.f32 %v3323, %v3554
    %v3622 = vadd.f32 %v3324, %v3560
    %v3623 = vadd.f32 %v3325, %v3564
    %v3624 = vadd.f32 %v3326, %v3570
    %v3625 = vadd.f32 %v3327, %v3574
    %v3626 = vadd.f32 %v3328, %v3580
    %v3627 = vadd.f32 %v3329, %v3584
    %v3628 = vadd.f32 %v3330, %v3590
    %v3629 = vadd.f32 %v3331, %v3594
    %v3630 = vadd.f32 %v3332, %v3600
    %v3631 = vadd.f32 %v3333, %v3604
    %v3632 = vadd.f32 %v3334, %v3610
    %v3633 = vadd.f32 %v3335, %v3614
    %v3634 = vadd.f32 %v627, %v3542
    %v3635 = vadd.f32 %v630, %v3546
    %v3636 = vadd.f32 %v635, %v3552
    %v3637 = vadd.f32 %v638, %v3556
    %v3638 = vadd.f32 %v643, %v3562
    %v3639 = vadd.f32 %v646, %v3566
    %v3640 = vadd.f32 %v651, %v3572
    %v3641 = vadd.f32 %v654, %v3576
    %v3642 = vadd.f32 %v659, %v3582
    %v3643 = vadd.f32 %v662, %v3586
    %v3644 = vadd.f32 %v667, %v3592
    %v3645 = vadd.f32 %v670, %v3596
    %v3646 = vadd.f32 %v675, %v3602
    %v3647 = vadd.f32 %v678, %v3606
    %v3648 = vadd.f32 %v683, %v3612
    %v3649 = vadd.f32 %v686, %v3616
    %v3650 = vxor.u32 %v3634, 2147483648
    %v3651 = vxor.u32 %v3635, 2147483648
    %v3652 = vxor.u32 %v3636, 2147483648
    %v3653 = vxor.u32 %v3637, 2147483648
    %v3654 = vxor.u32 %v3638, 2147483648
    %v3655 = vxor.u32 %v3639, 2147483648
    %v3656 = vxor.u32 %v3640, 2147483648
    %v3657 = vxor.u32 %v3641, 2147483648
    %v3658 = vxor.u32 %v3642, 2147483648
    %v3659 = vxor.u32 %v3643, 2147483648
    %v3660 = vxor.u32 %v3644, 2147483648
    %v3661 = vxor.u32 %v3645, 2147483648
    %v3662 = vxor.u32 %v3646, 2147483648
    %v3663 = vxor.u32 %v3647, 2147483648
    %v3664 = vxor.u32 %v3648, 2147483648
    %v3665 = vxor.u32 %v3649, 2147483648
    %v3666 = vmul.f32 %v3650, 1.442695
    %v3667 = vpow.pop %v3666
    %v3668 = vmul.f32 %v3651, 1.442695
    %v3669 = vpow.pop %v3668
    %v3670 = vmul.f32 %v3652, 1.442695
    %v3671 = vpow.pop %v3670
    %v3672 = vmul.f32 %v3653, 1.442695
    %v3673 = vpow.pop %v3672
    %v3674 = vmul.f32 %v3654, 1.442695
    %v3675 = vpow.pop %v3674
    %v3676 = vmul.f32 %v3655, 1.442695
    %v3677 = vpow.pop %v3676
    %v3678 = vmul.f32 %v3656, 1.442695
    %v3679 = vpow.pop %v3678
    %v3680 = vmul.f32 %v3657, 1.442695
    %v3681 = vpow.pop %v3680
    %v3682 = vmul.f32 %v3658, 1.442695
    %v3683 = vpow.pop %v3682
    %v3684 = vmul.f32 %v3659, 1.442695
    %v3685 = vpow.pop %v3684
    %v3686 = vmul.f32 %v3660, 1.442695
    %v3687 = vpow.pop %v3686
    %v3688 = vmul.f32 %v3661, 1.442695
    %v3689 = vpow.pop %v3688
    %v3690 = vmul.f32 %v3662, 1.442695
    %v3691 = vpow.pop %v3690
    %v3692 = vmul.f32 %v3663, 1.442695
    %v3693 = vpow.pop %v3692
    %v3694 = vmul.f32 %v3664, 1.442695
    %v3695 = vpow.pop %v3694
    %v3696 = vmul.f32 %v3665, 1.442695
    %v3697 = vpow.pop %v3696
    %v3698 = vadd.f32 %v3667, 1.0
    %v3699 = vadd.f32 %v3669, 1.0
    %v3700 = vadd.f32 %v3671, 1.0
    %v3701 = vadd.f32 %v3673, 1.0
    %v3702 = vadd.f32 %v3675, 1.0
    %v3703 = vadd.f32 %v3677, 1.0
    %v3704 = vadd.f32 %v3679, 1.0
    %v3705 = vadd.f32 %v3681, 1.0
    %v3706 = vadd.f32 %v3683, 1.0
    %v3707 = vadd.f32 %v3685, 1.0
    %v3708 = vadd.f32 %v3687, 1.0
    %v3709 = vadd.f32 %v3689, 1.0
    %v3710 = vadd.f32 %v3691, 1.0
    %v3711 = vadd.f32 %v3693, 1.0
    %v3712 = vadd.f32 %v3695, 1.0
    %v3713 = vadd.f32 %v3697, 1.0
    %v3714 = vrcp.pop %v3698
    %v3715 = vmul.f32 1.0, %v3714
    %v3716 = vrcp.pop %v3699
    %v3717 = vmul.f32 1.0, %v3716
    %v3718 = vrcp.pop %v3700
    %v3719 = vmul.f32 1.0, %v3718
    %v3720 = vrcp.pop %v3701
    %v3721 = vmul.f32 1.0, %v3720
    %v3722 = vrcp.pop %v3702
    %v3723 = vmul.f32 1.0, %v3722
    %v3724 = vrcp.pop %v3703
    %v3725 = vmul.f32 1.0, %v3724
    %v3726 = vrcp.pop %v3704
    %v3727 = vmul.f32 1.0, %v3726
    %v3728 = vrcp.pop %v3705
    %v3729 = vmul.f32 1.0, %v3728
    %v3730 = vrcp.pop %v3706
    %v3731 = vmul.f32 1.0, %v3730
    %v3732 = vrcp.pop %v3707
    %v3733 = vmul.f32 1.0, %v3732
    %v3734 = vrcp.pop %v3708
    %v3735 = vmul.f32 1.0, %v3734
    %v3736 = vrcp.pop %v3709
    %v3737 = vmul.f32 1.0, %v3736
    %v3738 = vrcp.pop %v3710
    %v3739 = vmul.f32 1.0, %v3738
    %v3740 = vrcp.pop %v3711
    %v3741 = vmul.f32 1.0, %v3740
    %v3742 = vrcp.pop %v3712
    %v3743 = vmul.f32 1.0, %v3742
    %v3744 = vrcp.pop %v3713
    %v3745 = vmul.f32 1.0, %v3744
    %v3746 = vmul.f32 %v3715, %v3540
    %v3747 = vmul.f32 %v3717, %v3544
    %v3748 = vmul.f32 %v3719, %v3550
    %v3749 = vmul.f32 %v3721, %v3554
    %v3750 = vmul.f32 %v3723, %v3560
    %v3751 = vmul.f32 %v3725, %v3564
    %v3752 = vmul.f32 %v3727, %v3570
    %v3753 = vmul.f32 %v3729, %v3574
    %v3754 = vmul.f32 %v3731, %v3580
    %v3755 = vmul.f32 %v3733, %v3584
    %v3756 = vmul.f32 %v3735, %v3590
    %v3757 = vmul.f32 %v3737, %v3594
    %v3758 = vmul.f32 %v3739, %v3600
    %v3759 = vmul.f32 %v3741, %v3604
    %v3760 = vmul.f32 %v3743, %v3610
    %v3761 = vmul.f32 %v3745, %v3614
    %v3762 = vadd.f32 %v3464, %v3746
    %v3763 = vadd.f32 %v3465, %v3747
    %v3764 = vadd.f32 %v3466, %v3748
    %v3765 = vadd.f32 %v3467, %v3749
    %v3766 = vadd.f32 %v3468, %v3750
    %v3767 = vadd.f32 %v3469, %v3751
    %v3768 = vadd.f32 %v3470, %v3752
    %v3769 = vadd.f32 %v3471, %v3753
    %v3770 = vadd.f32 %v3472, %v3754
    %v3771 = vadd.f32 %v3473, %v3755
    %v3772 = vadd.f32 %v3474, %v3756
    %v3773 = vadd.f32 %v3475, %v3757
    %v3774 = vadd.f32 %v3476, %v3758
    %v3775 = vadd.f32 %v3477, %v3759
    %v3776 = vadd.f32 %v3478, %v3760
    %v3777 = vadd.f32 %v3479, %v3761
    %s3778 = sshll.u32 %s1059, 4
    %3779 = dma.done %s1064, %s3778
    // Predicated region
    $region134: #{tpu_custom_call.1} parent=1 // pred_check
      _
    $region135: #{tpu_custom_call.1} parent=1 // pred_check_branch
      %3781 = sbr.rel target = $region137
    $region136: #{tpu_custom_call.1} parent=1 // pred_region
      %3782 = sst [smem:[#allocation24]] [#allocation41]
      %3783 = sst [smem:[#allocation25]] [#allocation40]
    $region137: #{tpu_custom_call.1} parent=1 // pred_fallthru
      _
    %3785 = shalt.err (0)
    %s3787 = sshll.u32 [#allocation2], 4
    %s3788 = int_to_ptr.vmem [resolvable:$true] %s3787
    %3790 = dma.hbm_to_vmem [thread:$0]  %s2, 512, %s3788, [#allocation3]
    %v3791 = vld [vmem:[%s1063] sm:$0xff]
    %v3792 = vld [vmem:[%s1063 + $0x8] sm:$0xff]
    %v3793 = vld [vmem:[%s1063 + $0x10] sm:$0xff]
    %v3794 = vld [vmem:[%s1063 + $0x18] sm:$0xff]
    %v3795 = vunpack.c.l.s8.bf16 %v3791
    %v3796 = vunpack.c.h.s8.bf16 %v3791
    %v3797 = vunpack.c.l.s8.bf16 %v3792
    %v3798 = vunpack.c.h.s8.bf16 %v3792
    %v3799 = vunpack.c.l.s8.bf16 %v3793
    %v3800 = vunpack.c.h.s8.bf16 %v3793
    %v3801 = vunpack.c.l.s8.bf16 %v3794
    %v3802 = vunpack.c.h.s8.bf16 %v3794
    %3803 = vmatprep.subr.bf16.mxu0 %v2883
    %3804 = vmatpush1.bf16.msra.mxu0 %v2778
    %3805 = vmatprep.subr.bf16.mxu0 %v2882
    %3806 = vmatpush1.bf16.msra.mxu0 %v2777
    %3807 = vmatprep.subr.bf16.mxu0 %v2881
    %3808 = vmatpush1.bf16.msra.mxu0 %v2776
    %3809 = vmatprep.subr.bf16.mxu0 %v2880
    %3810 = vmatpush1.bf16.msra.mxu0 %v2775
    %3811 = vmatprep.subr.bf16.mxu0 %v2879
    %3812 = vmatpush1.bf16.msra.mxu0 %v2774
    %3813 = vmatprep.subr.bf16.mxu0 %v2878
    %3814 = vmatpush1.bf16.msra.mxu0 %v2773
    %3815 = vmatprep.subr.bf16.mxu0 %v2877
    %3816 = vmatpush1.bf16.msra.mxu0 %v2772
    %3817 = vmatprep.subr.bf16.mxu0 %v2876
    %3818 = vmatpush1.bf16.msra.mxu0 %v2771
    %3819 = vmatprep.subr.bf16.mxu0 0
    %3820 = vmatpush2.bf16.msra.mxu0 0
    %3821 = vmatprep.subr.bf16.mxu0 0
    %3822 = vmatpush2.bf16.msra.mxu0 0
    %3823 = vmatprep.subr.bf16.mxu0 0
    %3824 = vmatpush2.bf16.msra.mxu0 0
    %3825 = vmatprep.subr.bf16.mxu0 0
    %3826 = vmatpush2.bf16.msra.mxu0 0
    %3827 = vmatprep.subr.bf16.mxu0 0
    %3828 = vmatpush2.bf16.msra.mxu0 0
    %3829 = vmatprep.subr.bf16.mxu0 0
    %3830 = vmatpush2.bf16.msra.mxu0 0
    %3831 = vmatprep.subr.bf16.mxu0 0
    %3832 = vmatpush2.bf16.msra.mxu0 0
    %3833 = vmatprep.subr.bf16.mxu0 0
    %3834 = vmatpush2.bf16.msra.mxu0 0
    %3835 = vmatprep.mubr.bf16.mxu0 0
    %3836 = vmatmul.mubr.bf16.gmra.mxu0 %v3795
    %v3837 = vpop.f32.mrf.mxu0
    %v3838 = vadd.f32 0.0, %v3837
    %v3839 = vpop.f32.mrf.mxu0
    %v3840 = vadd.f32 0.0, %v3839
    %v3841 = vpop.f32.mrf.mxu0
    %v3842 = vadd.f32 0.0, %v3841
    %v3843 = vpop.f32.mrf.mxu0
    %v3844 = vadd.f32 0.0, %v3843
    %3845 = vmatprep.mubr.bf16.mxu0 0
    %3846 = vmatmul.mubr.bf16.gmra.mxu0 %v3796
    %v3847 = vpop.f32.mrf.mxu0
    %v3848 = vadd.f32 0.0, %v3847
    %v3849 = vpop.f32.mrf.mxu0
    %v3850 = vadd.f32 0.0, %v3849
    %v3851 = vpop.f32.mrf.mxu0
    %v3852 = vadd.f32 0.0, %v3851
    %v3853 = vpop.f32.mrf.mxu0
    %v3854 = vadd.f32 0.0, %v3853
    %3855 = vmatprep.mubr.bf16.mxu0 0
    %3856 = vmatmul.mubr.bf16.gmra.mxu0 %v3797
    %v3857 = vpop.f32.mrf.mxu0
    %v3858 = vadd.f32 0.0, %v3857
    %v3859 = vpop.f32.mrf.mxu0
    %v3860 = vadd.f32 0.0, %v3859
    %v3861 = vpop.f32.mrf.mxu0
    %v3862 = vadd.f32 0.0, %v3861
    %v3863 = vpop.f32.mrf.mxu0
    %v3864 = vadd.f32 0.0, %v3863
    %3865 = vmatprep.mubr.bf16.mxu0 0
    %3866 = vmatmul.mubr.bf16.gmra.mxu0 %v3798
    %v3867 = vpop.f32.mrf.mxu0
    %v3868 = vadd.f32 0.0, %v3867
    %v3869 = vpop.f32.mrf.mxu0
    %v3870 = vadd.f32 0.0, %v3869
    %v3871 = vpop.f32.mrf.mxu0
    %v3872 = vadd.f32 0.0, %v3871
    %v3873 = vpop.f32.mrf.mxu0
    %v3874 = vadd.f32 0.0, %v3873
    %3875 = vmatprep.mubr.bf16.mxu0 0
    %3876 = vmatmul.mubr.bf16.gmra.mxu0 %v3799
    %v3877 = vpop.f32.mrf.mxu0
    %v3878 = vadd.f32 0.0, %v3877
    %v3879 = vpop.f32.mrf.mxu0
    %v3880 = vadd.f32 0.0, %v3879
    %v3881 = vpop.f32.mrf.mxu0
    %v3882 = vadd.f32 0.0, %v3881
    %v3883 = vpop.f32.mrf.mxu0
    %v3884 = vadd.f32 0.0, %v3883
    %3885 = vmatprep.mubr.bf16.mxu0 0
    %3886 = vmatmul.mubr.bf16.gmra.mxu0 %v3800
    %v3887 = vpop.f32.mrf.mxu0
    %v3888 = vadd.f32 0.0, %v3887
    %v3889 = vpop.f32.mrf.mxu0
    %v3890 = vadd.f32 0.0, %v3889
    %v3891 = vpop.f32.mrf.mxu0
    %v3892 = vadd.f32 0.0, %v3891
    %v3893 = vpop.f32.mrf.mxu0
    %v3894 = vadd.f32 0.0, %v3893
    %3895 = vmatprep.mubr.bf16.mxu0 0
    %3896 = vmatmul.mubr.bf16.gmra.mxu0 %v3801
    %v3897 = vpop.f32.mrf.mxu0
    %v3898 = vadd.f32 0.0, %v3897
    %v3899 = vpop.f32.mrf.mxu0
    %v3900 = vadd.f32 0.0, %v3899
    %v3901 = vpop.f32.mrf.mxu0
    %v3902 = vadd.f32 0.0, %v3901
    %v3903 = vpop.f32.mrf.mxu0
    %v3904 = vadd.f32 0.0, %v3903
    %3905 = vmatprep.mubr.bf16.mxu0 0
    %3906 = vmatmul.mubr.bf16.gmra.mxu0 %v3802
    %v3907 = vpop.f32.mrf.mxu0
    %v3908 = vadd.f32 0.0, %v3907
    %v3909 = vpop.f32.mrf.mxu0
    %v3910 = vadd.f32 0.0, %v3909
    %v3911 = vpop.f32.mrf.mxu0
    %v3912 = vadd.f32 0.0, %v3911
    %v3913 = vpop.f32.mrf.mxu0
    %v3914 = vadd.f32 0.0, %v3913
    %3915 = vdwg.mxu0
    %v3916 = vadd.f32 %v3618, %v3838
    %v3917 = vadd.f32 %v3619, %v3842
    %v3918 = vadd.f32 %v3620, %v3848
    %v3919 = vadd.f32 %v3621, %v3852
    %v3920 = vadd.f32 %v3622, %v3858
    %v3921 = vadd.f32 %v3623, %v3862
    %v3922 = vadd.f32 %v3624, %v3868
    %v3923 = vadd.f32 %v3625, %v3872
    %v3924 = vadd.f32 %v3626, %v3878
    %v3925 = vadd.f32 %v3627, %v3882
    %v3926 = vadd.f32 %v3628, %v3888
    %v3927 = vadd.f32 %v3629, %v3892
    %v3928 = vadd.f32 %v3630, %v3898
    %v3929 = vadd.f32 %v3631, %v3902
    %v3930 = vadd.f32 %v3632, %v3908
    %v3931 = vadd.f32 %v3633, %v3912
    %v3932 = vadd.f32 %v627, %v3840
    %v3933 = vadd.f32 %v630, %v3844
    %v3934 = vadd.f32 %v635, %v3850
    %v3935 = vadd.f32 %v638, %v3854
    %v3936 = vadd.f32 %v643, %v3860
    %v3937 = vadd.f32 %v646, %v3864
    %v3938 = vadd.f32 %v651, %v3870
    %v3939 = vadd.f32 %v654, %v3874
    %v3940 = vadd.f32 %v659, %v3880
    %v3941 = vadd.f32 %v662, %v3884
    %v3942 = vadd.f32 %v667, %v3890
    %v3943 = vadd.f32 %v670, %v3894
    %v3944 = vadd.f32 %v675, %v3900
    %v3945 = vadd.f32 %v678, %v3904
    %v3946 = vadd.f32 %v683, %v3910
    %v3947 = vadd.f32 %v686, %v3914
    %v3948 = vxor.u32 %v3932, 2147483648
    %v3949 = vxor.u32 %v3933, 2147483648
    %v3950 = vxor.u32 %v3934, 2147483648
    %v3951 = vxor.u32 %v3935, 2147483648
    %v3952 = vxor.u32 %v3936, 2147483648
    %v3953 = vxor.u32 %v3937, 2147483648
    %v3954 = vxor.u32 %v3938, 2147483648
    %v3955 = vxor.u32 %v3939, 2147483648
    %v3956 = vxor.u32 %v3940, 2147483648
    %v3957 = vxor.u32 %v3941, 2147483648
    %v3958 = vxor.u32 %v3942, 2147483648
    %v3959 = vxor.u32 %v3943, 2147483648
    %v3960 = vxor.u32 %v3944, 2147483648
    %v3961 = vxor.u32 %v3945, 2147483648
    %v3962 = vxor.u32 %v3946, 2147483648
    %v3963 = vxor.u32 %v3947, 2147483648
    %v3964 = vmul.f32 %v3948, 1.442695
    %v3965 = vpow.pop %v3964
    %v3966 = vmul.f32 %v3949, 1.442695
    %v3967 = vpow.pop %v3966
    %v3968 = vmul.f32 %v3950, 1.442695
    %v3969 = vpow.pop %v3968
    %v3970 = vmul.f32 %v3951, 1.442695
    %v3971 = vpow.pop %v3970
    %v3972 = vmul.f32 %v3952, 1.442695
    %v3973 = vpow.pop %v3972
    %v3974 = vmul.f32 %v3953, 1.442695
    %v3975 = vpow.pop %v3974
    %v3976 = vmul.f32 %v3954, 1.442695
    %v3977 = vpow.pop %v3976
    %v3978 = vmul.f32 %v3955, 1.442695
    %v3979 = vpow.pop %v3978
    %v3980 = vmul.f32 %v3956, 1.442695
    %v3981 = vpow.pop %v3980
    %v3982 = vmul.f32 %v3957, 1.442695
    %v3983 = vpow.pop %v3982
    %v3984 = vmul.f32 %v3958, 1.442695
    %v3985 = vpow.pop %v3984
    %v3986 = vmul.f32 %v3959, 1.442695
    %v3987 = vpow.pop %v3986
    %v3988 = vmul.f32 %v3960, 1.442695
    %v3989 = vpow.pop %v3988
    %v3990 = vmul.f32 %v3961, 1.442695
    %v3991 = vpow.pop %v3990
    %v3992 = vmul.f32 %v3962, 1.442695
    %v3993 = vpow.pop %v3992
    %v3994 = vmul.f32 %v3963, 1.442695
    %v3995 = vpow.pop %v3994
    %v3996 = vadd.f32 %v3965, 1.0
    %v3997 = vadd.f32 %v3967, 1.0
    %v3998 = vadd.f32 %v3969, 1.0
    %v3999 = vadd.f32 %v3971, 1.0
    %v4000 = vadd.f32 %v3973, 1.0
    %v4001 = vadd.f32 %v3975, 1.0
    %v4002 = vadd.f32 %v3977, 1.0
    %v4003 = vadd.f32 %v3979, 1.0
    %v4004 = vadd.f32 %v3981, 1.0
    %v4005 = vadd.f32 %v3983, 1.0
    %v4006 = vadd.f32 %v3985, 1.0
    %v4007 = vadd.f32 %v3987, 1.0
    %v4008 = vadd.f32 %v3989, 1.0
    %v4009 = vadd.f32 %v3991, 1.0
    %v4010 = vadd.f32 %v3993, 1.0
    %v4011 = vadd.f32 %v3995, 1.0
    %v4012 = vrcp.pop %v3996
    %v4013 = vmul.f32 1.0, %v4012
    %v4014 = vrcp.pop %v3997
    %v4015 = vmul.f32 1.0, %v4014
    %v4016 = vrcp.pop %v3998
    %v4017 = vmul.f32 1.0, %v4016
    %v4018 = vrcp.pop %v3999
    %v4019 = vmul.f32 1.0, %v4018
    %v4020 = vrcp.pop %v4000
    %v4021 = vmul.f32 1.0, %v4020
    %v4022 = vrcp.pop %v4001
    %v4023 = vmul.f32 1.0, %v4022
    %v4024 = vrcp.pop %v4002
    %v4025 = vmul.f32 1.0, %v4024
    %v4026 = vrcp.pop %v4003
    %v4027 = vmul.f32 1.0, %v4026
    %v4028 = vrcp.pop %v4004
    %v4029 = vmul.f32 1.0, %v4028
    %v4030 = vrcp.pop %v4005
    %v4031 = vmul.f32 1.0, %v4030
    %v4032 = vrcp.pop %v4006
    %v4033 = vmul.f32 1.0, %v4032
    %v4034 = vrcp.pop %v4007
    %v4035 = vmul.f32 1.0, %v4034
    %v4036 = vrcp.pop %v4008
    %v4037 = vmul.f32 1.0, %v4036
    %v4038 = vrcp.pop %v4009
    %v4039 = vmul.f32 1.0, %v4038
    %v4040 = vrcp.pop %v4010
    %v4041 = vmul.f32 1.0, %v4040
    %v4042 = vrcp.pop %v4011
    %v4043 = vmul.f32 1.0, %v4042
    %v4044 = vmul.f32 %v4013, %v3838
    %v4045 = vmul.f32 %v4015, %v3842
    %v4046 = vmul.f32 %v4017, %v3848
    %v4047 = vmul.f32 %v4019, %v3852
    %v4048 = vmul.f32 %v4021, %v3858
    %v4049 = vmul.f32 %v4023, %v3862
    %v4050 = vmul.f32 %v4025, %v3868
    %v4051 = vmul.f32 %v4027, %v3872
    %v4052 = vmul.f32 %v4029, %v3878
    %v4053 = vmul.f32 %v4031, %v3882
    %v4054 = vmul.f32 %v4033, %v3888
    %v4055 = vmul.f32 %v4035, %v3892
    %v4056 = vmul.f32 %v4037, %v3898
    %v4057 = vmul.f32 %v4039, %v3902
    %v4058 = vmul.f32 %v4041, %v3908
    %v4059 = vmul.f32 %v4043, %v3912
    %v4060 = vadd.f32 %v3762, %v4044
    %v4061 = vadd.f32 %v3763, %v4045
    %v4062 = vadd.f32 %v3764, %v4046
    %v4063 = vadd.f32 %v3765, %v4047
    %v4064 = vadd.f32 %v3766, %v4048
    %v4065 = vadd.f32 %v3767, %v4049
    %v4066 = vadd.f32 %v3768, %v4050
    %v4067 = vadd.f32 %v3769, %v4051
    %v4068 = vadd.f32 %v3770, %v4052
    %v4069 = vadd.f32 %v3771, %v4053
    %v4070 = vadd.f32 %v3772, %v4054
    %v4071 = vadd.f32 %v3773, %v4055
    %v4072 = vadd.f32 %v3774, %v4056
    %v4073 = vadd.f32 %v3775, %v4057
    %v4074 = vadd.f32 %v3776, %v4058
    %v4075 = vadd.f32 %v3777, %v4059
    %v4076 = vpack.c.bf16 %v3917, %v3916
    %v4077 = vpack.c.bf16 %v3919, %v3918
    %v4078 = vpack.c.bf16 %v3921, %v3920
    %v4079 = vpack.c.bf16 %v3923, %v3922
    %v4080 = vpack.c.bf16 %v3925, %v3924
    %v4081 = vpack.c.bf16 %v3927, %v3926
    %v4082 = vpack.c.bf16 %v3929, %v3928
    %v4083 = vpack.c.bf16 %v3931, %v3930
    %4084 = vmatprep.subr.bf16.mxu0 0
    %4085 = vmatpush1.bf16.msra.mxu0 %v2304
    %4086 = vmatprep.subr.bf16.mxu0 0
    %4087 = vmatpush1.bf16.msra.mxu0 %v2303
    %4088 = vmatprep.subr.bf16.mxu0 0
    %4089 = vmatpush1.bf16.msra.mxu0 %v2302
    %4090 = vmatprep.subr.bf16.mxu0 0
    %4091 = vmatpush1.bf16.msra.mxu0 %v2301
    %4092 = vmatprep.subr.bf16.mxu0 0
    %4093 = vmatpush1.bf16.msra.mxu0 %v2300
    %4094 = vmatprep.subr.bf16.mxu0 0
    %4095 = vmatpush1.bf16.msra.mxu0 %v2299
    %4096 = vmatprep.subr.bf16.mxu0 0
    %4097 = vmatpush1.bf16.msra.mxu0 %v2298
    %4098 = vmatprep.subr.bf16.mxu0 0
    %4099 = vmatpush1.bf16.msra.mxu0 %v2297
    %4100 = vmatprep.subr.bf16.mxu0 0
    %4101 = vmatpush2.bf16.msra.mxu0 0
    %4102 = vmatprep.subr.bf16.mxu0 0
    %4103 = vmatpush2.bf16.msra.mxu0 0
    %4104 = vmatprep.subr.bf16.mxu0 0
    %4105 = vmatpush2.bf16.msra.mxu0 0
    %4106 = vmatprep.subr.bf16.mxu0 0
    %4107 = vmatpush2.bf16.msra.mxu0 0
    %4108 = vmatprep.subr.bf16.mxu0 0
    %4109 = vmatpush2.bf16.msra.mxu0 0
    %4110 = vmatprep.subr.bf16.mxu0 0
    %4111 = vmatpush2.bf16.msra.mxu0 0
    %4112 = vmatprep.subr.bf16.mxu0 0
    %4113 = vmatpush2.bf16.msra.mxu0 0
    %4114 = vmatprep.subr.bf16.mxu0 0
    %4115 = vmatpush2.bf16.msra.mxu0 0
    %4116 = vmatprep.mubr.bf16.mxu0 0
    %4117 = vmatmul.mubr.bf16.gmra.mxu0 %v4076
    %v4118 = vpop.f32.mrf.mxu0
    %v4119 = vadd.f32 0.0, %v4118
    %v4120 = vpop.f32.mrf.mxu0
    %v4121 = vpop.f32.mrf.mxu0
    %v4122 = vadd.f32 0.0, %v4121
    %v4123 = vpop.f32.mrf.mxu0
    %4124 = vmatprep.mubr.bf16.mxu0 0
    %4125 = vmatmul.mubr.bf16.gmra.mxu0 %v4077
    %v4126 = vpop.f32.mrf.mxu0
    %v4127 = vadd.f32 0.0, %v4126
    %v4128 = vpop.f32.mrf.mxu0
    %v4129 = vpop.f32.mrf.mxu0
    %v4130 = vadd.f32 0.0, %v4129
    %v4131 = vpop.f32.mrf.mxu0
    %4132 = vmatprep.mubr.bf16.mxu0 0
    %4133 = vmatmul.mubr.bf16.gmra.mxu0 %v4078
    %v4134 = vpop.f32.mrf.mxu0
    %v4135 = vadd.f32 0.0, %v4134
    %v4136 = vpop.f32.mrf.mxu0
    %v4137 = vpop.f32.mrf.mxu0
    %v4138 = vadd.f32 0.0, %v4137
    %v4139 = vpop.f32.mrf.mxu0
    %4140 = vmatprep.mubr.bf16.mxu0 0
    %4141 = vmatmul.mubr.bf16.gmra.mxu0 %v4079
    %v4142 = vpop.f32.mrf.mxu0
    %v4143 = vadd.f32 0.0, %v4142
    %v4144 = vpop.f32.mrf.mxu0
    %v4145 = vpop.f32.mrf.mxu0
    %v4146 = vadd.f32 0.0, %v4145
    %v4147 = vpop.f32.mrf.mxu0
    %4148 = vmatprep.mubr.bf16.mxu0 0
    %4149 = vmatmul.mubr.bf16.gmra.mxu0 %v4080
    %v4150 = vpop.f32.mrf.mxu0
    %v4151 = vadd.f32 0.0, %v4150
    %v4152 = vpop.f32.mrf.mxu0
    %v4153 = vpop.f32.mrf.mxu0
    %v4154 = vadd.f32 0.0, %v4153
    %v4155 = vpop.f32.mrf.mxu0
    %4156 = vmatprep.mubr.bf16.mxu0 0
    %4157 = vmatmul.mubr.bf16.gmra.mxu0 %v4081
    %v4158 = vpop.f32.mrf.mxu0
    %v4159 = vadd.f32 0.0, %v4158
    %v4160 = vpop.f32.mrf.mxu0
    %v4161 = vpop.f32.mrf.mxu0
    %v4162 = vadd.f32 0.0, %v4161
    %v4163 = vpop.f32.mrf.mxu0
    %4164 = vmatprep.mubr.bf16.mxu0 0
    %4165 = vmatmul.mubr.bf16.gmra.mxu0 %v4082
    %v4166 = vpop.f32.mrf.mxu0
    %v4167 = vadd.f32 0.0, %v4166
    %v4168 = vpop.f32.mrf.mxu0
    %v4169 = vpop.f32.mrf.mxu0
    %v4170 = vadd.f32 0.0, %v4169
    %v4171 = vpop.f32.mrf.mxu0
    %4172 = vmatprep.mubr.bf16.mxu0 0
    %4173 = vmatmul.mubr.bf16.gmra.mxu0 %v4083
    %v4174 = vpop.f32.mrf.mxu0
    %v4175 = vadd.f32 0.0, %v4174
    %v4176 = vpop.f32.mrf.mxu0
    %v4177 = vpop.f32.mrf.mxu0
    %v4178 = vadd.f32 0.0, %v4177
    %v4179 = vpop.f32.mrf.mxu0
    %4180 = vdwg.mxu0
    %v4181 = vadd.f32 %v459, %v4119
    %v4182 = vadd.f32 %v462, %v4122
    %v4183 = vadd.f32 %v467, %v4127
    %v4184 = vadd.f32 %v470, %v4130
    %v4185 = vadd.f32 %v475, %v4135
    %v4186 = vadd.f32 %v478, %v4138
    %v4187 = vadd.f32 %v483, %v4143
    %v4188 = vadd.f32 %v486, %v4146
    %v4189 = vadd.f32 %v491, %v4151
    %v4190 = vadd.f32 %v494, %v4154
    %v4191 = vadd.f32 %v499, %v4159
    %v4192 = vadd.f32 %v502, %v4162
    %v4193 = vadd.f32 %v507, %v4167
    %v4194 = vadd.f32 %v510, %v4170
    %v4195 = vadd.f32 %v515, %v4175
    %v4196 = vadd.f32 %v518, %v4178
    %v4197 = vxor.u32 %v4181, 2147483648
    %v4198 = vxor.u32 %v4182, 2147483648
    %v4199 = vxor.u32 %v4183, 2147483648
    %v4200 = vxor.u32 %v4184, 2147483648
    %v4201 = vxor.u32 %v4185, 2147483648
    %v4202 = vxor.u32 %v4186, 2147483648
    %v4203 = vxor.u32 %v4187, 2147483648
    %v4204 = vxor.u32 %v4188, 2147483648
    %v4205 = vxor.u32 %v4189, 2147483648
    %v4206 = vxor.u32 %v4190, 2147483648
    %v4207 = vxor.u32 %v4191, 2147483648
    %v4208 = vxor.u32 %v4192, 2147483648
    %v4209 = vxor.u32 %v4193, 2147483648
    %v4210 = vxor.u32 %v4194, 2147483648
    %v4211 = vxor.u32 %v4195, 2147483648
    %v4212 = vxor.u32 %v4196, 2147483648
    %v4213 = vmul.f32 %v4197, 1.442695
    %v4214 = vpow.pop %v4213
    %v4215 = vmul.f32 %v4198, 1.442695
    %v4216 = vpow.pop %v4215
    %v4217 = vmul.f32 %v4199, 1.442695
    %v4218 = vpow.pop %v4217
    %v4219 = vmul.f32 %v4200, 1.442695
    %v4220 = vpow.pop %v4219
    %v4221 = vmul.f32 %v4201, 1.442695
    %v4222 = vpow.pop %v4221
    %v4223 = vmul.f32 %v4202, 1.442695
    %v4224 = vpow.pop %v4223
    %v4225 = vmul.f32 %v4203, 1.442695
    %v4226 = vpow.pop %v4225
    %v4227 = vmul.f32 %v4204, 1.442695
    %v4228 = vpow.pop %v4227
    %v4229 = vmul.f32 %v4205, 1.442695
    %v4230 = vpow.pop %v4229
    %v4231 = vmul.f32 %v4206, 1.442695
    %v4232 = vpow.pop %v4231
    %v4233 = vmul.f32 %v4207, 1.442695
    %v4234 = vpow.pop %v4233
    %v4235 = vmul.f32 %v4208, 1.442695
    %v4236 = vpow.pop %v4235
    %v4237 = vmul.f32 %v4209, 1.442695
    %v4238 = vpow.pop %v4237
    %v4239 = vmul.f32 %v4210, 1.442695
    %v4240 = vpow.pop %v4239
    %v4241 = vmul.f32 %v4211, 1.442695
    %v4242 = vpow.pop %v4241
    %v4243 = vmul.f32 %v4212, 1.442695
    %v4244 = vpow.pop %v4243
    %v4245 = vadd.f32 %v4214, 1.0
    %v4246 = vadd.f32 %v4216, 1.0
    %v4247 = vadd.f32 %v4218, 1.0
    %v4248 = vadd.f32 %v4220, 1.0
    %v4249 = vadd.f32 %v4222, 1.0
    %v4250 = vadd.f32 %v4224, 1.0
    %v4251 = vadd.f32 %v4226, 1.0
    %v4252 = vadd.f32 %v4228, 1.0
    %v4253 = vadd.f32 %v4230, 1.0
    %v4254 = vadd.f32 %v4232, 1.0
    %v4255 = vadd.f32 %v4234, 1.0
    %v4256 = vadd.f32 %v4236, 1.0
    %v4257 = vadd.f32 %v4238, 1.0
    %v4258 = vadd.f32 %v4240, 1.0
    %v4259 = vadd.f32 %v4242, 1.0
    %v4260 = vadd.f32 %v4244, 1.0
    %v4261 = vrcp.pop %v4245
    %v4262 = vmul.f32 1.0, %v4261
    %v4263 = vrcp.pop %v4246
    %v4264 = vmul.f32 1.0, %v4263
    %v4265 = vrcp.pop %v4247
    %v4266 = vmul.f32 1.0, %v4265
    %v4267 = vrcp.pop %v4248
    %v4268 = vmul.f32 1.0, %v4267
    %v4269 = vrcp.pop %v4249
    %v4270 = vmul.f32 1.0, %v4269
    %v4271 = vrcp.pop %v4250
    %v4272 = vmul.f32 1.0, %v4271
    %v4273 = vrcp.pop %v4251
    %v4274 = vmul.f32 1.0, %v4273
    %v4275 = vrcp.pop %v4252
    %v4276 = vmul.f32 1.0, %v4275
    %v4277 = vrcp.pop %v4253
    %v4278 = vmul.f32 1.0, %v4277
    %v4279 = vrcp.pop %v4254
    %v4280 = vmul.f32 1.0, %v4279
    %v4281 = vrcp.pop %v4255
    %v4282 = vmul.f32 1.0, %v4281
    %v4283 = vrcp.pop %v4256
    %v4284 = vmul.f32 1.0, %v4283
    %v4285 = vrcp.pop %v4257
    %v4286 = vmul.f32 1.0, %v4285
    %v4287 = vrcp.pop %v4258
    %v4288 = vmul.f32 1.0, %v4287
    %v4289 = vrcp.pop %v4259
    %v4290 = vmul.f32 1.0, %v4289
    %v4291 = vrcp.pop %v4260
    %v4292 = vmul.f32 1.0, %v4291
    %v4293 = vpack.c.bf16 %v4061, %v4060
    %v4294 = vpack.c.bf16 %v4063, %v4062
    %v4295 = vpack.c.bf16 %v4065, %v4064
    %v4296 = vpack.c.bf16 %v4067, %v4066
    %v4297 = vpack.c.bf16 %v4069, %v4068
    %v4298 = vpack.c.bf16 %v4071, %v4070
    %v4299 = vpack.c.bf16 %v4073, %v4072
    %v4300 = vpack.c.bf16 %v4075, %v4074
    %4301 = vmatprep.subr.bf16.mxu0 0
    %4302 = vmatpush1.bf16.msra.mxu0 %v2569
    %4303 = vmatprep.subr.bf16.mxu0 0
    %4304 = vmatpush1.bf16.msra.mxu0 %v2568
    %4305 = vmatprep.subr.bf16.mxu0 0
    %4306 = vmatpush1.bf16.msra.mxu0 %v2567
    %4307 = vmatprep.subr.bf16.mxu0 0
    %4308 = vmatpush1.bf16.msra.mxu0 %v2566
    %4309 = vmatprep.subr.bf16.mxu0 0
    %4310 = vmatpush1.bf16.msra.mxu0 %v2565
    %4311 = vmatprep.subr.bf16.mxu0 0
    %4312 = vmatpush1.bf16.msra.mxu0 %v2564
    %4313 = vmatprep.subr.bf16.mxu0 0
    %4314 = vmatpush1.bf16.msra.mxu0 %v2563
    %4315 = vmatprep.subr.bf16.mxu0 0
    %4316 = vmatpush1.bf16.msra.mxu0 %v2562
    %4317 = vmatprep.subr.bf16.mxu0 0
    %4318 = vmatpush2.bf16.msra.mxu0 0
    %4319 = vmatprep.subr.bf16.mxu0 0
    %4320 = vmatpush2.bf16.msra.mxu0 0
    %4321 = vmatprep.subr.bf16.mxu0 0
    %4322 = vmatpush2.bf16.msra.mxu0 0
    %4323 = vmatprep.subr.bf16.mxu0 0
    %4324 = vmatpush2.bf16.msra.mxu0 0
    %4325 = vmatprep.subr.bf16.mxu0 0
    %4326 = vmatpush2.bf16.msra.mxu0 0
    %4327 = vmatprep.subr.bf16.mxu0 0
    %4328 = vmatpush2.bf16.msra.mxu0 0
    %4329 = vmatprep.subr.bf16.mxu0 0
    %4330 = vmatpush2.bf16.msra.mxu0 0
    %4331 = vmatprep.subr.bf16.mxu0 0
    %4332 = vmatpush2.bf16.msra.mxu0 0
    %4333 = vmatprep.mubr.bf16.mxu0 0
    %4334 = vmatmul.mubr.bf16.gmra.mxu0 %v4293
    %v4335 = vpop.f32.mrf.mxu0
    %v4336 = vadd.f32 0.0, %v4335
    %v4337 = vpop.f32.mrf.mxu0
    %v4338 = vpop.f32.mrf.mxu0
    %v4339 = vadd.f32 0.0, %v4338
    %v4340 = vpop.f32.mrf.mxu0
    %4341 = vmatprep.mubr.bf16.mxu0 0
    %4342 = vmatmul.mubr.bf16.gmra.mxu0 %v4294
    %v4343 = vpop.f32.mrf.mxu0
    %v4344 = vadd.f32 0.0, %v4343
    %v4345 = vpop.f32.mrf.mxu0
    %v4346 = vpop.f32.mrf.mxu0
    %v4347 = vadd.f32 0.0, %v4346
    %v4348 = vpop.f32.mrf.mxu0
    %4349 = vmatprep.mubr.bf16.mxu0 0
    %4350 = vmatmul.mubr.bf16.gmra.mxu0 %v4295
    %v4351 = vpop.f32.mrf.mxu0
    %v4352 = vadd.f32 0.0, %v4351
    %v4353 = vpop.f32.mrf.mxu0
    %v4354 = vpop.f32.mrf.mxu0
    %v4355 = vadd.f32 0.0, %v4354
    %v4356 = vpop.f32.mrf.mxu0
    %4357 = vmatprep.mubr.bf16.mxu0 0
    %4358 = vmatmul.mubr.bf16.gmra.mxu0 %v4296
    %v4359 = vpop.f32.mrf.mxu0
    %v4360 = vadd.f32 0.0, %v4359
    %v4361 = vpop.f32.mrf.mxu0
    %v4362 = vpop.f32.mrf.mxu0
    %v4363 = vadd.f32 0.0, %v4362
    %v4364 = vpop.f32.mrf.mxu0
    %4365 = vmatprep.mubr.bf16.mxu0 0
    %4366 = vmatmul.mubr.bf16.gmra.mxu0 %v4297
    %v4367 = vpop.f32.mrf.mxu0
    %v4368 = vadd.f32 0.0, %v4367
    %v4369 = vpop.f32.mrf.mxu0
    %v4370 = vpop.f32.mrf.mxu0
    %v4371 = vadd.f32 0.0, %v4370
    %v4372 = vpop.f32.mrf.mxu0
    %4373 = vmatprep.mubr.bf16.mxu0 0
    %4374 = vmatmul.mubr.bf16.gmra.mxu0 %v4298
    %v4375 = vpop.f32.mrf.mxu0
    %v4376 = vadd.f32 0.0, %v4375
    %v4377 = vpop.f32.mrf.mxu0
    %v4378 = vpop.f32.mrf.mxu0
    %v4379 = vadd.f32 0.0, %v4378
    %v4380 = vpop.f32.mrf.mxu0
    %4381 = vmatprep.mubr.bf16.mxu0 0
    %4382 = vmatmul.mubr.bf16.gmra.mxu0 %v4299
    %v4383 = vpop.f32.mrf.mxu0
    %v4384 = vadd.f32 0.0, %v4383
    %v4385 = vpop.f32.mrf.mxu0
    %v4386 = vpop.f32.mrf.mxu0
    %v4387 = vadd.f32 0.0, %v4386
    %v4388 = vpop.f32.mrf.mxu0
    %4389 = vmatprep.mubr.bf16.mxu0 0
    %4390 = vmatmul.mubr.bf16.gmra.mxu0 %v4300
    %v4391 = vpop.f32.mrf.mxu0
    %v4392 = vadd.f32 0.0, %v4391
    %v4393 = vpop.f32.mrf.mxu0
    %v4394 = vpop.f32.mrf.mxu0
    %v4395 = vadd.f32 0.0, %v4394
    %v4396 = vpop.f32.mrf.mxu0
    %4397 = vdwg.mxu0
    %v4398 = vadd.f32 %v795, %v4336
    %v4399 = vadd.f32 %v798, %v4339
    %v4400 = vadd.f32 %v803, %v4344
    %v4401 = vadd.f32 %v806, %v4347
    %v4402 = vadd.f32 %v811, %v4352
    %v4403 = vadd.f32 %v814, %v4355
    %v4404 = vadd.f32 %v819, %v4360
    %v4405 = vadd.f32 %v822, %v4363
    %v4406 = vadd.f32 %v827, %v4368
    %v4407 = vadd.f32 %v830, %v4371
    %v4408 = vadd.f32 %v835, %v4376
    %v4409 = vadd.f32 %v838, %v4379
    %v4410 = vadd.f32 %v843, %v4384
    %v4411 = vadd.f32 %v846, %v4387
    %v4412 = vadd.f32 %v851, %v4392
    %v4413 = vadd.f32 %v854, %v4395
    %v4414 = vtanh.pop %v4398
    %v4415 = vtanh.pop %v4399
    %v4416 = vtanh.pop %v4400
    %v4417 = vtanh.pop %v4401
    %v4418 = vtanh.pop %v4402
    %v4419 = vtanh.pop %v4403
    %v4420 = vtanh.pop %v4404
    %v4421 = vtanh.pop %v4405
    %v4422 = vtanh.pop %v4406
    %v4423 = vtanh.pop %v4407
    %v4424 = vtanh.pop %v4408
    %v4425 = vtanh.pop %v4409
    %v4426 = vtanh.pop %v4410
    %v4427 = vtanh.pop %v4411
    %v4428 = vtanh.pop %v4412
    %v4429 = vtanh.pop %v4413
    %v4430 = vsub.f32 %v4414, %v3916
    %v4431 = vsub.f32 %v4415, %v3917
    %v4432 = vsub.f32 %v4416, %v3918
    %v4433 = vsub.f32 %v4417, %v3919
    %v4434 = vsub.f32 %v4418, %v3920
    %v4435 = vsub.f32 %v4419, %v3921
    %v4436 = vsub.f32 %v4420, %v3922
    %v4437 = vsub.f32 %v4421, %v3923
    %v4438 = vsub.f32 %v4422, %v3924
    %v4439 = vsub.f32 %v4423, %v3925
    %v4440 = vsub.f32 %v4424, %v3926
    %v4441 = vsub.f32 %v4425, %v3927
    %v4442 = vsub.f32 %v4426, %v3928
    %v4443 = vsub.f32 %v4427, %v3929
    %v4444 = vsub.f32 %v4428, %v3930
    %v4445 = vsub.f32 %v4429, %v3931
    %v4446 = vmul.f32 %v4262, %v4430
    %v4447 = vmul.f32 %v4264, %v4431
    %v4448 = vmul.f32 %v4266, %v4432
    %v4449 = vmul.f32 %v4268, %v4433
    %v4450 = vmul.f32 %v4270, %v4434
    %v4451 = vmul.f32 %v4272, %v4435
    %v4452 = vmul.f32 %v4274, %v4436
    %v4453 = vmul.f32 %v4276, %v4437
    %v4454 = vmul.f32 %v4278, %v4438
    %v4455 = vmul.f32 %v4280, %v4439
    %v4456 = vmul.f32 %v4282, %v4440
    %v4457 = vmul.f32 %v4284, %v4441
    %v4458 = vmul.f32 %v4286, %v4442
    %v4459 = vmul.f32 %v4288, %v4443
    %v4460 = vmul.f32 %v4290, %v4444
    %v4461 = vmul.f32 %v4292, %v4445
    %v4462 = vadd.f32 %v3916, %v4446
    %v4463 = vadd.f32 %v3917, %v4447
    %v4464 = vadd.f32 %v3918, %v4448
    %v4465 = vadd.f32 %v3919, %v4449
    %v4466 = vadd.f32 %v3920, %v4450
    %v4467 = vadd.f32 %v3921, %v4451
    %v4468 = vadd.f32 %v3922, %v4452
    %v4469 = vadd.f32 %v3923, %v4453
    %v4470 = vadd.f32 %v3924, %v4454
    %v4471 = vadd.f32 %v3925, %v4455
    %v4472 = vadd.f32 %v3926, %v4456
    %v4473 = vadd.f32 %v3927, %v4457
    %v4474 = vadd.f32 %v3928, %v4458
    %v4475 = vadd.f32 %v3929, %v4459
    %v4476 = vadd.f32 %v3930, %v4460
    %v4477 = vadd.f32 %v3931, %v4461
    %v4478 = vmul.f32 %v4462, %v289
    %v4479 = vmul.f32 %v4463, %v290
    %v4480 = vmul.f32 %v4464, %v291
    %v4481 = vmul.f32 %v4465, %v292
    %v4482 = vmul.f32 %v4466, %v293
    %v4483 = vmul.f32 %v4467, %v294
    %v4484 = vmul.f32 %v4468, %v295
    %v4485 = vmul.f32 %v4469, %v296
    %v4486 = vmul.f32 %v4470, %v297
    %v4487 = vmul.f32 %v4471, %v298
    %v4488 = vmul.f32 %v4472, %v299
    %v4489 = vmul.f32 %v4473, %v300
    %v4490 = vmul.f32 %v4474, %v301
    %v4491 = vmul.f32 %v4475, %v302
    %v4492 = vmul.f32 %v4476, %v303
    %v4493 = vmul.f32 %v4477, %v304
    %v4494 = vpack.c.bf16 %v4479, %v4478
    %v4495 = vpack.c.bf16 %v4481, %v4480
    %v4496 = vpack.c.bf16 %v4483, %v4482
    %v4497 = vpack.c.bf16 %v4485, %v4484
    %v4498 = vpack.c.bf16 %v4487, %v4486
    %v4499 = vpack.c.bf16 %v4489, %v4488
    %v4500 = vpack.c.bf16 %v4491, %v4490
    %v4501 = vpack.c.bf16 %v4493, %v4492
    %4502 = vmatprep.subr.bf16.mxu0 0
    %4503 = vmatpush1.bf16.msra.mxu0 %v944
    %4504 = vmatprep.subr.bf16.mxu0 0
    %4505 = vmatpush1.bf16.msra.mxu0 %v943
    %4506 = vmatprep.subr.bf16.mxu0 0
    %4507 = vmatpush1.bf16.msra.mxu0 %v942
    %4508 = vmatprep.subr.bf16.mxu0 0
    %4509 = vmatpush1.bf16.msra.mxu0 %v941
    %4510 = vmatprep.subr.bf16.mxu0 0
    %4511 = vmatpush1.bf16.msra.mxu0 %v940
    %4512 = vmatprep.subr.bf16.mxu0 0
    %4513 = vmatpush1.bf16.msra.mxu0 %v939
    %4514 = vmatprep.subr.bf16.mxu0 0
    %4515 = vmatpush1.bf16.msra.mxu0 %v938
    %4516 = vmatprep.subr.bf16.mxu0 0
    %4517 = vmatpush1.bf16.msra.mxu0 %v937
    %4518 = vmatprep.subr.bf16.mxu0 0
    %4519 = vmatpush2.bf16.msra.mxu0 0
    %4520 = vmatprep.subr.bf16.mxu0 0
    %4521 = vmatpush2.bf16.msra.mxu0 0
    %4522 = vmatprep.subr.bf16.mxu0 0
    %4523 = vmatpush2.bf16.msra.mxu0 0
    %4524 = vmatprep.subr.bf16.mxu0 0
    %4525 = vmatpush2.bf16.msra.mxu0 0
    %4526 = vmatprep.subr.bf16.mxu0 0
    %4527 = vmatpush2.bf16.msra.mxu0 0
    %4528 = vmatprep.subr.bf16.mxu0 0
    %4529 = vmatpush2.bf16.msra.mxu0 0
    %4530 = vmatprep.subr.bf16.mxu0 0
    %4531 = vmatpush2.bf16.msra.mxu0 0
    %4532 = vmatprep.subr.bf16.mxu0 0
    %4533 = vmatpush2.bf16.msra.mxu0 0
    %4534 = vmatprep.mubr.bf16.mxu0 0
    %4535 = vmatmul.mubr.bf16.gmra.mxu0 %v4494
    %v4536 = vpop.f32.mrf.mxu0
    %v4537 = vadd.f32 0.0, %v4536
    %v4538 = vpop.f32.mrf.mxu0
    %v4539 = vpop.f32.mrf.mxu0
    %v4540 = vadd.f32 0.0, %v4539
    %v4541 = vpop.f32.mrf.mxu0
    %4542 = vmatprep.mubr.bf16.mxu0 0
    %4543 = vmatmul.mubr.bf16.gmra.mxu0 %v4495
    %v4544 = vpop.f32.mrf.mxu0
    %v4545 = vadd.f32 0.0, %v4544
    %v4546 = vpop.f32.mrf.mxu0
    %v4547 = vpop.f32.mrf.mxu0
    %v4548 = vadd.f32 0.0, %v4547
    %v4549 = vpop.f32.mrf.mxu0
    %4550 = vmatprep.mubr.bf16.mxu0 0
    %4551 = vmatmul.mubr.bf16.gmra.mxu0 %v4496
    %v4552 = vpop.f32.mrf.mxu0
    %v4553 = vadd.f32 0.0, %v4552
    %v4554 = vpop.f32.mrf.mxu0
    %v4555 = vpop.f32.mrf.mxu0
    %v4556 = vadd.f32 0.0, %v4555
    %v4557 = vpop.f32.mrf.mxu0
    %4558 = vmatprep.mubr.bf16.mxu0 0
    %4559 = vmatmul.mubr.bf16.gmra.mxu0 %v4497
    %v4560 = vpop.f32.mrf.mxu0
    %v4561 = vadd.f32 0.0, %v4560
    %v4562 = vpop.f32.mrf.mxu0
    %v4563 = vpop.f32.mrf.mxu0
    %v4564 = vadd.f32 0.0, %v4563
    %v4565 = vpop.f32.mrf.mxu0
    %4566 = vmatprep.mubr.bf16.mxu0 0
    %4567 = vmatmul.mubr.bf16.gmra.mxu0 %v4498
    %v4568 = vpop.f32.mrf.mxu0
    %v4569 = vadd.f32 0.0, %v4568
    %v4570 = vpop.f32.mrf.mxu0
    %v4571 = vpop.f32.mrf.mxu0
    %v4572 = vadd.f32 0.0, %v4571
    %v4573 = vpop.f32.mrf.mxu0
    %4574 = vmatprep.mubr.bf16.mxu0 0
    %4575 = vmatmul.mubr.bf16.gmra.mxu0 %v4499
    %v4576 = vpop.f32.mrf.mxu0
    %v4577 = vadd.f32 0.0, %v4576
    %v4578 = vpop.f32.mrf.mxu0
    %v4579 = vpop.f32.mrf.mxu0
    %v4580 = vadd.f32 0.0, %v4579
    %v4581 = vpop.f32.mrf.mxu0
    %4582 = vmatprep.mubr.bf16.mxu0 0
    %4583 = vmatmul.mubr.bf16.gmra.mxu0 %v4500
    %v4584 = vpop.f32.mrf.mxu0
    %v4585 = vadd.f32 0.0, %v4584
    %v4586 = vpop.f32.mrf.mxu0
    %v4587 = vpop.f32.mrf.mxu0
    %v4588 = vadd.f32 0.0, %v4587
    %v4589 = vpop.f32.mrf.mxu0
    %4590 = vmatprep.mubr.bf16.mxu0 0
    %4591 = vmatmul.mubr.bf16.gmra.mxu0 %v4501
    %v4592 = vpop.f32.mrf.mxu0
    %v4593 = vadd.f32 0.0, %v4592
    %v4594 = vpop.f32.mrf.mxu0
    %v4595 = vpop.f32.mrf.mxu0
    %v4596 = vadd.f32 0.0, %v4595
    %v4597 = vpop.f32.mrf.mxu0
    %4598 = vdwg.mxu0
    %v4599 = vpack.c.bf16 %v4540, %v4537
    %v4600 = vpack.c.bf16 %v4548, %v4545
    %v4601 = vpack.c.bf16 %v4556, %v4553
    %v4602 = vpack.c.bf16 %v4564, %v4561
    %v4603 = vpack.c.bf16 %v4572, %v4569
    %v4604 = vpack.c.bf16 %v4580, %v4577
    %v4605 = vpack.c.bf16 %v4588, %v4585
    %v4606 = vpack.c.bf16 %v4596, %v4593
    %s4607 = sshll.u32 %s1059, 4
    %4608 = dma.done [#allocation3], %s4607
    // Predicated region
    $region138: #{tpu_custom_call.1} parent=1 // pred_check
      _
    $region139: #{tpu_custom_call.1} parent=1 // pred_check_branch
      %4610 = sbr.rel target = $region141
    $region140: #{tpu_custom_call.1} parent=1 // pred_region
      %4611 = sst [smem:[#allocation24]] [#allocation43]
      %4612 = sst [smem:[#allocation25]] [#allocation42]
    $region141: #{tpu_custom_call.1} parent=1 // pred_fallthru
      _
    %4614 = shalt.err (0)
    %s4616 = sshll.u32 %s1063, 4
    %s4617 = int_to_ptr.vmem [resolvable:$true] %s4616
    %4619 = dma.hbm_to_vmem [thread:$0]  %s1062, 512, %s4617, %s1064
    %v4620 = vld [vmem:[#allocation2] sm:$0xff]
    %v4621 = vld [vmem:[#allocation2 + $0x8] sm:$0xff]
    %v4622 = vld [vmem:[#allocation2 + $0x10] sm:$0xff]
    %v4623 = vld [vmem:[#allocation2 + $0x18] sm:$0xff]
    %v4624 = vunpack.c.l.s8.bf16 %v4620
    %v4625 = vunpack.c.h.s8.bf16 %v4620
    %v4626 = vunpack.c.l.s8.bf16 %v4621
    %v4627 = vunpack.c.h.s8.bf16 %v4621
    %v4628 = vunpack.c.l.s8.bf16 %v4622
    %v4629 = vunpack.c.h.s8.bf16 %v4622
    %v4630 = vunpack.c.l.s8.bf16 %v4623
    %v4631 = vunpack.c.h.s8.bf16 %v4623
    %4632 = vmatprep.subr.bf16.mxu0 %v4606
    %4633 = vmatpush1.bf16.msra.mxu0 %v4501
    %4634 = vmatprep.subr.bf16.mxu0 %v4605
    %4635 = vmatpush1.bf16.msra.mxu0 %v4500
    %4636 = vmatprep.subr.bf16.mxu0 %v4604
    %4637 = vmatpush1.bf16.msra.mxu0 %v4499
    %4638 = vmatprep.subr.bf16.mxu0 %v4603
    %4639 = vmatpush1.bf16.msra.mxu0 %v4498
    %4640 = vmatprep.subr.bf16.mxu0 %v4602
    %4641 = vmatpush1.bf16.msra.mxu0 %v4497
    %4642 = vmatprep.subr.bf16.mxu0 %v4601
    %4643 = vmatpush1.bf16.msra.mxu0 %v4496
    %4644 = vmatprep.subr.bf16.mxu0 %v4600
    %4645 = vmatpush1.bf16.msra.mxu0 %v4495
    %4646 = vmatprep.subr.bf16.mxu0 %v4599
    %4647 = vmatpush1.bf16.msra.mxu0 %v4494
    %4648 = vmatprep.subr.bf16.mxu0 0
    %4649 = vmatpush2.bf16.msra.mxu0 0
    %4650 = vmatprep.subr.bf16.mxu0 0
    %4651 = vmatpush2.bf16.msra.mxu0 0
    %4652 = vmatprep.subr.bf16.mxu0 0
    %4653 = vmatpush2.bf16.msra.mxu0 0
    %4654 = vmatprep.subr.bf16.mxu0 0
    %4655 = vmatpush2.bf16.msra.mxu0 0
    %4656 = vmatprep.subr.bf16.mxu0 0
    %4657 = vmatpush2.bf16.msra.mxu0 0
    %4658 = vmatprep.subr.bf16.mxu0 0
    %4659 = vmatpush2.bf16.msra.mxu0 0
    %4660 = vmatprep.subr.bf16.mxu0 0
    %4661 = vmatpush2.bf16.msra.mxu0 0
    %4662 = vmatprep.subr.bf16.mxu0 0
    %4663 = vmatpush2.bf16.msra.mxu0 0
    %4664 = vmatprep.mubr.bf16.mxu0 0
    %4665 = vmatmul.mubr.bf16.gmra.mxu0 %v4624
    %v4666 = vpop.f32.mrf.mxu0
    %v4667 = vadd.f32 0.0, %v4666
    %v4668 = vpop.f32.mrf.mxu0
    %v4669 = vadd.f32 0.0, %v4668
    %v4670 = vpop.f32.mrf.mxu0
    %v4671 = vadd.f32 0.0, %v4670
    %v4672 = vpop.f32.mrf.mxu0
    %v4673 = vadd.f32 0.0, %v4672
    %4674 = vmatprep.mubr.bf16.mxu0 0
    %4675 = vmatmul.mubr.bf16.gmra.mxu0 %v4625
    %v4676 = vpop.f32.mrf.mxu0
    %v4677 = vadd.f32 0.0, %v4676
    %v4678 = vpop.f32.mrf.mxu0
    %v4679 = vadd.f32 0.0, %v4678
    %v4680 = vpop.f32.mrf.mxu0
    %v4681 = vadd.f32 0.0, %v4680
    %v4682 = vpop.f32.mrf.mxu0
    %v4683 = vadd.f32 0.0, %v4682
    %4684 = vmatprep.mubr.bf16.mxu0 0
    %4685 = vmatmul.mubr.bf16.gmra.mxu0 %v4626
    %v4686 = vpop.f32.mrf.mxu0
    %v4687 = vadd.f32 0.0, %v4686
    %v4688 = vpop.f32.mrf.mxu0
    %v4689 = vadd.f32 0.0, %v4688
    %v4690 = vpop.f32.mrf.mxu0
    %v4691 = vadd.f32 0.0, %v4690
    %v4692 = vpop.f32.mrf.mxu0
    %v4693 = vadd.f32 0.0, %v4692
    %4694 = vmatprep.mubr.bf16.mxu0 0
    %4695 = vmatmul.mubr.bf16.gmra.mxu0 %v4627
    %v4696 = vpop.f32.mrf.mxu0
    %v4697 = vadd.f32 0.0, %v4696
    %v4698 = vpop.f32.mrf.mxu0
    %v4699 = vadd.f32 0.0, %v4698
    %v4700 = vpop.f32.mrf.mxu0
    %v4701 = vadd.f32 0.0, %v4700
    %v4702 = vpop.f32.mrf.mxu0
    %v4703 = vadd.f32 0.0, %v4702
    %4704 = vmatprep.mubr.bf16.mxu0 0
    %4705 = vmatmul.mubr.bf16.gmra.mxu0 %v4628
    %v4706 = vpop.f32.mrf.mxu0
    %v4707 = vadd.f32 0.0, %v4706
    %v4708 = vpop.f32.mrf.mxu0
    %v4709 = vadd.f32 0.0, %v4708
    %v4710 = vpop.f32.mrf.mxu0
    %v4711 = vadd.f32 0.0, %v4710
    %v4712 = vpop.f32.mrf.mxu0
    %v4713 = vadd.f32 0.0, %v4712
    %4714 = vmatprep.mubr.bf16.mxu0 0
    %4715 = vmatmul.mubr.bf16.gmra.mxu0 %v4629
    %v4716 = vpop.f32.mrf.mxu0
    %v4717 = vadd.f32 0.0, %v4716
    %v4718 = vpop.f32.mrf.mxu0
    %v4719 = vadd.f32 0.0, %v4718
    %v4720 = vpop.f32.mrf.mxu0
    %v4721 = vadd.f32 0.0, %v4720
    %v4722 = vpop.f32.mrf.mxu0
    %v4723 = vadd.f32 0.0, %v4722
    %4724 = vmatprep.mubr.bf16.mxu0 0
    %4725 = vmatmul.mubr.bf16.gmra.mxu0 %v4630
    %v4726 = vpop.f32.mrf.mxu0
    %v4727 = vadd.f32 0.0, %v4726
    %v4728 = vpop.f32.mrf.mxu0
    %v4729 = vadd.f32 0.0, %v4728
    %v4730 = vpop.f32.mrf.mxu0
    %v4731 = vadd.f32 0.0, %v4730
    %v4732 = vpop.f32.mrf.mxu0
    %v4733 = vadd.f32 0.0, %v4732
    %4734 = vmatprep.mubr.bf16.mxu0 0
    %4735 = vmatmul.mubr.bf16.gmra.mxu0 %v4631
    %v4736 = vpop.f32.mrf.mxu0
    %v4737 = vadd.f32 0.0, %v4736
    %v4738 = vpop.f32.mrf.mxu0
    %v4739 = vadd.f32 0.0, %v4738
    %v4740 = vpop.f32.mrf.mxu0
    %v4741 = vadd.f32 0.0, %v4740
    %v4742 = vpop.f32.mrf.mxu0
    %v4743 = vadd.f32 0.0, %v4742
    %4744 = vdwg.mxu0
    %v4745 = vadd.f32 %v4667, 0.0
    %v4746 = vadd.f32 %v4671, 0.0
    %v4747 = vadd.f32 %v4677, 0.0
    %v4748 = vadd.f32 %v4681, 0.0
    %v4749 = vadd.f32 %v4687, 0.0
    %v4750 = vadd.f32 %v4691, 0.0
    %v4751 = vadd.f32 %v4697, 0.0
    %v4752 = vadd.f32 %v4701, 0.0
    %v4753 = vadd.f32 %v4707, 0.0
    %v4754 = vadd.f32 %v4711, 0.0
    %v4755 = vadd.f32 %v4717, 0.0
    %v4756 = vadd.f32 %v4721, 0.0
    %v4757 = vadd.f32 %v4727, 0.0
    %v4758 = vadd.f32 %v4731, 0.0
    %v4759 = vadd.f32 %v4737, 0.0
    %v4760 = vadd.f32 %v4741, 0.0
    %v4761 = vadd.f32 %v627, %v4669
    %v4762 = vadd.f32 %v630, %v4673
    %v4763 = vadd.f32 %v635, %v4679
    %v4764 = vadd.f32 %v638, %v4683
    %v4765 = vadd.f32 %v643, %v4689
    %v4766 = vadd.f32 %v646, %v4693
    %v4767 = vadd.f32 %v651, %v4699
    %v4768 = vadd.f32 %v654, %v4703
    %v4769 = vadd.f32 %v659, %v4709
    %v4770 = vadd.f32 %v662, %v4713
    %v4771 = vadd.f32 %v667, %v4719
    %v4772 = vadd.f32 %v670, %v4723
    %v4773 = vadd.f32 %v675, %v4729
    %v4774 = vadd.f32 %v678, %v4733
    %v4775 = vadd.f32 %v683, %v4739
    %v4776 = vadd.f32 %v686, %v4743
    %v4777 = vxor.u32 %v4761, 2147483648
    %v4778 = vxor.u32 %v4762, 2147483648
    %v4779 = vxor.u32 %v4763, 2147483648
    %v4780 = vxor.u32 %v4764, 2147483648
    %v4781 = vxor.u32 %v4765, 2147483648
    %v4782 = vxor.u32 %v4766, 2147483648
    %v4783 = vxor.u32 %v4767, 2147483648
    %v4784 = vxor.u32 %v4768, 2147483648
    %v4785 = vxor.u32 %v4769, 2147483648
    %v4786 = vxor.u32 %v4770, 2147483648
    %v4787 = vxor.u32 %v4771, 2147483648
    %v4788 = vxor.u32 %v4772, 2147483648
    %v4789 = vxor.u32 %v4773, 2147483648
    %v4790 = vxor.u32 %v4774, 2147483648
    %v4791 = vxor.u32 %v4775, 2147483648
    %v4792 = vxor.u32 %v4776, 2147483648
    %v4793 = vmul.f32 %v4777, 1.442695
    %v4794 = vpow.pop %v4793
    %v4795 = vmul.f32 %v4778, 1.442695
    %v4796 = vpow.pop %v4795
    %v4797 = vmul.f32 %v4779, 1.442695
    %v4798 = vpow.pop %v4797
    %v4799 = vmul.f32 %v4780, 1.442695
    %v4800 = vpow.pop %v4799
    %v4801 = vmul.f32 %v4781, 1.442695
    %v4802 = vpow.pop %v4801
    %v4803 = vmul.f32 %v4782, 1.442695
    %v4804 = vpow.pop %v4803
    %v4805 = vmul.f32 %v4783, 1.442695
    %v4806 = vpow.pop %v4805
    %v4807 = vmul.f32 %v4784, 1.442695
    %v4808 = vpow.pop %v4807
    %v4809 = vmul.f32 %v4785, 1.442695
    %v4810 = vpow.pop %v4809
    %v4811 = vmul.f32 %v4786, 1.442695
    %v4812 = vpow.pop %v4811
    %v4813 = vmul.f32 %v4787, 1.442695
    %v4814 = vpow.pop %v4813
    %v4815 = vmul.f32 %v4788, 1.442695
    %v4816 = vpow.pop %v4815
    %v4817 = vmul.f32 %v4789, 1.442695
    %v4818 = vpow.pop %v4817
    %v4819 = vmul.f32 %v4790, 1.442695
    %v4820 = vpow.pop %v4819
    %v4821 = vmul.f32 %v4791, 1.442695
    %v4822 = vpow.pop %v4821
    %v4823 = vmul.f32 %v4792, 1.442695
    %v4824 = vpow.pop %v4823
    %v4825 = vadd.f32 %v4794, 1.0
    %v4826 = vadd.f32 %v4796, 1.0
    %v4827 = vadd.f32 %v4798, 1.0
    %v4828 = vadd.f32 %v4800, 1.0
    %v4829 = vadd.f32 %v4802, 1.0
    %v4830 = vadd.f32 %v4804, 1.0
    %v4831 = vadd.f32 %v4806, 1.0
    %v4832 = vadd.f32 %v4808, 1.0
    %v4833 = vadd.f32 %v4810, 1.0
    %v4834 = vadd.f32 %v4812, 1.0
    %v4835 = vadd.f32 %v4814, 1.0
    %v4836 = vadd.f32 %v4816, 1.0
    %v4837 = vadd.f32 %v4818, 1.0
    %v4838 = vadd.f32 %v4820, 1.0
    %v4839 = vadd.f32 %v4822, 1.0
    %v4840 = vadd.f32 %v4824, 1.0
    %v4841 = vrcp.pop %v4825
    %v4842 = vmul.f32 1.0, %v4841
    %v4843 = vrcp.pop %v4826
    %v4844 = vmul.f32 1.0, %v4843
    %v4845 = vrcp.pop %v4827
    %v4846 = vmul.f32 1.0, %v4845
    %v4847 = vrcp.pop %v4828
    %v4848 = vmul.f32 1.0, %v4847
    %v4849 = vrcp.pop %v4829
    %v4850 = vmul.f32 1.0, %v4849
    %v4851 = vrcp.pop %v4830
    %v4852 = vmul.f32 1.0, %v4851
    %v4853 = vrcp.pop %v4831
    %v4854 = vmul.f32 1.0, %v4853
    %v4855 = vrcp.pop %v4832
    %v4856 = vmul.f32 1.0, %v4855
    %v4857 = vrcp.pop %v4833
    %v4858 = vmul.f32 1.0, %v4857
    %v4859 = vrcp.pop %v4834
    %v4860 = vmul.f32 1.0, %v4859
    %v4861 = vrcp.pop %v4835
    %v4862 = vmul.f32 1.0, %v4861
    %v4863 = vrcp.pop %v4836
    %v4864 = vmul.f32 1.0, %v4863
    %v4865 = vrcp.pop %v4837
    %v4866 = vmul.f32 1.0, %v4865
    %v4867 = vrcp.pop %v4838
    %v4868 = vmul.f32 1.0, %v4867
    %v4869 = vrcp.pop %v4839
    %v4870 = vmul.f32 1.0, %v4869
    %v4871 = vrcp.pop %v4840
    %v4872 = vmul.f32 1.0, %v4871
    %v4873 = vmul.f32 %v4842, %v4667
    %v4874 = vmul.f32 %v4844, %v4671
    %v4875 = vmul.f32 %v4846, %v4677
    %v4876 = vmul.f32 %v4848, %v4681
    %v4877 = vmul.f32 %v4850, %v4687
    %v4878 = vmul.f32 %v4852, %v4691
    %v4879 = vmul.f32 %v4854, %v4697
    %v4880 = vmul.f32 %v4856, %v4701
    %v4881 = vmul.f32 %v4858, %v4707
    %v4882 = vmul.f32 %v4860, %v4711
    %v4883 = vmul.f32 %v4862, %v4717
    %v4884 = vmul.f32 %v4864, %v4721
    %v4885 = vmul.f32 %v4866, %v4727
    %v4886 = vmul.f32 %v4868, %v4731
    %v4887 = vmul.f32 %v4870, %v4737
    %v4888 = vmul.f32 %v4872, %v4741
    %v4889 = vadd.f32 %v4873, 0.0
    %v4890 = vadd.f32 %v4874, 0.0
    %v4891 = vadd.f32 %v4875, 0.0
    %v4892 = vadd.f32 %v4876, 0.0
    %v4893 = vadd.f32 %v4877, 0.0
    %v4894 = vadd.f32 %v4878, 0.0
    %v4895 = vadd.f32 %v4879, 0.0
    %v4896 = vadd.f32 %v4880, 0.0
    %v4897 = vadd.f32 %v4881, 0.0
    %v4898 = vadd.f32 %v4882, 0.0
    %v4899 = vadd.f32 %v4883, 0.0
    %v4900 = vadd.f32 %v4884, 0.0
    %v4901 = vadd.f32 %v4885, 0.0
    %v4902 = vadd.f32 %v4886, 0.0
    %v4903 = vadd.f32 %v4887, 0.0
    %v4904 = vadd.f32 %v4888, 0.0
    %s4905 = sshll.u32 %s1059, 4
    %4906 = dma.done %s1064, %s4905
    // Predicated region
    $region142: #{tpu_custom_call.1} parent=1 // pred_check
      _
    $region143: #{tpu_custom_call.1} parent=1 // pred_check_branch
      %4908 = sbr.rel target = $region145
    $region144: #{tpu_custom_call.1} parent=1 // pred_region
      %4909 = sst [smem:[#allocation24]] [#allocation45]
      %4910 = sst [smem:[#allocation25]] [#allocation44]
    $region145: #{tpu_custom_call.1} parent=1 // pred_fallthru
      _
    %4912 = shalt.err (0)
    %s4914 = sshll.u32 [#allocation2], 4
    %s4915 = int_to_ptr.vmem [resolvable:$true] %s4914
    %4917 = dma.hbm_to_vmem [thread:$0]  %s1363, 512, %s4915, [#allocation3]
    %v4918 = vld [vmem:[%s1063] sm:$0xff]
    %v4919 = vld [vmem:[%s1063 + $0x8] sm:$0xff]
    %v4920 = vld [vmem:[%s1063 + $0x10] sm:$0xff]
    %v4921 = vld [vmem:[%s1063 + $0x18] sm:$0xff]
    %v4922 = vunpack.c.l.s8.bf16 %v4918
    %v4923 = vunpack.c.h.s8.bf16 %v4918
    %v4924 = vunpack.c.l.s8.bf16 %v4919
    %v4925 = vunpack.c.h.s8.bf16 %v4919
    %v4926 = vunpack.c.l.s8.bf16 %v4920
    %v4927 = vunpack.c.h.s8.bf16 %v4920
    %v4928 = vunpack.c.l.s8.bf16 %v4921
    %v4929 = vunpack.c.h.s8.bf16 %v4921
    %4930 = vmatprep.subr.bf16.mxu0 %v4606
    %4931 = vmatpush1.bf16.msra.mxu0 %v4501
    %4932 = vmatprep.subr.bf16.mxu0 %v4605
    %4933 = vmatpush1.bf16.msra.mxu0 %v4500
    %4934 = vmatprep.subr.bf16.mxu0 %v4604
    %4935 = vmatpush1.bf16.msra.mxu0 %v4499
    %4936 = vmatprep.subr.bf16.mxu0 %v4603
    %4937 = vmatpush1.bf16.msra.mxu0 %v4498
    %4938 = vmatprep.subr.bf16.mxu0 %v4602
    %4939 = vmatpush1.bf16.msra.mxu0 %v4497
    %4940 = vmatprep.subr.bf16.mxu0 %v4601
    %4941 = vmatpush1.bf16.msra.mxu0 %v4496
    %4942 = vmatprep.subr.bf16.mxu0 %v4600
    %4943 = vmatpush1.bf16.msra.mxu0 %v4495
    %4944 = vmatprep.subr.bf16.mxu0 %v4599
    %4945 = vmatpush1.bf16.msra.mxu0 %v4494
    %4946 = vmatprep.subr.bf16.mxu0 0
    %4947 = vmatpush2.bf16.msra.mxu0 0
    %4948 = vmatprep.subr.bf16.mxu0 0
    %4949 = vmatpush2.bf16.msra.mxu0 0
    %4950 = vmatprep.subr.bf16.mxu0 0
    %4951 = vmatpush2.bf16.msra.mxu0 0
    %4952 = vmatprep.subr.bf16.mxu0 0
    %4953 = vmatpush2.bf16.msra.mxu0 0
    %4954 = vmatprep.subr.bf16.mxu0 0
    %4955 = vmatpush2.bf16.msra.mxu0 0
    %4956 = vmatprep.subr.bf16.mxu0 0
    %4957 = vmatpush2.bf16.msra.mxu0 0
    %4958 = vmatprep.subr.bf16.mxu0 0
    %4959 = vmatpush2.bf16.msra.mxu0 0
    %4960 = vmatprep.subr.bf16.mxu0 0
    %4961 = vmatpush2.bf16.msra.mxu0 0
    %4962 = vmatprep.mubr.bf16.mxu0 0
    %4963 = vmatmul.mubr.bf16.gmra.mxu0 %v4922
    %v4964 = vpop.f32.mrf.mxu0
    %v4965 = vadd.f32 0.0, %v4964
    %v4966 = vpop.f32.mrf.mxu0
    %v4967 = vadd.f32 0.0, %v4966
    %v4968 = vpop.f32.mrf.mxu0
    %v4969 = vadd.f32 0.0, %v4968
    %v4970 = vpop.f32.mrf.mxu0
    %v4971 = vadd.f32 0.0, %v4970
    %4972 = vmatprep.mubr.bf16.mxu0 0
    %4973 = vmatmul.mubr.bf16.gmra.mxu0 %v4923
    %v4974 = vpop.f32.mrf.mxu0
    %v4975 = vadd.f32 0.0, %v4974
    %v4976 = vpop.f32.mrf.mxu0
    %v4977 = vadd.f32 0.0, %v4976
    %v4978 = vpop.f32.mrf.mxu0
    %v4979 = vadd.f32 0.0, %v4978
    %v4980 = vpop.f32.mrf.mxu0
    %v4981 = vadd.f32 0.0, %v4980
    %4982 = vmatprep.mubr.bf16.mxu0 0
    %4983 = vmatmul.mubr.bf16.gmra.mxu0 %v4924
    %v4984 = vpop.f32.mrf.mxu0
    %v4985 = vadd.f32 0.0, %v4984
    %v4986 = vpop.f32.mrf.mxu0
    %v4987 = vadd.f32 0.0, %v4986
    %v4988 = vpop.f32.mrf.mxu0
    %v4989 = vadd.f32 0.0, %v4988
    %v4990 = vpop.f32.mrf.mxu0
    %v4991 = vadd.f32 0.0, %v4990
    %4992 = vmatprep.mubr.bf16.mxu0 0
    %4993 = vmatmul.mubr.bf16.gmra.mxu0 %v4925
    %v4994 = vpop.f32.mrf.mxu0
    %v4995 = vadd.f32 0.0, %v4994
    %v4996 = vpop.f32.mrf.mxu0
    %v4997 = vadd.f32 0.0, %v4996
    %v4998 = vpop.f32.mrf.mxu0
    %v4999 = vadd.f32 0.0, %v4998
    %v5000 = vpop.f32.mrf.mxu0
    %v5001 = vadd.f32 0.0, %v5000
    %5002 = vmatprep.mubr.bf16.mxu0 0
    %5003 = vmatmul.mubr.bf16.gmra.mxu0 %v4926
    %v5004 = vpop.f32.mrf.mxu0
    %v5005 = vadd.f32 0.0, %v5004
    %v5006 = vpop.f32.mrf.mxu0
    %v5007 = vadd.f32 0.0, %v5006
    %v5008 = vpop.f32.mrf.mxu0
    %v5009 = vadd.f32 0.0, %v5008
    %v5010 = vpop.f32.mrf.mxu0
    %v5011 = vadd.f32 0.0, %v5010
    %5012 = vmatprep.mubr.bf16.mxu0 0
    %5013 = vmatmul.mubr.bf16.gmra.mxu0 %v4927
    %v5014 = vpop.f32.mrf.mxu0
    %v5015 = vadd.f32 0.0, %v5014
    %v5016 = vpop.f32.mrf.mxu0
    %v5017 = vadd.f32 0.0, %v5016
    %v5018 = vpop.f32.mrf.mxu0
    %v5019 = vadd.f32 0.0, %v5018
    %v5020 = vpop.f32.mrf.mxu0
    %v5021 = vadd.f32 0.0, %v5020
    %5022 = vmatprep.mubr.bf16.mxu0 0
    %5023 = vmatmul.mubr.bf16.gmra.mxu0 %v4928
    %v5024 = vpop.f32.mrf.mxu0
    %v5025 = vadd.f32 0.0, %v5024
    %v5026 = vpop.f32.mrf.mxu0
    %v5027 = vadd.f32 0.0, %v5026
    %v5028 = vpop.f32.mrf.mxu0
    %v5029 = vadd.f32 0.0, %v5028
    %v5030 = vpop.f32.mrf.mxu0
    %v5031 = vadd.f32 0.0, %v5030
    %5032 = vmatprep.mubr.bf16.mxu0 0
    %5033 = vmatmul.mubr.bf16.gmra.mxu0 %v4929
    %v5034 = vpop.f32.mrf.mxu0
    %v5035 = vadd.f32 0.0, %v5034
    %v5036 = vpop.f32.mrf.mxu0
    %v5037 = vadd.f32 0.0, %v5036
    %v5038 = vpop.f32.mrf.mxu0
    %v5039 = vadd.f32 0.0, %v5038
    %v5040 = vpop.f32.mrf.mxu0
    %v5041 = vadd.f32 0.0, %v5040
    %5042 = vdwg.mxu0
    %v5043 = vadd.f32 %v4745, %v4965
    %v5044 = vadd.f32 %v4746, %v4969
    %v5045 = vadd.f32 %v4747, %v4975
    %v5046 = vadd.f32 %v4748, %v4979
    %v5047 = vadd.f32 %v4749, %v4985
    %v5048 = vadd.f32 %v4750, %v4989
    %v5049 = vadd.f32 %v4751, %v4995
    %v5050 = vadd.f32 %v4752, %v4999
    %v5051 = vadd.f32 %v4753, %v5005
    %v5052 = vadd.f32 %v4754, %v5009
    %v5053 = vadd.f32 %v4755, %v5015
    %v5054 = vadd.f32 %v4756, %v5019
    %v5055 = vadd.f32 %v4757, %v5025
    %v5056 = vadd.f32 %v4758, %v5029
    %v5057 = vadd.f32 %v4759, %v5035
    %v5058 = vadd.f32 %v4760, %v5039
    %v5059 = vadd.f32 %v627, %v4967
    %v5060 = vadd.f32 %v630, %v4971
    %v5061 = vadd.f32 %v635, %v4977
    %v5062 = vadd.f32 %v638, %v4981
    %v5063 = vadd.f32 %v643, %v4987
    %v5064 = vadd.f32 %v646, %v4991
    %v5065 = vadd.f32 %v651, %v4997
    %v5066 = vadd.f32 %v654, %v5001
    %v5067 = vadd.f32 %v659, %v5007
    %v5068 = vadd.f32 %v662, %v5011
    %v5069 = vadd.f32 %v667, %v5017
    %v5070 = vadd.f32 %v670, %v5021
    %v5071 = vadd.f32 %v675, %v5027
    %v5072 = vadd.f32 %v678, %v5031
    %v5073 = vadd.f32 %v683, %v5037
    %v5074 = vadd.f32 %v686, %v5041
    %v5075 = vxor.u32 %v5059, 2147483648
    %v5076 = vxor.u32 %v5060, 2147483648
    %v5077 = vxor.u32 %v5061, 2147483648
    %v5078 = vxor.u32 %v5062, 2147483648
    %v5079 = vxor.u32 %v5063, 2147483648
    %v5080 = vxor.u32 %v5064, 2147483648
    %v5081 = vxor.u32 %v5065, 2147483648
    %v5082 = vxor.u32 %v5066, 2147483648
    %v5083 = vxor.u32 %v5067, 2147483648
    %v5084 = vxor.u32 %v5068, 2147483648
    %v5085 = vxor.u32 %v5069, 2147483648
    %v5086 = vxor.u32 %v5070, 2147483648
    %v5087 = vxor.u32 %v5071, 2147483648
    %v5088 = vxor.u32 %v5072, 2147483648
    %v5089 = vxor.u32 %v5073, 2147483648
    %v5090 = vxor.u32 %v5074, 2147483648
    %v5091 = vmul.f32 %v5075, 1.442695
    %v5092 = vpow.pop %v5091
    %v5093 = vmul.f32 %v5076, 1.442695
    %v5094 = vpow.pop %v5093
    %v5095 = vmul.f32 %v5077, 1.442695
    %v5096 = vpow.pop %v5095
    %v5097 = vmul.f32 %v5078, 1.442695
    %v5098 = vpow.pop %v5097
    %v5099 = vmul.f32 %v5079, 1.442695
    %v5100 = vpow.pop %v5099
    %v5101 = vmul.f32 %v5080, 1.442695
    %v5102 = vpow.pop %v5101
    %v5103 = vmul.f32 %v5081, 1.442695
    %v5104 = vpow.pop %v5103
    %v5105 = vmul.f32 %v5082, 1.442695
    %v5106 = vpow.pop %v5105
    %v5107 = vmul.f32 %v5083, 1.442695
    %v5108 = vpow.pop %v5107
    %v5109 = vmul.f32 %v5084, 1.442695
    %v5110 = vpow.pop %v5109
    %v5111 = vmul.f32 %v5085, 1.442695
    %v5112 = vpow.pop %v5111
    %v5113 = vmul.f32 %v5086, 1.442695
    %v5114 = vpow.pop %v5113
    %v5115 = vmul.f32 %v5087, 1.442695
    %v5116 = vpow.pop %v5115
    %v5117 = vmul.f32 %v5088, 1.442695
    %v5118 = vpow.pop %v5117
    %v5119 = vmul.f32 %v5089, 1.442695
    %v5120 = vpow.pop %v5119
    %v5121 = vmul.f32 %v5090, 1.442695
    %v5122 = vpow.pop %v5121
    %v5123 = vadd.f32 %v5092, 1.0
    %v5124 = vadd.f32 %v5094, 1.0
    %v5125 = vadd.f32 %v5096, 1.0
    %v5126 = vadd.f32 %v5098, 1.0
    %v5127 = vadd.f32 %v5100, 1.0
    %v5128 = vadd.f32 %v5102, 1.0
    %v5129 = vadd.f32 %v5104, 1.0
    %v5130 = vadd.f32 %v5106, 1.0
    %v5131 = vadd.f32 %v5108, 1.0
    %v5132 = vadd.f32 %v5110, 1.0
    %v5133 = vadd.f32 %v5112, 1.0
    %v5134 = vadd.f32 %v5114, 1.0
    %v5135 = vadd.f32 %v5116, 1.0
    %v5136 = vadd.f32 %v5118, 1.0
    %v5137 = vadd.f32 %v5120, 1.0
    %v5138 = vadd.f32 %v5122, 1.0
    %v5139 = vrcp.pop %v5123
    %v5140 = vmul.f32 1.0, %v5139
    %v5141 = vrcp.pop %v5124
    %v5142 = vmul.f32 1.0, %v5141
    %v5143 = vrcp.pop %v5125
    %v5144 = vmul.f32 1.0, %v5143
    %v5145 = vrcp.pop %v5126
    %v5146 = vmul.f32 1.0, %v5145
    %v5147 = vrcp.pop %v5127
    %v5148 = vmul.f32 1.0, %v5147
    %v5149 = vrcp.pop %v5128
    %v5150 = vmul.f32 1.0, %v5149
    %v5151 = vrcp.pop %v5129
    %v5152 = vmul.f32 1.0, %v5151
    %v5153 = vrcp.pop %v5130
    %v5154 = vmul.f32 1.0, %v5153
    %v5155 = vrcp.pop %v5131
    %v5156 = vmul.f32 1.0, %v5155
    %v5157 = vrcp.pop %v5132
    %v5158 = vmul.f32 1.0, %v5157
    %v5159 = vrcp.pop %v5133
    %v5160 = vmul.f32 1.0, %v5159
    %v5161 = vrcp.pop %v5134
    %v5162 = vmul.f32 1.0, %v5161
    %v5163 = vrcp.pop %v5135
    %v5164 = vmul.f32 1.0, %v5163
    %v5165 = vrcp.pop %v5136
    %v5166 = vmul.f32 1.0, %v5165
    %v5167 = vrcp.pop %v5137
    %v5168 = vmul.f32 1.0, %v5167
    %v5169 = vrcp.pop %v5138
    %v5170 = vmul.f32 1.0, %v5169
    %v5171 = vmul.f32 %v5140, %v4965
    %v5172 = vmul.f32 %v5142, %v4969
    %v5173 = vmul.f32 %v5144, %v4975
    %v5174 = vmul.f32 %v5146, %v4979
    %v5175 = vmul.f32 %v5148, %v4985
    %v5176 = vmul.f32 %v5150, %v4989
    %v5177 = vmul.f32 %v5152, %v4995
    %v5178 = vmul.f32 %v5154, %v4999
    %v5179 = vmul.f32 %v5156, %v5005
    %v5180 = vmul.f32 %v5158, %v5009
    %v5181 = vmul.f32 %v5160, %v5015
    %v5182 = vmul.f32 %v5162, %v5019
    %v5183 = vmul.f32 %v5164, %v5025
    %v5184 = vmul.f32 %v5166, %v5029
    %v5185 = vmul.f32 %v5168, %v5035
    %v5186 = vmul.f32 %v5170, %v5039
    %v5187 = vadd.f32 %v4889, %v5171
    %v5188 = vadd.f32 %v4890, %v5172
    %v5189 = vadd.f32 %v4891, %v5173
    %v5190 = vadd.f32 %v4892, %v5174
    %v5191 = vadd.f32 %v4893, %v5175
    %v5192 = vadd.f32 %v4894, %v5176
    %v5193 = vadd.f32 %v4895, %v5177
    %v5194 = vadd.f32 %v4896, %v5178
    %v5195 = vadd.f32 %v4897, %v5179
    %v5196 = vadd.f32 %v4898, %v5180
    %v5197 = vadd.f32 %v4899, %v5181
    %v5198 = vadd.f32 %v4900, %v5182
    %v5199 = vadd.f32 %v4901, %v5183
    %v5200 = vadd.f32 %v4902, %v5184
    %v5201 = vadd.f32 %v4903, %v5185
    %v5202 = vadd.f32 %v4904, %v5186
    %s5203 = sshll.u32 %s1059, 4
    %5204 = dma.done [#allocation3], %s5203
    // Predicated region
    $region146: #{tpu_custom_call.1} parent=1 // pred_check
      _
    $region147: #{tpu_custom_call.1} parent=1 // pred_check_branch
      %5206 = sbr.rel target = $region149
    $region148: #{tpu_custom_call.1} parent=1 // pred_region
      %5207 = sst [smem:[#allocation24]] [#allocation47]
      %5208 = sst [smem:[#allocation25]] [#allocation46]
    $region149: #{tpu_custom_call.1} parent=1 // pred_fallthru
      _
    %5210 = shalt.err (0)
    %s5212 = sshll.u32 %s1063, 4
    %s5213 = int_to_ptr.vmem [resolvable:$true] %s5212
    %5215 = dma.hbm_to_vmem [thread:$0]  %s1662, 512, %s5213, %s1064
    %v5216 = vld [vmem:[#allocation2] sm:$0xff]
    %v5217 = vld [vmem:[#allocation2 + $0x8] sm:$0xff]
    %v5218 = vld [vmem:[#allocation2 + $0x10] sm:$0xff]
    %v5219 = vld [vmem:[#allocation2 + $0x18] sm:$0xff]
    %v5220 = vunpack.c.l.s8.bf16 %v5216
    %v5221 = vunpack.c.h.s8.bf16 %v5216
    %v5222 = vunpack.c.l.s8.bf16 %v5217
    %v5223 = vunpack.c.h.s8.bf16 %v5217
    %v5224 = vunpack.c.l.s8.bf16 %v5218
    %v5225 = vunpack.c.h.s8.bf16 %v5218
    %v5226 = vunpack.c.l.s8.bf16 %v5219
    %v5227 = vunpack.c.h.s8.bf16 %v5219
    %5228 = vmatprep.subr.bf16.mxu0 %v4606
    %5229 = vmatpush1.bf16.msra.mxu0 %v4501
    %5230 = vmatprep.subr.bf16.mxu0 %v4605
    %5231 = vmatpush1.bf16.msra.mxu0 %v4500
    %5232 = vmatprep.subr.bf16.mxu0 %v4604
    %5233 = vmatpush1.bf16.msra.mxu0 %v4499
    %5234 = vmatprep.subr.bf16.mxu0 %v4603
    %5235 = vmatpush1.bf16.msra.mxu0 %v4498
    %5236 = vmatprep.subr.bf16.mxu0 %v4602
    %5237 = vmatpush1.bf16.msra.mxu0 %v4497
    %5238 = vmatprep.subr.bf16.mxu0 %v4601
    %5239 = vmatpush1.bf16.msra.mxu0 %v4496
    %5240 = vmatprep.subr.bf16.mxu0 %v4600
    %5241 = vmatpush1.bf16.msra.mxu0 %v4495
    %5242 = vmatprep.subr.bf16.mxu0 %v4599
    %5243 = vmatpush1.bf16.msra.mxu0 %v4494
    %5244 = vmatprep.subr.bf16.mxu0 0
    %5245 = vmatpush2.bf16.msra.mxu0 0
    %5246 = vmatprep.subr.bf16.mxu0 0
    %5247 = vmatpush2.bf16.msra.mxu0 0
    %5248 = vmatprep.subr.bf16.mxu0 0
    %5249 = vmatpush2.bf16.msra.mxu0 0
    %5250 = vmatprep.subr.bf16.mxu0 0
    %5251 = vmatpush2.bf16.msra.mxu0 0
    %5252 = vmatprep.subr.bf16.mxu0 0
    %5253 = vmatpush2.bf16.msra.mxu0 0
    %5254 = vmatprep.subr.bf16.mxu0 0
    %5255 = vmatpush2.bf16.msra.mxu0 0
    %5256 = vmatprep.subr.bf16.mxu0 0
    %5257 = vmatpush2.bf16.msra.mxu0 0
    %5258 = vmatprep.subr.bf16.mxu0 0
    %5259 = vmatpush2.bf16.msra.mxu0 0
    %5260 = vmatprep.mubr.bf16.mxu0 0
    %5261 = vmatmul.mubr.bf16.gmra.mxu0 %v5220
    %v5262 = vpop.f32.mrf.mxu0
    %v5263 = vadd.f32 0.0, %v5262
    %v5264 = vpop.f32.mrf.mxu0
    %v5265 = vadd.f32 0.0, %v5264
    %v5266 = vpop.f32.mrf.mxu0
    %v5267 = vadd.f32 0.0, %v5266
    %v5268 = vpop.f32.mrf.mxu0
    %v5269 = vadd.f32 0.0, %v5268
    %5270 = vmatprep.mubr.bf16.mxu0 0
    %5271 = vmatmul.mubr.bf16.gmra.mxu0 %v5221
    %v5272 = vpop.f32.mrf.mxu0
    %v5273 = vadd.f32 0.0, %v5272
    %v5274 = vpop.f32.mrf.mxu0
    %v5275 = vadd.f32 0.0, %v5274
    %v5276 = vpop.f32.mrf.mxu0
    %v5277 = vadd.f32 0.0, %v5276
    %v5278 = vpop.f32.mrf.mxu0
    %v5279 = vadd.f32 0.0, %v5278
    %5280 = vmatprep.mubr.bf16.mxu0 0
    %5281 = vmatmul.mubr.bf16.gmra.mxu0 %v5222
    %v5282 = vpop.f32.mrf.mxu0
    %v5283 = vadd.f32 0.0, %v5282
    %v5284 = vpop.f32.mrf.mxu0
    %v5285 = vadd.f32 0.0, %v5284
    %v5286 = vpop.f32.mrf.mxu0
    %v5287 = vadd.f32 0.0, %v5286
    %v5288 = vpop.f32.mrf.mxu0
    %v5289 = vadd.f32 0.0, %v5288
    %5290 = vmatprep.mubr.bf16.mxu0 0
    %5291 = vmatmul.mubr.bf16.gmra.mxu0 %v5223
    %v5292 = vpop.f32.mrf.mxu0
    %v5293 = vadd.f32 0.0, %v5292
    %v5294 = vpop.f32.mrf.mxu0
    %v5295 = vadd.f32 0.0, %v5294
    %v5296 = vpop.f32.mrf.mxu0
    %v5297 = vadd.f32 0.0, %v5296
    %v5298 = vpop.f32.mrf.mxu0
    %v5299 = vadd.f32 0.0, %v5298
    %5300 = vmatprep.mubr.bf16.mxu0 0
    %5301 = vmatmul.mubr.bf16.gmra.mxu0 %v5224
    %v5302 = vpop.f32.mrf.mxu0
    %v5303 = vadd.f32 0.0, %v5302
    %v5304 = vpop.f32.mrf.mxu0
    %v5305 = vadd.f32 0.0, %v5304
    %v5306 = vpop.f32.mrf.mxu0
    %v5307 = vadd.f32 0.0, %v5306
    %v5308 = vpop.f32.mrf.mxu0
    %v5309 = vadd.f32 0.0, %v5308
    %5310 = vmatprep.mubr.bf16.mxu0 0
    %5311 = vmatmul.mubr.bf16.gmra.mxu0 %v5225
    %v5312 = vpop.f32.mrf.mxu0
    %v5313 = vadd.f32 0.0, %v5312
    %v5314 = vpop.f32.mrf.mxu0
    %v5315 = vadd.f32 0.0, %v5314
    %v5316 = vpop.f32.mrf.mxu0
    %v5317 = vadd.f32 0.0, %v5316
    %v5318 = vpop.f32.mrf.mxu0
    %v5319 = vadd.f32 0.0, %v5318
    %5320 = vmatprep.mubr.bf16.mxu0 0
    %5321 = vmatmul.mubr.bf16.gmra.mxu0 %v5226
    %v5322 = vpop.f32.mrf.mxu0
    %v5323 = vadd.f32 0.0, %v5322
    %v5324 = vpop.f32.mrf.mxu0
    %v5325 = vadd.f32 0.0, %v5324
    %v5326 = vpop.f32.mrf.mxu0
    %v5327 = vadd.f32 0.0, %v5326
    %v5328 = vpop.f32.mrf.mxu0
    %v5329 = vadd.f32 0.0, %v5328
    %5330 = vmatprep.mubr.bf16.mxu0 0
    %5331 = vmatmul.mubr.bf16.gmra.mxu0 %v5227
    %v5332 = vpop.f32.mrf.mxu0
    %v5333 = vadd.f32 0.0, %v5332
    %v5334 = vpop.f32.mrf.mxu0
    %v5335 = vadd.f32 0.0, %v5334
    %v5336 = vpop.f32.mrf.mxu0
    %v5337 = vadd.f32 0.0, %v5336
    %v5338 = vpop.f32.mrf.mxu0
    %v5339 = vadd.f32 0.0, %v5338
    %5340 = vdwg.mxu0
    %v5341 = vadd.f32 %v5043, %v5263
    %v5342 = vadd.f32 %v5044, %v5267
    %v5343 = vadd.f32 %v5045, %v5273
    %v5344 = vadd.f32 %v5046, %v5277
    %v5345 = vadd.f32 %v5047, %v5283
    %v5346 = vadd.f32 %v5048, %v5287
    %v5347 = vadd.f32 %v5049, %v5293
    %v5348 = vadd.f32 %v5050, %v5297
    %v5349 = vadd.f32 %v5051, %v5303
    %v5350 = vadd.f32 %v5052, %v5307
    %v5351 = vadd.f32 %v5053, %v5313
    %v5352 = vadd.f32 %v5054, %v5317
    %v5353 = vadd.f32 %v5055, %v5323
    %v5354 = vadd.f32 %v5056, %v5327
    %v5355 = vadd.f32 %v5057, %v5333
    %v5356 = vadd.f32 %v5058, %v5337
    %v5357 = vadd.f32 %v627, %v5265
    %v5358 = vadd.f32 %v630, %v5269
    %v5359 = vadd.f32 %v635, %v5275
    %v5360 = vadd.f32 %v638, %v5279
    %v5361 = vadd.f32 %v643, %v5285
    %v5362 = vadd.f32 %v646, %v5289
    %v5363 = vadd.f32 %v651, %v5295
    %v5364 = vadd.f32 %v654, %v5299
    %v5365 = vadd.f32 %v659, %v5305
    %v5366 = vadd.f32 %v662, %v5309
    %v5367 = vadd.f32 %v667, %v5315
    %v5368 = vadd.f32 %v670, %v5319
    %v5369 = vadd.f32 %v675, %v5325
    %v5370 = vadd.f32 %v678, %v5329
    %v5371 = vadd.f32 %v683, %v5335
    %v5372 = vadd.f32 %v686, %v5339
    %v5373 = vxor.u32 %v5357, 2147483648
    %v5374 = vxor.u32 %v5358, 2147483648
    %v5375 = vxor.u32 %v5359, 2147483648
    %v5376 = vxor.u32 %v5360, 2147483648
    %v5377 = vxor.u32 %v5361, 2147483648
    %v5378 = vxor.u32 %v5362, 2147483648
    %v5379 = vxor.u32 %v5363, 2147483648
    %v5380 = vxor.u32 %v5364, 2147483648
    %v5381 = vxor.u32 %v5365, 2147483648
    %v5382 = vxor.u32 %v5366, 2147483648
    %v5383 = vxor.u32 %v5367, 2147483648
    %v5384 = vxor.u32 %v5368, 2147483648
    %v5385 = vxor.u32 %v5369, 2147483648
    %v5386 = vxor.u32 %v5370, 2147483648
    %v5387 = vxor.u32 %v5371, 2147483648
    %v5388 = vxor.u32 %v5372, 2147483648
    %v5389 = vmul.f32 %v5373, 1.442695
    %v5390 = vpow.pop %v5389
    %v5391 = vmul.f32 %v5374, 1.442695
    %v5392 = vpow.pop %v5391
    %v5393 = vmul.f32 %v5375, 1.442695
    %v5394 = vpow.pop %v5393
    %v5395 = vmul.f32 %v5376, 1.442695
    %v5396 = vpow.pop %v5395
    %v5397 = vmul.f32 %v5377, 1.442695
    %v5398 = vpow.pop %v5397
    %v5399 = vmul.f32 %v5378, 1.442695
    %v5400 = vpow.pop %v5399
    %v5401 = vmul.f32 %v5379, 1.442695
    %v5402 = vpow.pop %v5401
    %v5403 = vmul.f32 %v5380, 1.442695
    %v5404 = vpow.pop %v5403
    %v5405 = vmul.f32 %v5381, 1.442695
    %v5406 = vpow.pop %v5405
    %v5407 = vmul.f32 %v5382, 1.442695
    %v5408 = vpow.pop %v5407
    %v5409 = vmul.f32 %v5383, 1.442695
    %v5410 = vpow.pop %v5409
    %v5411 = vmul.f32 %v5384, 1.442695
    %v5412 = vpow.pop %v5411
    %v5413 = vmul.f32 %v5385, 1.442695
    %v5414 = vpow.pop %v5413
    %v5415 = vmul.f32 %v5386, 1.442695
    %v5416 = vpow.pop %v5415
    %v5417 = vmul.f32 %v5387, 1.442695
    %v5418 = vpow.pop %v5417
    %v5419 = vmul.f32 %v5388, 1.442695
    %v5420 = vpow.pop %v5419
    %v5421 = vadd.f32 %v5390, 1.0
    %v5422 = vadd.f32 %v5392, 1.0
    %v5423 = vadd.f32 %v5394, 1.0
    %v5424 = vadd.f32 %v5396, 1.0
    %v5425 = vadd.f32 %v5398, 1.0
    %v5426 = vadd.f32 %v5400, 1.0
    %v5427 = vadd.f32 %v5402, 1.0
    %v5428 = vadd.f32 %v5404, 1.0
    %v5429 = vadd.f32 %v5406, 1.0
    %v5430 = vadd.f32 %v5408, 1.0
    %v5431 = vadd.f32 %v5410, 1.0
    %v5432 = vadd.f32 %v5412, 1.0
    %v5433 = vadd.f32 %v5414, 1.0
    %v5434 = vadd.f32 %v5416, 1.0
    %v5435 = vadd.f32 %v5418, 1.0
    %v5436 = vadd.f32 %v5420, 1.0
    %v5437 = vrcp.pop %v5421
    %v5438 = vmul.f32 1.0, %v5437
    %v5439 = vrcp.pop %v5422
    %v5440 = vmul.f32 1.0, %v5439
    %v5441 = vrcp.pop %v5423
    %v5442 = vmul.f32 1.0, %v5441
    %v5443 = vrcp.pop %v5424
    %v5444 = vmul.f32 1.0, %v5443
    %v5445 = vrcp.pop %v5425
    %v5446 = vmul.f32 1.0, %v5445
    %v5447 = vrcp.pop %v5426
    %v5448 = vmul.f32 1.0, %v5447
    %v5449 = vrcp.pop %v5427
    %v5450 = vmul.f32 1.0, %v5449
    %v5451 = vrcp.pop %v5428
    %v5452 = vmul.f32 1.0, %v5451
    %v5453 = vrcp.pop %v5429
    %v5454 = vmul.f32 1.0, %v5453
    %v5455 = vrcp.pop %v5430
    %v5456 = vmul.f32 1.0, %v5455
    %v5457 = vrcp.pop %v5431
    %v5458 = vmul.f32 1.0, %v5457
    %v5459 = vrcp.pop %v5432
    %v5460 = vmul.f32 1.0, %v5459
    %v5461 = vrcp.pop %v5433
    %v5462 = vmul.f32 1.0, %v5461
    %v5463 = vrcp.pop %v5434
    %v5464 = vmul.f32 1.0, %v5463
    %v5465 = vrcp.pop %v5435
    %v5466 = vmul.f32 1.0, %v5465
    %v5467 = vrcp.pop %v5436
    %v5468 = vmul.f32 1.0, %v5467
    %v5469 = vmul.f32 %v5438, %v5263
    %v5470 = vmul.f32 %v5440, %v5267
    %v5471 = vmul.f32 %v5442, %v5273
    %v5472 = vmul.f32 %v5444, %v5277
    %v5473 = vmul.f32 %v5446, %v5283
    %v5474 = vmul.f32 %v5448, %v5287
    %v5475 = vmul.f32 %v5450, %v5293
    %v5476 = vmul.f32 %v5452, %v5297
    %v5477 = vmul.f32 %v5454, %v5303
    %v5478 = vmul.f32 %v5456, %v5307
    %v5479 = vmul.f32 %v5458, %v5313
    %v5480 = vmul.f32 %v5460, %v5317
    %v5481 = vmul.f32 %v5462, %v5323
    %v5482 = vmul.f32 %v5464, %v5327
    %v5483 = vmul.f32 %v5466, %v5333
    %v5484 = vmul.f32 %v5468, %v5337
    %v5485 = vadd.f32 %v5187, %v5469
    %v5486 = vadd.f32 %v5188, %v5470
    %v5487 = vadd.f32 %v5189, %v5471
    %v5488 = vadd.f32 %v5190, %v5472
    %v5489 = vadd.f32 %v5191, %v5473
    %v5490 = vadd.f32 %v5192, %v5474
    %v5491 = vadd.f32 %v5193, %v5475
    %v5492 = vadd.f32 %v5194, %v5476
    %v5493 = vadd.f32 %v5195, %v5477
    %v5494 = vadd.f32 %v5196, %v5478
    %v5495 = vadd.f32 %v5197, %v5479
    %v5496 = vadd.f32 %v5198, %v5480
    %v5497 = vadd.f32 %v5199, %v5481
    %v5498 = vadd.f32 %v5200, %v5482
    %v5499 = vadd.f32 %v5201, %v5483
    %v5500 = vadd.f32 %v5202, %v5484
    %s5501 = sshll.u32 %s1059, 4
    %5502 = dma.done %s1064, %s5501
    %v5503 = vld [vmem:[%s1063] sm:$0xff]
    %v5504 = vld [vmem:[%s1063 + $0x8] sm:$0xff]
    %v5505 = vld [vmem:[%s1063 + $0x10] sm:$0xff]
    %v5506 = vld [vmem:[%s1063 + $0x18] sm:$0xff]
    %v5507 = vunpack.c.l.s8.bf16 %v5503
    %v5508 = vunpack.c.h.s8.bf16 %v5503
    %v5509 = vunpack.c.l.s8.bf16 %v5504
    %v5510 = vunpack.c.h.s8.bf16 %v5504
    %v5511 = vunpack.c.l.s8.bf16 %v5505
    %v5512 = vunpack.c.h.s8.bf16 %v5505
    %v5513 = vunpack.c.l.s8.bf16 %v5506
    %v5514 = vunpack.c.h.s8.bf16 %v5506
    %5515 = vmatprep.subr.bf16.mxu0 %v4606
    %5516 = vmatpush1.bf16.msra.mxu0 %v4501
    %5517 = vmatprep.subr.bf16.mxu0 %v4605
    %5518 = vmatpush1.bf16.msra.mxu0 %v4500
    %5519 = vmatprep.subr.bf16.mxu0 %v4604
    %5520 = vmatpush1.bf16.msra.mxu0 %v4499
    %5521 = vmatprep.subr.bf16.mxu0 %v4603
    %5522 = vmatpush1.bf16.msra.mxu0 %v4498
    %5523 = vmatprep.subr.bf16.mxu0 %v4602
    %5524 = vmatpush1.bf16.msra.mxu0 %v4497
    %5525 = vmatprep.subr.bf16.mxu0 %v4601
    %5526 = vmatpush1.bf16.msra.mxu0 %v4496
    %5527 = vmatprep.subr.bf16.mxu0 %v4600
    %5528 = vmatpush1.bf16.msra.mxu0 %v4495
    %5529 = vmatprep.subr.bf16.mxu0 %v4599
    %5530 = vmatpush1.bf16.msra.mxu0 %v4494
    %5531 = vmatprep.subr.bf16.mxu0 0
    %5532 = vmatpush2.bf16.msra.mxu0 0
    %5533 = vmatprep.subr.bf16.mxu0 0
    %5534 = vmatpush2.bf16.msra.mxu0 0
    %5535 = vmatprep.subr.bf16.mxu0 0
    %5536 = vmatpush2.bf16.msra.mxu0 0
    %5537 = vmatprep.subr.bf16.mxu0 0
    %5538 = vmatpush2.bf16.msra.mxu0 0
    %5539 = vmatprep.subr.bf16.mxu0 0
    %5540 = vmatpush2.bf16.msra.mxu0 0
    %5541 = vmatprep.subr.bf16.mxu0 0
    %5542 = vmatpush2.bf16.msra.mxu0 0
    %5543 = vmatprep.subr.bf16.mxu0 0
    %5544 = vmatpush2.bf16.msra.mxu0 0
    %5545 = vmatprep.subr.bf16.mxu0 0
    %5546 = vmatpush2.bf16.msra.mxu0 0
    %5547 = vmatprep.mubr.bf16.mxu0 0
    %5548 = vmatmul.mubr.bf16.gmra.mxu0 %v5507
    %v5549 = vpop.f32.mrf.mxu0
    %v5550 = vadd.f32 0.0, %v5549
    %v5551 = vpop.f32.mrf.mxu0
    %v5552 = vadd.f32 0.0, %v5551
    %v5553 = vpop.f32.mrf.mxu0
    %v5554 = vadd.f32 0.0, %v5553
    %v5555 = vpop.f32.mrf.mxu0
    %v5556 = vadd.f32 0.0, %v5555
    %5557 = vmatprep.mubr.bf16.mxu0 0
    %5558 = vmatmul.mubr.bf16.gmra.mxu0 %v5508
    %v5559 = vpop.f32.mrf.mxu0
    %v5560 = vadd.f32 0.0, %v5559
    %v5561 = vpop.f32.mrf.mxu0
    %v5562 = vadd.f32 0.0, %v5561
    %v5563 = vpop.f32.mrf.mxu0
    %v5564 = vadd.f32 0.0, %v5563
    %v5565 = vpop.f32.mrf.mxu0
    %v5566 = vadd.f32 0.0, %v5565
    %5567 = vmatprep.mubr.bf16.mxu0 0
    %5568 = vmatmul.mubr.bf16.gmra.mxu0 %v5509
    %v5569 = vpop.f32.mrf.mxu0
    %v5570 = vadd.f32 0.0, %v5569
    %v5571 = vpop.f32.mrf.mxu0
    %v5572 = vadd.f32 0.0, %v5571
    %v5573 = vpop.f32.mrf.mxu0
    %v5574 = vadd.f32 0.0, %v5573
    %v5575 = vpop.f32.mrf.mxu0
    %v5576 = vadd.f32 0.0, %v5575
    %5577 = vmatprep.mubr.bf16.mxu0 0
    %5578 = vmatmul.mubr.bf16.gmra.mxu0 %v5510
    %v5579 = vpop.f32.mrf.mxu0
    %v5580 = vadd.f32 0.0, %v5579
    %v5581 = vpop.f32.mrf.mxu0
    %v5582 = vadd.f32 0.0, %v5581
    %v5583 = vpop.f32.mrf.mxu0
    %v5584 = vadd.f32 0.0, %v5583
    %v5585 = vpop.f32.mrf.mxu0
    %v5586 = vadd.f32 0.0, %v5585
    %5587 = vmatprep.mubr.bf16.mxu0 0
    %5588 = vmatmul.mubr.bf16.gmra.mxu0 %v5511
    %v5589 = vpop.f32.mrf.mxu0
    %v5590 = vadd.f32 0.0, %v5589
    %v5591 = vpop.f32.mrf.mxu0
    %v5592 = vadd.f32 0.0, %v5591
    %v5593 = vpop.f32.mrf.mxu0
    %v5594 = vadd.f32 0.0, %v5593
    %v5595 = vpop.f32.mrf.mxu0
    %v5596 = vadd.f32 0.0, %v5595
    %5597 = vmatprep.mubr.bf16.mxu0 0
    %5598 = vmatmul.mubr.bf16.gmra.mxu0 %v5512
    %v5599 = vpop.f32.mrf.mxu0
    %v5600 = vadd.f32 0.0, %v5599
    %v5601 = vpop.f32.mrf.mxu0
    %v5602 = vadd.f32 0.0, %v5601
    %v5603 = vpop.f32.mrf.mxu0
    %v5604 = vadd.f32 0.0, %v5603
    %v5605 = vpop.f32.mrf.mxu0
    %v5606 = vadd.f32 0.0, %v5605
    %5607 = vmatprep.mubr.bf16.mxu0 0
    %5608 = vmatmul.mubr.bf16.gmra.mxu0 %v5513
    %v5609 = vpop.f32.mrf.mxu0
    %v5610 = vadd.f32 0.0, %v5609
    %v5611 = vpop.f32.mrf.mxu0
    %v5612 = vadd.f32 0.0, %v5611
    %v5613 = vpop.f32.mrf.mxu0
    %v5614 = vadd.f32 0.0, %v5613
    %v5615 = vpop.f32.mrf.mxu0
    %v5616 = vadd.f32 0.0, %v5615
    %5617 = vmatprep.mubr.bf16.mxu0 0
    %5618 = vmatmul.mubr.bf16.gmra.mxu0 %v5514
    %v5619 = vpop.f32.mrf.mxu0
    %v5620 = vadd.f32 0.0, %v5619
    %v5621 = vpop.f32.mrf.mxu0
    %v5622 = vadd.f32 0.0, %v5621
    %v5623 = vpop.f32.mrf.mxu0
    %v5624 = vadd.f32 0.0, %v5623
    %v5625 = vpop.f32.mrf.mxu0
    %v5626 = vadd.f32 0.0, %v5625
    %5627 = vdwg.mxu0
    %v5628 = vadd.f32 %v5341, %v5550
    %v5629 = vadd.f32 %v5342, %v5554
    %v5630 = vadd.f32 %v5343, %v5560
    %v5631 = vadd.f32 %v5344, %v5564
    %v5632 = vadd.f32 %v5345, %v5570
    %v5633 = vadd.f32 %v5346, %v5574
    %v5634 = vadd.f32 %v5347, %v5580
    %v5635 = vadd.f32 %v5348, %v5584
    %v5636 = vadd.f32 %v5349, %v5590
    %v5637 = vadd.f32 %v5350, %v5594
    %v5638 = vadd.f32 %v5351, %v5600
    %v5639 = vadd.f32 %v5352, %v5604
    %v5640 = vadd.f32 %v5353, %v5610
    %v5641 = vadd.f32 %v5354, %v5614
    %v5642 = vadd.f32 %v5355, %v5620
    %v5643 = vadd.f32 %v5356, %v5624
    %v5644 = vadd.f32 %v627, %v5552
    %v5645 = vadd.f32 %v630, %v5556
    %v5646 = vadd.f32 %v635, %v5562
    %v5647 = vadd.f32 %v638, %v5566
    %v5648 = vadd.f32 %v643, %v5572
    %v5649 = vadd.f32 %v646, %v5576
    %v5650 = vadd.f32 %v651, %v5582
    %v5651 = vadd.f32 %v654, %v5586
    %v5652 = vadd.f32 %v659, %v5592
    %v5653 = vadd.f32 %v662, %v5596
    %v5654 = vadd.f32 %v667, %v5602
    %v5655 = vadd.f32 %v670, %v5606
    %v5656 = vadd.f32 %v675, %v5612
    %v5657 = vadd.f32 %v678, %v5616
    %v5658 = vadd.f32 %v683, %v5622
    %v5659 = vadd.f32 %v686, %v5626
    %v5660 = vxor.u32 %v5644, 2147483648
    %v5661 = vxor.u32 %v5645, 2147483648
    %v5662 = vxor.u32 %v5646, 2147483648
    %v5663 = vxor.u32 %v5647, 2147483648
    %v5664 = vxor.u32 %v5648, 2147483648
    %v5665 = vxor.u32 %v5649, 2147483648
    %v5666 = vxor.u32 %v5650, 2147483648
    %v5667 = vxor.u32 %v5651, 2147483648
    %v5668 = vxor.u32 %v5652, 2147483648
    %v5669 = vxor.u32 %v5653, 2147483648
    %v5670 = vxor.u32 %v5654, 2147483648
    %v5671 = vxor.u32 %v5655, 2147483648
    %v5672 = vxor.u32 %v5656, 2147483648
    %v5673 = vxor.u32 %v5657, 2147483648
    %v5674 = vxor.u32 %v5658, 2147483648
    %v5675 = vxor.u32 %v5659, 2147483648
    %v5676 = vmul.f32 %v5660, 1.442695
    %v5677 = vpow.pop %v5676
    %v5678 = vmul.f32 %v5661, 1.442695
    %v5679 = vpow.pop %v5678
    %v5680 = vmul.f32 %v5662, 1.442695
    %v5681 = vpow.pop %v5680
    %v5682 = vmul.f32 %v5663, 1.442695
    %v5683 = vpow.pop %v5682
    %v5684 = vmul.f32 %v5664, 1.442695
    %v5685 = vpow.pop %v5684
    %v5686 = vmul.f32 %v5665, 1.442695
    %v5687 = vpow.pop %v5686
    %v5688 = vmul.f32 %v5666, 1.442695
    %v5689 = vpow.pop %v5688
    %v5690 = vmul.f32 %v5667, 1.442695
    %v5691 = vpow.pop %v5690
    %v5692 = vmul.f32 %v5668, 1.442695
    %v5693 = vpow.pop %v5692
    %v5694 = vmul.f32 %v5669, 1.442695
    %v5695 = vpow.pop %v5694
    %v5696 = vmul.f32 %v5670, 1.442695
    %v5697 = vpow.pop %v5696
    %v5698 = vmul.f32 %v5671, 1.442695
    %v5699 = vpow.pop %v5698
    %v5700 = vmul.f32 %v5672, 1.442695
    %v5701 = vpow.pop %v5700
    %v5702 = vmul.f32 %v5673, 1.442695
    %v5703 = vpow.pop %v5702
    %v5704 = vmul.f32 %v5674, 1.442695
    %v5705 = vpow.pop %v5704
    %v5706 = vmul.f32 %v5675, 1.442695
    %v5707 = vpow.pop %v5706
    %v5708 = vadd.f32 %v5677, 1.0
    %v5709 = vadd.f32 %v5679, 1.0
    %v5710 = vadd.f32 %v5681, 1.0
    %v5711 = vadd.f32 %v5683, 1.0
    %v5712 = vadd.f32 %v5685, 1.0
    %v5713 = vadd.f32 %v5687, 1.0
    %v5714 = vadd.f32 %v5689, 1.0
    %v5715 = vadd.f32 %v5691, 1.0
    %v5716 = vadd.f32 %v5693, 1.0
    %v5717 = vadd.f32 %v5695, 1.0
    %v5718 = vadd.f32 %v5697, 1.0
    %v5719 = vadd.f32 %v5699, 1.0
    %v5720 = vadd.f32 %v5701, 1.0
    %v5721 = vadd.f32 %v5703, 1.0
    %v5722 = vadd.f32 %v5705, 1.0
    %v5723 = vadd.f32 %v5707, 1.0
    %v5724 = vrcp.pop %v5708
    %v5725 = vmul.f32 1.0, %v5724
    %v5726 = vrcp.pop %v5709
    %v5727 = vmul.f32 1.0, %v5726
    %v5728 = vrcp.pop %v5710
    %v5729 = vmul.f32 1.0, %v5728
    %v5730 = vrcp.pop %v5711
    %v5731 = vmul.f32 1.0, %v5730
    %v5732 = vrcp.pop %v5712
    %v5733 = vmul.f32 1.0, %v5732
    %v5734 = vrcp.pop %v5713
    %v5735 = vmul.f32 1.0, %v5734
    %v5736 = vrcp.pop %v5714
    %v5737 = vmul.f32 1.0, %v5736
    %v5738 = vrcp.pop %v5715
    %v5739 = vmul.f32 1.0, %v5738
    %v5740 = vrcp.pop %v5716
    %v5741 = vmul.f32 1.0, %v5740
    %v5742 = vrcp.pop %v5717
    %v5743 = vmul.f32 1.0, %v5742
    %v5744 = vrcp.pop %v5718
    %v5745 = vmul.f32 1.0, %v5744
    %v5746 = vrcp.pop %v5719
    %v5747 = vmul.f32 1.0, %v5746
    %v5748 = vrcp.pop %v5720
    %v5749 = vmul.f32 1.0, %v5748
    %v5750 = vrcp.pop %v5721
    %v5751 = vmul.f32 1.0, %v5750
    %v5752 = vrcp.pop %v5722
    %v5753 = vmul.f32 1.0, %v5752
    %v5754 = vrcp.pop %v5723
    %v5755 = vmul.f32 1.0, %v5754
    %v5756 = vmul.f32 %v5725, %v5550
    %v5757 = vmul.f32 %v5727, %v5554
    %v5758 = vmul.f32 %v5729, %v5560
    %v5759 = vmul.f32 %v5731, %v5564
    %v5760 = vmul.f32 %v5733, %v5570
    %v5761 = vmul.f32 %v5735, %v5574
    %v5762 = vmul.f32 %v5737, %v5580
    %v5763 = vmul.f32 %v5739, %v5584
    %v5764 = vmul.f32 %v5741, %v5590
    %v5765 = vmul.f32 %v5743, %v5594
    %v5766 = vmul.f32 %v5745, %v5600
    %v5767 = vmul.f32 %v5747, %v5604
    %v5768 = vmul.f32 %v5749, %v5610
    %v5769 = vmul.f32 %v5751, %v5614
    %v5770 = vmul.f32 %v5753, %v5620
    %v5771 = vmul.f32 %v5755, %v5624
    %v5772 = vadd.f32 %v5485, %v5756
    %v5773 = vadd.f32 %v5486, %v5757
    %v5774 = vadd.f32 %v5487, %v5758
    %v5775 = vadd.f32 %v5488, %v5759
    %v5776 = vadd.f32 %v5489, %v5760
    %v5777 = vadd.f32 %v5490, %v5761
    %v5778 = vadd.f32 %v5491, %v5762
    %v5779 = vadd.f32 %v5492, %v5763
    %v5780 = vadd.f32 %v5493, %v5764
    %v5781 = vadd.f32 %v5494, %v5765
    %v5782 = vadd.f32 %v5495, %v5766
    %v5783 = vadd.f32 %v5496, %v5767
    %v5784 = vadd.f32 %v5497, %v5768
    %v5785 = vadd.f32 %v5498, %v5769
    %v5786 = vadd.f32 %v5499, %v5770
    %v5787 = vadd.f32 %v5500, %v5771
    %v5788 = vpack.c.bf16 %v5629, %v5628
    %v5789 = vpack.c.bf16 %v5631, %v5630
    %v5790 = vpack.c.bf16 %v5633, %v5632
    %v5791 = vpack.c.bf16 %v5635, %v5634
    %v5792 = vpack.c.bf16 %v5637, %v5636
    %v5793 = vpack.c.bf16 %v5639, %v5638
    %v5794 = vpack.c.bf16 %v5641, %v5640
    %v5795 = vpack.c.bf16 %v5643, %v5642
    %5796 = vmatprep.subr.bf16.mxu0 0
    %5797 = vmatpush1.bf16.msra.mxu0 %v2304
    %5798 = vmatprep.subr.bf16.mxu0 0
    %5799 = vmatpush1.bf16.msra.mxu0 %v2303
    %5800 = vmatprep.subr.bf16.mxu0 0
    %5801 = vmatpush1.bf16.msra.mxu0 %v2302
    %5802 = vmatprep.subr.bf16.mxu0 0
    %5803 = vmatpush1.bf16.msra.mxu0 %v2301
    %5804 = vmatprep.subr.bf16.mxu0 0
    %5805 = vmatpush1.bf16.msra.mxu0 %v2300
    %5806 = vmatprep.subr.bf16.mxu0 0
    %5807 = vmatpush1.bf16.msra.mxu0 %v2299
    %5808 = vmatprep.subr.bf16.mxu0 0
    %5809 = vmatpush1.bf16.msra.mxu0 %v2298
    %5810 = vmatprep.subr.bf16.mxu0 0
    %5811 = vmatpush1.bf16.msra.mxu0 %v2297
    %5812 = vmatprep.subr.bf16.mxu0 0
    %5813 = vmatpush2.bf16.msra.mxu0 0
    %5814 = vmatprep.subr.bf16.mxu0 0
    %5815 = vmatpush2.bf16.msra.mxu0 0
    %5816 = vmatprep.subr.bf16.mxu0 0
    %5817 = vmatpush2.bf16.msra.mxu0 0
    %5818 = vmatprep.subr.bf16.mxu0 0
    %5819 = vmatpush2.bf16.msra.mxu0 0
    %5820 = vmatprep.subr.bf16.mxu0 0
    %5821 = vmatpush2.bf16.msra.mxu0 0
    %5822 = vmatprep.subr.bf16.mxu0 0
    %5823 = vmatpush2.bf16.msra.mxu0 0
    %5824 = vmatprep.subr.bf16.mxu0 0
    %5825 = vmatpush2.bf16.msra.mxu0 0
    %5826 = vmatprep.subr.bf16.mxu0 0
    %5827 = vmatpush2.bf16.msra.mxu0 0
    %5828 = vmatprep.mubr.bf16.mxu0 0
    %5829 = vmatmul.mubr.bf16.gmra.mxu0 %v5788
    %v5830 = vpop.f32.mrf.mxu0
    %v5831 = vadd.f32 0.0, %v5830
    %v5832 = vpop.f32.mrf.mxu0
    %v5833 = vpop.f32.mrf.mxu0
    %v5834 = vadd.f32 0.0, %v5833
    %v5835 = vpop.f32.mrf.mxu0
    %5836 = vmatprep.mubr.bf16.mxu0 0
    %5837 = vmatmul.mubr.bf16.gmra.mxu0 %v5789
    %v5838 = vpop.f32.mrf.mxu0
    %v5839 = vadd.f32 0.0, %v5838
    %v5840 = vpop.f32.mrf.mxu0
    %v5841 = vpop.f32.mrf.mxu0
    %v5842 = vadd.f32 0.0, %v5841
    %v5843 = vpop.f32.mrf.mxu0
    %5844 = vmatprep.mubr.bf16.mxu0 0
    %5845 = vmatmul.mubr.bf16.gmra.mxu0 %v5790
    %v5846 = vpop.f32.mrf.mxu0
    %v5847 = vadd.f32 0.0, %v5846
    %v5848 = vpop.f32.mrf.mxu0
    %v5849 = vpop.f32.mrf.mxu0
    %v5850 = vadd.f32 0.0, %v5849
    %v5851 = vpop.f32.mrf.mxu0
    %5852 = vmatprep.mubr.bf16.mxu0 0
    %5853 = vmatmul.mubr.bf16.gmra.mxu0 %v5791
    %v5854 = vpop.f32.mrf.mxu0
    %v5855 = vadd.f32 0.0, %v5854
    %v5856 = vpop.f32.mrf.mxu0
    %v5857 = vpop.f32.mrf.mxu0
    %v5858 = vadd.f32 0.0, %v5857
    %v5859 = vpop.f32.mrf.mxu0
    %5860 = vmatprep.mubr.bf16.mxu0 0
    %5861 = vmatmul.mubr.bf16.gmra.mxu0 %v5792
    %v5862 = vpop.f32.mrf.mxu0
    %v5863 = vadd.f32 0.0, %v5862
    %v5864 = vpop.f32.mrf.mxu0
    %v5865 = vpop.f32.mrf.mxu0
    %v5866 = vadd.f32 0.0, %v5865
    %v5867 = vpop.f32.mrf.mxu0
    %5868 = vmatprep.mubr.bf16.mxu0 0
    %5869 = vmatmul.mubr.bf16.gmra.mxu0 %v5793
    %v5870 = vpop.f32.mrf.mxu0
    %v5871 = vadd.f32 0.0, %v5870
    %v5872 = vpop.f32.mrf.mxu0
    %v5873 = vpop.f32.mrf.mxu0
    %v5874 = vadd.f32 0.0, %v5873
    %v5875 = vpop.f32.mrf.mxu0
    %5876 = vmatprep.mubr.bf16.mxu0 0
    %5877 = vmatmul.mubr.bf16.gmra.mxu0 %v5794
    %v5878 = vpop.f32.mrf.mxu0
    %v5879 = vadd.f32 0.0, %v5878
    %v5880 = vpop.f32.mrf.mxu0
    %v5881 = vpop.f32.mrf.mxu0
    %v5882 = vadd.f32 0.0, %v5881
    %v5883 = vpop.f32.mrf.mxu0
    %5884 = vmatprep.mubr.bf16.mxu0 0
    %5885 = vmatmul.mubr.bf16.gmra.mxu0 %v5795
    %v5886 = vpop.f32.mrf.mxu0
    %v5887 = vadd.f32 0.0, %v5886
    %v5888 = vpop.f32.mrf.mxu0
    %v5889 = vpop.f32.mrf.mxu0
    %v5890 = vadd.f32 0.0, %v5889
    %v5891 = vpop.f32.mrf.mxu0
    %5892 = vdwg.mxu0
    %v5893 = vadd.f32 %v459, %v5831
    %v5894 = vadd.f32 %v462, %v5834
    %v5895 = vadd.f32 %v467, %v5839
    %v5896 = vadd.f32 %v470, %v5842
    %v5897 = vadd.f32 %v475, %v5847
    %v5898 = vadd.f32 %v478, %v5850
    %v5899 = vadd.f32 %v483, %v5855
    %v5900 = vadd.f32 %v486, %v5858
    %v5901 = vadd.f32 %v491, %v5863
    %v5902 = vadd.f32 %v494, %v5866
    %v5903 = vadd.f32 %v499, %v5871
    %v5904 = vadd.f32 %v502, %v5874
    %v5905 = vadd.f32 %v507, %v5879
    %v5906 = vadd.f32 %v510, %v5882
    %v5907 = vadd.f32 %v515, %v5887
    %v5908 = vadd.f32 %v518, %v5890
    %v5909 = vxor.u32 %v5893, 2147483648
    %v5910 = vxor.u32 %v5894, 2147483648
    %v5911 = vxor.u32 %v5895, 2147483648
    %v5912 = vxor.u32 %v5896, 2147483648
    %v5913 = vxor.u32 %v5897, 2147483648
    %v5914 = vxor.u32 %v5898, 2147483648
    %v5915 = vxor.u32 %v5899, 2147483648
    %v5916 = vxor.u32 %v5900, 2147483648
    %v5917 = vxor.u32 %v5901, 2147483648
    %v5918 = vxor.u32 %v5902, 2147483648
    %v5919 = vxor.u32 %v5903, 2147483648
    %v5920 = vxor.u32 %v5904, 2147483648
    %v5921 = vxor.u32 %v5905, 2147483648
    %v5922 = vxor.u32 %v5906, 2147483648
    %v5923 = vxor.u32 %v5907, 2147483648
    %v5924 = vxor.u32 %v5908, 2147483648
    %v5925 = vmul.f32 %v5909, 1.442695
    %v5926 = vpow.pop %v5925
    %v5927 = vmul.f32 %v5910, 1.442695
    %v5928 = vpow.pop %v5927
    %v5929 = vmul.f32 %v5911, 1.442695
    %v5930 = vpow.pop %v5929
    %v5931 = vmul.f32 %v5912, 1.442695
    %v5932 = vpow.pop %v5931
    %v5933 = vmul.f32 %v5913, 1.442695
    %v5934 = vpow.pop %v5933
    %v5935 = vmul.f32 %v5914, 1.442695
    %v5936 = vpow.pop %v5935
    %v5937 = vmul.f32 %v5915, 1.442695
    %v5938 = vpow.pop %v5937
    %v5939 = vmul.f32 %v5916, 1.442695
    %v5940 = vpow.pop %v5939
    %v5941 = vmul.f32 %v5917, 1.442695
    %v5942 = vpow.pop %v5941
    %v5943 = vmul.f32 %v5918, 1.442695
    %v5944 = vpow.pop %v5943
    %v5945 = vmul.f32 %v5919, 1.442695
    %v5946 = vpow.pop %v5945
    %v5947 = vmul.f32 %v5920, 1.442695
    %v5948 = vpow.pop %v5947
    %v5949 = vmul.f32 %v5921, 1.442695
    %v5950 = vpow.pop %v5949
    %v5951 = vmul.f32 %v5922, 1.442695
    %v5952 = vpow.pop %v5951
    %v5953 = vmul.f32 %v5923, 1.442695
    %v5954 = vpow.pop %v5953
    %v5955 = vmul.f32 %v5924, 1.442695
    %v5956 = vpow.pop %v5955
    %v5957 = vadd.f32 %v5926, 1.0
    %v5958 = vadd.f32 %v5928, 1.0
    %v5959 = vadd.f32 %v5930, 1.0
    %v5960 = vadd.f32 %v5932, 1.0
    %v5961 = vadd.f32 %v5934, 1.0
    %v5962 = vadd.f32 %v5936, 1.0
    %v5963 = vadd.f32 %v5938, 1.0
    %v5964 = vadd.f32 %v5940, 1.0
    %v5965 = vadd.f32 %v5942, 1.0
    %v5966 = vadd.f32 %v5944, 1.0
    %v5967 = vadd.f32 %v5946, 1.0
    %v5968 = vadd.f32 %v5948, 1.0
    %v5969 = vadd.f32 %v5950, 1.0
    %v5970 = vadd.f32 %v5952, 1.0
    %v5971 = vadd.f32 %v5954, 1.0
    %v5972 = vadd.f32 %v5956, 1.0
    %v5973 = vrcp.pop %v5957
    %v5974 = vmul.f32 1.0, %v5973
    %v5975 = vrcp.pop %v5958
    %v5976 = vmul.f32 1.0, %v5975
    %v5977 = vrcp.pop %v5959
    %v5978 = vmul.f32 1.0, %v5977
    %v5979 = vrcp.pop %v5960
    %v5980 = vmul.f32 1.0, %v5979
    %v5981 = vrcp.pop %v5961
    %v5982 = vmul.f32 1.0, %v5981
    %v5983 = vrcp.pop %v5962
    %v5984 = vmul.f32 1.0, %v5983
    %v5985 = vrcp.pop %v5963
    %v5986 = vmul.f32 1.0, %v5985
    %v5987 = vrcp.pop %v5964
    %v5988 = vmul.f32 1.0, %v5987
    %v5989 = vrcp.pop %v5965
    %v5990 = vmul.f32 1.0, %v5989
    %v5991 = vrcp.pop %v5966
    %v5992 = vmul.f32 1.0, %v5991
    %v5993 = vrcp.pop %v5967
    %v5994 = vmul.f32 1.0, %v5993
    %v5995 = vrcp.pop %v5968
    %v5996 = vmul.f32 1.0, %v5995
    %v5997 = vrcp.pop %v5969
    %v5998 = vmul.f32 1.0, %v5997
    %v5999 = vrcp.pop %v5970
    %v6000 = vmul.f32 1.0, %v5999
    %v6001 = vrcp.pop %v5971
    %v6002 = vmul.f32 1.0, %v6001
    %v6003 = vrcp.pop %v5972
    %v6004 = vmul.f32 1.0, %v6003
    %v6005 = vpack.c.bf16 %v5773, %v5772
    %v6006 = vpack.c.bf16 %v5775, %v5774
    %v6007 = vpack.c.bf16 %v5777, %v5776
    %v6008 = vpack.c.bf16 %v5779, %v5778
    %v6009 = vpack.c.bf16 %v5781, %v5780
    %v6010 = vpack.c.bf16 %v5783, %v5782
    %v6011 = vpack.c.bf16 %v5785, %v5784
    %v6012 = vpack.c.bf16 %v5787, %v5786
    %6013 = vmatprep.subr.bf16.mxu0 0
    %6014 = vmatpush1.bf16.msra.mxu0 %v2569
    %6015 = vmatprep.subr.bf16.mxu0 0
    %6016 = vmatpush1.bf16.msra.mxu0 %v2568
    %6017 = vmatprep.subr.bf16.mxu0 0
    %6018 = vmatpush1.bf16.msra.mxu0 %v2567
    %6019 = vmatprep.subr.bf16.mxu0 0
    %6020 = vmatpush1.bf16.msra.mxu0 %v2566
    %6021 = vmatprep.subr.bf16.mxu0 0
    %6022 = vmatpush1.bf16.msra.mxu0 %v2565
    %6023 = vmatprep.subr.bf16.mxu0 0
    %6024 = vmatpush1.bf16.msra.mxu0 %v2564
    %6025 = vmatprep.subr.bf16.mxu0 0
    %6026 = vmatpush1.bf16.msra.mxu0 %v2563
    %6027 = vmatprep.subr.bf16.mxu0 0
    %6028 = vmatpush1.bf16.msra.mxu0 %v2562
    %6029 = vmatprep.subr.bf16.mxu0 0
    %6030 = vmatpush2.bf16.msra.mxu0 0
    %6031 = vmatprep.subr.bf16.mxu0 0
    %6032 = vmatpush2.bf16.msra.mxu0 0
    %6033 = vmatprep.subr.bf16.mxu0 0
    %6034 = vmatpush2.bf16.msra.mxu0 0
    %6035 = vmatprep.subr.bf16.mxu0 0
    %6036 = vmatpush2.bf16.msra.mxu0 0
    %6037 = vmatprep.subr.bf16.mxu0 0
    %6038 = vmatpush2.bf16.msra.mxu0 0
    %6039 = vmatprep.subr.bf16.mxu0 0
    %6040 = vmatpush2.bf16.msra.mxu0 0
    %6041 = vmatprep.subr.bf16.mxu0 0
    %6042 = vmatpush2.bf16.msra.mxu0 0
    %6043 = vmatprep.subr.bf16.mxu0 0
    %6044 = vmatpush2.bf16.msra.mxu0 0
    %6045 = vmatprep.mubr.bf16.mxu0 0
    %6046 = vmatmul.mubr.bf16.gmra.mxu0 %v6005
    %v6047 = vpop.f32.mrf.mxu0
    %v6048 = vadd.f32 0.0, %v6047
    %v6049 = vpop.f32.mrf.mxu0
    %v6050 = vpop.f32.mrf.mxu0
    %v6051 = vadd.f32 0.0, %v6050
    %v6052 = vpop.f32.mrf.mxu0
    %6053 = vmatprep.mubr.bf16.mxu0 0
    %6054 = vmatmul.mubr.bf16.gmra.mxu0 %v6006
    %v6055 = vpop.f32.mrf.mxu0
    %v6056 = vadd.f32 0.0, %v6055
    %v6057 = vpop.f32.mrf.mxu0
    %v6058 = vpop.f32.mrf.mxu0
    %v6059 = vadd.f32 0.0, %v6058
    %v6060 = vpop.f32.mrf.mxu0
    %6061 = vmatprep.mubr.bf16.mxu0 0
    %6062 = vmatmul.mubr.bf16.gmra.mxu0 %v6007
    %v6063 = vpop.f32.mrf.mxu0
    %v6064 = vadd.f32 0.0, %v6063
    %v6065 = vpop.f32.mrf.mxu0
    %v6066 = vpop.f32.mrf.mxu0
    %v6067 = vadd.f32 0.0, %v6066
    %v6068 = vpop.f32.mrf.mxu0
    %6069 = vmatprep.mubr.bf16.mxu0 0
    %6070 = vmatmul.mubr.bf16.gmra.mxu0 %v6008
    %v6071 = vpop.f32.mrf.mxu0
    %v6072 = vadd.f32 0.0, %v6071
    %v6073 = vpop.f32.mrf.mxu0
    %v6074 = vpop.f32.mrf.mxu0
    %v6075 = vadd.f32 0.0, %v6074
    %v6076 = vpop.f32.mrf.mxu0
    %6077 = vmatprep.mubr.bf16.mxu0 0
    %6078 = vmatmul.mubr.bf16.gmra.mxu0 %v6009
    %v6079 = vpop.f32.mrf.mxu0
    %v6080 = vadd.f32 0.0, %v6079
    %v6081 = vpop.f32.mrf.mxu0
    %v6082 = vpop.f32.mrf.mxu0
    %v6083 = vadd.f32 0.0, %v6082
    %v6084 = vpop.f32.mrf.mxu0
    %6085 = vmatprep.mubr.bf16.mxu0 0
    %6086 = vmatmul.mubr.bf16.gmra.mxu0 %v6010
    %v6087 = vpop.f32.mrf.mxu0
    %v6088 = vadd.f32 0.0, %v6087
    %v6089 = vpop.f32.mrf.mxu0
    %v6090 = vpop.f32.mrf.mxu0
    %v6091 = vadd.f32 0.0, %v6090
    %v6092 = vpop.f32.mrf.mxu0
    %6093 = vmatprep.mubr.bf16.mxu0 0
    %6094 = vmatmul.mubr.bf16.gmra.mxu0 %v6011
    %v6095 = vpop.f32.mrf.mxu0
    %v6096 = vadd.f32 0.0, %v6095
    %v6097 = vpop.f32.mrf.mxu0
    %v6098 = vpop.f32.mrf.mxu0
    %v6099 = vadd.f32 0.0, %v6098
    %v6100 = vpop.f32.mrf.mxu0
    %6101 = vmatprep.mubr.bf16.mxu0 0
    %6102 = vmatmul.mubr.bf16.gmra.mxu0 %v6012
    %v6103 = vpop.f32.mrf.mxu0
    %v6104 = vadd.f32 0.0, %v6103
    %v6105 = vpop.f32.mrf.mxu0
    %v6106 = vpop.f32.mrf.mxu0
    %v6107 = vadd.f32 0.0, %v6106
    %v6108 = vpop.f32.mrf.mxu0
    %6109 = vdwg.mxu0
    %v6110 = vadd.f32 %v795, %v6048
    %v6111 = vadd.f32 %v798, %v6051
    %v6112 = vadd.f32 %v803, %v6056
    %v6113 = vadd.f32 %v806, %v6059
    %v6114 = vadd.f32 %v811, %v6064
    %v6115 = vadd.f32 %v814, %v6067
    %v6116 = vadd.f32 %v819, %v6072
    %v6117 = vadd.f32 %v822, %v6075
    %v6118 = vadd.f32 %v827, %v6080
    %v6119 = vadd.f32 %v830, %v6083
    %v6120 = vadd.f32 %v835, %v6088
    %v6121 = vadd.f32 %v838, %v6091
    %v6122 = vadd.f32 %v843, %v6096
    %v6123 = vadd.f32 %v846, %v6099
    %v6124 = vadd.f32 %v851, %v6104
    %v6125 = vadd.f32 %v854, %v6107
    %v6126 = vtanh.pop %v6110
    %v6127 = vtanh.pop %v6111
    %v6128 = vtanh.pop %v6112
    %v6129 = vtanh.pop %v6113
    %v6130 = vtanh.pop %v6114
    %v6131 = vtanh.pop %v6115
    %v6132 = vtanh.pop %v6116
    %v6133 = vtanh.pop %v6117
    %v6134 = vtanh.pop %v6118
    %v6135 = vtanh.pop %v6119
    %v6136 = vtanh.pop %v6120
    %v6137 = vtanh.pop %v6121
    %v6138 = vtanh.pop %v6122
    %v6139 = vtanh.pop %v6123
    %v6140 = vtanh.pop %v6124
    %v6141 = vtanh.pop %v6125
    %v6142 = vsub.f32 %v6126, %v5628
    %v6143 = vsub.f32 %v6127, %v5629
    %v6144 = vsub.f32 %v6128, %v5630
    %v6145 = vsub.f32 %v6129, %v5631
    %v6146 = vsub.f32 %v6130, %v5632
    %v6147 = vsub.f32 %v6131, %v5633
    %v6148 = vsub.f32 %v6132, %v5634
    %v6149 = vsub.f32 %v6133, %v5635
    %v6150 = vsub.f32 %v6134, %v5636
    %v6151 = vsub.f32 %v6135, %v5637
    %v6152 = vsub.f32 %v6136, %v5638
    %v6153 = vsub.f32 %v6137, %v5639
    %v6154 = vsub.f32 %v6138, %v5640
    %v6155 = vsub.f32 %v6139, %v5641
    %v6156 = vsub.f32 %v6140, %v5642
    %v6157 = vsub.f32 %v6141, %v5643
    %v6158 = vmul.f32 %v5974, %v6142
    %v6159 = vmul.f32 %v5976, %v6143
    %v6160 = vmul.f32 %v5978, %v6144
    %v6161 = vmul.f32 %v5980, %v6145
    %v6162 = vmul.f32 %v5982, %v6146
    %v6163 = vmul.f32 %v5984, %v6147
    %v6164 = vmul.f32 %v5986, %v6148
    %v6165 = vmul.f32 %v5988, %v6149
    %v6166 = vmul.f32 %v5990, %v6150
    %v6167 = vmul.f32 %v5992, %v6151
    %v6168 = vmul.f32 %v5994, %v6152
    %v6169 = vmul.f32 %v5996, %v6153
    %v6170 = vmul.f32 %v5998, %v6154
    %v6171 = vmul.f32 %v6000, %v6155
    %v6172 = vmul.f32 %v6002, %v6156
    %v6173 = vmul.f32 %v6004, %v6157
    %v6174 = vadd.f32 %v5628, %v6158
    %v6175 = vadd.f32 %v5629, %v6159
    %v6176 = vadd.f32 %v5630, %v6160
    %v6177 = vadd.f32 %v5631, %v6161
    %v6178 = vadd.f32 %v5632, %v6162
    %v6179 = vadd.f32 %v5633, %v6163
    %v6180 = vadd.f32 %v5634, %v6164
    %v6181 = vadd.f32 %v5635, %v6165
    %v6182 = vadd.f32 %v5636, %v6166
    %v6183 = vadd.f32 %v5637, %v6167
    %v6184 = vadd.f32 %v5638, %v6168
    %v6185 = vadd.f32 %v5639, %v6169
    %v6186 = vadd.f32 %v5640, %v6170
    %v6187 = vadd.f32 %v5641, %v6171
    %v6188 = vadd.f32 %v5642, %v6172
    %v6189 = vadd.f32 %v5643, %v6173
    %v6190 = vmul.f32 %v6174, %v289
    %v6191 = vmul.f32 %v6175, %v290
    %v6192 = vmul.f32 %v6176, %v291
    %v6193 = vmul.f32 %v6177, %v292
    %v6194 = vmul.f32 %v6178, %v293
    %v6195 = vmul.f32 %v6179, %v294
    %v6196 = vmul.f32 %v6180, %v295
    %v6197 = vmul.f32 %v6181, %v296
    %v6198 = vmul.f32 %v6182, %v297
    %v6199 = vmul.f32 %v6183, %v298
    %v6200 = vmul.f32 %v6184, %v299
    %v6201 = vmul.f32 %v6185, %v300
    %v6202 = vmul.f32 %v6186, %v301
    %v6203 = vmul.f32 %v6187, %v302
    %v6204 = vmul.f32 %v6188, %v303
    %v6205 = vmul.f32 %v6189, %v304
    %6206 = vst [vmem:[#allocation20] sm:$0xff] %v6190
    %6207 = vst [vmem:[#allocation20 + $0x8] sm:$0xff] %v6191
    %6208 = vst [vmem:[#allocation20 + $0x10] sm:$0xff] %v6192
    %6209 = vst [vmem:[#allocation20 + $0x18] sm:$0xff] %v6193
    %6210 = vst [vmem:[#allocation20 + $0x20] sm:$0xff] %v6194
    %6211 = vst [vmem:[#allocation20 + $0x28] sm:$0xff] %v6195
    %6212 = vst [vmem:[#allocation20 + $0x30] sm:$0xff] %v6196
    %6213 = vst [vmem:[#allocation20 + $0x38] sm:$0xff] %v6197
    %6214 = vst [vmem:[#allocation20 + $0x40] sm:$0xff] %v6198
    %6215 = vst [vmem:[#allocation20 + $0x48] sm:$0xff] %v6199
    %6216 = vst [vmem:[#allocation20 + $0x50] sm:$0xff] %v6200
    %6217 = vst [vmem:[#allocation20 + $0x58] sm:$0xff] %v6201
    %6218 = vst [vmem:[#allocation20 + $0x60] sm:$0xff] %v6202
    %6219 = vst [vmem:[#allocation20 + $0x68] sm:$0xff] %v6203
    %6220 = vst [vmem:[#allocation20 + $0x70] sm:$0xff] %v6204
    %6221 = vst [vmem:[#allocation20 + $0x78] sm:$0xff] %v6205
    %v6222 = vld [vmem:[%s3] sm:$0xf]
    %v6223 = vld [vmem:[%s3 + $0x4] sm:$0xf]
    %v6224 = vpack.c.bf16 %v6191, %v6190
    %v6225 = vpack.c.bf16 %v6193, %v6192
    %v6226 = vpack.c.bf16 %v6195, %v6194
    %v6227 = vpack.c.bf16 %v6197, %v6196
    %v6228 = vpack.c.bf16 %v6199, %v6198
    %v6229 = vpack.c.bf16 %v6201, %v6200
    %v6230 = vpack.c.bf16 %v6203, %v6202
    %v6231 = vpack.c.bf16 %v6205, %v6204
    %v6234 = vunpack.c.l.b16 %v6222
    %v6235 = vunpack.c.l.b16 %v6223
    %v6236 = vpack.c.b16 %v6235, %v6234
    %6238 = vmatprep.subr.bf16.mxu0 0
    %6239 = vmatpush1.bf16.msra.mxu0 %v6231
    %6240 = vmatprep.subr.bf16.mxu0 0
    %6241 = vmatpush1.bf16.msra.mxu0 %v6230
    %6242 = vmatprep.subr.bf16.mxu0 0
    %6243 = vmatpush1.bf16.msra.mxu0 %v6229
    %6244 = vmatprep.subr.bf16.mxu0 0
    %6245 = vmatpush1.bf16.msra.mxu0 %v6228
    %6246 = vmatprep.subr.bf16.mxu0 0
    %6247 = vmatpush1.bf16.msra.mxu0 %v6227
    %6248 = vmatprep.subr.bf16.mxu0 0
    %6249 = vmatpush1.bf16.msra.mxu0 %v6226
    %6250 = vmatprep.subr.bf16.mxu0 0
    %6251 = vmatpush1.bf16.msra.mxu0 %v6225
    %6252 = vmatprep.subr.bf16.mxu0 0
    %6253 = vmatpush1.bf16.msra.mxu0 %v6224
    %6254 = vmatprep.subr.bf16.mxu0 0
    %6255 = vmatpush2.bf16.msra.mxu0 0
    %6256 = vmatprep.subr.bf16.mxu0 0
    %6257 = vmatpush2.bf16.msra.mxu0 0
    %6258 = vmatprep.subr.bf16.mxu0 0
    %6259 = vmatpush2.bf16.msra.mxu0 0
    %6260 = vmatprep.subr.bf16.mxu0 0
    %6261 = vmatpush2.bf16.msra.mxu0 0
    %6262 = vmatprep.subr.bf16.mxu0 0
    %6263 = vmatpush2.bf16.msra.mxu0 0
    %6264 = vmatprep.subr.bf16.mxu0 0
    %6265 = vmatpush2.bf16.msra.mxu0 0
    %6266 = vmatprep.subr.bf16.mxu0 0
    %6267 = vmatpush2.bf16.msra.mxu0 0
    %6268 = vmatprep.subr.bf16.mxu0 0
    %6269 = vmatpush2.bf16.msra.mxu0 0
    %6270 = vmatprep.mubr.bf16.mxu0 0
    %6271 = vmatmul.mubr.bf16.gmra.mxu0 %v6236
    %v6272 = vpop.f32.mrf.mxu0
    %v6273 = vadd.f32 0.0, %v6272
    %v6274 = vpop.f32.mrf.mxu0
    %v6275 = vpop.f32.mrf.mxu0
    %v6276 = vadd.f32 0.0, %v6275
    %v6277 = vpop.f32.mrf.mxu0
    %6278 = vdwg.mxu0
    %v6279 = vld [vmem:[%s0] sm:$0xf]
    %v6280 = vld [vmem:[%s0 + $0x4] sm:$0xf]
    %v6281 = vld [vmem:[#allocation16] sm:$0xf]
    %v6282 = vld [vmem:[#allocation16 + $0x4] sm:$0xf]
    %v6283 = vld [vmem:[#allocation16 + $0x8] sm:$0xf]
    %v6284 = vld [vmem:[#allocation16 + $0xc] sm:$0xf]
    %v6285 = vld [vmem:[#allocation16 + $0x10] sm:$0xf]
    %v6286 = vld [vmem:[#allocation16 + $0x14] sm:$0xf]
    %v6287 = vld [vmem:[#allocation16 + $0x18] sm:$0xf]
    %v6288 = vld [vmem:[#allocation16 + $0x1c] sm:$0xf]
    %v6289 = vld [vmem:[#allocation16 + $0x20] sm:$0xf]
    %v6290 = vld [vmem:[#allocation16 + $0x24] sm:$0xf]
    %v6291 = vld [vmem:[#allocation16 + $0x28] sm:$0xf]
    %v6292 = vld [vmem:[#allocation16 + $0x2c] sm:$0xf]
    %v6293 = vld [vmem:[#allocation16 + $0x30] sm:$0xf]
    %v6294 = vld [vmem:[#allocation16 + $0x34] sm:$0xf]
    %v6295 = vld [vmem:[#allocation16 + $0x38] sm:$0xf]
    %v6296 = vld [vmem:[#allocation16 + $0x3c] sm:$0xf]
    %v6297 = vpack.c.bf16 %v6276, %v6273
    %v6298 = vld [vmem:[#allocation18] sm:$0xf]
    %v6299 = vld [vmem:[#allocation18 + $0x4] sm:$0xf]
    %v6300 = vld [vmem:[#allocation18 + $0x8] sm:$0xf]
    %v6301 = vld [vmem:[#allocation18 + $0xc] sm:$0xf]
    %v6302 = vld [vmem:[#allocation18 + $0x10] sm:$0xf]
    %v6303 = vld [vmem:[#allocation18 + $0x14] sm:$0xf]
    %v6304 = vld [vmem:[#allocation18 + $0x18] sm:$0xf]
    %v6305 = vld [vmem:[#allocation18 + $0x1c] sm:$0xf]
    %v6306 = vld [vmem:[#allocation18 + $0x20] sm:$0xf]
    %v6307 = vld [vmem:[#allocation18 + $0x24] sm:$0xf]
    %v6308 = vld [vmem:[#allocation18 + $0x28] sm:$0xf]
    %v6309 = vld [vmem:[#allocation18 + $0x2c] sm:$0xf]
    %v6310 = vld [vmem:[#allocation18 + $0x30] sm:$0xf]
    %v6311 = vld [vmem:[#allocation18 + $0x34] sm:$0xf]
    %v6312 = vld [vmem:[#allocation18 + $0x38] sm:$0xf]
    %v6313 = vld [vmem:[#allocation18 + $0x3c] sm:$0xf]
    %v6330 = vunpack.c.l.b16 %v6298
    %v6331 = vunpack.c.l.b16 %v6299
    %v6332 = vunpack.c.l.b16 %v6300
    %v6333 = vunpack.c.l.b16 %v6301
    %v6334 = vunpack.c.l.b16 %v6302
    %v6335 = vunpack.c.l.b16 %v6303
    %v6336 = vunpack.c.l.b16 %v6304
    %v6337 = vunpack.c.l.b16 %v6305
    %v6338 = vunpack.c.l.b16 %v6306
    %v6339 = vunpack.c.l.b16 %v6307
    %v6340 = vunpack.c.l.b16 %v6308
    %v6341 = vunpack.c.l.b16 %v6309
    %v6342 = vunpack.c.l.b16 %v6310
    %v6343 = vunpack.c.l.b16 %v6311
    %v6344 = vunpack.c.l.b16 %v6312
    %v6345 = vunpack.c.l.b16 %v6313
    %v6346 = vpack.c.b16 %v6331, %v6330
    %v6347 = vpack.c.b16 %v6333, %v6332
    %v6348 = vpack.c.b16 %v6335, %v6334
    %v6349 = vpack.c.b16 %v6337, %v6336
    %v6350 = vpack.c.b16 %v6339, %v6338
    %v6351 = vpack.c.b16 %v6341, %v6340
    %v6352 = vpack.c.b16 %v6343, %v6342
    %v6353 = vpack.c.b16 %v6345, %v6344
    %6362 = vmatprep.subr.bf16.mxu0 0
    %6363 = vmatpush1.bf16.msra.mxu0 %v6353
    %6364 = vmatprep.subr.bf16.mxu0 0
    %6365 = vmatpush1.bf16.msra.mxu0 %v6352
    %6366 = vmatprep.subr.bf16.mxu0 0
    %6367 = vmatpush1.bf16.msra.mxu0 %v6351
    %6368 = vmatprep.subr.bf16.mxu0 0
    %6369 = vmatpush1.bf16.msra.mxu0 %v6350
    %6370 = vmatprep.subr.bf16.mxu0 0
    %6371 = vmatpush1.bf16.msra.mxu0 %v6349
    %6372 = vmatprep.subr.bf16.mxu0 0
    %6373 = vmatpush1.bf16.msra.mxu0 %v6348
    %6374 = vmatprep.subr.bf16.mxu0 0
    %6375 = vmatpush1.bf16.msra.mxu0 %v6347
    %6376 = vmatprep.subr.bf16.mxu0 0
    %6377 = vmatpush1.bf16.msra.mxu0 %v6346
    %6378 = vmatprep.subr.bf16.mxu0 0
    %6379 = vmatpush2.bf16.msra.mxu0 0
    %6380 = vmatprep.subr.bf16.mxu0 0
    %6381 = vmatpush2.bf16.msra.mxu0 0
    %6382 = vmatprep.subr.bf16.mxu0 0
    %6383 = vmatpush2.bf16.msra.mxu0 0
    %6384 = vmatprep.subr.bf16.mxu0 0
    %6385 = vmatpush2.bf16.msra.mxu0 0
    %6386 = vmatprep.subr.bf16.mxu0 0
    %6387 = vmatpush2.bf16.msra.mxu0 0
    %6388 = vmatprep.subr.bf16.mxu0 0
    %6389 = vmatpush2.bf16.msra.mxu0 0
    %6390 = vmatprep.subr.bf16.mxu0 0
    %6391 = vmatpush2.bf16.msra.mxu0 0
    %6392 = vmatprep.subr.bf16.mxu0 0
    %6393 = vmatpush2.bf16.msra.mxu0 0
    %6394 = vmatprep.mubr.bf16.mxu0 0
    %6395 = vmatmul.mubr.bf16.gmra.mxu0 %v6297
    %v6396 = vpop.f32.mrf.mxu0
    %v6397 = vadd.f32 0.0, %v6396
    %v6398 = vpop.f32.mrf.mxu0
    %v6399 = vpop.f32.mrf.mxu0
    %v6400 = vadd.f32 0.0, %v6399
    %v6401 = vpop.f32.mrf.mxu0
    %6402 = vdwg.mxu0
    %v6405 = vunpack.c.l.b16 %v6279
    %v6406 = vunpack.c.l.b16 %v6280
    %v6407 = vpack.c.b16 %v6406, %v6405
    %v6425 = vunpack.c.l.b16 %v6281
    %v6426 = vunpack.c.l.b16 %v6282
    %v6427 = vunpack.c.l.b16 %v6283
    %v6428 = vunpack.c.l.b16 %v6284
    %v6429 = vunpack.c.l.b16 %v6285
    %v6430 = vunpack.c.l.b16 %v6286
    %v6431 = vunpack.c.l.b16 %v6287
    %v6432 = vunpack.c.l.b16 %v6288
    %v6433 = vunpack.c.l.b16 %v6289
    %v6434 = vunpack.c.l.b16 %v6290
    %v6435 = vunpack.c.l.b16 %v6291
    %v6436 = vunpack.c.l.b16 %v6292
    %v6437 = vunpack.c.l.b16 %v6293
    %v6438 = vunpack.c.l.b16 %v6294
    %v6439 = vunpack.c.l.b16 %v6295
    %v6440 = vunpack.c.l.b16 %v6296
    %v6441 = vpack.c.b16 %v6426, %v6425
    %v6442 = vpack.c.b16 %v6428, %v6427
    %v6443 = vpack.c.b16 %v6430, %v6429
    %v6444 = vpack.c.b16 %v6432, %v6431
    %v6445 = vpack.c.b16 %v6434, %v6433
    %v6446 = vpack.c.b16 %v6436, %v6435
    %v6447 = vpack.c.b16 %v6438, %v6437
    %v6448 = vpack.c.b16 %v6440, %v6439
    %6457 = vmatprep.subr.bf16.mxu0 0
    %6458 = vmatpush1.bf16.msra.mxu0 %v6448
    %6459 = vmatprep.subr.bf16.mxu0 0
    %6460 = vmatpush1.bf16.msra.mxu0 %v6447
    %6461 = vmatprep.subr.bf16.mxu0 0
    %6462 = vmatpush1.bf16.msra.mxu0 %v6446
    %6463 = vmatprep.subr.bf16.mxu0 0
    %6464 = vmatpush1.bf16.msra.mxu0 %v6445
    %6465 = vmatprep.subr.bf16.mxu0 0
    %6466 = vmatpush1.bf16.msra.mxu0 %v6444
    %6467 = vmatprep.subr.bf16.mxu0 0
    %6468 = vmatpush1.bf16.msra.mxu0 %v6443
    %6469 = vmatprep.subr.bf16.mxu0 0
    %6470 = vmatpush1.bf16.msra.mxu0 %v6442
    %6471 = vmatprep.subr.bf16.mxu0 0
    %6472 = vmatpush1.bf16.msra.mxu0 %v6441
    %6473 = vmatprep.subr.bf16.mxu0 0
    %6474 = vmatpush2.bf16.msra.mxu0 0
    %6475 = vmatprep.subr.bf16.mxu0 0
    %6476 = vmatpush2.bf16.msra.mxu0 0
    %6477 = vmatprep.subr.bf16.mxu0 0
    %6478 = vmatpush2.bf16.msra.mxu0 0
    %6479 = vmatprep.subr.bf16.mxu0 0
    %6480 = vmatpush2.bf16.msra.mxu0 0
    %6481 = vmatprep.subr.bf16.mxu0 0
    %6482 = vmatpush2.bf16.msra.mxu0 0
    %6483 = vmatprep.subr.bf16.mxu0 0
    %6484 = vmatpush2.bf16.msra.mxu0 0
    %6485 = vmatprep.subr.bf16.mxu0 0
    %6486 = vmatpush2.bf16.msra.mxu0 0
    %6487 = vmatprep.subr.bf16.mxu0 0
    %6488 = vmatpush2.bf16.msra.mxu0 0
    %6489 = vmatprep.mubr.bf16.mxu0 0
    %6490 = vmatmul.mubr.bf16.gmra.mxu0 %v6407
    %v6491 = vpop.f32.mrf.mxu0
    %v6492 = vadd.f32 %v6397, %v6491
    %v6493 = vpop.f32.mrf.mxu0
    %v6494 = vpop.f32.mrf.mxu0
    %v6495 = vadd.f32 %v6400, %v6494
    %v6496 = vpop.f32.mrf.mxu0
    %6497 = vdwg.mxu0
    %v6498 = vld [vmem:[%s16] sm:$0x1]
    %v6500 = vlaneseq
    %v6501 = vshrl.u32 %v6500, 7
    %v6502 = vsub.s32 0, %v6501
    %v6503 = vrot.slane %v6498, %v6502
    %v6505 = vadd.f32 %v6492, %v6503
    %v6506 = vadd.f32 %v6495, %v6503
    %v6507 = vmax.f32 %v6505, 0.0
    %v6508 = vmax.f32 %v6506, 0.0
    %v6509 = vld [vmem:[%s4] sm:$0xff]
    %v6510 = vld [vmem:[%s4 + $0x8] sm:$0xff]
    %6512 = vset.pattern.permute.xlu0 0
    %6513 = vperm.xlu0 %6512, %v6509
    %v6514 = vpop.permute.xlu0 %6513
    %6517 = vset.pattern.permute.xlu0 0
    %6518 = vperm.xlu0 %6517, %v6510
    %v6519 = vpop.permute.xlu0 %6518
    %v6521 = vmul.f32 %v6507, %v6514
    %v6522 = vmul.f32 %v6508, %v6519
    %6523 = vst [vmem:[#allocation19] sm:$0xff] %v6521
    %6524 = vst [vmem:[#allocation19 + $0x8] sm:$0xff] %v6522
    // Predicated region
    $region150: #{tpu_custom_call.1} parent=1 // pred_check
      _
    $region151: #{tpu_custom_call.1} parent=1 // pred_check_branch
      %6526 = sbr.rel (0) target = $region153
    $region152: #{tpu_custom_call.1} parent=1 // pred_region
      %s6528 = ssub.s32 256, 256
      %6529 = vsyncadd [#allocation6], %s6528
      %s6530 = sshll.u32 [#allocation19], 4
      %s6531 = int_to_ptr.vmem [resolvable:$true] %s6530
      %6536 = dma.vmem_to_hbm [thread:$0]  %s6531, 256, %s17, [#allocation6], 128, 128, 8
    $region153: #{tpu_custom_call.1} parent=1 // pred_fallthru
      _
    // Predicated region
    $region154: #{tpu_custom_call.1} parent=1 // pred_check
      _
    $region155: #{tpu_custom_call.1} parent=1 // pred_check_branch
      %6538 = sbr.rel (0) target = $region157
    $region156: #{tpu_custom_call.1} parent=1 // pred_region
      %s6540 = ssub.s32 2048, 2048
      %6541 = vsyncadd [#allocation21], %s6540
      %s6542 = sshll.u32 [#allocation20], 4
      %s6543 = int_to_ptr.vmem [resolvable:$true] %s6542
      %6548 = dma.vmem_to_hbm [thread:$0]  %s6543, 2048, %s18, [#allocation21], 128, 128, 8
    $region157: #{tpu_custom_call.1} parent=1 // pred_fallthru
      _
    // Predicated region
    $region158: #{tpu_custom_call.1} parent=1 // pred_check
      _
    $region159: #{tpu_custom_call.1} parent=1 // pred_check_branch
      %6550 = sbr.rel (0) target = $region161
    $region160: #{tpu_custom_call.1} parent=1 // pred_region
      %6551 = dma.done [#allocation6], 256
    $region161: #{tpu_custom_call.1} parent=1 // pred_fallthru
      _
    // Predicated region
    $region162: #{tpu_custom_call.1} parent=1 // pred_check
      _
    $region163: #{tpu_custom_call.1} parent=1 // pred_check_branch
      %6553 = sbr.rel (0) target = $region165
    $region164: #{tpu_custom_call.1} parent=1 // pred_region
      %6554 = dma.done [#allocation21], 2048
    $region165: #{tpu_custom_call.1} parent=1 // pred_fallthru
      _
    %6555 = vsyncpa [#allocation5], 1
    %6556 = vsyncpa [#allocation8], 1
    %6557 = vsyncpa [#allocation11], 1
    %6558 = vsyncpa [#allocation14], 1
    %6559 = vsyncpa [#allocation17], 1
    %6560 = vsyncpa [#allocation6], 1
    %6561 = vsyncpa [#allocation21], 1
  %6562 = vsyncmov [#allocation3]
  %s6563 = vpop.sfrf %6562
  %p6564 = scmp.eq.s32.totalorder %s6563, 0
  %p6565 = pneg %p6564
  %6567 = shalt.err (%p6565)
  %s6568 = scalar_lea.sflag [#allocation3], 1
  %6569 = vsyncmov %s6568
  %s6570 = vpop.sfrf %6569
  %p6571 = scmp.eq.s32.totalorder %s6570, 0
  %p6572 = pneg %p6571
  %6574 = shalt.err (%p6572)

</llo_original>
